<compile_context>
chip_gen: v7x
topology: tpu7x:2x2x1
jax: 0.10.0
libtpu: 0.0.40
codegen_flags: <defaults>
</compile_context>

<pallas_src>
import functools
import math

import jax
import jax.numpy as jnp
from jax.experimental import pallas as pl
from jax.experimental.pallas import tpu as pltpu


HP = 128   # lane-padded gate/hidden width for layers 2 (H=64) and 3 (H=1)
FP = 128   # lane-padded input-feature width for layer 1 (95 -> 128)


def _lstm_cell(gates, c_prev, h):
    """One LSTM cell update from pre-activations.  PyTorch gate order
    [i, f, g, o]; each gate occupies an `h`-wide, 128-lane-aligned block of
    `gates`.  Padded lanes see pre-activation 0 and stay exactly 0 in (h, c)
    given zero initial state (sigmoid(0) * tanh(0) == 0)."""
    i_g = jax.nn.sigmoid(gates[:, 0 * h:1 * h])
    f_g = jax.nn.sigmoid(gates[:, 1 * h:2 * h])
    g_g = jnp.tanh(gates[:, 2 * h:3 * h])
    o_g = jax.nn.sigmoid(gates[:, 3 * h:4 * h])
    c_new = f_g * c_prev + i_g * g_g
    h_new = o_g * jnp.tanh(c_new)
    return h_new, c_new


def _encoder_kernel(x_ref, w1ih_ref, b1_ref, w1hh_ref,
                    w2ih_hbm, b2_ref, w2hh_hbm, w3ih_hbm, b3_ref, w3hh_ref,
                    o_ref,
                    w2ih_buf, w2hh_buf, w3ih_buf, xw_buf, h1seq_buf,
                    h2seq_buf, dma_sem,
                    *, seq_len, batch):
    T, B = seq_len, batch
    H1 = w1hh_ref.shape[0]      # 128
    H2 = w2hh_buf.shape[0]      # 64

    # ---- Prologue: start streaming layer-2/3 weights.  They are first used
    # only after the full layer-1 recurrence, so these DMAs hide behind
    # compute instead of being serialized in front of the kernel.
    cp_w2ih = pltpu.make_async_copy(w2ih_hbm, w2ih_buf, dma_sem.at[0])
    cp_w2hh = pltpu.make_async_copy(w2hh_hbm, w2hh_buf, dma_sem.at[1])
    cp_w3ih = pltpu.make_async_copy(w3ih_hbm, w3ih_buf, dma_sem.at[2])
    cp_w2ih.start()
    cp_w2hh.start()
    cp_w3ih.start()

    # ---- Layer 1: 95 (lane-padded to 128) -> 128.
    # Hoisted input projection for all T steps in one matmul; only h @ W_hh
    # remains on the serial per-timestep path.
    xw_buf[...] = jnp.dot(x_ref[...], w1ih_ref[...],
                          preferred_element_type=jnp.float32) + b1_ref[...]
    h1 = jnp.zeros((B, H1), jnp.float32)
    c1 = jnp.zeros((B, H1), jnp.float32)
    for t in range(T):
        g1 = xw_buf[t * B:(t + 1) * B, :] + jnp.dot(
            h1, w1hh_ref[...], preferred_element_type=jnp.float32)
        h1, c1 = _lstm_cell(g1, c1, H1)
        h1seq_buf[t * B:(t + 1) * B, :] = h1

    # ---- Layer 2: 128 -> 64 (gates lane-padded to 128).
    cp_w2ih.wait()
    cp_w2hh.wait()
    xw_buf[...] = jnp.dot(h1seq_buf[...], w2ih_buf[...],
                          preferred_element_type=jnp.float32) + b2_ref[...]
    h2 = jnp.zeros((B, HP), jnp.float32)
    c2 = jnp.zeros((B, HP), jnp.float32)
    for t in range(T):
        # Recurrent matmul contracts only the 64 valid lanes of h2.
        g2 = xw_buf[t * B:(t + 1) * B, :] + jnp.dot(
            h2[:, :H2], w2hh_buf[...], preferred_element_type=jnp.float32)
        h2, c2 = _lstm_cell(g2, c2, HP)
        h2seq_buf[t * B:(t + 1) * B, :] = h2[:, :H2]

    # ---- Layer 3: 64 -> 1 (gates lane-padded to 128).  Input projection
    # contracts the 64 valid lanes of h2; the recurrent term is a
    # scalar-times-row VPU multiply -- no MXU work on the serial path.
    cp_w3ih.wait()
    xw_buf[...] = jnp.dot(h2seq_buf[...], w3ih_buf[...],
                          preferred_element_type=jnp.float32) + b3_ref[...]
    h3 = jnp.zeros((B, HP), jnp.float32)
    c3 = jnp.zeros((B, HP), jnp.float32)
    for t in range(T):
        g3 = xw_buf[t * B:(t + 1) * B, :] + h3[:, 0:1] * w3hh_ref[...]
        h3, c3 = _lstm_cell(g3, c3, HP)
        o_ref[t * B:(t + 1) * B, :] = h3.astype(o_ref.dtype)


def _gate_pad_cols(m, h):
    """Scatter the 4 gate blocks (each `h` columns wide) of `m` (rows, 4*h)
    into 128-lane-aligned blocks of a (rows, 4*HP) zero matrix, so every gate
    slice in the kernel is vreg-aligned and padded lanes stay zero."""
    out = jnp.zeros((m.shape[0], 4 * HP), jnp.float32)
    for g in range(4):
        out = out.at[:, g * HP:g * HP + h].set(m[:, g * h:(g + 1) * h])
    return out


@jax.jit
def encoder_forward(x, params):
    (w1_ih, w1_hh, b1_ih, b1_hh) = params[0]
    (w2_ih, w2_hh, b2_ih, b2_hh) = params[1]
    (w3_ih, w3_hh, b3_ih, b3_hh) = params[2]

    T, B, F = x.shape
    H1 = w1_hh.shape[1]   # 128
    H2 = w2_hh.shape[1]   # 64
    H3 = w3_hh.shape[1]   # 1

    # Layer-1 operands: pad the 95-wide feature dim to 128 lanes (zero weight
    # rows make the padding a no-op).
    x2d = jnp.pad(x.reshape(T * B, F).astype(jnp.float32),
                  ((0, 0), (0, FP - F)))
    w1ih_t = jnp.zeros((FP, 4 * H1), jnp.float32).at[:F, :].set(
        w1_ih.T.astype(jnp.float32))
    w1hh_t = w1_hh.T.astype(jnp.float32)                         # (128, 512)
    b1 = (b1_ih + b1_hh).astype(jnp.float32).reshape(1, 4 * H1)

    # Layers 2/3: gate columns scattered to 128-lane-aligned blocks.
    w2ih_gp = _gate_pad_cols(w2_ih.T.astype(jnp.float32), H2)    # (128, 512)
    w2hh_gp = _gate_pad_cols(w2_hh.T.astype(jnp.float32), H2)    # (64, 512)
    b2 = _gate_pad_cols(
        (b2_ih + b2_hh).astype(jnp.float32).reshape(1, 4 * H2), H2)
    w3ih_gp = _gate_pad_cols(w3_ih.T.astype(jnp.float32), H3)    # (64, 512)
    w3hh_gp = _gate_pad_cols(w3_hh.T.astype(jnp.float32), H3)    # (1, 512)
    b3 = _gate_pad_cols(
        (b3_ih + b3_hh).astype(jnp.float32).reshape(1, 4 * H3), H3)

    kernel = functools.partial(_encoder_kernel, seq_len=T, batch=B)

    out = pl.pallas_call(
        kernel,
        out_shape=jax.ShapeDtypeStruct((T * B, HP), jnp.float32),
        grid_spec=pltpu.PrefetchScalarGridSpec(
            num_scalar_prefetch=0,
            grid=(1,),  # single grid step; the whole problem lives in VMEM
            in_specs=[
                pl.BlockSpec((T * B, FP), lambda i: (0, 0)),     # x (padded)
                pl.BlockSpec((FP, 4 * H1), lambda i: (0, 0)),    # W1_ih^T
                pl.BlockSpec((1, 4 * H1), lambda i: (0, 0)),     # b1
                pl.BlockSpec((H1, 4 * H1), lambda i: (0, 0)),    # W1_hh^T
                pl.BlockSpec(memory_space=pl.ANY),               # W2_ih^T (manual DMA)
                pl.BlockSpec((1, 4 * HP), lambda i: (0, 0)),     # b2
                pl.BlockSpec(memory_space=pl.ANY),               # W2_hh^T (manual DMA)
                pl.BlockSpec(memory_space=pl.ANY),               # W3_ih^T (manual DMA)
                pl.BlockSpec((1, 4 * HP), lambda i: (0, 0)),     # b3
                pl.BlockSpec((1, 4 * HP), lambda i: (0, 0)),     # W3_hh^T row
            ],
            out_specs=pl.BlockSpec((T * B, HP), lambda i: (0, 0)),
            scratch_shapes=[
                pltpu.VMEM((H1, 4 * HP), jnp.float32),      # W2_ih^T landing buf
                pltpu.VMEM((H2, 4 * HP), jnp.float32),      # W2_hh^T landing buf
                pltpu.VMEM((H2, 4 * HP), jnp.float32),      # W3_ih^T landing buf
                pltpu.VMEM((T * B, 4 * HP), jnp.float32),   # hoisted projections (reused)
                pltpu.VMEM((T * B, H1), jnp.float32),       # layer-1 hidden sequence
                pltpu.VMEM((T * B, H2), jnp.float32),       # layer-2 hidden sequence
                pltpu.SemaphoreType.DMA((3,)),
            ],
        ),
        compiler_params=pltpu.CompilerParams(
            dimension_semantics=("arbitrary",)),
    )(x2d, w1ih_t, b1, w1hh_t, w2ih_gp, b2, w2hh_gp, w3ih_gp, b3, w3hh_gp)

    # Only lane 0 of each padded layer-3 hidden vector holds real data.
    return out.reshape(T, B, HP)[..., :H3]


def init_lstm_params(key, input_size, hidden_size):
    """PyTorch-style uniform(-k, k) init with k = 1/sqrt(hidden_size)."""
    k = 1.0 / math.sqrt(hidden_size)
    ks = jax.random.split(key, 4)
    w_ih = jax.random.uniform(ks[0], (4 * hidden_size, input_size),
                              jnp.float32, -k, k)
    w_hh = jax.random.uniform(ks[1], (4 * hidden_size, hidden_size),
                              jnp.float32, -k, k)
    b_ih = jax.random.uniform(ks[2], (4 * hidden_size,), jnp.float32, -k, k)
    b_hh = jax.random.uniform(ks[3], (4 * hidden_size,), jnp.float32, -k, k)
    return (w_ih, w_hh, b_ih, b_hh)


def _lstm_ref(x, w_ih, w_hh, b_ih, b_hh):
    """Pure-JAX reference for one nn.LSTM layer (zero initial state)."""
    T, B, _ = x.shape
    H = w_hh.shape[1]
    h = jnp.zeros((B, H), jnp.float32)
    c = jnp.zeros((B, H), jnp.float32)
    outs = []
    for t in range(T):
        gates = x[t] @ w_ih.T + h @ w_hh.T + b_ih + b_hh
        i, f, g, o = jnp.split(gates, 4, axis=1)
        i = jax.nn.sigmoid(i)
        f = jax.nn.sigmoid(f)
        g = jnp.tanh(g)
        o = jax.nn.sigmoid(o)
        c = f * c + i * g
        h = o * jnp.tanh(c)
        outs.append(h)
    return jnp.stack(outs, axis=0)


if __name__ == "__main__":
    key = jax.random.PRNGKey(0)
    k_x, k1, k2, k3 = jax.random.split(key, 4)

    seq_len, batch, in_dim = 8, 2, 95
    x = jax.random.normal(k_x, (seq_len, batch, in_dim), jnp.float32)

    params = (
        init_lstm_params(k1, 95, 128),
        init_lstm_params(k2, 128, 64),
        init_lstm_params(k3, 64, 1),
    )

    out = encoder_forward(x, params)
    out = jax.block_until_ready(out)
    assert out.shape == (seq_len, batch, 1), out.shape

    # Correctness check against a pure-JAX stacked-LSTM reference.
    ref = x
    for p in params:
        ref = _lstm_ref(ref, *p)
    assert jnp.allclose(out, ref, atol=1e-3, rtol=1e-3), \
        float(jnp.max(jnp.abs(out - ref)))

    print("KERNEL_OK")
</pallas_src>

<mosaic_0001>
module attributes {stable_mosaic.version = 11 : i64} {
  func.func @_encoder_kernel(%arg0: i32, %arg1: memref<16x128xf32, #tpu.memory_space<vmem>>, %arg2: memref<128x512xf32, #tpu.memory_space<vmem>>, %arg3: memref<1x512xf32, #tpu.memory_space<vmem>>, %arg4: memref<128x512xf32, #tpu.memory_space<vmem>>, %arg5: memref<128x512xf32, #tpu.memory_space<any>>, %arg6: memref<1x512xf32, #tpu.memory_space<vmem>>, %arg7: memref<64x512xf32, #tpu.memory_space<any>>, %arg8: memref<64x512xf32, #tpu.memory_space<any>>, %arg9: memref<1x512xf32, #tpu.memory_space<vmem>>, %arg10: memref<1x512xf32, #tpu.memory_space<vmem>>, %arg11: memref<16x128xf32, #tpu.memory_space<vmem>>, %arg12: memref<128x512xf32, #tpu.memory_space<vmem>>, %arg13: memref<64x512xf32, #tpu.memory_space<vmem>>, %arg14: memref<64x512xf32, #tpu.memory_space<vmem>>, %arg15: memref<16x512xf32, #tpu.memory_space<vmem>>, %arg16: memref<16x128xf32, #tpu.memory_space<vmem>>, %arg17: memref<16x64xf32, #tpu.memory_space<vmem>>, %arg18: memref<3x!tpu.dma_semaphore, #tpu.memory_space<semaphore_mem>>) attributes {dimension_semantics = [#tpu.dimension_semantics<arbitrary>], iteration_bounds = array<i64: 1>, scalar_prefetch = 0 : i64, scratch_operands = 7 : i64, tpu.core_type = #tpu.core_type<tc>, window_params = [{pipeline_mode = #tpu.pipeline_mode<synchronous>, transform_indices = @transform_0, window_bounds = array<i64: 16, 128>}, {pipeline_mode = #tpu.pipeline_mode<synchronous>, transform_indices = @transform_1, window_bounds = array<i64: 128, 512>}, {pipeline_mode = #tpu.pipeline_mode<synchronous>, transform_indices = @transform_2, window_bounds = array<i64: 1, 512>}, {pipeline_mode = #tpu.pipeline_mode<synchronous>, transform_indices = @transform_3, window_bounds = array<i64: 128, 512>}, {}, {pipeline_mode = #tpu.pipeline_mode<synchronous>, transform_indices = @transform_5, window_bounds = array<i64: 1, 512>}, {}, {}, {pipeline_mode = #tpu.pipeline_mode<synchronous>, transform_indices = @transform_8, window_bounds = array<i64: 1, 512>}, {pipeline_mode = #tpu.pipeline_mode<synchronous>, transform_indices = @transform_9, window_bounds = array<i64: 1, 512>}, {pipeline_mode = #tpu.pipeline_mode<synchronous>, transform_indices = @transform_10, window_bounds = array<i64: 16, 128>}]} {
    %c0_i32 = arith.constant 0 : i32
    %0 = tpu.memref_slice %arg18[%c0_i32] : memref<3x!tpu.dma_semaphore, #tpu.memory_space<semaphore_mem>> -> memref<1x!tpu.dma_semaphore, #tpu.memory_space<semaphore_mem>>
    %1 = tpu.memref_squeeze %0 : memref<1x!tpu.dma_semaphore, #tpu.memory_space<semaphore_mem>> -> memref<!tpu.dma_semaphore, #tpu.memory_space<semaphore_mem>>
    tpu.enqueue_dma source(%arg5 : memref<128x512xf32, #tpu.memory_space<any>>) target(%arg12 : memref<128x512xf32, #tpu.memory_space<vmem>>) target_semaphore(%1 : memref<!tpu.dma_semaphore, #tpu.memory_space<semaphore_mem>>)
    %c1_i32 = arith.constant 1 : i32
    %2 = tpu.memref_slice %arg18[%c1_i32] : memref<3x!tpu.dma_semaphore, #tpu.memory_space<semaphore_mem>> -> memref<1x!tpu.dma_semaphore, #tpu.memory_space<semaphore_mem>>
    %3 = tpu.memref_squeeze %2 : memref<1x!tpu.dma_semaphore, #tpu.memory_space<semaphore_mem>> -> memref<!tpu.dma_semaphore, #tpu.memory_space<semaphore_mem>>
    tpu.enqueue_dma source(%arg7 : memref<64x512xf32, #tpu.memory_space<any>>) target(%arg13 : memref<64x512xf32, #tpu.memory_space<vmem>>) target_semaphore(%3 : memref<!tpu.dma_semaphore, #tpu.memory_space<semaphore_mem>>)
    %c2_i32 = arith.constant 2 : i32
    %4 = tpu.memref_slice %arg18[%c2_i32] : memref<3x!tpu.dma_semaphore, #tpu.memory_space<semaphore_mem>> -> memref<1x!tpu.dma_semaphore, #tpu.memory_space<semaphore_mem>>
    %5 = tpu.memref_squeeze %4 : memref<1x!tpu.dma_semaphore, #tpu.memory_space<semaphore_mem>> -> memref<!tpu.dma_semaphore, #tpu.memory_space<semaphore_mem>>
    tpu.enqueue_dma source(%arg8 : memref<64x512xf32, #tpu.memory_space<any>>) target(%arg14 : memref<64x512xf32, #tpu.memory_space<vmem>>) target_semaphore(%5 : memref<!tpu.dma_semaphore, #tpu.memory_space<semaphore_mem>>)
    %c0 = arith.constant 0 : index
    %c0_0 = arith.constant 0 : index
    %6 = vector.load %arg1[%c0, %c0_0] : memref<16x128xf32, #tpu.memory_space<vmem>>, vector<16x128xf32>
    %c0_1 = arith.constant 0 : index
    %c0_2 = arith.constant 0 : index
    %7 = vector.load %arg2[%c0_1, %c0_2] : memref<128x512xf32, #tpu.memory_space<vmem>>, vector<128x512xf32>
    %cst = arith.constant dense<0.000000e+00> : vector<16x512xf32>
    %8 = tpu.matmul %6, %7, %cst {dimension_numbers = #tpu.dot_dimension_numbers<[1], [0], [0], [1], [0, 0, 1, 1], [], []>} : vector<16x128xf32>, vector<128x512xf32>, vector<16x512xf32> -> vector<16x512xf32>
    %c0_3 = arith.constant 0 : index
    %c0_4 = arith.constant 0 : index
    %9 = vector.load %arg3[%c0_3, %c0_4] : memref<1x512xf32, #tpu.memory_space<vmem>>, vector<1x512xf32>
    %10 = vector.broadcast %9 : vector<1x512xf32> to vector<16x512xf32>
    %11 = arith.addf %8, %10 : vector<16x512xf32>
    %c0_5 = arith.constant 0 : index
    %c0_6 = arith.constant 0 : index
    %12 = vector.load %arg15[%c0_5, %c0_6] : memref<16x512xf32, #tpu.memory_space<vmem>>, vector<16x512xf32>
    tpu.vector_store %arg15[%c0_5, %c0_6], %11 {strides = array<i32>} : memref<16x512xf32, #tpu.memory_space<vmem>>, vector<16x512xf32>,
    %cst_7 = arith.constant 0.000000e+00 : f32
    %13 = vector.broadcast %cst_7 : f32 to vector<2x128xf32>
    %cst_8 = arith.constant 0.000000e+00 : f32
    %14 = vector.broadcast %cst_8 : f32 to vector<2x128xf32>
    %c0_9 = arith.constant 0 : index
    %c0_10 = arith.constant 0 : index
    %15 = vector.load %arg15[%c0_9, %c0_10] : memref<16x512xf32, #tpu.memory_space<vmem>>, vector<2x512xf32>
    %c0_11 = arith.constant 0 : index
    %c0_12 = arith.constant 0 : index
    %16 = vector.load %arg4[%c0_11, %c0_12] : memref<128x512xf32, #tpu.memory_space<vmem>>, vector<128x512xf32>
    %cst_13 = arith.constant dense<0.000000e+00> : vector<2x512xf32>
    %17 = tpu.matmul %13, %16, %cst_13 {dimension_numbers = #tpu.dot_dimension_numbers<[1], [0], [0], [1], [0, 0, 1, 1], [], []>} : vector<2x128xf32>, vector<128x512xf32>, vector<2x512xf32> -> vector<2x512xf32>
    %18 = arith.addf %15, %17 : vector<2x512xf32>
    %19 = vector.extract_strided_slice %18 {offsets = [0, 0], sizes = [2, 128], strides = [1, 1]} : vector<2x512xf32> to vector<2x128xf32>
    %20 = arith.negf %19 : vector<2x128xf32>
    %21 = math.exp %20 : vector<2x128xf32>
    %cst_14 = arith.constant 1.000000e+00 : f32
    %22 = vector.broadcast %cst_14 : f32 to vector<2x128xf32>
    %23 = arith.addf %22, %21 : vector<2x128xf32>
    %24 = arith.divf %22, %23 : vector<2x128xf32>
    %25 = vector.extract_strided_slice %18 {offsets = [0, 128], sizes = [2, 128], strides = [1, 1]} : vector<2x512xf32> to vector<2x128xf32>
    %26 = arith.negf %25 : vector<2x128xf32>
    %27 = math.exp %26 : vector<2x128xf32>
    %cst_15 = arith.constant 1.000000e+00 : f32
    %28 = vector.broadcast %cst_15 : f32 to vector<2x128xf32>
    %29 = arith.addf %28, %27 : vector<2x128xf32>
    %30 = arith.divf %28, %29 : vector<2x128xf32>
    %31 = vector.extract_strided_slice %18 {offsets = [0, 256], sizes = [2, 128], strides = [1, 1]} : vector<2x512xf32> to vector<2x128xf32>
    %32 = math.tanh %31 : vector<2x128xf32>
    %33 = vector.extract_strided_slice %18 {offsets = [0, 384], sizes = [2, 128], strides = [1, 1]} : vector<2x512xf32> to vector<2x128xf32>
    %34 = arith.negf %33 : vector<2x128xf32>
    %35 = math.exp %34 : vector<2x128xf32>
    %cst_16 = arith.constant 1.000000e+00 : f32
    %36 = vector.broadcast %cst_16 : f32 to vector<2x128xf32>
    %37 = arith.addf %36, %35 : vector<2x128xf32>
    %38 = arith.divf %36, %37 : vector<2x128xf32>
    %39 = arith.mulf %30, %14 : vector<2x128xf32>
    %40 = arith.mulf %24, %32 : vector<2x128xf32>
    %41 = arith.addf %39, %40 : vector<2x128xf32>
    %42 = math.tanh %41 : vector<2x128xf32>
    %43 = arith.mulf %38, %42 : vector<2x128xf32>
    %c0_17 = arith.constant 0 : index
    %c0_18 = arith.constant 0 : index
    %44 = vector.load %arg16[%c0_17, %c0_18] : memref<16x128xf32, #tpu.memory_space<vmem>>, vector<2x128xf32>
    tpu.vector_store %arg16[%c0_17, %c0_18], %43 {strides = array<i32>} : memref<16x128xf32, #tpu.memory_space<vmem>>, vector<2x128xf32>,
    %c2 = arith.constant 2 : index
    %c0_19 = arith.constant 0 : index
    %45 = vector.load %arg15[%c2, %c0_19] : memref<16x512xf32, #tpu.memory_space<vmem>>, vector<2x512xf32>
    %c0_20 = arith.constant 0 : index
    %c0_21 = arith.constant 0 : index
    %46 = vector.load %arg4[%c0_20, %c0_21] : memref<128x512xf32, #tpu.memory_space<vmem>>, vector<128x512xf32>
    %cst_22 = arith.constant dense<0.000000e+00> : vector<2x512xf32>
    %47 = tpu.matmul %43, %46, %cst_22 {dimension_numbers = #tpu.dot_dimension_numbers<[1], [0], [0], [1], [0, 0, 1, 1], [], []>} : vector<2x128xf32>, vector<128x512xf32>, vector<2x512xf32> -> vector<2x512xf32>
    %48 = arith.addf %45, %47 : vector<2x512xf32>
    %49 = vector.extract_strided_slice %48 {offsets = [0, 0], sizes = [2, 128], strides = [1, 1]} : vector<2x512xf32> to vector<2x128xf32>
    %50 = arith.negf %49 : vector<2x128xf32>
    %51 = math.exp %50 : vector<2x128xf32>
    %cst_23 = arith.constant 1.000000e+00 : f32
    %52 = vector.broadcast %cst_23 : f32 to vector<2x128xf32>
    %53 = arith.addf %52, %51 : vector<2x128xf32>
    %54 = arith.divf %52, %53 : vector<2x128xf32>
    %55 = vector.extract_strided_slice %48 {offsets = [0, 128], sizes = [2, 128], strides = [1, 1]} : vector<2x512xf32> to vector<2x128xf32>
    %56 = arith.negf %55 : vector<2x128xf32>
    %57 = math.exp %56 : vector<2x128xf32>
    %cst_24 = arith.constant 1.000000e+00 : f32
    %58 = vector.broadcast %cst_24 : f32 to vector<2x128xf32>
    %59 = arith.addf %58, %57 : vector<2x128xf32>
    %60 = arith.divf %58, %59 : vector<2x128xf32>
    %61 = vector.extract_strided_slice %48 {offsets = [0, 256], sizes = [2, 128], strides = [1, 1]} : vector<2x512xf32> to vector<2x128xf32>
    %62 = math.tanh %61 : vector<2x128xf32>
    %63 = vector.extract_strided_slice %48 {offsets = [0, 384], sizes = [2, 128], strides = [1, 1]} : vector<2x512xf32> to vector<2x128xf32>
    %64 = arith.negf %63 : vector<2x128xf32>
    %65 = math.exp %64 : vector<2x128xf32>
    %cst_25 = arith.constant 1.000000e+00 : f32
    %66 = vector.broadcast %cst_25 : f32 to vector<2x128xf32>
    %67 = arith.addf %66, %65 : vector<2x128xf32>
    %68 = arith.divf %66, %67 : vector<2x128xf32>
    %69 = arith.mulf %60, %41 : vector<2x128xf32>
    %70 = arith.mulf %54, %62 : vector<2x128xf32>
    %71 = arith.addf %69, %70 : vector<2x128xf32>
    %72 = math.tanh %71 : vector<2x128xf32>
    %73 = arith.mulf %68, %72 : vector<2x128xf32>
    %c2_26 = arith.constant 2 : index
    %c0_27 = arith.constant 0 : index
    %74 = vector.load %arg16[%c2_26, %c0_27] : memref<16x128xf32, #tpu.memory_space<vmem>>, vector<2x128xf32>
    tpu.vector_store %arg16[%c2_26, %c0_27], %73 {strides = array<i32>} : memref<16x128xf32, #tpu.memory_space<vmem>>, vector<2x128xf32>,
    %c4 = arith.constant 4 : index
    %c0_28 = arith.constant 0 : index
    %75 = vector.load %arg15[%c4, %c0_28] : memref<16x512xf32, #tpu.memory_space<vmem>>, vector<2x512xf32>
    %c0_29 = arith.constant 0 : index
    %c0_30 = arith.constant 0 : index
    %76 = vector.load %arg4[%c0_29, %c0_30] : memref<128x512xf32, #tpu.memory_space<vmem>>, vector<128x512xf32>
    %cst_31 = arith.constant dense<0.000000e+00> : vector<2x512xf32>
    %77 = tpu.matmul %73, %76, %cst_31 {dimension_numbers = #tpu.dot_dimension_numbers<[1], [0], [0], [1], [0, 0, 1, 1], [], []>} : vector<2x128xf32>, vector<128x512xf32>, vector<2x512xf32> -> vector<2x512xf32>
    %78 = arith.addf %75, %77 : vector<2x512xf32>
    %79 = vector.extract_strided_slice %78 {offsets = [0, 0], sizes = [2, 128], strides = [1, 1]} : vector<2x512xf32> to vector<2x128xf32>
    %80 = arith.negf %79 : vector<2x128xf32>
    %81 = math.exp %80 : vector<2x128xf32>
    %cst_32 = arith.constant 1.000000e+00 : f32
    %82 = vector.broadcast %cst_32 : f32 to vector<2x128xf32>
    %83 = arith.addf %82, %81 : vector<2x128xf32>
    %84 = arith.divf %82, %83 : vector<2x128xf32>
    %85 = vector.extract_strided_slice %78 {offsets = [0, 128], sizes = [2, 128], strides = [1, 1]} : vector<2x512xf32> to vector<2x128xf32>
    %86 = arith.negf %85 : vector<2x128xf32>
    %87 = math.exp %86 : vector<2x128xf32>
    %cst_33 = arith.constant 1.000000e+00 : f32
    %88 = vector.broadcast %cst_33 : f32 to vector<2x128xf32>
    %89 = arith.addf %88, %87 : vector<2x128xf32>
    %90 = arith.divf %88, %89 : vector<2x128xf32>
    %91 = vector.extract_strided_slice %78 {offsets = [0, 256], sizes = [2, 128], strides = [1, 1]} : vector<2x512xf32> to vector<2x128xf32>
    %92 = math.tanh %91 : vector<2x128xf32>
    %93 = vector.extract_strided_slice %78 {offsets = [0, 384], sizes = [2, 128], strides = [1, 1]} : vector<2x512xf32> to vector<2x128xf32>
    %94 = arith.negf %93 : vector<2x128xf32>
    %95 = math.exp %94 : vector<2x128xf32>
    %cst_34 = arith.constant 1.000000e+00 : f32
    %96 = vector.broadcast %cst_34 : f32 to vector<2x128xf32>
    %97 = arith.addf %96, %95 : vector<2x128xf32>
    %98 = arith.divf %96, %97 : vector<2x128xf32>
    %99 = arith.mulf %90, %71 : vector<2x128xf32>
    %100 = arith.mulf %84, %92 : vector<2x128xf32>
    %101 = arith.addf %99, %100 : vector<2x128xf32>
    %102 = math.tanh %101 : vector<2x128xf32>
    %103 = arith.mulf %98, %102 : vector<2x128xf32>
    %c4_35 = arith.constant 4 : index
    %c0_36 = arith.constant 0 : index
    %104 = vector.load %arg16[%c4_35, %c0_36] : memref<16x128xf32, #tpu.memory_space<vmem>>, vector<2x128xf32>
    tpu.vector_store %arg16[%c4_35, %c0_36], %103 {strides = array<i32>} : memref<16x128xf32, #tpu.memory_space<vmem>>, vector<2x128xf32>,
    %c6 = arith.constant 6 : index
    %c0_37 = arith.constant 0 : index
    %105 = vector.load %arg15[%c6, %c0_37] : memref<16x512xf32, #tpu.memory_space<vmem>>, vector<2x512xf32>
    %c0_38 = arith.constant 0 : index
    %c0_39 = arith.constant 0 : index
    %106 = vector.load %arg4[%c0_38, %c0_39] : memref<128x512xf32, #tpu.memory_space<vmem>>, vector<128x512xf32>
    %cst_40 = arith.constant dense<0.000000e+00> : vector<2x512xf32>
    %107 = tpu.matmul %103, %106, %cst_40 {dimension_numbers = #tpu.dot_dimension_numbers<[1], [0], [0], [1], [0, 0, 1, 1], [], []>} : vector<2x128xf32>, vector<128x512xf32>, vector<2x512xf32> -> vector<2x512xf32>
    %108 = arith.addf %105, %107 : vector<2x512xf32>
    %109 = vector.extract_strided_slice %108 {offsets = [0, 0], sizes = [2, 128], strides = [1, 1]} : vector<2x512xf32> to vector<2x128xf32>
    %110 = arith.negf %109 : vector<2x128xf32>
    %111 = math.exp %110 : vector<2x128xf32>
    %cst_41 = arith.constant 1.000000e+00 : f32
    %112 = vector.broadcast %cst_41 : f32 to vector<2x128xf32>
    %113 = arith.addf %112, %111 : vector<2x128xf32>
    %114 = arith.divf %112, %113 : vector<2x128xf32>
    %115 = vector.extract_strided_slice %108 {offsets = [0, 128], sizes = [2, 128], strides = [1, 1]} : vector<2x512xf32> to vector<2x128xf32>
    %116 = arith.negf %115 : vector<2x128xf32>
    %117 = math.exp %116 : vector<2x128xf32>
    %cst_42 = arith.constant 1.000000e+00 : f32
    %118 = vector.broadcast %cst_42 : f32 to vector<2x128xf32>
    %119 = arith.addf %118, %117 : vector<2x128xf32>
    %120 = arith.divf %118, %119 : vector<2x128xf32>
    %121 = vector.extract_strided_slice %108 {offsets = [0, 256], sizes = [2, 128], strides = [1, 1]} : vector<2x512xf32> to vector<2x128xf32>
    %122 = math.tanh %121 : vector<2x128xf32>
    %123 = vector.extract_strided_slice %108 {offsets = [0, 384], sizes = [2, 128], strides = [1, 1]} : vector<2x512xf32> to vector<2x128xf32>
    %124 = arith.negf %123 : vector<2x128xf32>
    %125 = math.exp %124 : vector<2x128xf32>
    %cst_43 = arith.constant 1.000000e+00 : f32
    %126 = vector.broadcast %cst_43 : f32 to vector<2x128xf32>
    %127 = arith.addf %126, %125 : vector<2x128xf32>
    %128 = arith.divf %126, %127 : vector<2x128xf32>
    %129 = arith.mulf %120, %101 : vector<2x128xf32>
    %130 = arith.mulf %114, %122 : vector<2x128xf32>
    %131 = arith.addf %129, %130 : vector<2x128xf32>
    %132 = math.tanh %131 : vector<2x128xf32>
    %133 = arith.mulf %128, %132 : vector<2x128xf32>
    %c6_44 = arith.constant 6 : index
    %c0_45 = arith.constant 0 : index
    %134 = vector.load %arg16[%c6_44, %c0_45] : memref<16x128xf32, #tpu.memory_space<vmem>>, vector<2x128xf32>
    tpu.vector_store %arg16[%c6_44, %c0_45], %133 {strides = array<i32>} : memref<16x128xf32, #tpu.memory_space<vmem>>, vector<2x128xf32>,
    %c8 = arith.constant 8 : index
    %c0_46 = arith.constant 0 : index
    %135 = vector.load %arg15[%c8, %c0_46] : memref<16x512xf32, #tpu.memory_space<vmem>>, vector<2x512xf32>
    %c0_47 = arith.constant 0 : index
    %c0_48 = arith.constant 0 : index
    %136 = vector.load %arg4[%c0_47, %c0_48] : memref<128x512xf32, #tpu.memory_space<vmem>>, vector<128x512xf32>
    %cst_49 = arith.constant dense<0.000000e+00> : vector<2x512xf32>
    %137 = tpu.matmul %133, %136, %cst_49 {dimension_numbers = #tpu.dot_dimension_numbers<[1], [0], [0], [1], [0, 0, 1, 1], [], []>} : vector<2x128xf32>, vector<128x512xf32>, vector<2x512xf32> -> vector<2x512xf32>
    %138 = arith.addf %135, %137 : vector<2x512xf32>
    %139 = vector.extract_strided_slice %138 {offsets = [0, 0], sizes = [2, 128], strides = [1, 1]} : vector<2x512xf32> to vector<2x128xf32>
    %140 = arith.negf %139 : vector<2x128xf32>
    %141 = math.exp %140 : vector<2x128xf32>
    %cst_50 = arith.constant 1.000000e+00 : f32
    %142 = vector.broadcast %cst_50 : f32 to vector<2x128xf32>
    %143 = arith.addf %142, %141 : vector<2x128xf32>
    %144 = arith.divf %142, %143 : vector<2x128xf32>
    %145 = vector.extract_strided_slice %138 {offsets = [0, 128], sizes = [2, 128], strides = [1, 1]} : vector<2x512xf32> to vector<2x128xf32>
    %146 = arith.negf %145 : vector<2x128xf32>
    %147 = math.exp %146 : vector<2x128xf32>
    %cst_51 = arith.constant 1.000000e+00 : f32
    %148 = vector.broadcast %cst_51 : f32 to vector<2x128xf32>
    %149 = arith.addf %148, %147 : vector<2x128xf32>
    %150 = arith.divf %148, %149 : vector<2x128xf32>
    %151 = vector.extract_strided_slice %138 {offsets = [0, 256], sizes = [2, 128], strides = [1, 1]} : vector<2x512xf32> to vector<2x128xf32>
    %152 = math.tanh %151 : vector<2x128xf32>
    %153 = vector.extract_strided_slice %138 {offsets = [0, 384], sizes = [2, 128], strides = [1, 1]} : vector<2x512xf32> to vector<2x128xf32>
    %154 = arith.negf %153 : vector<2x128xf32>
    %155 = math.exp %154 : vector<2x128xf32>
    %cst_52 = arith.constant 1.000000e+00 : f32
    %156 = vector.broadcast %cst_52 : f32 to vector<2x128xf32>
    %157 = arith.addf %156, %155 : vector<2x128xf32>
    %158 = arith.divf %156, %157 : vector<2x128xf32>
    %159 = arith.mulf %150, %131 : vector<2x128xf32>
    %160 = arith.mulf %144, %152 : vector<2x128xf32>
    %161 = arith.addf %159, %160 : vector<2x128xf32>
    %162 = math.tanh %161 : vector<2x128xf32>
    %163 = arith.mulf %158, %162 : vector<2x128xf32>
    %c8_53 = arith.constant 8 : index
    %c0_54 = arith.constant 0 : index
    %164 = vector.load %arg16[%c8_53, %c0_54] : memref<16x128xf32, #tpu.memory_space<vmem>>, vector<2x128xf32>
    tpu.vector_store %arg16[%c8_53, %c0_54], %163 {strides = array<i32>} : memref<16x128xf32, #tpu.memory_space<vmem>>, vector<2x128xf32>,
    %c10 = arith.constant 10 : index
    %c0_55 = arith.constant 0 : index
    %165 = vector.load %arg15[%c10, %c0_55] : memref<16x512xf32, #tpu.memory_space<vmem>>, vector<2x512xf32>
    %c0_56 = arith.constant 0 : index
    %c0_57 = arith.constant 0 : index
    %166 = vector.load %arg4[%c0_56, %c0_57] : memref<128x512xf32, #tpu.memory_space<vmem>>, vector<128x512xf32>
    %cst_58 = arith.constant dense<0.000000e+00> : vector<2x512xf32>
    %167 = tpu.matmul %163, %166, %cst_58 {dimension_numbers = #tpu.dot_dimension_numbers<[1], [0], [0], [1], [0, 0, 1, 1], [], []>} : vector<2x128xf32>, vector<128x512xf32>, vector<2x512xf32> -> vector<2x512xf32>
    %168 = arith.addf %165, %167 : vector<2x512xf32>
    %169 = vector.extract_strided_slice %168 {offsets = [0, 0], sizes = [2, 128], strides = [1, 1]} : vector<2x512xf32> to vector<2x128xf32>
    %170 = arith.negf %169 : vector<2x128xf32>
    %171 = math.exp %170 : vector<2x128xf32>
    %cst_59 = arith.constant 1.000000e+00 : f32
    %172 = vector.broadcast %cst_59 : f32 to vector<2x128xf32>
    %173 = arith.addf %172, %171 : vector<2x128xf32>
    %174 = arith.divf %172, %173 : vector<2x128xf32>
    %175 = vector.extract_strided_slice %168 {offsets = [0, 128], sizes = [2, 128], strides = [1, 1]} : vector<2x512xf32> to vector<2x128xf32>
    %176 = arith.negf %175 : vector<2x128xf32>
    %177 = math.exp %176 : vector<2x128xf32>
    %cst_60 = arith.constant 1.000000e+00 : f32
    %178 = vector.broadcast %cst_60 : f32 to vector<2x128xf32>
    %179 = arith.addf %178, %177 : vector<2x128xf32>
    %180 = arith.divf %178, %179 : vector<2x128xf32>
    %181 = vector.extract_strided_slice %168 {offsets = [0, 256], sizes = [2, 128], strides = [1, 1]} : vector<2x512xf32> to vector<2x128xf32>
    %182 = math.tanh %181 : vector<2x128xf32>
    %183 = vector.extract_strided_slice %168 {offsets = [0, 384], sizes = [2, 128], strides = [1, 1]} : vector<2x512xf32> to vector<2x128xf32>
    %184 = arith.negf %183 : vector<2x128xf32>
    %185 = math.exp %184 : vector<2x128xf32>
    %cst_61 = arith.constant 1.000000e+00 : f32
    %186 = vector.broadcast %cst_61 : f32 to vector<2x128xf32>
    %187 = arith.addf %186, %185 : vector<2x128xf32>
    %188 = arith.divf %186, %187 : vector<2x128xf32>
    %189 = arith.mulf %180, %161 : vector<2x128xf32>
    %190 = arith.mulf %174, %182 : vector<2x128xf32>
    %191 = arith.addf %189, %190 : vector<2x128xf32>
    %192 = math.tanh %191 : vector<2x128xf32>
    %193 = arith.mulf %188, %192 : vector<2x128xf32>
    %c10_62 = arith.constant 10 : index
    %c0_63 = arith.constant 0 : index
    %194 = vector.load %arg16[%c10_62, %c0_63] : memref<16x128xf32, #tpu.memory_space<vmem>>, vector<2x128xf32>
    tpu.vector_store %arg16[%c10_62, %c0_63], %193 {strides = array<i32>} : memref<16x128xf32, #tpu.memory_space<vmem>>, vector<2x128xf32>,
    %c12 = arith.constant 12 : index
    %c0_64 = arith.constant 0 : index
    %195 = vector.load %arg15[%c12, %c0_64] : memref<16x512xf32, #tpu.memory_space<vmem>>, vector<2x512xf32>
    %c0_65 = arith.constant 0 : index
    %c0_66 = arith.constant 0 : index
    %196 = vector.load %arg4[%c0_65, %c0_66] : memref<128x512xf32, #tpu.memory_space<vmem>>, vector<128x512xf32>
    %cst_67 = arith.constant dense<0.000000e+00> : vector<2x512xf32>
    %197 = tpu.matmul %193, %196, %cst_67 {dimension_numbers = #tpu.dot_dimension_numbers<[1], [0], [0], [1], [0, 0, 1, 1], [], []>} : vector<2x128xf32>, vector<128x512xf32>, vector<2x512xf32> -> vector<2x512xf32>
    %198 = arith.addf %195, %197 : vector<2x512xf32>
    %199 = vector.extract_strided_slice %198 {offsets = [0, 0], sizes = [2, 128], strides = [1, 1]} : vector<2x512xf32> to vector<2x128xf32>
    %200 = arith.negf %199 : vector<2x128xf32>
    %201 = math.exp %200 : vector<2x128xf32>
    %cst_68 = arith.constant 1.000000e+00 : f32
    %202 = vector.broadcast %cst_68 : f32 to vector<2x128xf32>
    %203 = arith.addf %202, %201 : vector<2x128xf32>
    %204 = arith.divf %202, %203 : vector<2x128xf32>
    %205 = vector.extract_strided_slice %198 {offsets = [0, 128], sizes = [2, 128], strides = [1, 1]} : vector<2x512xf32> to vector<2x128xf32>
    %206 = arith.negf %205 : vector<2x128xf32>
    %207 = math.exp %206 : vector<2x128xf32>
    %cst_69 = arith.constant 1.000000e+00 : f32
    %208 = vector.broadcast %cst_69 : f32 to vector<2x128xf32>
    %209 = arith.addf %208, %207 : vector<2x128xf32>
    %210 = arith.divf %208, %209 : vector<2x128xf32>
    %211 = vector.extract_strided_slice %198 {offsets = [0, 256], sizes = [2, 128], strides = [1, 1]} : vector<2x512xf32> to vector<2x128xf32>
    %212 = math.tanh %211 : vector<2x128xf32>
    %213 = vector.extract_strided_slice %198 {offsets = [0, 384], sizes = [2, 128], strides = [1, 1]} : vector<2x512xf32> to vector<2x128xf32>
    %214 = arith.negf %213 : vector<2x128xf32>
    %215 = math.exp %214 : vector<2x128xf32>
    %cst_70 = arith.constant 1.000000e+00 : f32
    %216 = vector.broadcast %cst_70 : f32 to vector<2x128xf32>
    %217 = arith.addf %216, %215 : vector<2x128xf32>
    %218 = arith.divf %216, %217 : vector<2x128xf32>
    %219 = arith.mulf %210, %191 : vector<2x128xf32>
    %220 = arith.mulf %204, %212 : vector<2x128xf32>
    %221 = arith.addf %219, %220 : vector<2x128xf32>
    %222 = math.tanh %221 : vector<2x128xf32>
    %223 = arith.mulf %218, %222 : vector<2x128xf32>
    %c12_71 = arith.constant 12 : index
    %c0_72 = arith.constant 0 : index
    %224 = vector.load %arg16[%c12_71, %c0_72] : memref<16x128xf32, #tpu.memory_space<vmem>>, vector<2x128xf32>
    tpu.vector_store %arg16[%c12_71, %c0_72], %223 {strides = array<i32>} : memref<16x128xf32, #tpu.memory_space<vmem>>, vector<2x128xf32>,
    %c14 = arith.constant 14 : index
    %c0_73 = arith.constant 0 : index
    %225 = vector.load %arg15[%c14, %c0_73] : memref<16x512xf32, #tpu.memory_space<vmem>>, vector<2x512xf32>
    %c0_74 = arith.constant 0 : index
    %c0_75 = arith.constant 0 : index
    %226 = vector.load %arg4[%c0_74, %c0_75] : memref<128x512xf32, #tpu.memory_space<vmem>>, vector<128x512xf32>
    %cst_76 = arith.constant dense<0.000000e+00> : vector<2x512xf32>
    %227 = tpu.matmul %223, %226, %cst_76 {dimension_numbers = #tpu.dot_dimension_numbers<[1], [0], [0], [1], [0, 0, 1, 1], [], []>} : vector<2x128xf32>, vector<128x512xf32>, vector<2x512xf32> -> vector<2x512xf32>
    %228 = arith.addf %225, %227 : vector<2x512xf32>
    %229 = vector.extract_strided_slice %228 {offsets = [0, 0], sizes = [2, 128], strides = [1, 1]} : vector<2x512xf32> to vector<2x128xf32>
    %230 = arith.negf %229 : vector<2x128xf32>
    %231 = math.exp %230 : vector<2x128xf32>
    %cst_77 = arith.constant 1.000000e+00 : f32
    %232 = vector.broadcast %cst_77 : f32 to vector<2x128xf32>
    %233 = arith.addf %232, %231 : vector<2x128xf32>
    %234 = arith.divf %232, %233 : vector<2x128xf32>
    %235 = vector.extract_strided_slice %228 {offsets = [0, 128], sizes = [2, 128], strides = [1, 1]} : vector<2x512xf32> to vector<2x128xf32>
    %236 = arith.negf %235 : vector<2x128xf32>
    %237 = math.exp %236 : vector<2x128xf32>
    %cst_78 = arith.constant 1.000000e+00 : f32
    %238 = vector.broadcast %cst_78 : f32 to vector<2x128xf32>
    %239 = arith.addf %238, %237 : vector<2x128xf32>
    %240 = arith.divf %238, %239 : vector<2x128xf32>
    %241 = vector.extract_strided_slice %228 {offsets = [0, 256], sizes = [2, 128], strides = [1, 1]} : vector<2x512xf32> to vector<2x128xf32>
    %242 = math.tanh %241 : vector<2x128xf32>
    %243 = vector.extract_strided_slice %228 {offsets = [0, 384], sizes = [2, 128], strides = [1, 1]} : vector<2x512xf32> to vector<2x128xf32>
    %244 = arith.negf %243 : vector<2x128xf32>
    %245 = math.exp %244 : vector<2x128xf32>
    %cst_79 = arith.constant 1.000000e+00 : f32
    %246 = vector.broadcast %cst_79 : f32 to vector<2x128xf32>
    %247 = arith.addf %246, %245 : vector<2x128xf32>
    %248 = arith.divf %246, %247 : vector<2x128xf32>
    %249 = arith.mulf %240, %221 : vector<2x128xf32>
    %250 = arith.mulf %234, %242 : vector<2x128xf32>
    %251 = arith.addf %249, %250 : vector<2x128xf32>
    %252 = math.tanh %251 : vector<2x128xf32>
    %253 = arith.mulf %248, %252 : vector<2x128xf32>
    %c14_80 = arith.constant 14 : index
    %c0_81 = arith.constant 0 : index
    %254 = vector.load %arg16[%c14_80, %c0_81] : memref<16x128xf32, #tpu.memory_space<vmem>>, vector<2x128xf32>
    tpu.vector_store %arg16[%c14_80, %c0_81], %253 {strides = array<i32>} : memref<16x128xf32, #tpu.memory_space<vmem>>, vector<2x128xf32>,
    %c0_i32_82 = arith.constant 0 : i32
    %255 = tpu.memref_slice %arg18[%c0_i32_82] : memref<3x!tpu.dma_semaphore, #tpu.memory_space<semaphore_mem>> -> memref<1x!tpu.dma_semaphore, #tpu.memory_space<semaphore_mem>>
    %256 = tpu.memref_squeeze %255 : memref<1x!tpu.dma_semaphore, #tpu.memory_space<semaphore_mem>> -> memref<!tpu.dma_semaphore, #tpu.memory_space<semaphore_mem>>
    tpu.wait_dma2 semaphore(%256 : memref<!tpu.dma_semaphore, #tpu.memory_space<semaphore_mem>>) src(%arg5 : memref<128x512xf32, #tpu.memory_space<any>>) dst(%arg12 : memref<128x512xf32, #tpu.memory_space<vmem>>)
    %c1_i32_83 = arith.constant 1 : i32
    %257 = tpu.memref_slice %arg18[%c1_i32_83] : memref<3x!tpu.dma_semaphore, #tpu.memory_space<semaphore_mem>> -> memref<1x!tpu.dma_semaphore, #tpu.memory_space<semaphore_mem>>
    %258 = tpu.memref_squeeze %257 : memref<1x!tpu.dma_semaphore, #tpu.memory_space<semaphore_mem>> -> memref<!tpu.dma_semaphore, #tpu.memory_space<semaphore_mem>>
    tpu.wait_dma2 semaphore(%258 : memref<!tpu.dma_semaphore, #tpu.memory_space<semaphore_mem>>) src(%arg7 : memref<64x512xf32, #tpu.memory_space<any>>) dst(%arg13 : memref<64x512xf32, #tpu.memory_space<vmem>>)
    %c0_84 = arith.constant 0 : index
    %c0_85 = arith.constant 0 : index
    %259 = vector.load %arg16[%c0_84, %c0_85] : memref<16x128xf32, #tpu.memory_space<vmem>>, vector<16x128xf32>
    %c0_86 = arith.constant 0 : index
    %c0_87 = arith.constant 0 : index
    %260 = vector.load %arg12[%c0_86, %c0_87] : memref<128x512xf32, #tpu.memory_space<vmem>>, vector<128x512xf32>
    %cst_88 = arith.constant dense<0.000000e+00> : vector<16x512xf32>
    %261 = tpu.matmul %259, %260, %cst_88 {dimension_numbers = #tpu.dot_dimension_numbers<[1], [0], [0], [1], [0, 0, 1, 1], [], []>} : vector<16x128xf32>, vector<128x512xf32>, vector<16x512xf32> -> vector<16x512xf32>
    %c0_89 = arith.constant 0 : index
    %c0_90 = arith.constant 0 : index
    %262 = vector.load %arg6[%c0_89, %c0_90] : memref<1x512xf32, #tpu.memory_space<vmem>>, vector<1x512xf32>
    %263 = vector.broadcast %262 : vector<1x512xf32> to vector<16x512xf32>
    %264 = arith.addf %261, %263 : vector<16x512xf32>
    %c0_91 = arith.constant 0 : index
    %c0_92 = arith.constant 0 : index
    %265 = vector.load %arg15[%c0_91, %c0_92] : memref<16x512xf32, #tpu.memory_space<vmem>>, vector<16x512xf32>
    tpu.vector_store %arg15[%c0_91, %c0_92], %264 {strides = array<i32>} : memref<16x512xf32, #tpu.memory_space<vmem>>, vector<16x512xf32>,
    %cst_93 = arith.constant 0.000000e+00 : f32
    %266 = vector.broadcast %cst_93 : f32 to vector<2x128xf32>
    %cst_94 = arith.constant 0.000000e+00 : f32
    %267 = vector.broadcast %cst_94 : f32 to vector<2x128xf32>
    %c0_95 = arith.constant 0 : index
    %c0_96 = arith.constant 0 : index
    %268 = vector.load %arg15[%c0_95, %c0_96] : memref<16x512xf32, #tpu.memory_space<vmem>>, vector<2x512xf32>
    %269 = vector.extract_strided_slice %266 {offsets = [0, 0], sizes = [2, 64], strides = [1, 1]} : vector<2x128xf32> to vector<2x64xf32>
    %c0_97 = arith.constant 0 : index
    %c0_98 = arith.constant 0 : index
    %270 = vector.load %arg13[%c0_97, %c0_98] : memref<64x512xf32, #tpu.memory_space<vmem>>, vector<64x512xf32>
    %cst_99 = arith.constant dense<0.000000e+00> : vector<2x512xf32>
    %271 = tpu.matmul %269, %270, %cst_99 {dimension_numbers = #tpu.dot_dimension_numbers<[1], [0], [0], [1], [0, 0, 1, 1], [], []>} : vector<2x64xf32>, vector<64x512xf32>, vector<2x512xf32> -> vector<2x512xf32>
    %272 = arith.addf %268, %271 : vector<2x512xf32>
    %273 = vector.extract_strided_slice %272 {offsets = [0, 0], sizes = [2, 128], strides = [1, 1]} : vector<2x512xf32> to vector<2x128xf32>
    %274 = arith.negf %273 : vector<2x128xf32>
    %275 = math.exp %274 : vector<2x128xf32>
    %cst_100 = arith.constant 1.000000e+00 : f32
    %276 = vector.broadcast %cst_100 : f32 to vector<2x128xf32>
    %277 = arith.addf %276, %275 : vector<2x128xf32>
    %278 = arith.divf %276, %277 : vector<2x128xf32>
    %279 = vector.extract_strided_slice %272 {offsets = [0, 128], sizes = [2, 128], strides = [1, 1]} : vector<2x512xf32> to vector<2x128xf32>
    %280 = arith.negf %279 : vector<2x128xf32>
    %281 = math.exp %280 : vector<2x128xf32>
    %cst_101 = arith.constant 1.000000e+00 : f32
    %282 = vector.broadcast %cst_101 : f32 to vector<2x128xf32>
    %283 = arith.addf %282, %281 : vector<2x128xf32>
    %284 = arith.divf %282, %283 : vector<2x128xf32>
    %285 = vector.extract_strided_slice %272 {offsets = [0, 256], sizes = [2, 128], strides = [1, 1]} : vector<2x512xf32> to vector<2x128xf32>
    %286 = math.tanh %285 : vector<2x128xf32>
    %287 = vector.extract_strided_slice %272 {offsets = [0, 384], sizes = [2, 128], strides = [1, 1]} : vector<2x512xf32> to vector<2x128xf32>
    %288 = arith.negf %287 : vector<2x128xf32>
    %289 = math.exp %288 : vector<2x128xf32>
    %cst_102 = arith.constant 1.000000e+00 : f32
    %290 = vector.broadcast %cst_102 : f32 to vector<2x128xf32>
    %291 = arith.addf %290, %289 : vector<2x128xf32>
    %292 = arith.divf %290, %291 : vector<2x128xf32>
    %293 = arith.mulf %284, %267 : vector<2x128xf32>
    %294 = arith.mulf %278, %286 : vector<2x128xf32>
    %295 = arith.addf %293, %294 : vector<2x128xf32>
    %296 = math.tanh %295 : vector<2x128xf32>
    %297 = arith.mulf %292, %296 : vector<2x128xf32>
    %298 = vector.extract_strided_slice %297 {offsets = [0, 0], sizes = [2, 64], strides = [1, 1]} : vector<2x128xf32> to vector<2x64xf32>
    %c0_103 = arith.constant 0 : index
    %c0_104 = arith.constant 0 : index
    %299 = vector.load %arg17[%c0_103, %c0_104] : memref<16x64xf32, #tpu.memory_space<vmem>>, vector<2x64xf32>
    tpu.vector_store %arg17[%c0_103, %c0_104], %298 {strides = array<i32>} : memref<16x64xf32, #tpu.memory_space<vmem>>, vector<2x64xf32>,
    %c2_105 = arith.constant 2 : index
    %c0_106 = arith.constant 0 : index
    %300 = vector.load %arg15[%c2_105, %c0_106] : memref<16x512xf32, #tpu.memory_space<vmem>>, vector<2x512xf32>
    %301 = vector.extract_strided_slice %297 {offsets = [0, 0], sizes = [2, 64], strides = [1, 1]} : vector<2x128xf32> to vector<2x64xf32>
    %c0_107 = arith.constant 0 : index
    %c0_108 = arith.constant 0 : index
    %302 = vector.load %arg13[%c0_107, %c0_108] : memref<64x512xf32, #tpu.memory_space<vmem>>, vector<64x512xf32>
    %cst_109 = arith.constant dense<0.000000e+00> : vector<2x512xf32>
    %303 = tpu.matmul %301, %302, %cst_109 {dimension_numbers = #tpu.dot_dimension_numbers<[1], [0], [0], [1], [0, 0, 1, 1], [], []>} : vector<2x64xf32>, vector<64x512xf32>, vector<2x512xf32> -> vector<2x512xf32>
    %304 = arith.addf %300, %303 : vector<2x512xf32>
    %305 = vector.extract_strided_slice %304 {offsets = [0, 0], sizes = [2, 128], strides = [1, 1]} : vector<2x512xf32> to vector<2x128xf32>
    %306 = arith.negf %305 : vector<2x128xf32>
    %307 = math.exp %306 : vector<2x128xf32>
    %cst_110 = arith.constant 1.000000e+00 : f32
    %308 = vector.broadcast %cst_110 : f32 to vector<2x128xf32>
    %309 = arith.addf %308, %307 : vector<2x128xf32>
    %310 = arith.divf %308, %309 : vector<2x128xf32>
    %311 = vector.extract_strided_slice %304 {offsets = [0, 128], sizes = [2, 128], strides = [1, 1]} : vector<2x512xf32> to vector<2x128xf32>
    %312 = arith.negf %311 : vector<2x128xf32>
    %313 = math.exp %312 : vector<2x128xf32>
    %cst_111 = arith.constant 1.000000e+00 : f32
    %314 = vector.broadcast %cst_111 : f32 to vector<2x128xf32>
    %315 = arith.addf %314, %313 : vector<2x128xf32>
    %316 = arith.divf %314, %315 : vector<2x128xf32>
    %317 = vector.extract_strided_slice %304 {offsets = [0, 256], sizes = [2, 128], strides = [1, 1]} : vector<2x512xf32> to vector<2x128xf32>
    %318 = math.tanh %317 : vector<2x128xf32>
    %319 = vector.extract_strided_slice %304 {offsets = [0, 384], sizes = [2, 128], strides = [1, 1]} : vector<2x512xf32> to vector<2x128xf32>
    %320 = arith.negf %319 : vector<2x128xf32>
    %321 = math.exp %320 : vector<2x128xf32>
    %cst_112 = arith.constant 1.000000e+00 : f32
    %322 = vector.broadcast %cst_112 : f32 to vector<2x128xf32>
    %323 = arith.addf %322, %321 : vector<2x128xf32>
    %324 = arith.divf %322, %323 : vector<2x128xf32>
    %325 = arith.mulf %316, %295 : vector<2x128xf32>
    %326 = arith.mulf %310, %318 : vector<2x128xf32>
    %327 = arith.addf %325, %326 : vector<2x128xf32>
    %328 = math.tanh %327 : vector<2x128xf32>
    %329 = arith.mulf %324, %328 : vector<2x128xf32>
    %330 = vector.extract_strided_slice %329 {offsets = [0, 0], sizes = [2, 64], strides = [1, 1]} : vector<2x128xf32> to vector<2x64xf32>
    %c2_113 = arith.constant 2 : index
    %c0_114 = arith.constant 0 : index
    %331 = vector.load %arg17[%c2_113, %c0_114] : memref<16x64xf32, #tpu.memory_space<vmem>>, vector<2x64xf32>
    tpu.vector_store %arg17[%c2_113, %c0_114], %330 {strides = array<i32>} : memref<16x64xf32, #tpu.memory_space<vmem>>, vector<2x64xf32>,
    %c4_115 = arith.constant 4 : index
    %c0_116 = arith.constant 0 : index
    %332 = vector.load %arg15[%c4_115, %c0_116] : memref<16x512xf32, #tpu.memory_space<vmem>>, vector<2x512xf32>
    %333 = vector.extract_strided_slice %329 {offsets = [0, 0], sizes = [2, 64], strides = [1, 1]} : vector<2x128xf32> to vector<2x64xf32>
    %c0_117 = arith.constant 0 : index
    %c0_118 = arith.constant 0 : index
    %334 = vector.load %arg13[%c0_117, %c0_118] : memref<64x512xf32, #tpu.memory_space<vmem>>, vector<64x512xf32>
    %cst_119 = arith.constant dense<0.000000e+00> : vector<2x512xf32>
    %335 = tpu.matmul %333, %334, %cst_119 {dimension_numbers = #tpu.dot_dimension_numbers<[1], [0], [0], [1], [0, 0, 1, 1], [], []>} : vector<2x64xf32>, vector<64x512xf32>, vector<2x512xf32> -> vector<2x512xf32>
    %336 = arith.addf %332, %335 : vector<2x512xf32>
    %337 = vector.extract_strided_slice %336 {offsets = [0, 0], sizes = [2, 128], strides = [1, 1]} : vector<2x512xf32> to vector<2x128xf32>
    %338 = arith.negf %337 : vector<2x128xf32>
    %339 = math.exp %338 : vector<2x128xf32>
    %cst_120 = arith.constant 1.000000e+00 : f32
    %340 = vector.broadcast %cst_120 : f32 to vector<2x128xf32>
    %341 = arith.addf %340, %339 : vector<2x128xf32>
    %342 = arith.divf %340, %341 : vector<2x128xf32>
    %343 = vector.extract_strided_slice %336 {offsets = [0, 128], sizes = [2, 128], strides = [1, 1]} : vector<2x512xf32> to vector<2x128xf32>
    %344 = arith.negf %343 : vector<2x128xf32>
    %345 = math.exp %344 : vector<2x128xf32>
    %cst_121 = arith.constant 1.000000e+00 : f32
    %346 = vector.broadcast %cst_121 : f32 to vector<2x128xf32>
    %347 = arith.addf %346, %345 : vector<2x128xf32>
    %348 = arith.divf %346, %347 : vector<2x128xf32>
    %349 = vector.extract_strided_slice %336 {offsets = [0, 256], sizes = [2, 128], strides = [1, 1]} : vector<2x512xf32> to vector<2x128xf32>
    %350 = math.tanh %349 : vector<2x128xf32>
    %351 = vector.extract_strided_slice %336 {offsets = [0, 384], sizes = [2, 128], strides = [1, 1]} : vector<2x512xf32> to vector<2x128xf32>
    %352 = arith.negf %351 : vector<2x128xf32>
    %353 = math.exp %352 : vector<2x128xf32>
    %cst_122 = arith.constant 1.000000e+00 : f32
    %354 = vector.broadcast %cst_122 : f32 to vector<2x128xf32>
    %355 = arith.addf %354, %353 : vector<2x128xf32>
    %356 = arith.divf %354, %355 : vector<2x128xf32>
    %357 = arith.mulf %348, %327 : vector<2x128xf32>
    %358 = arith.mulf %342, %350 : vector<2x128xf32>
    %359 = arith.addf %357, %358 : vector<2x128xf32>
    %360 = math.tanh %359 : vector<2x128xf32>
    %361 = arith.mulf %356, %360 : vector<2x128xf32>
    %362 = vector.extract_strided_slice %361 {offsets = [0, 0], sizes = [2, 64], strides = [1, 1]} : vector<2x128xf32> to vector<2x64xf32>
    %c4_123 = arith.constant 4 : index
    %c0_124 = arith.constant 0 : index
    %363 = vector.load %arg17[%c4_123, %c0_124] : memref<16x64xf32, #tpu.memory_space<vmem>>, vector<2x64xf32>
    tpu.vector_store %arg17[%c4_123, %c0_124], %362 {strides = array<i32>} : memref<16x64xf32, #tpu.memory_space<vmem>>, vector<2x64xf32>,
    %c6_125 = arith.constant 6 : index
    %c0_126 = arith.constant 0 : index
    %364 = vector.load %arg15[%c6_125, %c0_126] : memref<16x512xf32, #tpu.memory_space<vmem>>, vector<2x512xf32>
    %365 = vector.extract_strided_slice %361 {offsets = [0, 0], sizes = [2, 64], strides = [1, 1]} : vector<2x128xf32> to vector<2x64xf32>
    %c0_127 = arith.constant 0 : index
    %c0_128 = arith.constant 0 : index
    %366 = vector.load %arg13[%c0_127, %c0_128] : memref<64x512xf32, #tpu.memory_space<vmem>>, vector<64x512xf32>
    %cst_129 = arith.constant dense<0.000000e+00> : vector<2x512xf32>
    %367 = tpu.matmul %365, %366, %cst_129 {dimension_numbers = #tpu.dot_dimension_numbers<[1], [0], [0], [1], [0, 0, 1, 1], [], []>} : vector<2x64xf32>, vector<64x512xf32>, vector<2x512xf32> -> vector<2x512xf32>
    %368 = arith.addf %364, %367 : vector<2x512xf32>
    %369 = vector.extract_strided_slice %368 {offsets = [0, 0], sizes = [2, 128], strides = [1, 1]} : vector<2x512xf32> to vector<2x128xf32>
    %370 = arith.negf %369 : vector<2x128xf32>
    %371 = math.exp %370 : vector<2x128xf32>
    %cst_130 = arith.constant 1.000000e+00 : f32
    %372 = vector.broadcast %cst_130 : f32 to vector<2x128xf32>
    %373 = arith.addf %372, %371 : vector<2x128xf32>
    %374 = arith.divf %372, %373 : vector<2x128xf32>
    %375 = vector.extract_strided_slice %368 {offsets = [0, 128], sizes = [2, 128], strides = [1, 1]} : vector<2x512xf32> to vector<2x128xf32>
    %376 = arith.negf %375 : vector<2x128xf32>
    %377 = math.exp %376 : vector<2x128xf32>
    %cst_131 = arith.constant 1.000000e+00 : f32
    %378 = vector.broadcast %cst_131 : f32 to vector<2x128xf32>
    %379 = arith.addf %378, %377 : vector<2x128xf32>
    %380 = arith.divf %378, %379 : vector<2x128xf32>
    %381 = vector.extract_strided_slice %368 {offsets = [0, 256], sizes = [2, 128], strides = [1, 1]} : vector<2x512xf32> to vector<2x128xf32>
    %382 = math.tanh %381 : vector<2x128xf32>
    %383 = vector.extract_strided_slice %368 {offsets = [0, 384], sizes = [2, 128], strides = [1, 1]} : vector<2x512xf32> to vector<2x128xf32>
    %384 = arith.negf %383 : vector<2x128xf32>
    %385 = math.exp %384 : vector<2x128xf32>
    %cst_132 = arith.constant 1.000000e+00 : f32
    %386 = vector.broadcast %cst_132 : f32 to vector<2x128xf32>
    %387 = arith.addf %386, %385 : vector<2x128xf32>
    %388 = arith.divf %386, %387 : vector<2x128xf32>
    %389 = arith.mulf %380, %359 : vector<2x128xf32>
    %390 = arith.mulf %374, %382 : vector<2x128xf32>
    %391 = arith.addf %389, %390 : vector<2x128xf32>
    %392 = math.tanh %391 : vector<2x128xf32>
    %393 = arith.mulf %388, %392 : vector<2x128xf32>
    %394 = vector.extract_strided_slice %393 {offsets = [0, 0], sizes = [2, 64], strides = [1, 1]} : vector<2x128xf32> to vector<2x64xf32>
    %c6_133 = arith.constant 6 : index
    %c0_134 = arith.constant 0 : index
    %395 = vector.load %arg17[%c6_133, %c0_134] : memref<16x64xf32, #tpu.memory_space<vmem>>, vector<2x64xf32>
    tpu.vector_store %arg17[%c6_133, %c0_134], %394 {strides = array<i32>} : memref<16x64xf32, #tpu.memory_space<vmem>>, vector<2x64xf32>,
    %c8_135 = arith.constant 8 : index
    %c0_136 = arith.constant 0 : index
    %396 = vector.load %arg15[%c8_135, %c0_136] : memref<16x512xf32, #tpu.memory_space<vmem>>, vector<2x512xf32>
    %397 = vector.extract_strided_slice %393 {offsets = [0, 0], sizes = [2, 64], strides = [1, 1]} : vector<2x128xf32> to vector<2x64xf32>
    %c0_137 = arith.constant 0 : index
    %c0_138 = arith.constant 0 : index
    %398 = vector.load %arg13[%c0_137, %c0_138] : memref<64x512xf32, #tpu.memory_space<vmem>>, vector<64x512xf32>
    %cst_139 = arith.constant dense<0.000000e+00> : vector<2x512xf32>
    %399 = tpu.matmul %397, %398, %cst_139 {dimension_numbers = #tpu.dot_dimension_numbers<[1], [0], [0], [1], [0, 0, 1, 1], [], []>} : vector<2x64xf32>, vector<64x512xf32>, vector<2x512xf32> -> vector<2x512xf32>
    %400 = arith.addf %396, %399 : vector<2x512xf32>
    %401 = vector.extract_strided_slice %400 {offsets = [0, 0], sizes = [2, 128], strides = [1, 1]} : vector<2x512xf32> to vector<2x128xf32>
    %402 = arith.negf %401 : vector<2x128xf32>
    %403 = math.exp %402 : vector<2x128xf32>
    %cst_140 = arith.constant 1.000000e+00 : f32
    %404 = vector.broadcast %cst_140 : f32 to vector<2x128xf32>
    %405 = arith.addf %404, %403 : vector<2x128xf32>
    %406 = arith.divf %404, %405 : vector<2x128xf32>
    %407 = vector.extract_strided_slice %400 {offsets = [0, 128], sizes = [2, 128], strides = [1, 1]} : vector<2x512xf32> to vector<2x128xf32>
    %408 = arith.negf %407 : vector<2x128xf32>
    %409 = math.exp %408 : vector<2x128xf32>
    %cst_141 = arith.constant 1.000000e+00 : f32
    %410 = vector.broadcast %cst_141 : f32 to vector<2x128xf32>
    %411 = arith.addf %410, %409 : vector<2x128xf32>
    %412 = arith.divf %410, %411 : vector<2x128xf32>
    %413 = vector.extract_strided_slice %400 {offsets = [0, 256], sizes = [2, 128], strides = [1, 1]} : vector<2x512xf32> to vector<2x128xf32>
    %414 = math.tanh %413 : vector<2x128xf32>
    %415 = vector.extract_strided_slice %400 {offsets = [0, 384], sizes = [2, 128], strides = [1, 1]} : vector<2x512xf32> to vector<2x128xf32>
    %416 = arith.negf %415 : vector<2x128xf32>
    %417 = math.exp %416 : vector<2x128xf32>
    %cst_142 = arith.constant 1.000000e+00 : f32
    %418 = vector.broadcast %cst_142 : f32 to vector<2x128xf32>
    %419 = arith.addf %418, %417 : vector<2x128xf32>
    %420 = arith.divf %418, %419 : vector<2x128xf32>
    %421 = arith.mulf %412, %391 : vector<2x128xf32>
    %422 = arith.mulf %406, %414 : vector<2x128xf32>
    %423 = arith.addf %421, %422 : vector<2x128xf32>
    %424 = math.tanh %423 : vector<2x128xf32>
    %425 = arith.mulf %420, %424 : vector<2x128xf32>
    %426 = vector.extract_strided_slice %425 {offsets = [0, 0], sizes = [2, 64], strides = [1, 1]} : vector<2x128xf32> to vector<2x64xf32>
    %c8_143 = arith.constant 8 : index
    %c0_144 = arith.constant 0 : index
    %427 = vector.load %arg17[%c8_143, %c0_144] : memref<16x64xf32, #tpu.memory_space<vmem>>, vector<2x64xf32>
    tpu.vector_store %arg17[%c8_143, %c0_144], %426 {strides = array<i32>} : memref<16x64xf32, #tpu.memory_space<vmem>>, vector<2x64xf32>,
    %c10_145 = arith.constant 10 : index
    %c0_146 = arith.constant 0 : index
    %428 = vector.load %arg15[%c10_145, %c0_146] : memref<16x512xf32, #tpu.memory_space<vmem>>, vector<2x512xf32>
    %429 = vector.extract_strided_slice %425 {offsets = [0, 0], sizes = [2, 64], strides = [1, 1]} : vector<2x128xf32> to vector<2x64xf32>
    %c0_147 = arith.constant 0 : index
    %c0_148 = arith.constant 0 : index
    %430 = vector.load %arg13[%c0_147, %c0_148] : memref<64x512xf32, #tpu.memory_space<vmem>>, vector<64x512xf32>
    %cst_149 = arith.constant dense<0.000000e+00> : vector<2x512xf32>
    %431 = tpu.matmul %429, %430, %cst_149 {dimension_numbers = #tpu.dot_dimension_numbers<[1], [0], [0], [1], [0, 0, 1, 1], [], []>} : vector<2x64xf32>, vector<64x512xf32>, vector<2x512xf32> -> vector<2x512xf32>
    %432 = arith.addf %428, %431 : vector<2x512xf32>
    %433 = vector.extract_strided_slice %432 {offsets = [0, 0], sizes = [2, 128], strides = [1, 1]} : vector<2x512xf32> to vector<2x128xf32>
    %434 = arith.negf %433 : vector<2x128xf32>
    %435 = math.exp %434 : vector<2x128xf32>
    %cst_150 = arith.constant 1.000000e+00 : f32
    %436 = vector.broadcast %cst_150 : f32 to vector<2x128xf32>
    %437 = arith.addf %436, %435 : vector<2x128xf32>
    %438 = arith.divf %436, %437 : vector<2x128xf32>
    %439 = vector.extract_strided_slice %432 {offsets = [0, 128], sizes = [2, 128], strides = [1, 1]} : vector<2x512xf32> to vector<2x128xf32>
    %440 = arith.negf %439 : vector<2x128xf32>
    %441 = math.exp %440 : vector<2x128xf32>
    %cst_151 = arith.constant 1.000000e+00 : f32
    %442 = vector.broadcast %cst_151 : f32 to vector<2x128xf32>
    %443 = arith.addf %442, %441 : vector<2x128xf32>
    %444 = arith.divf %442, %443 : vector<2x128xf32>
    %445 = vector.extract_strided_slice %432 {offsets = [0, 256], sizes = [2, 128], strides = [1, 1]} : vector<2x512xf32> to vector<2x128xf32>
    %446 = math.tanh %445 : vector<2x128xf32>
    %447 = vector.extract_strided_slice %432 {offsets = [0, 384], sizes = [2, 128], strides = [1, 1]} : vector<2x512xf32> to vector<2x128xf32>
    %448 = arith.negf %447 : vector<2x128xf32>
    %449 = math.exp %448 : vector<2x128xf32>
    %cst_152 = arith.constant 1.000000e+00 : f32
    %450 = vector.broadcast %cst_152 : f32 to vector<2x128xf32>
    %451 = arith.addf %450, %449 : vector<2x128xf32>
    %452 = arith.divf %450, %451 : vector<2x128xf32>
    %453 = arith.mulf %444, %423 : vector<2x128xf32>
    %454 = arith.mulf %438, %446 : vector<2x128xf32>
    %455 = arith.addf %453, %454 : vector<2x128xf32>
    %456 = math.tanh %455 : vector<2x128xf32>
    %457 = arith.mulf %452, %456 : vector<2x128xf32>
    %458 = vector.extract_strided_slice %457 {offsets = [0, 0], sizes = [2, 64], strides = [1, 1]} : vector<2x128xf32> to vector<2x64xf32>
    %c10_153 = arith.constant 10 : index
    %c0_154 = arith.constant 0 : index
    %459 = vector.load %arg17[%c10_153, %c0_154] : memref<16x64xf32, #tpu.memory_space<vmem>>, vector<2x64xf32>
    tpu.vector_store %arg17[%c10_153, %c0_154], %458 {strides = array<i32>} : memref<16x64xf32, #tpu.memory_space<vmem>>, vector<2x64xf32>,
    %c12_155 = arith.constant 12 : index
    %c0_156 = arith.constant 0 : index
    %460 = vector.load %arg15[%c12_155, %c0_156] : memref<16x512xf32, #tpu.memory_space<vmem>>, vector<2x512xf32>
    %461 = vector.extract_strided_slice %457 {offsets = [0, 0], sizes = [2, 64], strides = [1, 1]} : vector<2x128xf32> to vector<2x64xf32>
    %c0_157 = arith.constant 0 : index
    %c0_158 = arith.constant 0 : index
    %462 = vector.load %arg13[%c0_157, %c0_158] : memref<64x512xf32, #tpu.memory_space<vmem>>, vector<64x512xf32>
    %cst_159 = arith.constant dense<0.000000e+00> : vector<2x512xf32>
    %463 = tpu.matmul %461, %462, %cst_159 {dimension_numbers = #tpu.dot_dimension_numbers<[1], [0], [0], [1], [0, 0, 1, 1], [], []>} : vector<2x64xf32>, vector<64x512xf32>, vector<2x512xf32> -> vector<2x512xf32>
    %464 = arith.addf %460, %463 : vector<2x512xf32>
    %465 = vector.extract_strided_slice %464 {offsets = [0, 0], sizes = [2, 128], strides = [1, 1]} : vector<2x512xf32> to vector<2x128xf32>
    %466 = arith.negf %465 : vector<2x128xf32>
    %467 = math.exp %466 : vector<2x128xf32>
    %cst_160 = arith.constant 1.000000e+00 : f32
    %468 = vector.broadcast %cst_160 : f32 to vector<2x128xf32>
    %469 = arith.addf %468, %467 : vector<2x128xf32>
    %470 = arith.divf %468, %469 : vector<2x128xf32>
    %471 = vector.extract_strided_slice %464 {offsets = [0, 128], sizes = [2, 128], strides = [1, 1]} : vector<2x512xf32> to vector<2x128xf32>
    %472 = arith.negf %471 : vector<2x128xf32>
    %473 = math.exp %472 : vector<2x128xf32>
    %cst_161 = arith.constant 1.000000e+00 : f32
    %474 = vector.broadcast %cst_161 : f32 to vector<2x128xf32>
    %475 = arith.addf %474, %473 : vector<2x128xf32>
    %476 = arith.divf %474, %475 : vector<2x128xf32>
    %477 = vector.extract_strided_slice %464 {offsets = [0, 256], sizes = [2, 128], strides = [1, 1]} : vector<2x512xf32> to vector<2x128xf32>
    %478 = math.tanh %477 : vector<2x128xf32>
    %479 = vector.extract_strided_slice %464 {offsets = [0, 384], sizes = [2, 128], strides = [1, 1]} : vector<2x512xf32> to vector<2x128xf32>
    %480 = arith.negf %479 : vector<2x128xf32>
    %481 = math.exp %480 : vector<2x128xf32>
    %cst_162 = arith.constant 1.000000e+00 : f32
    %482 = vector.broadcast %cst_162 : f32 to vector<2x128xf32>
    %483 = arith.addf %482, %481 : vector<2x128xf32>
    %484 = arith.divf %482, %483 : vector<2x128xf32>
    %485 = arith.mulf %476, %455 : vector<2x128xf32>
    %486 = arith.mulf %470, %478 : vector<2x128xf32>
    %487 = arith.addf %485, %486 : vector<2x128xf32>
    %488 = math.tanh %487 : vector<2x128xf32>
    %489 = arith.mulf %484, %488 : vector<2x128xf32>
    %490 = vector.extract_strided_slice %489 {offsets = [0, 0], sizes = [2, 64], strides = [1, 1]} : vector<2x128xf32> to vector<2x64xf32>
    %c12_163 = arith.constant 12 : index
    %c0_164 = arith.constant 0 : index
    %491 = vector.load %arg17[%c12_163, %c0_164] : memref<16x64xf32, #tpu.memory_space<vmem>>, vector<2x64xf32>
    tpu.vector_store %arg17[%c12_163, %c0_164], %490 {strides = array<i32>} : memref<16x64xf32, #tpu.memory_space<vmem>>, vector<2x64xf32>,
    %c14_165 = arith.constant 14 : index
    %c0_166 = arith.constant 0 : index
    %492 = vector.load %arg15[%c14_165, %c0_166] : memref<16x512xf32, #tpu.memory_space<vmem>>, vector<2x512xf32>
    %493 = vector.extract_strided_slice %489 {offsets = [0, 0], sizes = [2, 64], strides = [1, 1]} : vector<2x128xf32> to vector<2x64xf32>
    %c0_167 = arith.constant 0 : index
    %c0_168 = arith.constant 0 : index
    %494 = vector.load %arg13[%c0_167, %c0_168] : memref<64x512xf32, #tpu.memory_space<vmem>>, vector<64x512xf32>
    %cst_169 = arith.constant dense<0.000000e+00> : vector<2x512xf32>
    %495 = tpu.matmul %493, %494, %cst_169 {dimension_numbers = #tpu.dot_dimension_numbers<[1], [0], [0], [1], [0, 0, 1, 1], [], []>} : vector<2x64xf32>, vector<64x512xf32>, vector<2x512xf32> -> vector<2x512xf32>
    %496 = arith.addf %492, %495 : vector<2x512xf32>
    %497 = vector.extract_strided_slice %496 {offsets = [0, 0], sizes = [2, 128], strides = [1, 1]} : vector<2x512xf32> to vector<2x128xf32>
    %498 = arith.negf %497 : vector<2x128xf32>
    %499 = math.exp %498 : vector<2x128xf32>
    %cst_170 = arith.constant 1.000000e+00 : f32
    %500 = vector.broadcast %cst_170 : f32 to vector<2x128xf32>
    %501 = arith.addf %500, %499 : vector<2x128xf32>
    %502 = arith.divf %500, %501 : vector<2x128xf32>
    %503 = vector.extract_strided_slice %496 {offsets = [0, 128], sizes = [2, 128], strides = [1, 1]} : vector<2x512xf32> to vector<2x128xf32>
    %504 = arith.negf %503 : vector<2x128xf32>
    %505 = math.exp %504 : vector<2x128xf32>
    %cst_171 = arith.constant 1.000000e+00 : f32
    %506 = vector.broadcast %cst_171 : f32 to vector<2x128xf32>
    %507 = arith.addf %506, %505 : vector<2x128xf32>
    %508 = arith.divf %506, %507 : vector<2x128xf32>
    %509 = vector.extract_strided_slice %496 {offsets = [0, 256], sizes = [2, 128], strides = [1, 1]} : vector<2x512xf32> to vector<2x128xf32>
    %510 = math.tanh %509 : vector<2x128xf32>
    %511 = vector.extract_strided_slice %496 {offsets = [0, 384], sizes = [2, 128], strides = [1, 1]} : vector<2x512xf32> to vector<2x128xf32>
    %512 = arith.negf %511 : vector<2x128xf32>
    %513 = math.exp %512 : vector<2x128xf32>
    %cst_172 = arith.constant 1.000000e+00 : f32
    %514 = vector.broadcast %cst_172 : f32 to vector<2x128xf32>
    %515 = arith.addf %514, %513 : vector<2x128xf32>
    %516 = arith.divf %514, %515 : vector<2x128xf32>
    %517 = arith.mulf %508, %487 : vector<2x128xf32>
    %518 = arith.mulf %502, %510 : vector<2x128xf32>
    %519 = arith.addf %517, %518 : vector<2x128xf32>
    %520 = math.tanh %519 : vector<2x128xf32>
    %521 = arith.mulf %516, %520 : vector<2x128xf32>
    %522 = vector.extract_strided_slice %521 {offsets = [0, 0], sizes = [2, 64], strides = [1, 1]} : vector<2x128xf32> to vector<2x64xf32>
    %c14_173 = arith.constant 14 : index
    %c0_174 = arith.constant 0 : index
    %523 = vector.load %arg17[%c14_173, %c0_174] : memref<16x64xf32, #tpu.memory_space<vmem>>, vector<2x64xf32>
    tpu.vector_store %arg17[%c14_173, %c0_174], %522 {strides = array<i32>} : memref<16x64xf32, #tpu.memory_space<vmem>>, vector<2x64xf32>,
    %c2_i32_175 = arith.constant 2 : i32
    %524 = tpu.memref_slice %arg18[%c2_i32_175] : memref<3x!tpu.dma_semaphore, #tpu.memory_space<semaphore_mem>> -> memref<1x!tpu.dma_semaphore, #tpu.memory_space<semaphore_mem>>
    %525 = tpu.memref_squeeze %524 : memref<1x!tpu.dma_semaphore, #tpu.memory_space<semaphore_mem>> -> memref<!tpu.dma_semaphore, #tpu.memory_space<semaphore_mem>>
    tpu.wait_dma2 semaphore(%525 : memref<!tpu.dma_semaphore, #tpu.memory_space<semaphore_mem>>) src(%arg8 : memref<64x512xf32, #tpu.memory_space<any>>) dst(%arg14 : memref<64x512xf32, #tpu.memory_space<vmem>>)
    %c0_176 = arith.constant 0 : index
    %c0_177 = arith.constant 0 : index
    %526 = vector.load %arg17[%c0_176, %c0_177] : memref<16x64xf32, #tpu.memory_space<vmem>>, vector<16x64xf32>
    %c0_178 = arith.constant 0 : index
    %c0_179 = arith.constant 0 : index
    %527 = vector.load %arg14[%c0_178, %c0_179] : memref<64x512xf32, #tpu.memory_space<vmem>>, vector<64x512xf32>
    %cst_180 = arith.constant dense<0.000000e+00> : vector<16x512xf32>
    %528 = tpu.matmul %526, %527, %cst_180 {dimension_numbers = #tpu.dot_dimension_numbers<[1], [0], [0], [1], [0, 0, 1, 1], [], []>} : vector<16x64xf32>, vector<64x512xf32>, vector<16x512xf32> -> vector<16x512xf32>
    %c0_181 = arith.constant 0 : index
    %c0_182 = arith.constant 0 : index
    %529 = vector.load %arg9[%c0_181, %c0_182] : memref<1x512xf32, #tpu.memory_space<vmem>>, vector<1x512xf32>
    %530 = vector.broadcast %529 : vector<1x512xf32> to vector<16x512xf32>
    %531 = arith.addf %528, %530 : vector<16x512xf32>
    %c0_183 = arith.constant 0 : index
    %c0_184 = arith.constant 0 : index
    %532 = vector.load %arg15[%c0_183, %c0_184] : memref<16x512xf32, #tpu.memory_space<vmem>>, vector<16x512xf32>
    tpu.vector_store %arg15[%c0_183, %c0_184], %531 {strides = array<i32>} : memref<16x512xf32, #tpu.memory_space<vmem>>, vector<16x512xf32>,
    %cst_185 = arith.constant 0.000000e+00 : f32
    %533 = vector.broadcast %cst_185 : f32 to vector<2x128xf32>
    %cst_186 = arith.constant 0.000000e+00 : f32
    %534 = vector.broadcast %cst_186 : f32 to vector<2x128xf32>
    %c0_187 = arith.constant 0 : index
    %c0_188 = arith.constant 0 : index
    %535 = vector.load %arg15[%c0_187, %c0_188] : memref<16x512xf32, #tpu.memory_space<vmem>>, vector<2x512xf32>
    %536 = vector.extract_strided_slice %533 {offsets = [0, 0], sizes = [2, 1], strides = [1, 1]} : vector<2x128xf32> to vector<2x1xf32>
    %c0_189 = arith.constant 0 : index
    %c0_190 = arith.constant 0 : index
    %537 = vector.load %arg10[%c0_189, %c0_190] : memref<1x512xf32, #tpu.memory_space<vmem>>, vector<1x512xf32>
    %538 = vector.broadcast %536 : vector<2x1xf32> to vector<2x512xf32>
    %539 = vector.broadcast %537 : vector<1x512xf32> to vector<2x512xf32>
    %540 = arith.mulf %538, %539 : vector<2x512xf32>
    %541 = arith.addf %535, %540 : vector<2x512xf32>
    %542 = vector.extract_strided_slice %541 {offsets = [0, 0], sizes = [2, 128], strides = [1, 1]} : vector<2x512xf32> to vector<2x128xf32>
    %543 = arith.negf %542 : vector<2x128xf32>
    %544 = math.exp %543 : vector<2x128xf32>
    %cst_191 = arith.constant 1.000000e+00 : f32
    %545 = vector.broadcast %cst_191 : f32 to vector<2x128xf32>
    %546 = arith.addf %545, %544 : vector<2x128xf32>
    %547 = arith.divf %545, %546 : vector<2x128xf32>
    %548 = vector.extract_strided_slice %541 {offsets = [0, 128], sizes = [2, 128], strides = [1, 1]} : vector<2x512xf32> to vector<2x128xf32>
    %549 = arith.negf %548 : vector<2x128xf32>
    %550 = math.exp %549 : vector<2x128xf32>
    %cst_192 = arith.constant 1.000000e+00 : f32
    %551 = vector.broadcast %cst_192 : f32 to vector<2x128xf32>
    %552 = arith.addf %551, %550 : vector<2x128xf32>
    %553 = arith.divf %551, %552 : vector<2x128xf32>
    %554 = vector.extract_strided_slice %541 {offsets = [0, 256], sizes = [2, 128], strides = [1, 1]} : vector<2x512xf32> to vector<2x128xf32>
    %555 = math.tanh %554 : vector<2x128xf32>
    %556 = vector.extract_strided_slice %541 {offsets = [0, 384], sizes = [2, 128], strides = [1, 1]} : vector<2x512xf32> to vector<2x128xf32>
    %557 = arith.negf %556 : vector<2x128xf32>
    %558 = math.exp %557 : vector<2x128xf32>
    %cst_193 = arith.constant 1.000000e+00 : f32
    %559 = vector.broadcast %cst_193 : f32 to vector<2x128xf32>
    %560 = arith.addf %559, %558 : vector<2x128xf32>
    %561 = arith.divf %559, %560 : vector<2x128xf32>
    %562 = arith.mulf %553, %534 : vector<2x128xf32>
    %563 = arith.mulf %547, %555 : vector<2x128xf32>
    %564 = arith.addf %562, %563 : vector<2x128xf32>
    %565 = math.tanh %564 : vector<2x128xf32>
    %566 = arith.mulf %561, %565 : vector<2x128xf32>
    %c0_194 = arith.constant 0 : index
    %c0_195 = arith.constant 0 : index
    %567 = vector.load %arg11[%c0_194, %c0_195] : memref<16x128xf32, #tpu.memory_space<vmem>>, vector<2x128xf32>
    tpu.vector_store %arg11[%c0_194, %c0_195], %566 {strides = array<i32>} : memref<16x128xf32, #tpu.memory_space<vmem>>, vector<2x128xf32>,
    %c2_196 = arith.constant 2 : index
    %c0_197 = arith.constant 0 : index
    %568 = vector.load %arg15[%c2_196, %c0_197] : memref<16x512xf32, #tpu.memory_space<vmem>>, vector<2x512xf32>
    %569 = vector.extract_strided_slice %566 {offsets = [0, 0], sizes = [2, 1], strides = [1, 1]} : vector<2x128xf32> to vector<2x1xf32>
    %c0_198 = arith.constant 0 : index
    %c0_199 = arith.constant 0 : index
    %570 = vector.load %arg10[%c0_198, %c0_199] : memref<1x512xf32, #tpu.memory_space<vmem>>, vector<1x512xf32>
    %571 = vector.broadcast %569 : vector<2x1xf32> to vector<2x512xf32>
    %572 = vector.broadcast %570 : vector<1x512xf32> to vector<2x512xf32>
    %573 = arith.mulf %571, %572 : vector<2x512xf32>
    %574 = arith.addf %568, %573 : vector<2x512xf32>
    %575 = vector.extract_strided_slice %574 {offsets = [0, 0], sizes = [2, 128], strides = [1, 1]} : vector<2x512xf32> to vector<2x128xf32>
    %576 = arith.negf %575 : vector<2x128xf32>
    %577 = math.exp %576 : vector<2x128xf32>
    %cst_200 = arith.constant 1.000000e+00 : f32
    %578 = vector.broadcast %cst_200 : f32 to vector<2x128xf32>
    %579 = arith.addf %578, %577 : vector<2x128xf32>
    %580 = arith.divf %578, %579 : vector<2x128xf32>
    %581 = vector.extract_strided_slice %574 {offsets = [0, 128], sizes = [2, 128], strides = [1, 1]} : vector<2x512xf32> to vector<2x128xf32>
    %582 = arith.negf %581 : vector<2x128xf32>
    %583 = math.exp %582 : vector<2x128xf32>
    %cst_201 = arith.constant 1.000000e+00 : f32
    %584 = vector.broadcast %cst_201 : f32 to vector<2x128xf32>
    %585 = arith.addf %584, %583 : vector<2x128xf32>
    %586 = arith.divf %584, %585 : vector<2x128xf32>
    %587 = vector.extract_strided_slice %574 {offsets = [0, 256], sizes = [2, 128], strides = [1, 1]} : vector<2x512xf32> to vector<2x128xf32>
    %588 = math.tanh %587 : vector<2x128xf32>
    %589 = vector.extract_strided_slice %574 {offsets = [0, 384], sizes = [2, 128], strides = [1, 1]} : vector<2x512xf32> to vector<2x128xf32>
    %590 = arith.negf %589 : vector<2x128xf32>
    %591 = math.exp %590 : vector<2x128xf32>
    %cst_202 = arith.constant 1.000000e+00 : f32
    %592 = vector.broadcast %cst_202 : f32 to vector<2x128xf32>
    %593 = arith.addf %592, %591 : vector<2x128xf32>
    %594 = arith.divf %592, %593 : vector<2x128xf32>
    %595 = arith.mulf %586, %564 : vector<2x128xf32>
    %596 = arith.mulf %580, %588 : vector<2x128xf32>
    %597 = arith.addf %595, %596 : vector<2x128xf32>
    %598 = math.tanh %597 : vector<2x128xf32>
    %599 = arith.mulf %594, %598 : vector<2x128xf32>
    %c2_203 = arith.constant 2 : index
    %c0_204 = arith.constant 0 : index
    %600 = vector.load %arg11[%c2_203, %c0_204] : memref<16x128xf32, #tpu.memory_space<vmem>>, vector<2x128xf32>
    tpu.vector_store %arg11[%c2_203, %c0_204], %599 {strides = array<i32>} : memref<16x128xf32, #tpu.memory_space<vmem>>, vector<2x128xf32>,
    %c4_205 = arith.constant 4 : index
    %c0_206 = arith.constant 0 : index
    %601 = vector.load %arg15[%c4_205, %c0_206] : memref<16x512xf32, #tpu.memory_space<vmem>>, vector<2x512xf32>
    %602 = vector.extract_strided_slice %599 {offsets = [0, 0], sizes = [2, 1], strides = [1, 1]} : vector<2x128xf32> to vector<2x1xf32>
    %c0_207 = arith.constant 0 : index
    %c0_208 = arith.constant 0 : index
    %603 = vector.load %arg10[%c0_207, %c0_208] : memref<1x512xf32, #tpu.memory_space<vmem>>, vector<1x512xf32>
    %604 = vector.broadcast %602 : vector<2x1xf32> to vector<2x512xf32>
    %605 = vector.broadcast %603 : vector<1x512xf32> to vector<2x512xf32>
    %606 = arith.mulf %604, %605 : vector<2x512xf32>
    %607 = arith.addf %601, %606 : vector<2x512xf32>
    %608 = vector.extract_strided_slice %607 {offsets = [0, 0], sizes = [2, 128], strides = [1, 1]} : vector<2x512xf32> to vector<2x128xf32>
    %609 = arith.negf %608 : vector<2x128xf32>
    %610 = math.exp %609 : vector<2x128xf32>
    %cst_209 = arith.constant 1.000000e+00 : f32
    %611 = vector.broadcast %cst_209 : f32 to vector<2x128xf32>
    %612 = arith.addf %611, %610 : vector<2x128xf32>
    %613 = arith.divf %611, %612 : vector<2x128xf32>
    %614 = vector.extract_strided_slice %607 {offsets = [0, 128], sizes = [2, 128], strides = [1, 1]} : vector<2x512xf32> to vector<2x128xf32>
    %615 = arith.negf %614 : vector<2x128xf32>
    %616 = math.exp %615 : vector<2x128xf32>
    %cst_210 = arith.constant 1.000000e+00 : f32
    %617 = vector.broadcast %cst_210 : f32 to vector<2x128xf32>
    %618 = arith.addf %617, %616 : vector<2x128xf32>
    %619 = arith.divf %617, %618 : vector<2x128xf32>
    %620 = vector.extract_strided_slice %607 {offsets = [0, 256], sizes = [2, 128], strides = [1, 1]} : vector<2x512xf32> to vector<2x128xf32>
    %621 = math.tanh %620 : vector<2x128xf32>
    %622 = vector.extract_strided_slice %607 {offsets = [0, 384], sizes = [2, 128], strides = [1, 1]} : vector<2x512xf32> to vector<2x128xf32>
    %623 = arith.negf %622 : vector<2x128xf32>
    %624 = math.exp %623 : vector<2x128xf32>
    %cst_211 = arith.constant 1.000000e+00 : f32
    %625 = vector.broadcast %cst_211 : f32 to vector<2x128xf32>
    %626 = arith.addf %625, %624 : vector<2x128xf32>
    %627 = arith.divf %625, %626 : vector<2x128xf32>
    %628 = arith.mulf %619, %597 : vector<2x128xf32>
    %629 = arith.mulf %613, %621 : vector<2x128xf32>
    %630 = arith.addf %628, %629 : vector<2x128xf32>
    %631 = math.tanh %630 : vector<2x128xf32>
    %632 = arith.mulf %627, %631 : vector<2x128xf32>
    %c4_212 = arith.constant 4 : index
    %c0_213 = arith.constant 0 : index
    %633 = vector.load %arg11[%c4_212, %c0_213] : memref<16x128xf32, #tpu.memory_space<vmem>>, vector<2x128xf32>
    tpu.vector_store %arg11[%c4_212, %c0_213], %632 {strides = array<i32>} : memref<16x128xf32, #tpu.memory_space<vmem>>, vector<2x128xf32>,
    %c6_214 = arith.constant 6 : index
    %c0_215 = arith.constant 0 : index
    %634 = vector.load %arg15[%c6_214, %c0_215] : memref<16x512xf32, #tpu.memory_space<vmem>>, vector<2x512xf32>
    %635 = vector.extract_strided_slice %632 {offsets = [0, 0], sizes = [2, 1], strides = [1, 1]} : vector<2x128xf32> to vector<2x1xf32>
    %c0_216 = arith.constant 0 : index
    %c0_217 = arith.constant 0 : index
    %636 = vector.load %arg10[%c0_216, %c0_217] : memref<1x512xf32, #tpu.memory_space<vmem>>, vector<1x512xf32>
    %637 = vector.broadcast %635 : vector<2x1xf32> to vector<2x512xf32>
    %638 = vector.broadcast %636 : vector<1x512xf32> to vector<2x512xf32>
    %639 = arith.mulf %637, %638 : vector<2x512xf32>
    %640 = arith.addf %634, %639 : vector<2x512xf32>
    %641 = vector.extract_strided_slice %640 {offsets = [0, 0], sizes = [2, 128], strides = [1, 1]} : vector<2x512xf32> to vector<2x128xf32>
    %642 = arith.negf %641 : vector<2x128xf32>
    %643 = math.exp %642 : vector<2x128xf32>
    %cst_218 = arith.constant 1.000000e+00 : f32
    %644 = vector.broadcast %cst_218 : f32 to vector<2x128xf32>
    %645 = arith.addf %644, %643 : vector<2x128xf32>
    %646 = arith.divf %644, %645 : vector<2x128xf32>
    %647 = vector.extract_strided_slice %640 {offsets = [0, 128], sizes = [2, 128], strides = [1, 1]} : vector<2x512xf32> to vector<2x128xf32>
    %648 = arith.negf %647 : vector<2x128xf32>
    %649 = math.exp %648 : vector<2x128xf32>
    %cst_219 = arith.constant 1.000000e+00 : f32
    %650 = vector.broadcast %cst_219 : f32 to vector<2x128xf32>
    %651 = arith.addf %650, %649 : vector<2x128xf32>
    %652 = arith.divf %650, %651 : vector<2x128xf32>
    %653 = vector.extract_strided_slice %640 {offsets = [0, 256], sizes = [2, 128], strides = [1, 1]} : vector<2x512xf32> to vector<2x128xf32>
    %654 = math.tanh %653 : vector<2x128xf32>
    %655 = vector.extract_strided_slice %640 {offsets = [0, 384], sizes = [2, 128], strides = [1, 1]} : vector<2x512xf32> to vector<2x128xf32>
    %656 = arith.negf %655 : vector<2x128xf32>
    %657 = math.exp %656 : vector<2x128xf32>
    %cst_220 = arith.constant 1.000000e+00 : f32
    %658 = vector.broadcast %cst_220 : f32 to vector<2x128xf32>
    %659 = arith.addf %658, %657 : vector<2x128xf32>
    %660 = arith.divf %658, %659 : vector<2x128xf32>
    %661 = arith.mulf %652, %630 : vector<2x128xf32>
    %662 = arith.mulf %646, %654 : vector<2x128xf32>
    %663 = arith.addf %661, %662 : vector<2x128xf32>
    %664 = math.tanh %663 : vector<2x128xf32>
    %665 = arith.mulf %660, %664 : vector<2x128xf32>
    %c6_221 = arith.constant 6 : index
    %c0_222 = arith.constant 0 : index
    %666 = vector.load %arg11[%c6_221, %c0_222] : memref<16x128xf32, #tpu.memory_space<vmem>>, vector<2x128xf32>
    tpu.vector_store %arg11[%c6_221, %c0_222], %665 {strides = array<i32>} : memref<16x128xf32, #tpu.memory_space<vmem>>, vector<2x128xf32>,
    %c8_223 = arith.constant 8 : index
    %c0_224 = arith.constant 0 : index
    %667 = vector.load %arg15[%c8_223, %c0_224] : memref<16x512xf32, #tpu.memory_space<vmem>>, vector<2x512xf32>
    %668 = vector.extract_strided_slice %665 {offsets = [0, 0], sizes = [2, 1], strides = [1, 1]} : vector<2x128xf32> to vector<2x1xf32>
    %c0_225 = arith.constant 0 : index
    %c0_226 = arith.constant 0 : index
    %669 = vector.load %arg10[%c0_225, %c0_226] : memref<1x512xf32, #tpu.memory_space<vmem>>, vector<1x512xf32>
    %670 = vector.broadcast %668 : vector<2x1xf32> to vector<2x512xf32>
    %671 = vector.broadcast %669 : vector<1x512xf32> to vector<2x512xf32>
    %672 = arith.mulf %670, %671 : vector<2x512xf32>
    %673 = arith.addf %667, %672 : vector<2x512xf32>
    %674 = vector.extract_strided_slice %673 {offsets = [0, 0], sizes = [2, 128], strides = [1, 1]} : vector<2x512xf32> to vector<2x128xf32>
    %675 = arith.negf %674 : vector<2x128xf32>
    %676 = math.exp %675 : vector<2x128xf32>
    %cst_227 = arith.constant 1.000000e+00 : f32
    %677 = vector.broadcast %cst_227 : f32 to vector<2x128xf32>
    %678 = arith.addf %677, %676 : vector<2x128xf32>
    %679 = arith.divf %677, %678 : vector<2x128xf32>
    %680 = vector.extract_strided_slice %673 {offsets = [0, 128], sizes = [2, 128], strides = [1, 1]} : vector<2x512xf32> to vector<2x128xf32>
    %681 = arith.negf %680 : vector<2x128xf32>
    %682 = math.exp %681 : vector<2x128xf32>
    %cst_228 = arith.constant 1.000000e+00 : f32
    %683 = vector.broadcast %cst_228 : f32 to vector<2x128xf32>
    %684 = arith.addf %683, %682 : vector<2x128xf32>
    %685 = arith.divf %683, %684 : vector<2x128xf32>
    %686 = vector.extract_strided_slice %673 {offsets = [0, 256], sizes = [2, 128], strides = [1, 1]} : vector<2x512xf32> to vector<2x128xf32>
    %687 = math.tanh %686 : vector<2x128xf32>
    %688 = vector.extract_strided_slice %673 {offsets = [0, 384], sizes = [2, 128], strides = [1, 1]} : vector<2x512xf32> to vector<2x128xf32>
    %689 = arith.negf %688 : vector<2x128xf32>
    %690 = math.exp %689 : vector<2x128xf32>
    %cst_229 = arith.constant 1.000000e+00 : f32
    %691 = vector.broadcast %cst_229 : f32 to vector<2x128xf32>
    %692 = arith.addf %691, %690 : vector<2x128xf32>
    %693 = arith.divf %691, %692 : vector<2x128xf32>
    %694 = arith.mulf %685, %663 : vector<2x128xf32>
    %695 = arith.mulf %679, %687 : vector<2x128xf32>
    %696 = arith.addf %694, %695 : vector<2x128xf32>
    %697 = math.tanh %696 : vector<2x128xf32>
    %698 = arith.mulf %693, %697 : vector<2x128xf32>
    %c8_230 = arith.constant 8 : index
    %c0_231 = arith.constant 0 : index
    %699 = vector.load %arg11[%c8_230, %c0_231] : memref<16x128xf32, #tpu.memory_space<vmem>>, vector<2x128xf32>
    tpu.vector_store %arg11[%c8_230, %c0_231], %698 {strides = array<i32>} : memref<16x128xf32, #tpu.memory_space<vmem>>, vector<2x128xf32>,
    %c10_232 = arith.constant 10 : index
    %c0_233 = arith.constant 0 : index
    %700 = vector.load %arg15[%c10_232, %c0_233] : memref<16x512xf32, #tpu.memory_space<vmem>>, vector<2x512xf32>
    %701 = vector.extract_strided_slice %698 {offsets = [0, 0], sizes = [2, 1], strides = [1, 1]} : vector<2x128xf32> to vector<2x1xf32>
    %c0_234 = arith.constant 0 : index
    %c0_235 = arith.constant 0 : index
    %702 = vector.load %arg10[%c0_234, %c0_235] : memref<1x512xf32, #tpu.memory_space<vmem>>, vector<1x512xf32>
    %703 = vector.broadcast %701 : vector<2x1xf32> to vector<2x512xf32>
    %704 = vector.broadcast %702 : vector<1x512xf32> to vector<2x512xf32>
    %705 = arith.mulf %703, %704 : vector<2x512xf32>
    %706 = arith.addf %700, %705 : vector<2x512xf32>
    %707 = vector.extract_strided_slice %706 {offsets = [0, 0], sizes = [2, 128], strides = [1, 1]} : vector<2x512xf32> to vector<2x128xf32>
    %708 = arith.negf %707 : vector<2x128xf32>
    %709 = math.exp %708 : vector<2x128xf32>
    %cst_236 = arith.constant 1.000000e+00 : f32
    %710 = vector.broadcast %cst_236 : f32 to vector<2x128xf32>
    %711 = arith.addf %710, %709 : vector<2x128xf32>
    %712 = arith.divf %710, %711 : vector<2x128xf32>
    %713 = vector.extract_strided_slice %706 {offsets = [0, 128], sizes = [2, 128], strides = [1, 1]} : vector<2x512xf32> to vector<2x128xf32>
    %714 = arith.negf %713 : vector<2x128xf32>
    %715 = math.exp %714 : vector<2x128xf32>
    %cst_237 = arith.constant 1.000000e+00 : f32
    %716 = vector.broadcast %cst_237 : f32 to vector<2x128xf32>
    %717 = arith.addf %716, %715 : vector<2x128xf32>
    %718 = arith.divf %716, %717 : vector<2x128xf32>
    %719 = vector.extract_strided_slice %706 {offsets = [0, 256], sizes = [2, 128], strides = [1, 1]} : vector<2x512xf32> to vector<2x128xf32>
    %720 = math.tanh %719 : vector<2x128xf32>
    %721 = vector.extract_strided_slice %706 {offsets = [0, 384], sizes = [2, 128], strides = [1, 1]} : vector<2x512xf32> to vector<2x128xf32>
    %722 = arith.negf %721 : vector<2x128xf32>
    %723 = math.exp %722 : vector<2x128xf32>
    %cst_238 = arith.constant 1.000000e+00 : f32
    %724 = vector.broadcast %cst_238 : f32 to vector<2x128xf32>
    %725 = arith.addf %724, %723 : vector<2x128xf32>
    %726 = arith.divf %724, %725 : vector<2x128xf32>
    %727 = arith.mulf %718, %696 : vector<2x128xf32>
    %728 = arith.mulf %712, %720 : vector<2x128xf32>
    %729 = arith.addf %727, %728 : vector<2x128xf32>
    %730 = math.tanh %729 : vector<2x128xf32>
    %731 = arith.mulf %726, %730 : vector<2x128xf32>
    %c10_239 = arith.constant 10 : index
    %c0_240 = arith.constant 0 : index
    %732 = vector.load %arg11[%c10_239, %c0_240] : memref<16x128xf32, #tpu.memory_space<vmem>>, vector<2x128xf32>
    tpu.vector_store %arg11[%c10_239, %c0_240], %731 {strides = array<i32>} : memref<16x128xf32, #tpu.memory_space<vmem>>, vector<2x128xf32>,
    %c12_241 = arith.constant 12 : index
    %c0_242 = arith.constant 0 : index
    %733 = vector.load %arg15[%c12_241, %c0_242] : memref<16x512xf32, #tpu.memory_space<vmem>>, vector<2x512xf32>
    %734 = vector.extract_strided_slice %731 {offsets = [0, 0], sizes = [2, 1], strides = [1, 1]} : vector<2x128xf32> to vector<2x1xf32>
    %c0_243 = arith.constant 0 : index
    %c0_244 = arith.constant 0 : index
    %735 = vector.load %arg10[%c0_243, %c0_244] : memref<1x512xf32, #tpu.memory_space<vmem>>, vector<1x512xf32>
    %736 = vector.broadcast %734 : vector<2x1xf32> to vector<2x512xf32>
    %737 = vector.broadcast %735 : vector<1x512xf32> to vector<2x512xf32>
    %738 = arith.mulf %736, %737 : vector<2x512xf32>
    %739 = arith.addf %733, %738 : vector<2x512xf32>
    %740 = vector.extract_strided_slice %739 {offsets = [0, 0], sizes = [2, 128], strides = [1, 1]} : vector<2x512xf32> to vector<2x128xf32>
    %741 = arith.negf %740 : vector<2x128xf32>
    %742 = math.exp %741 : vector<2x128xf32>
    %cst_245 = arith.constant 1.000000e+00 : f32
    %743 = vector.broadcast %cst_245 : f32 to vector<2x128xf32>
    %744 = arith.addf %743, %742 : vector<2x128xf32>
    %745 = arith.divf %743, %744 : vector<2x128xf32>
    %746 = vector.extract_strided_slice %739 {offsets = [0, 128], sizes = [2, 128], strides = [1, 1]} : vector<2x512xf32> to vector<2x128xf32>
    %747 = arith.negf %746 : vector<2x128xf32>
    %748 = math.exp %747 : vector<2x128xf32>
    %cst_246 = arith.constant 1.000000e+00 : f32
    %749 = vector.broadcast %cst_246 : f32 to vector<2x128xf32>
    %750 = arith.addf %749, %748 : vector<2x128xf32>
    %751 = arith.divf %749, %750 : vector<2x128xf32>
    %752 = vector.extract_strided_slice %739 {offsets = [0, 256], sizes = [2, 128], strides = [1, 1]} : vector<2x512xf32> to vector<2x128xf32>
    %753 = math.tanh %752 : vector<2x128xf32>
    %754 = vector.extract_strided_slice %739 {offsets = [0, 384], sizes = [2, 128], strides = [1, 1]} : vector<2x512xf32> to vector<2x128xf32>
    %755 = arith.negf %754 : vector<2x128xf32>
    %756 = math.exp %755 : vector<2x128xf32>
    %cst_247 = arith.constant 1.000000e+00 : f32
    %757 = vector.broadcast %cst_247 : f32 to vector<2x128xf32>
    %758 = arith.addf %757, %756 : vector<2x128xf32>
    %759 = arith.divf %757, %758 : vector<2x128xf32>
    %760 = arith.mulf %751, %729 : vector<2x128xf32>
    %761 = arith.mulf %745, %753 : vector<2x128xf32>
    %762 = arith.addf %760, %761 : vector<2x128xf32>
    %763 = math.tanh %762 : vector<2x128xf32>
    %764 = arith.mulf %759, %763 : vector<2x128xf32>
    %c12_248 = arith.constant 12 : index
    %c0_249 = arith.constant 0 : index
    %765 = vector.load %arg11[%c12_248, %c0_249] : memref<16x128xf32, #tpu.memory_space<vmem>>, vector<2x128xf32>
    tpu.vector_store %arg11[%c12_248, %c0_249], %764 {strides = array<i32>} : memref<16x128xf32, #tpu.memory_space<vmem>>, vector<2x128xf32>,
    %c14_250 = arith.constant 14 : index
    %c0_251 = arith.constant 0 : index
    %766 = vector.load %arg15[%c14_250, %c0_251] : memref<16x512xf32, #tpu.memory_space<vmem>>, vector<2x512xf32>
    %767 = vector.extract_strided_slice %764 {offsets = [0, 0], sizes = [2, 1], strides = [1, 1]} : vector<2x128xf32> to vector<2x1xf32>
    %c0_252 = arith.constant 0 : index
    %c0_253 = arith.constant 0 : index
    %768 = vector.load %arg10[%c0_252, %c0_253] : memref<1x512xf32, #tpu.memory_space<vmem>>, vector<1x512xf32>
    %769 = vector.broadcast %767 : vector<2x1xf32> to vector<2x512xf32>
    %770 = vector.broadcast %768 : vector<1x512xf32> to vector<2x512xf32>
    %771 = arith.mulf %769, %770 : vector<2x512xf32>
    %772 = arith.addf %766, %771 : vector<2x512xf32>
    %773 = vector.extract_strided_slice %772 {offsets = [0, 0], sizes = [2, 128], strides = [1, 1]} : vector<2x512xf32> to vector<2x128xf32>
    %774 = arith.negf %773 : vector<2x128xf32>
    %775 = math.exp %774 : vector<2x128xf32>
    %cst_254 = arith.constant 1.000000e+00 : f32
    %776 = vector.broadcast %cst_254 : f32 to vector<2x128xf32>
    %777 = arith.addf %776, %775 : vector<2x128xf32>
    %778 = arith.divf %776, %777 : vector<2x128xf32>
    %779 = vector.extract_strided_slice %772 {offsets = [0, 128], sizes = [2, 128], strides = [1, 1]} : vector<2x512xf32> to vector<2x128xf32>
    %780 = arith.negf %779 : vector<2x128xf32>
    %781 = math.exp %780 : vector<2x128xf32>
    %cst_255 = arith.constant 1.000000e+00 : f32
    %782 = vector.broadcast %cst_255 : f32 to vector<2x128xf32>
    %783 = arith.addf %782, %781 : vector<2x128xf32>
    %784 = arith.divf %782, %783 : vector<2x128xf32>
    %785 = vector.extract_strided_slice %772 {offsets = [0, 256], sizes = [2, 128], strides = [1, 1]} : vector<2x512xf32> to vector<2x128xf32>
    %786 = math.tanh %785 : vector<2x128xf32>
    %787 = vector.extract_strided_slice %772 {offsets = [0, 384], sizes = [2, 128], strides = [1, 1]} : vector<2x512xf32> to vector<2x128xf32>
    %788 = arith.negf %787 : vector<2x128xf32>
    %789 = math.exp %788 : vector<2x128xf32>
    %cst_256 = arith.constant 1.000000e+00 : f32
    %790 = vector.broadcast %cst_256 : f32 to vector<2x128xf32>
    %791 = arith.addf %790, %789 : vector<2x128xf32>
    %792 = arith.divf %790, %791 : vector<2x128xf32>
    %793 = arith.mulf %784, %762 : vector<2x128xf32>
    %794 = arith.mulf %778, %786 : vector<2x128xf32>
    %795 = arith.addf %793, %794 : vector<2x128xf32>
    %796 = math.tanh %795 : vector<2x128xf32>
    %797 = arith.mulf %792, %796 : vector<2x128xf32>
    %c14_257 = arith.constant 14 : index
    %c0_258 = arith.constant 0 : index
    %798 = vector.load %arg11[%c14_257, %c0_258] : memref<16x128xf32, #tpu.memory_space<vmem>>, vector<2x128xf32>
    tpu.vector_store %arg11[%c14_257, %c0_258], %797 {strides = array<i32>} : memref<16x128xf32, #tpu.memory_space<vmem>>, vector<2x128xf32>,
    return
  }
  func.func @transform_0(%arg0: i32) -> (i32, i32) {
    %c0_i32 = arith.constant 0 : i32
    %c0_i32_0 = arith.constant 0 : i32
    %c0_i32_1 = arith.constant 0 : i32
    return %c0_i32, %c0_i32_0 : i32, i32
  }
  func.func @transform_1(%arg0: i32) -> (i32, i32) {
    %c0_i32 = arith.constant 0 : i32
    %c0_i32_0 = arith.constant 0 : i32
    %c0_i32_1 = arith.constant 0 : i32
    return %c0_i32, %c0_i32_0 : i32, i32
  }
  func.func @transform_2(%arg0: i32) -> (i32, i32) {
    %c0_i32 = arith.constant 0 : i32
    %c0_i32_0 = arith.constant 0 : i32
    %c0_i32_1 = arith.constant 0 : i32
    return %c0_i32, %c0_i32_0 : i32, i32
  }
  func.func @transform_3(%arg0: i32) -> (i32, i32) {
    %c0_i32 = arith.constant 0 : i32
    %c0_i32_0 = arith.constant 0 : i32
    %c0_i32_1 = arith.constant 0 : i32
    return %c0_i32, %c0_i32_0 : i32, i32
  }
  func.func @transform_5(%arg0: i32) -> (i32, i32) {
    %c0_i32 = arith.constant 0 : i32
    %c0_i32_0 = arith.constant 0 : i32
    %c0_i32_1 = arith.constant 0 : i32
    return %c0_i32, %c0_i32_0 : i32, i32
  }
  func.func @transform_8(%arg0: i32) -> (i32, i32) {
    %c0_i32 = arith.constant 0 : i32
    %c0_i32_0 = arith.constant 0 : i32
    %c0_i32_1 = arith.constant 0 : i32
    return %c0_i32, %c0_i32_0 : i32, i32
  }
  func.func @transform_9(%arg0: i32) -> (i32, i32) {
    %c0_i32 = arith.constant 0 : i32
    %c0_i32_0 = arith.constant 0 : i32
    %c0_i32_1 = arith.constant 0 : i32
    return %c0_i32, %c0_i32_0 : i32, i32
  }
  func.func @transform_10(%arg0: i32) -> (i32, i32) {
    %c0_i32 = arith.constant 0 : i32
    %c0_i32_0 = arith.constant 0 : i32
    %c0_i32_1 = arith.constant 0 : i32
    return %c0_i32, %c0_i32_0 : i32, i32
  }
}

</mosaic_0001>

<llo_original>
// kernel: encoder_forward.1
$region0: #{encoder_forward.1}
  #allocation0 [shape = 'u32[]', space=smem, size = 0x4, offset = 0x4, fixed_abs, tag = 'smem constant byte address 0x4 - core index']
  #allocation1 [shape = 'u32[144,128]{1,0:T(1,128)}', space=vmem, size = 0x12000, scoped, tag = 'internal scratch']
  #allocation2 [shape = 'f32[128,512]{1,0:T(8,128)}', space=vmem, size = 0x40000, scoped, tag = 'scratch operand']
  #allocation3 [shape = 'f32[64,512]{1,0:T(8,128)}', space=vmem, size = 0x20000, scoped, tag = 'scratch operand']
  #allocation4 [shape = 'f32[64,512]{1,0:T(8,128)}', space=vmem, size = 0x20000, scoped, tag = 'scratch operand']
  #allocation5 [shape = 'f32[16,512]{1,0:T(8,128)}', space=vmem, size = 0x8000, scoped, tag = 'scratch operand']
  #allocation6 [shape = 'f32[16,128]{1,0:T(8,128)}', space=vmem, size = 0x2000, scoped, tag = 'scratch operand']
  #allocation7 [shape = 'f32[16,64]{1,0:T(8,128)}', space=vmem, size = 0x2000, scoped, tag = 'scratch operand']
  #allocation8 [shape = 's32[3]{0}', space=sflag, size = 0xc, scoped, tag = 'scratch operand']
  #allocation9 [shape = 's32[]', space=sflag, size = 0x4, offset = 0, fixed_abs, tag = 'sflag constant byte address 0x0 - dummy sync flag']
  #allocation10 [shape = 's32[]', space=sflag, size = 0x4, offset = 0, fixed_abs, tag = 'sflag constant byte address 0x0 - dummy sync flag']
  #allocation11 [shape = 's32[]', space=sflag, size = 0x4, offset = 0, fixed_abs, tag = 'sflag constant byte address 0x0 - dummy sync flag']
  %s0 = inlined_call_operand.vmem [shape: f32[16,128], index: 0, kind: input, shape index: {}]
  %s1 = inlined_call_operand.vmem [shape: f32[128,512], index: 1, kind: input, shape index: {}]
  %s2 = inlined_call_operand.vmem [shape: f32[1,512], index: 2, kind: input, shape index: {}]
  %s3 = inlined_call_operand.vmem [shape: f32[128,512], index: 3, kind: input, shape index: {}]
  %s4 = inlined_call_operand.vmem [shape: f32[128,512], index: 4, kind: input, shape index: {}]
  %s5 = inlined_call_operand.vmem [shape: f32[1,512], index: 5, kind: input, shape index: {}]
  %s6 = inlined_call_operand.vmem [shape: f32[64,512], index: 6, kind: input, shape index: {}]
  %s7 = inlined_call_operand.vmem [shape: f32[64,512], index: 7, kind: input, shape index: {}]
  %s8 = inlined_call_operand.vmem [shape: f32[1,512], index: 8, kind: input, shape index: {}]
  %s9 = inlined_call_operand.vmem [shape: f32[1,512], index: 9, kind: input, shape index: {}]
  %s10 = inlined_call_operand.vmem [shape: f32[16,128], index: 10, kind: output, shape index: {}]
  %s11 = sld [smem:[#allocation0]]
  $region140: #{encoder_forward.1} parent=0
    _
  %s13 = ssub.s32 1, %s11
  %s14 = scalar_select 0, %s13, %s11
  // Predicated region
  $region2: #{encoder_forward.1} parent=0 // pred_check
    _
  $region3: #{encoder_forward.1} parent=0 // pred_check_branch
    %16 = sbr.rel (0) target = $region5
  $region4: #{encoder_forward.1} parent=0 // pred_region
    _
  $region5: #{encoder_forward.1} parent=0 // pred_fallthru
    _
  // Predicated region
  $region6: #{encoder_forward.1} parent=0 // pred_check
    _
  $region7: #{encoder_forward.1} parent=0 // pred_check_branch
    %18 = sbr.rel (0) target = $region9
  $region8: #{encoder_forward.1} parent=0 // pred_region
    _
  $region9: #{encoder_forward.1} parent=0 // pred_fallthru
    _
  // Predicated region
  $region10: #{encoder_forward.1} parent=0 // pred_check
    _
  $region11: #{encoder_forward.1} parent=0 // pred_check_branch
    %20 = sbr.rel (0) target = $region13
  $region12: #{encoder_forward.1} parent=0 // pred_region
    _
  $region13: #{encoder_forward.1} parent=0 // pred_fallthru
    _
  // Predicated region
  $region14: #{encoder_forward.1} parent=0 // pred_check
    _
  $region15: #{encoder_forward.1} parent=0 // pred_check_branch
    %22 = sbr.rel (0) target = $region17
  $region16: #{encoder_forward.1} parent=0 // pred_region
    _
  $region17: #{encoder_forward.1} parent=0 // pred_fallthru
    _
  // Predicated region
  $region18: #{encoder_forward.1} parent=0 // pred_check
    _
  $region19: #{encoder_forward.1} parent=0 // pred_check_branch
    %24 = sbr.rel (0) target = $region21
  $region20: #{encoder_forward.1} parent=0 // pred_region
    _
  $region21: #{encoder_forward.1} parent=0 // pred_fallthru
    _
  // Predicated region
  $region22: #{encoder_forward.1} parent=0 // pred_check
    _
  $region23: #{encoder_forward.1} parent=0 // pred_check_branch
    %26 = sbr.rel (0) target = $region25
  $region24: #{encoder_forward.1} parent=0 // pred_region
    _
  $region25: #{encoder_forward.1} parent=0 // pred_fallthru
    _
  // Predicated region
  $region26: #{encoder_forward.1} parent=0 // pred_check
    _
  $region27: #{encoder_forward.1} parent=0 // pred_check_branch
    %28 = sbr.rel (0) target = $region29
  $region28: #{encoder_forward.1} parent=0 // pred_region
    _
  $region29: #{encoder_forward.1} parent=0 // pred_fallthru
    _
  %p30 = scmp.lt.u32.totalorder 512, 8
  %p31 = pneg %p30
  // Predicated region
  $region30: #{encoder_forward.1} parent=0 // pred_check
    _
  $region31: #{encoder_forward.1} parent=0 // pred_check_branch
    %33 = sbr.rel (%p30) target = $region33
  $region32: #{encoder_forward.1} parent=0 // pred_region
    %s48 = sand.u32 512, 7
    %p49 = scmp.eq.s32.totalorder %s48, 0
    // Predicated region
    $region45: #{encoder_forward.1} parent=32 // pred_check
      %p50 = pneg %p49
    $region46: #{encoder_forward.1} parent=32 // pred_check_branch
      %52 = sbr.rel (%p50) target = $region48
    $region47: #{encoder_forward.1} parent=32 // pred_region
      loop: start=0, step=1, limit=1
      $region49: #{encoder_forward.1} parent=47 // loop_pre_header
        _
      $region50: #{encoder_forward.1} parent=47 // loop_header
        %s54 = sphi 0, %s58
        %p55 = scmp.ge.s32.totalorder %s54, 1
        %s59 = sphi %s4, %s4
        %s60 = sphi [#allocation2], [#allocation2]
      $region51: #{encoder_forward.1} parent=47 // loop_header_branch
        %57 = sbr.rel (%p55) target = $region55
      $region52: #{encoder_forward.1} parent=47 // loop_body
        %v61 = vld [vmem:[%s59] sm:$0xff]
        %62 = vst [vmem:[%s60] sm:$0xff] %v61
        %v63 = vld [vmem:[%s59 + $0x8] sm:$0xff]
        %64 = vst [vmem:[%s60 + $0x8] sm:$0xff] %v63
        %v65 = vld [vmem:[%s59 + $0x10] sm:$0xff]
        %66 = vst [vmem:[%s60 + $0x10] sm:$0xff] %v65
        %v67 = vld [vmem:[%s59 + $0x18] sm:$0xff]
        %68 = vst [vmem:[%s60 + $0x18] sm:$0xff] %v67
        %v69 = vld [vmem:[%s59 + $0x20] sm:$0xff]
        %70 = vst [vmem:[%s60 + $0x20] sm:$0xff] %v69
        %v71 = vld [vmem:[%s59 + $0x28] sm:$0xff]
        %72 = vst [vmem:[%s60 + $0x28] sm:$0xff] %v71
        %v73 = vld [vmem:[%s59 + $0x30] sm:$0xff]
        %74 = vst [vmem:[%s60 + $0x30] sm:$0xff] %v73
        %v75 = vld [vmem:[%s59 + $0x38] sm:$0xff]
        %76 = vst [vmem:[%s60 + $0x38] sm:$0xff] %v75
        %v77 = vld [vmem:[%s59 + $0x40] sm:$0xff]
        %78 = vst [vmem:[%s60 + $0x40] sm:$0xff] %v77
        %v79 = vld [vmem:[%s59 + $0x48] sm:$0xff]
        %80 = vst [vmem:[%s60 + $0x48] sm:$0xff] %v79
        %v81 = vld [vmem:[%s59 + $0x50] sm:$0xff]
        %82 = vst [vmem:[%s60 + $0x50] sm:$0xff] %v81
        %v83 = vld [vmem:[%s59 + $0x58] sm:$0xff]
        %84 = vst [vmem:[%s60 + $0x58] sm:$0xff] %v83
        %v85 = vld [vmem:[%s59 + $0x60] sm:$0xff]
        %86 = vst [vmem:[%s60 + $0x60] sm:$0xff] %v85
        %v87 = vld [vmem:[%s59 + $0x68] sm:$0xff]
        %88 = vst [vmem:[%s60 + $0x68] sm:$0xff] %v87
        %v89 = vld [vmem:[%s59 + $0x70] sm:$0xff]
        %90 = vst [vmem:[%s60 + $0x70] sm:$0xff] %v89
        %v91 = vld [vmem:[%s59 + $0x78] sm:$0xff]
        %92 = vst [vmem:[%s60 + $0x78] sm:$0xff] %v91
        %v93 = vld [vmem:[%s59 + $0x80] sm:$0xff]
        %94 = vst [vmem:[%s60 + $0x80] sm:$0xff] %v93
        %v95 = vld [vmem:[%s59 + $0x88] sm:$0xff]
        %96 = vst [vmem:[%s60 + $0x88] sm:$0xff] %v95
        %v97 = vld [vmem:[%s59 + $0x90] sm:$0xff]
        %98 = vst [vmem:[%s60 + $0x90] sm:$0xff] %v97
        %v99 = vld [vmem:[%s59 + $0x98] sm:$0xff]
        %100 = vst [vmem:[%s60 + $0x98] sm:$0xff] %v99
        %v101 = vld [vmem:[%s59 + $0xa0] sm:$0xff]
        %102 = vst [vmem:[%s60 + $0xa0] sm:$0xff] %v101
        %v103 = vld [vmem:[%s59 + $0xa8] sm:$0xff]
        %104 = vst [vmem:[%s60 + $0xa8] sm:$0xff] %v103
        %v105 = vld [vmem:[%s59 + $0xb0] sm:$0xff]
        %106 = vst [vmem:[%s60 + $0xb0] sm:$0xff] %v105
        %v107 = vld [vmem:[%s59 + $0xb8] sm:$0xff]
        %108 = vst [vmem:[%s60 + $0xb8] sm:$0xff] %v107
        %v109 = vld [vmem:[%s59 + $0xc0] sm:$0xff]
        %110 = vst [vmem:[%s60 + $0xc0] sm:$0xff] %v109
        %v111 = vld [vmem:[%s59 + $0xc8] sm:$0xff]
        %112 = vst [vmem:[%s60 + $0xc8] sm:$0xff] %v111
        %v113 = vld [vmem:[%s59 + $0xd0] sm:$0xff]
        %114 = vst [vmem:[%s60 + $0xd0] sm:$0xff] %v113
        %v115 = vld [vmem:[%s59 + $0xd8] sm:$0xff]
        %116 = vst [vmem:[%s60 + $0xd8] sm:$0xff] %v115
        %v117 = vld [vmem:[%s59 + $0xe0] sm:$0xff]
        %118 = vst [vmem:[%s60 + $0xe0] sm:$0xff] %v117
        %v119 = vld [vmem:[%s59 + $0xe8] sm:$0xff]
        %120 = vst [vmem:[%s60 + $0xe8] sm:$0xff] %v119
        %v121 = vld [vmem:[%s59 + $0xf0] sm:$0xff]
        %122 = vst [vmem:[%s60 + $0xf0] sm:$0xff] %v121
        %v123 = vld [vmem:[%s59 + $0xf8] sm:$0xff]
        %124 = vst [vmem:[%s60 + $0xf8] sm:$0xff] %v123
        %v125 = vld [vmem:[%s59 + $0x100] sm:$0xff]
        %126 = vst [vmem:[%s60 + $0x100] sm:$0xff] %v125
        %v127 = vld [vmem:[%s59 + $0x108] sm:$0xff]
        %128 = vst [vmem:[%s60 + $0x108] sm:$0xff] %v127
        %v129 = vld [vmem:[%s59 + $0x110] sm:$0xff]
        %130 = vst [vmem:[%s60 + $0x110] sm:$0xff] %v129
        %v131 = vld [vmem:[%s59 + $0x118] sm:$0xff]
        %132 = vst [vmem:[%s60 + $0x118] sm:$0xff] %v131
        %v133 = vld [vmem:[%s59 + $0x120] sm:$0xff]
        %134 = vst [vmem:[%s60 + $0x120] sm:$0xff] %v133
        %v135 = vld [vmem:[%s59 + $0x128] sm:$0xff]
        %136 = vst [vmem:[%s60 + $0x128] sm:$0xff] %v135
        %v137 = vld [vmem:[%s59 + $0x130] sm:$0xff]
        %138 = vst [vmem:[%s60 + $0x130] sm:$0xff] %v137
        %v139 = vld [vmem:[%s59 + $0x138] sm:$0xff]
        %140 = vst [vmem:[%s60 + $0x138] sm:$0xff] %v139
        %v141 = vld [vmem:[%s59 + $0x140] sm:$0xff]
        %142 = vst [vmem:[%s60 + $0x140] sm:$0xff] %v141
        %v143 = vld [vmem:[%s59 + $0x148] sm:$0xff]
        %144 = vst [vmem:[%s60 + $0x148] sm:$0xff] %v143
        %v145 = vld [vmem:[%s59 + $0x150] sm:$0xff]
        %146 = vst [vmem:[%s60 + $0x150] sm:$0xff] %v145
        %v147 = vld [vmem:[%s59 + $0x158] sm:$0xff]
        %148 = vst [vmem:[%s60 + $0x158] sm:$0xff] %v147
        %v149 = vld [vmem:[%s59 + $0x160] sm:$0xff]
        %150 = vst [vmem:[%s60 + $0x160] sm:$0xff] %v149
        %v151 = vld [vmem:[%s59 + $0x168] sm:$0xff]
        %152 = vst [vmem:[%s60 + $0x168] sm:$0xff] %v151
        %v153 = vld [vmem:[%s59 + $0x170] sm:$0xff]
        %154 = vst [vmem:[%s60 + $0x170] sm:$0xff] %v153
        %v155 = vld [vmem:[%s59 + $0x178] sm:$0xff]
        %156 = vst [vmem:[%s60 + $0x178] sm:$0xff] %v155
        %v157 = vld [vmem:[%s59 + $0x180] sm:$0xff]
        %158 = vst [vmem:[%s60 + $0x180] sm:$0xff] %v157
        %v159 = vld [vmem:[%s59 + $0x188] sm:$0xff]
        %160 = vst [vmem:[%s60 + $0x188] sm:$0xff] %v159
        %v161 = vld [vmem:[%s59 + $0x190] sm:$0xff]
        %162 = vst [vmem:[%s60 + $0x190] sm:$0xff] %v161
        %v163 = vld [vmem:[%s59 + $0x198] sm:$0xff]
        %164 = vst [vmem:[%s60 + $0x198] sm:$0xff] %v163
        %v165 = vld [vmem:[%s59 + $0x1a0] sm:$0xff]
        %166 = vst [vmem:[%s60 + $0x1a0] sm:$0xff] %v165
        %v167 = vld [vmem:[%s59 + $0x1a8] sm:$0xff]
        %168 = vst [vmem:[%s60 + $0x1a8] sm:$0xff] %v167
        %v169 = vld [vmem:[%s59 + $0x1b0] sm:$0xff]
        %170 = vst [vmem:[%s60 + $0x1b0] sm:$0xff] %v169
        %v171 = vld [vmem:[%s59 + $0x1b8] sm:$0xff]
        %172 = vst [vmem:[%s60 + $0x1b8] sm:$0xff] %v171
        %v173 = vld [vmem:[%s59 + $0x1c0] sm:$0xff]
        %174 = vst [vmem:[%s60 + $0x1c0] sm:$0xff] %v173
        %v175 = vld [vmem:[%s59 + $0x1c8] sm:$0xff]
        %176 = vst [vmem:[%s60 + $0x1c8] sm:$0xff] %v175
        %v177 = vld [vmem:[%s59 + $0x1d0] sm:$0xff]
        %178 = vst [vmem:[%s60 + $0x1d0] sm:$0xff] %v177
        %v179 = vld [vmem:[%s59 + $0x1d8] sm:$0xff]
        %180 = vst [vmem:[%s60 + $0x1d8] sm:$0xff] %v179
        %v181 = vld [vmem:[%s59 + $0x1e0] sm:$0xff]
        %182 = vst [vmem:[%s60 + $0x1e0] sm:$0xff] %v181
        %v183 = vld [vmem:[%s59 + $0x1e8] sm:$0xff]
        %184 = vst [vmem:[%s60 + $0x1e8] sm:$0xff] %v183
        %v185 = vld [vmem:[%s59 + $0x1f0] sm:$0xff]
        %186 = vst [vmem:[%s60 + $0x1f0] sm:$0xff] %v185
        %v187 = vld [vmem:[%s59 + $0x1f8] sm:$0xff]
        %188 = vst [vmem:[%s60 + $0x1f8] sm:$0xff] %v187
      $region53: #{encoder_forward.1} parent=47 // loop_footer
        %s58 = sadd.s32 1, %s54
      $region54: #{encoder_forward.1} parent=47 // loop_footer_branch
        %53 = sbr.rel target = $region50
      $region55: #{encoder_forward.1} parent=47 // loop_exit
        _
    $region48: #{encoder_forward.1} parent=32 // pred_fallthru
      _
    %p189 = pneg %p49
    // Predicated region
    $region56: #{encoder_forward.1} parent=32 // pred_check
      _
    $region57: #{encoder_forward.1} parent=32 // pred_check_branch
      %191 = sbr.rel (%p49) target = $region59
    $region58: #{encoder_forward.1} parent=32 // pred_region
      %s192 = sand.u32 512, 7
    $region59: #{encoder_forward.1} parent=32 // pred_fallthru
      _
  $region33: #{encoder_forward.1} parent=0 // pred_fallthru
    _
  // Predicated region
  $region34: #{encoder_forward.1} parent=0 // pred_check
    %p34 = pneg %p30
  $region35: #{encoder_forward.1} parent=0 // pred_check_branch
    %36 = sbr.rel (%p34) target = $region37
  $region36: #{encoder_forward.1} parent=0 // pred_region
    %s37 = sshllo.u32 0, 512
    loop: start=0, step=1, limit=1
    $region38: #{encoder_forward.1} parent=36 // loop_pre_header
      _
    $region39: #{encoder_forward.1} parent=36 // loop_header
      %s39 = sphi 0, %s43
      %p40 = scmp.ge.s32.totalorder %s39, 1
      %s44 = sphi %s4, %s4
      %s45 = sphi [#allocation2], [#allocation2]
    $region40: #{encoder_forward.1} parent=36 // loop_header_branch
      %42 = sbr.rel (%p40) target = $region44
    $region41: #{encoder_forward.1} parent=36 // loop_body
      %v46 = vld [vmem:[%s44] sm:%s37]
      %47 = vst [vmem:[%s45] sm:%s37] %v46
    $region42: #{encoder_forward.1} parent=36 // loop_footer
      %s43 = sadd.s32 1, %s39
    $region43: #{encoder_forward.1} parent=36 // loop_footer_branch
      %38 = sbr.rel target = $region39
    $region44: #{encoder_forward.1} parent=36 // loop_exit
      _
  $region37: #{encoder_forward.1} parent=0 // pred_fallthru
    _
  // Predicated region
  $region60: #{encoder_forward.1} parent=0 // pred_check
    _
  $region61: #{encoder_forward.1} parent=0 // pred_check_branch
    %195 = sbr.rel (0) target = $region63
  $region62: #{encoder_forward.1} parent=0 // pred_region
    %196 = vsyncadd [#allocation8], 8192
  $region63: #{encoder_forward.1} parent=0 // pred_fallthru
    _
  %s197 = scalar_lea.sflag [#allocation8], 1
  %p199 = scmp.lt.u32.totalorder 256, 8
  %p200 = pneg %p199
  // Predicated region
  $region64: #{encoder_forward.1} parent=0 // pred_check
    _
  $region65: #{encoder_forward.1} parent=0 // pred_check_branch
    %202 = sbr.rel (%p199) target = $region67
  $region66: #{encoder_forward.1} parent=0 // pred_region
    %s217 = sand.u32 256, 7
    %p218 = scmp.eq.s32.totalorder %s217, 0
    // Predicated region
    $region79: #{encoder_forward.1} parent=66 // pred_check
      %p219 = pneg %p218
    $region80: #{encoder_forward.1} parent=66 // pred_check_branch
      %221 = sbr.rel (%p219) target = $region82
    $region81: #{encoder_forward.1} parent=66 // pred_region
      loop: start=0, step=1, limit=1
      $region83: #{encoder_forward.1} parent=81 // loop_pre_header
        _
      $region84: #{encoder_forward.1} parent=81 // loop_header
        %s223 = sphi 0, %s227
        %p224 = scmp.ge.s32.totalorder %s223, 1
        %s228 = sphi %s6, %s6
        %s229 = sphi [#allocation3], [#allocation3]
      $region85: #{encoder_forward.1} parent=81 // loop_header_branch
        %226 = sbr.rel (%p224) target = $region89
      $region86: #{encoder_forward.1} parent=81 // loop_body
        %v230 = vld [vmem:[%s228] sm:$0xff]
        %231 = vst [vmem:[%s229] sm:$0xff] %v230
        %v232 = vld [vmem:[%s228 + $0x8] sm:$0xff]
        %233 = vst [vmem:[%s229 + $0x8] sm:$0xff] %v232
        %v234 = vld [vmem:[%s228 + $0x10] sm:$0xff]
        %235 = vst [vmem:[%s229 + $0x10] sm:$0xff] %v234
        %v236 = vld [vmem:[%s228 + $0x18] sm:$0xff]
        %237 = vst [vmem:[%s229 + $0x18] sm:$0xff] %v236
        %v238 = vld [vmem:[%s228 + $0x20] sm:$0xff]
        %239 = vst [vmem:[%s229 + $0x20] sm:$0xff] %v238
        %v240 = vld [vmem:[%s228 + $0x28] sm:$0xff]
        %241 = vst [vmem:[%s229 + $0x28] sm:$0xff] %v240
        %v242 = vld [vmem:[%s228 + $0x30] sm:$0xff]
        %243 = vst [vmem:[%s229 + $0x30] sm:$0xff] %v242
        %v244 = vld [vmem:[%s228 + $0x38] sm:$0xff]
        %245 = vst [vmem:[%s229 + $0x38] sm:$0xff] %v244
        %v246 = vld [vmem:[%s228 + $0x40] sm:$0xff]
        %247 = vst [vmem:[%s229 + $0x40] sm:$0xff] %v246
        %v248 = vld [vmem:[%s228 + $0x48] sm:$0xff]
        %249 = vst [vmem:[%s229 + $0x48] sm:$0xff] %v248
        %v250 = vld [vmem:[%s228 + $0x50] sm:$0xff]
        %251 = vst [vmem:[%s229 + $0x50] sm:$0xff] %v250
        %v252 = vld [vmem:[%s228 + $0x58] sm:$0xff]
        %253 = vst [vmem:[%s229 + $0x58] sm:$0xff] %v252
        %v254 = vld [vmem:[%s228 + $0x60] sm:$0xff]
        %255 = vst [vmem:[%s229 + $0x60] sm:$0xff] %v254
        %v256 = vld [vmem:[%s228 + $0x68] sm:$0xff]
        %257 = vst [vmem:[%s229 + $0x68] sm:$0xff] %v256
        %v258 = vld [vmem:[%s228 + $0x70] sm:$0xff]
        %259 = vst [vmem:[%s229 + $0x70] sm:$0xff] %v258
        %v260 = vld [vmem:[%s228 + $0x78] sm:$0xff]
        %261 = vst [vmem:[%s229 + $0x78] sm:$0xff] %v260
        %v262 = vld [vmem:[%s228 + $0x80] sm:$0xff]
        %263 = vst [vmem:[%s229 + $0x80] sm:$0xff] %v262
        %v264 = vld [vmem:[%s228 + $0x88] sm:$0xff]
        %265 = vst [vmem:[%s229 + $0x88] sm:$0xff] %v264
        %v266 = vld [vmem:[%s228 + $0x90] sm:$0xff]
        %267 = vst [vmem:[%s229 + $0x90] sm:$0xff] %v266
        %v268 = vld [vmem:[%s228 + $0x98] sm:$0xff]
        %269 = vst [vmem:[%s229 + $0x98] sm:$0xff] %v268
        %v270 = vld [vmem:[%s228 + $0xa0] sm:$0xff]
        %271 = vst [vmem:[%s229 + $0xa0] sm:$0xff] %v270
        %v272 = vld [vmem:[%s228 + $0xa8] sm:$0xff]
        %273 = vst [vmem:[%s229 + $0xa8] sm:$0xff] %v272
        %v274 = vld [vmem:[%s228 + $0xb0] sm:$0xff]
        %275 = vst [vmem:[%s229 + $0xb0] sm:$0xff] %v274
        %v276 = vld [vmem:[%s228 + $0xb8] sm:$0xff]
        %277 = vst [vmem:[%s229 + $0xb8] sm:$0xff] %v276
        %v278 = vld [vmem:[%s228 + $0xc0] sm:$0xff]
        %279 = vst [vmem:[%s229 + $0xc0] sm:$0xff] %v278
        %v280 = vld [vmem:[%s228 + $0xc8] sm:$0xff]
        %281 = vst [vmem:[%s229 + $0xc8] sm:$0xff] %v280
        %v282 = vld [vmem:[%s228 + $0xd0] sm:$0xff]
        %283 = vst [vmem:[%s229 + $0xd0] sm:$0xff] %v282
        %v284 = vld [vmem:[%s228 + $0xd8] sm:$0xff]
        %285 = vst [vmem:[%s229 + $0xd8] sm:$0xff] %v284
        %v286 = vld [vmem:[%s228 + $0xe0] sm:$0xff]
        %287 = vst [vmem:[%s229 + $0xe0] sm:$0xff] %v286
        %v288 = vld [vmem:[%s228 + $0xe8] sm:$0xff]
        %289 = vst [vmem:[%s229 + $0xe8] sm:$0xff] %v288
        %v290 = vld [vmem:[%s228 + $0xf0] sm:$0xff]
        %291 = vst [vmem:[%s229 + $0xf0] sm:$0xff] %v290
        %v292 = vld [vmem:[%s228 + $0xf8] sm:$0xff]
        %293 = vst [vmem:[%s229 + $0xf8] sm:$0xff] %v292
      $region87: #{encoder_forward.1} parent=81 // loop_footer
        %s227 = sadd.s32 1, %s223
      $region88: #{encoder_forward.1} parent=81 // loop_footer_branch
        %222 = sbr.rel target = $region84
      $region89: #{encoder_forward.1} parent=81 // loop_exit
        _
    $region82: #{encoder_forward.1} parent=66 // pred_fallthru
      _
    %p294 = pneg %p218
    // Predicated region
    $region90: #{encoder_forward.1} parent=66 // pred_check
      _
    $region91: #{encoder_forward.1} parent=66 // pred_check_branch
      %296 = sbr.rel (%p218) target = $region93
    $region92: #{encoder_forward.1} parent=66 // pred_region
      %s297 = sand.u32 256, 7
    $region93: #{encoder_forward.1} parent=66 // pred_fallthru
      _
  $region67: #{encoder_forward.1} parent=0 // pred_fallthru
    _
  // Predicated region
  $region68: #{encoder_forward.1} parent=0 // pred_check
    %p203 = pneg %p199
  $region69: #{encoder_forward.1} parent=0 // pred_check_branch
    %205 = sbr.rel (%p203) target = $region71
  $region70: #{encoder_forward.1} parent=0 // pred_region
    %s206 = sshllo.u32 0, 256
    loop: start=0, step=1, limit=1
    $region72: #{encoder_forward.1} parent=70 // loop_pre_header
      _
    $region73: #{encoder_forward.1} parent=70 // loop_header
      %s208 = sphi 0, %s212
      %p209 = scmp.ge.s32.totalorder %s208, 1
      %s213 = sphi %s6, %s6
      %s214 = sphi [#allocation3], [#allocation3]
    $region74: #{encoder_forward.1} parent=70 // loop_header_branch
      %211 = sbr.rel (%p209) target = $region78
    $region75: #{encoder_forward.1} parent=70 // loop_body
      %v215 = vld [vmem:[%s213] sm:%s206]
      %216 = vst [vmem:[%s214] sm:%s206] %v215
    $region76: #{encoder_forward.1} parent=70 // loop_footer
      %s212 = sadd.s32 1, %s208
    $region77: #{encoder_forward.1} parent=70 // loop_footer_branch
      %207 = sbr.rel target = $region73
    $region78: #{encoder_forward.1} parent=70 // loop_exit
      _
  $region71: #{encoder_forward.1} parent=0 // pred_fallthru
    _
  // Predicated region
  $region94: #{encoder_forward.1} parent=0 // pred_check
    _
  $region95: #{encoder_forward.1} parent=0 // pred_check_branch
    %300 = sbr.rel (0) target = $region97
  $region96: #{encoder_forward.1} parent=0 // pred_region
    %301 = vsyncadd %s197, 4096
  $region97: #{encoder_forward.1} parent=0 // pred_fallthru
    _
  %s302 = scalar_lea.sflag [#allocation8], 2
  %p304 = scmp.lt.u32.totalorder 256, 8
  %p305 = pneg %p304
  // Predicated region
  $region98: #{encoder_forward.1} parent=0 // pred_check
    _
  $region99: #{encoder_forward.1} parent=0 // pred_check_branch
    %307 = sbr.rel (%p304) target = $region101
  $region100: #{encoder_forward.1} parent=0 // pred_region
    %s322 = sand.u32 256, 7
    %p323 = scmp.eq.s32.totalorder %s322, 0
    // Predicated region
    $region113: #{encoder_forward.1} parent=100 // pred_check
      %p324 = pneg %p323
    $region114: #{encoder_forward.1} parent=100 // pred_check_branch
      %326 = sbr.rel (%p324) target = $region116
    $region115: #{encoder_forward.1} parent=100 // pred_region
      loop: start=0, step=1, limit=1
      $region117: #{encoder_forward.1} parent=115 // loop_pre_header
        _
      $region118: #{encoder_forward.1} parent=115 // loop_header
        %s328 = sphi 0, %s332
        %p329 = scmp.ge.s32.totalorder %s328, 1
        %s333 = sphi %s7, %s7
        %s334 = sphi [#allocation4], [#allocation4]
      $region119: #{encoder_forward.1} parent=115 // loop_header_branch
        %331 = sbr.rel (%p329) target = $region123
      $region120: #{encoder_forward.1} parent=115 // loop_body
        %v335 = vld [vmem:[%s333] sm:$0xff]
        %336 = vst [vmem:[%s334] sm:$0xff] %v335
        %v337 = vld [vmem:[%s333 + $0x8] sm:$0xff]
        %338 = vst [vmem:[%s334 + $0x8] sm:$0xff] %v337
        %v339 = vld [vmem:[%s333 + $0x10] sm:$0xff]
        %340 = vst [vmem:[%s334 + $0x10] sm:$0xff] %v339
        %v341 = vld [vmem:[%s333 + $0x18] sm:$0xff]
        %342 = vst [vmem:[%s334 + $0x18] sm:$0xff] %v341
        %v343 = vld [vmem:[%s333 + $0x20] sm:$0xff]
        %344 = vst [vmem:[%s334 + $0x20] sm:$0xff] %v343
        %v345 = vld [vmem:[%s333 + $0x28] sm:$0xff]
        %346 = vst [vmem:[%s334 + $0x28] sm:$0xff] %v345
        %v347 = vld [vmem:[%s333 + $0x30] sm:$0xff]
        %348 = vst [vmem:[%s334 + $0x30] sm:$0xff] %v347
        %v349 = vld [vmem:[%s333 + $0x38] sm:$0xff]
        %350 = vst [vmem:[%s334 + $0x38] sm:$0xff] %v349
        %v351 = vld [vmem:[%s333 + $0x40] sm:$0xff]
        %352 = vst [vmem:[%s334 + $0x40] sm:$0xff] %v351
        %v353 = vld [vmem:[%s333 + $0x48] sm:$0xff]
        %354 = vst [vmem:[%s334 + $0x48] sm:$0xff] %v353
        %v355 = vld [vmem:[%s333 + $0x50] sm:$0xff]
        %356 = vst [vmem:[%s334 + $0x50] sm:$0xff] %v355
        %v357 = vld [vmem:[%s333 + $0x58] sm:$0xff]
        %358 = vst [vmem:[%s334 + $0x58] sm:$0xff] %v357
        %v359 = vld [vmem:[%s333 + $0x60] sm:$0xff]
        %360 = vst [vmem:[%s334 + $0x60] sm:$0xff] %v359
        %v361 = vld [vmem:[%s333 + $0x68] sm:$0xff]
        %362 = vst [vmem:[%s334 + $0x68] sm:$0xff] %v361
        %v363 = vld [vmem:[%s333 + $0x70] sm:$0xff]
        %364 = vst [vmem:[%s334 + $0x70] sm:$0xff] %v363
        %v365 = vld [vmem:[%s333 + $0x78] sm:$0xff]
        %366 = vst [vmem:[%s334 + $0x78] sm:$0xff] %v365
        %v367 = vld [vmem:[%s333 + $0x80] sm:$0xff]
        %368 = vst [vmem:[%s334 + $0x80] sm:$0xff] %v367
        %v369 = vld [vmem:[%s333 + $0x88] sm:$0xff]
        %370 = vst [vmem:[%s334 + $0x88] sm:$0xff] %v369
        %v371 = vld [vmem:[%s333 + $0x90] sm:$0xff]
        %372 = vst [vmem:[%s334 + $0x90] sm:$0xff] %v371
        %v373 = vld [vmem:[%s333 + $0x98] sm:$0xff]
        %374 = vst [vmem:[%s334 + $0x98] sm:$0xff] %v373
        %v375 = vld [vmem:[%s333 + $0xa0] sm:$0xff]
        %376 = vst [vmem:[%s334 + $0xa0] sm:$0xff] %v375
        %v377 = vld [vmem:[%s333 + $0xa8] sm:$0xff]
        %378 = vst [vmem:[%s334 + $0xa8] sm:$0xff] %v377
        %v379 = vld [vmem:[%s333 + $0xb0] sm:$0xff]
        %380 = vst [vmem:[%s334 + $0xb0] sm:$0xff] %v379
        %v381 = vld [vmem:[%s333 + $0xb8] sm:$0xff]
        %382 = vst [vmem:[%s334 + $0xb8] sm:$0xff] %v381
        %v383 = vld [vmem:[%s333 + $0xc0] sm:$0xff]
        %384 = vst [vmem:[%s334 + $0xc0] sm:$0xff] %v383
        %v385 = vld [vmem:[%s333 + $0xc8] sm:$0xff]
        %386 = vst [vmem:[%s334 + $0xc8] sm:$0xff] %v385
        %v387 = vld [vmem:[%s333 + $0xd0] sm:$0xff]
        %388 = vst [vmem:[%s334 + $0xd0] sm:$0xff] %v387
        %v389 = vld [vmem:[%s333 + $0xd8] sm:$0xff]
        %390 = vst [vmem:[%s334 + $0xd8] sm:$0xff] %v389
        %v391 = vld [vmem:[%s333 + $0xe0] sm:$0xff]
        %392 = vst [vmem:[%s334 + $0xe0] sm:$0xff] %v391
        %v393 = vld [vmem:[%s333 + $0xe8] sm:$0xff]
        %394 = vst [vmem:[%s334 + $0xe8] sm:$0xff] %v393
        %v395 = vld [vmem:[%s333 + $0xf0] sm:$0xff]
        %396 = vst [vmem:[%s334 + $0xf0] sm:$0xff] %v395
        %v397 = vld [vmem:[%s333 + $0xf8] sm:$0xff]
        %398 = vst [vmem:[%s334 + $0xf8] sm:$0xff] %v397
      $region121: #{encoder_forward.1} parent=115 // loop_footer
        %s332 = sadd.s32 1, %s328
      $region122: #{encoder_forward.1} parent=115 // loop_footer_branch
        %327 = sbr.rel target = $region118
      $region123: #{encoder_forward.1} parent=115 // loop_exit
        _
    $region116: #{encoder_forward.1} parent=100 // pred_fallthru
      _
    %p399 = pneg %p323
    // Predicated region
    $region124: #{encoder_forward.1} parent=100 // pred_check
      _
    $region125: #{encoder_forward.1} parent=100 // pred_check_branch
      %401 = sbr.rel (%p323) target = $region127
    $region126: #{encoder_forward.1} parent=100 // pred_region
      %s402 = sand.u32 256, 7
    $region127: #{encoder_forward.1} parent=100 // pred_fallthru
      _
  $region101: #{encoder_forward.1} parent=0 // pred_fallthru
    _
  // Predicated region
  $region102: #{encoder_forward.1} parent=0 // pred_check
    %p308 = pneg %p304
  $region103: #{encoder_forward.1} parent=0 // pred_check_branch
    %310 = sbr.rel (%p308) target = $region105
  $region104: #{encoder_forward.1} parent=0 // pred_region
    %s311 = sshllo.u32 0, 256
    loop: start=0, step=1, limit=1
    $region106: #{encoder_forward.1} parent=104 // loop_pre_header
      _
    $region107: #{encoder_forward.1} parent=104 // loop_header
      %s313 = sphi 0, %s317
      %p314 = scmp.ge.s32.totalorder %s313, 1
      %s318 = sphi %s7, %s7
      %s319 = sphi [#allocation4], [#allocation4]
    $region108: #{encoder_forward.1} parent=104 // loop_header_branch
      %316 = sbr.rel (%p314) target = $region112
    $region109: #{encoder_forward.1} parent=104 // loop_body
      %v320 = vld [vmem:[%s318] sm:%s311]
      %321 = vst [vmem:[%s319] sm:%s311] %v320
    $region110: #{encoder_forward.1} parent=104 // loop_footer
      %s317 = sadd.s32 1, %s313
    $region111: #{encoder_forward.1} parent=104 // loop_footer_branch
      %312 = sbr.rel target = $region107
    $region112: #{encoder_forward.1} parent=104 // loop_exit
      _
  $region105: #{encoder_forward.1} parent=0 // pred_fallthru
    _
  // Predicated region
  $region128: #{encoder_forward.1} parent=0 // pred_check
    _
  $region129: #{encoder_forward.1} parent=0 // pred_check_branch
    %405 = sbr.rel (0) target = $region131
  $region130: #{encoder_forward.1} parent=0 // pred_region
    %406 = vsyncadd %s302, 4096
  $region131: #{encoder_forward.1} parent=0 // pred_fallthru
    _
  %v407 = vld [vmem:[%s0] sm:$0xff]
  %v408 = vld [vmem:[%s0 + $0x8] sm:$0xff]
  %v409 = vld [vmem:[%s1] sm:$0xff]
  %v410 = vld [vmem:[%s1 + $0x8] sm:$0xff]
  %v411 = vld [vmem:[%s1 + $0x10] sm:$0xff]
  %v412 = vld [vmem:[%s1 + $0x18] sm:$0xff]
  %v413 = vld [vmem:[%s1 + $0x20] sm:$0xff]
  %v414 = vld [vmem:[%s1 + $0x28] sm:$0xff]
  %v415 = vld [vmem:[%s1 + $0x30] sm:$0xff]
  %v416 = vld [vmem:[%s1 + $0x38] sm:$0xff]
  %v417 = vld [vmem:[%s1 + $0x40] sm:$0xff]
  %v418 = vld [vmem:[%s1 + $0x48] sm:$0xff]
  %v419 = vld [vmem:[%s1 + $0x50] sm:$0xff]
  %v420 = vld [vmem:[%s1 + $0x58] sm:$0xff]
  %v421 = vld [vmem:[%s1 + $0x60] sm:$0xff]
  %v422 = vld [vmem:[%s1 + $0x68] sm:$0xff]
  %v423 = vld [vmem:[%s1 + $0x70] sm:$0xff]
  %v424 = vld [vmem:[%s1 + $0x78] sm:$0xff]
  %v425 = vld [vmem:[%s1 + $0x80] sm:$0xff]
  %v426 = vld [vmem:[%s1 + $0x88] sm:$0xff]
  %v427 = vld [vmem:[%s1 + $0x90] sm:$0xff]
  %v428 = vld [vmem:[%s1 + $0x98] sm:$0xff]
  %v429 = vld [vmem:[%s1 + $0xa0] sm:$0xff]
  %v430 = vld [vmem:[%s1 + $0xa8] sm:$0xff]
  %v431 = vld [vmem:[%s1 + $0xb0] sm:$0xff]
  %v432 = vld [vmem:[%s1 + $0xb8] sm:$0xff]
  %v433 = vld [vmem:[%s1 + $0xc0] sm:$0xff]
  %v434 = vld [vmem:[%s1 + $0xc8] sm:$0xff]
  %v435 = vld [vmem:[%s1 + $0xd0] sm:$0xff]
  %v436 = vld [vmem:[%s1 + $0xd8] sm:$0xff]
  %v437 = vld [vmem:[%s1 + $0xe0] sm:$0xff]
  %v438 = vld [vmem:[%s1 + $0xe8] sm:$0xff]
  %v439 = vld [vmem:[%s1 + $0xf0] sm:$0xff]
  %v440 = vld [vmem:[%s1 + $0xf8] sm:$0xff]
  %v441 = vld [vmem:[%s1 + $0x100] sm:$0xff]
  %v442 = vld [vmem:[%s1 + $0x108] sm:$0xff]
  %v443 = vld [vmem:[%s1 + $0x110] sm:$0xff]
  %v444 = vld [vmem:[%s1 + $0x118] sm:$0xff]
  %v445 = vld [vmem:[%s1 + $0x120] sm:$0xff]
  %v446 = vld [vmem:[%s1 + $0x128] sm:$0xff]
  %v447 = vld [vmem:[%s1 + $0x130] sm:$0xff]
  %v448 = vld [vmem:[%s1 + $0x138] sm:$0xff]
  %v449 = vld [vmem:[%s1 + $0x140] sm:$0xff]
  %v450 = vld [vmem:[%s1 + $0x148] sm:$0xff]
  %v451 = vld [vmem:[%s1 + $0x150] sm:$0xff]
  %v452 = vld [vmem:[%s1 + $0x158] sm:$0xff]
  %v453 = vld [vmem:[%s1 + $0x160] sm:$0xff]
  %v454 = vld [vmem:[%s1 + $0x168] sm:$0xff]
  %v455 = vld [vmem:[%s1 + $0x170] sm:$0xff]
  %v456 = vld [vmem:[%s1 + $0x178] sm:$0xff]
  %v457 = vld [vmem:[%s1 + $0x180] sm:$0xff]
  %v458 = vld [vmem:[%s1 + $0x188] sm:$0xff]
  %v459 = vld [vmem:[%s1 + $0x190] sm:$0xff]
  %v460 = vld [vmem:[%s1 + $0x198] sm:$0xff]
  %v461 = vld [vmem:[%s1 + $0x1a0] sm:$0xff]
  %v462 = vld [vmem:[%s1 + $0x1a8] sm:$0xff]
  %v463 = vld [vmem:[%s1 + $0x1b0] sm:$0xff]
  %v464 = vld [vmem:[%s1 + $0x1b8] sm:$0xff]
  %v465 = vld [vmem:[%s1 + $0x1c0] sm:$0xff]
  %v466 = vld [vmem:[%s1 + $0x1c8] sm:$0xff]
  %v467 = vld [vmem:[%s1 + $0x1d0] sm:$0xff]
  %v468 = vld [vmem:[%s1 + $0x1d8] sm:$0xff]
  %v469 = vld [vmem:[%s1 + $0x1e0] sm:$0xff]
  %v470 = vld [vmem:[%s1 + $0x1e8] sm:$0xff]
  %v471 = vld [vmem:[%s1 + $0x1f0] sm:$0xff]
  %v472 = vld [vmem:[%s1 + $0x1f8] sm:$0xff]
  %v473 = vld [vmem:[%s2] sm:$0xf]
  %v475 = vlaneseq
  %v476 = vshrl.u32 %v475, 7
  %v477 = vsub.s32 0, %v476
  %v478 = vrot.slane %v473, %v477
  %v479 = vlaneseq
  %v480 = vshrl.u32 %v479, 7
  %v481 = vsub.s32 1, %v480
  %v482 = vrot.slane %v473, %v481
  %v483 = vlaneseq
  %v484 = vshrl.u32 %v483, 7
  %v485 = vsub.s32 2, %v484
  %v486 = vrot.slane %v473, %v485
  %v487 = vlaneseq
  %v488 = vshrl.u32 %v487, 7
  %v489 = vsub.s32 3, %v488
  %v490 = vrot.slane %v473, %v489
  %495 = vmatprep.subr.mxu0 %v410
  %496 = vmatpush1.msra.mxu0 %v409
  %497 = vmatprep.subr.mxu0 %v414
  %498 = vmatpush1.msra.mxu0 %v413
  %499 = vmatprep.subr.mxu0 %v418
  %500 = vmatpush1.msra.mxu0 %v417
  %501 = vmatprep.subr.mxu0 %v422
  %502 = vmatpush1.msra.mxu0 %v421
  %503 = vmatprep.subr.mxu0 %v426
  %504 = vmatpush1.msra.mxu0 %v425
  %505 = vmatprep.subr.mxu0 %v430
  %506 = vmatpush1.msra.mxu0 %v429
  %507 = vmatprep.subr.mxu0 %v434
  %508 = vmatpush1.msra.mxu0 %v433
  %509 = vmatprep.subr.mxu0 %v438
  %510 = vmatpush1.msra.mxu0 %v437
  %511 = vmatprep.subr.mxu0 %v442
  %512 = vmatpush1.msra.mxu0 %v441
  %513 = vmatprep.subr.mxu0 %v446
  %514 = vmatpush1.msra.mxu0 %v445
  %515 = vmatprep.subr.mxu0 %v450
  %516 = vmatpush1.msra.mxu0 %v449
  %517 = vmatprep.subr.mxu0 %v454
  %518 = vmatpush1.msra.mxu0 %v453
  %519 = vmatprep.subr.mxu0 %v458
  %520 = vmatpush1.msra.mxu0 %v457
  %521 = vmatprep.subr.mxu0 %v462
  %522 = vmatpush1.msra.mxu0 %v461
  %523 = vmatprep.subr.mxu0 %v466
  %524 = vmatpush1.msra.mxu0 %v465
  %525 = vmatprep.subr.mxu0 %v470
  %526 = vmatpush1.msra.mxu0 %v469
  %527 = vmatprep.subr.mxu0 0.0
  %528 = vmatpush1.msra.mxu0 0.0
  %529 = vmatprep.subr.mxu0 0.0
  %530 = vmatpush1.msra.mxu0 0.0
  %531 = vmatprep.subr.mxu0 0.0
  %532 = vmatpush1.msra.mxu0 0.0
  %533 = vmatprep.subr.mxu0 0.0
  %534 = vmatpush1.msra.mxu0 0.0
  %535 = vmatprep.subr.mxu0 0.0
  %536 = vmatpush1.msra.mxu0 0.0
  %537 = vmatprep.subr.mxu0 0.0
  %538 = vmatpush1.msra.mxu0 0.0
  %539 = vmatprep.subr.mxu0 0.0
  %540 = vmatpush1.msra.mxu0 0.0
  %541 = vmatprep.subr.mxu0 0.0
  %542 = vmatpush1.msra.mxu0 0.0
  %543 = vmatprep.subr.mxu0 0.0
  %544 = vmatpush1.msra.mxu0 0.0
  %545 = vmatprep.subr.mxu0 0.0
  %546 = vmatpush1.msra.mxu0 0.0
  %547 = vmatprep.subr.mxu0 0.0
  %548 = vmatpush1.msra.mxu0 0.0
  %549 = vmatprep.subr.mxu0 0.0
  %550 = vmatpush1.msra.mxu0 0.0
  %551 = vmatprep.subr.mxu0 0.0
  %552 = vmatpush1.msra.mxu0 0.0
  %553 = vmatprep.subr.mxu0 0.0
  %554 = vmatpush1.msra.mxu0 0.0
  %555 = vmatprep.subr.mxu0 0.0
  %556 = vmatpush1.msra.mxu0 0.0
  %557 = vmatprep.subr.mxu0 0.0
  %558 = vmatpush1.msra.mxu0 0.0
  %559 = vmatprep.mubr.f32.mxu0 0.0
  %560 = vmatmul.mubr.f32.gmra.mrb[0].mxu0 %v407
  %v561 = vpop.f32.mrb[0].mxu0
  %v562 = vadd.f32 %v478, %v561
  %v563 = vpop.f32.mrb[0].mxu0
  %v564 = vadd.f32 %v482, %v563
  %565 = vmatprep.mubr.f32.mxu0 0.0
  %566 = vmatmul.mubr.f32.gmra.mrb[0].mxu0 %v408
  %v567 = vpop.f32.mrb[0].mxu0
  %v568 = vadd.f32 %v478, %v567
  %v569 = vpop.f32.mrb[0].mxu0
  %v570 = vadd.f32 %v482, %v569
  %571 = vdwg.mxu0
  %572 = vmatprep.subr.mxu0 %v412
  %573 = vmatpush1.msra.mxu0 %v411
  %574 = vmatprep.subr.mxu0 %v416
  %575 = vmatpush1.msra.mxu0 %v415
  %576 = vmatprep.subr.mxu0 %v420
  %577 = vmatpush1.msra.mxu0 %v419
  %578 = vmatprep.subr.mxu0 %v424
  %579 = vmatpush1.msra.mxu0 %v423
  %580 = vmatprep.subr.mxu0 %v428
  %581 = vmatpush1.msra.mxu0 %v427
  %582 = vmatprep.subr.mxu0 %v432
  %583 = vmatpush1.msra.mxu0 %v431
  %584 = vmatprep.subr.mxu0 %v436
  %585 = vmatpush1.msra.mxu0 %v435
  %586 = vmatprep.subr.mxu0 %v440
  %587 = vmatpush1.msra.mxu0 %v439
  %588 = vmatprep.subr.mxu0 %v444
  %589 = vmatpush1.msra.mxu0 %v443
  %590 = vmatprep.subr.mxu0 %v448
  %591 = vmatpush1.msra.mxu0 %v447
  %592 = vmatprep.subr.mxu0 %v452
  %593 = vmatpush1.msra.mxu0 %v451
  %594 = vmatprep.subr.mxu0 %v456
  %595 = vmatpush1.msra.mxu0 %v455
  %596 = vmatprep.subr.mxu0 %v460
  %597 = vmatpush1.msra.mxu0 %v459
  %598 = vmatprep.subr.mxu0 %v464
  %599 = vmatpush1.msra.mxu0 %v463
  %600 = vmatprep.subr.mxu0 %v468
  %601 = vmatpush1.msra.mxu0 %v467
  %602 = vmatprep.subr.mxu0 %v472
  %603 = vmatpush1.msra.mxu0 %v471
  %604 = vmatprep.subr.mxu0 0.0
  %605 = vmatpush1.msra.mxu0 0.0
  %606 = vmatprep.subr.mxu0 0.0
  %607 = vmatpush1.msra.mxu0 0.0
  %608 = vmatprep.subr.mxu0 0.0
  %609 = vmatpush1.msra.mxu0 0.0
  %610 = vmatprep.subr.mxu0 0.0
  %611 = vmatpush1.msra.mxu0 0.0
  %612 = vmatprep.subr.mxu0 0.0
  %613 = vmatpush1.msra.mxu0 0.0
  %614 = vmatprep.subr.mxu0 0.0
  %615 = vmatpush1.msra.mxu0 0.0
  %616 = vmatprep.subr.mxu0 0.0
  %617 = vmatpush1.msra.mxu0 0.0
  %618 = vmatprep.subr.mxu0 0.0
  %619 = vmatpush1.msra.mxu0 0.0
  %620 = vmatprep.subr.mxu0 0.0
  %621 = vmatpush1.msra.mxu0 0.0
  %622 = vmatprep.subr.mxu0 0.0
  %623 = vmatpush1.msra.mxu0 0.0
  %624 = vmatprep.subr.mxu0 0.0
  %625 = vmatpush1.msra.mxu0 0.0
  %626 = vmatprep.subr.mxu0 0.0
  %627 = vmatpush1.msra.mxu0 0.0
  %628 = vmatprep.subr.mxu0 0.0
  %629 = vmatpush1.msra.mxu0 0.0
  %630 = vmatprep.subr.mxu0 0.0
  %631 = vmatpush1.msra.mxu0 0.0
  %632 = vmatprep.subr.mxu0 0.0
  %633 = vmatpush1.msra.mxu0 0.0
  %634 = vmatprep.subr.mxu0 0.0
  %635 = vmatpush1.msra.mxu0 0.0
  %636 = vmatprep.mubr.f32.mxu0 0.0
  %637 = vmatmul.mubr.f32.gmra.mrb[0].mxu0 %v407
  %v638 = vpop.f32.mrb[0].mxu0
  %v639 = vadd.f32 %v486, %v638
  %v640 = vpop.f32.mrb[0].mxu0
  %v641 = vadd.f32 %v490, %v640
  %642 = vmatprep.mubr.f32.mxu0 0.0
  %643 = vmatmul.mubr.f32.gmra.mrb[0].mxu0 %v408
  %v644 = vpop.f32.mrb[0].mxu0
  %v645 = vadd.f32 %v486, %v644
  %v646 = vpop.f32.mrb[0].mxu0
  %v647 = vadd.f32 %v490, %v646
  %648 = vdwg.mxu0
  %649 = vst [vmem:[#allocation5] sm:$0xff] %v562
  %650 = vst [vmem:[#allocation5 + $0x8] sm:$0xff] %v564
  %651 = vst [vmem:[#allocation5 + $0x10] sm:$0xff] %v639
  %652 = vst [vmem:[#allocation5 + $0x18] sm:$0xff] %v641
  %653 = vst [vmem:[#allocation5 + $0x20] sm:$0xff] %v568
  %654 = vst [vmem:[#allocation5 + $0x28] sm:$0xff] %v570
  %655 = vst [vmem:[#allocation5 + $0x30] sm:$0xff] %v645
  %656 = vst [vmem:[#allocation5 + $0x38] sm:$0xff] %v647
  %v657 = vld [vmem:[#allocation5] sm:$0x3]
  %v658 = vld [vmem:[#allocation5 + $0x8] sm:$0x3]
  %v659 = vld [vmem:[#allocation5 + $0x10] sm:$0x3]
  %v660 = vld [vmem:[#allocation5 + $0x18] sm:$0x3]
  %v661 = vld [vmem:[%s3] sm:$0xff]
  %v662 = vld [vmem:[%s3 + $0x8] sm:$0xff]
  %v663 = vld [vmem:[%s3 + $0x10] sm:$0xff]
  %v664 = vld [vmem:[%s3 + $0x18] sm:$0xff]
  %v665 = vld [vmem:[%s3 + $0x20] sm:$0xff]
  %v666 = vld [vmem:[%s3 + $0x28] sm:$0xff]
  %v667 = vld [vmem:[%s3 + $0x30] sm:$0xff]
  %v668 = vld [vmem:[%s3 + $0x38] sm:$0xff]
  %v669 = vld [vmem:[%s3 + $0x40] sm:$0xff]
  %v670 = vld [vmem:[%s3 + $0x48] sm:$0xff]
  %v671 = vld [vmem:[%s3 + $0x50] sm:$0xff]
  %v672 = vld [vmem:[%s3 + $0x58] sm:$0xff]
  %v673 = vld [vmem:[%s3 + $0x60] sm:$0xff]
  %v674 = vld [vmem:[%s3 + $0x68] sm:$0xff]
  %v675 = vld [vmem:[%s3 + $0x70] sm:$0xff]
  %v676 = vld [vmem:[%s3 + $0x78] sm:$0xff]
  %v677 = vld [vmem:[%s3 + $0x80] sm:$0xff]
  %v678 = vld [vmem:[%s3 + $0x88] sm:$0xff]
  %v679 = vld [vmem:[%s3 + $0x90] sm:$0xff]
  %v680 = vld [vmem:[%s3 + $0x98] sm:$0xff]
  %v681 = vld [vmem:[%s3 + $0xa0] sm:$0xff]
  %v682 = vld [vmem:[%s3 + $0xa8] sm:$0xff]
  %v683 = vld [vmem:[%s3 + $0xb0] sm:$0xff]
  %v684 = vld [vmem:[%s3 + $0xb8] sm:$0xff]
  %v685 = vld [vmem:[%s3 + $0xc0] sm:$0xff]
  %v686 = vld [vmem:[%s3 + $0xc8] sm:$0xff]
  %v687 = vld [vmem:[%s3 + $0xd0] sm:$0xff]
  %v688 = vld [vmem:[%s3 + $0xd8] sm:$0xff]
  %v689 = vld [vmem:[%s3 + $0xe0] sm:$0xff]
  %v690 = vld [vmem:[%s3 + $0xe8] sm:$0xff]
  %v691 = vld [vmem:[%s3 + $0xf0] sm:$0xff]
  %v692 = vld [vmem:[%s3 + $0xf8] sm:$0xff]
  %v693 = vld [vmem:[%s3 + $0x100] sm:$0xff]
  %v694 = vld [vmem:[%s3 + $0x108] sm:$0xff]
  %v695 = vld [vmem:[%s3 + $0x110] sm:$0xff]
  %v696 = vld [vmem:[%s3 + $0x118] sm:$0xff]
  %v697 = vld [vmem:[%s3 + $0x120] sm:$0xff]
  %v698 = vld [vmem:[%s3 + $0x128] sm:$0xff]
  %v699 = vld [vmem:[%s3 + $0x130] sm:$0xff]
  %v700 = vld [vmem:[%s3 + $0x138] sm:$0xff]
  %v701 = vld [vmem:[%s3 + $0x140] sm:$0xff]
  %v702 = vld [vmem:[%s3 + $0x148] sm:$0xff]
  %v703 = vld [vmem:[%s3 + $0x150] sm:$0xff]
  %v704 = vld [vmem:[%s3 + $0x158] sm:$0xff]
  %v705 = vld [vmem:[%s3 + $0x160] sm:$0xff]
  %v706 = vld [vmem:[%s3 + $0x168] sm:$0xff]
  %v707 = vld [vmem:[%s3 + $0x170] sm:$0xff]
  %v708 = vld [vmem:[%s3 + $0x178] sm:$0xff]
  %v709 = vld [vmem:[%s3 + $0x180] sm:$0xff]
  %v710 = vld [vmem:[%s3 + $0x188] sm:$0xff]
  %v711 = vld [vmem:[%s3 + $0x190] sm:$0xff]
  %v712 = vld [vmem:[%s3 + $0x198] sm:$0xff]
  %v713 = vld [vmem:[%s3 + $0x1a0] sm:$0xff]
  %v714 = vld [vmem:[%s3 + $0x1a8] sm:$0xff]
  %v715 = vld [vmem:[%s3 + $0x1b0] sm:$0xff]
  %v716 = vld [vmem:[%s3 + $0x1b8] sm:$0xff]
  %v717 = vld [vmem:[%s3 + $0x1c0] sm:$0xff]
  %v718 = vld [vmem:[%s3 + $0x1c8] sm:$0xff]
  %v719 = vld [vmem:[%s3 + $0x1d0] sm:$0xff]
  %v720 = vld [vmem:[%s3 + $0x1d8] sm:$0xff]
  %v721 = vld [vmem:[%s3 + $0x1e0] sm:$0xff]
  %v722 = vld [vmem:[%s3 + $0x1e8] sm:$0xff]
  %v723 = vld [vmem:[%s3 + $0x1f0] sm:$0xff]
  %v724 = vld [vmem:[%s3 + $0x1f8] sm:$0xff]
  %725 = vmatprep.subr.mxu0 %v662
  %726 = vmatpush1.msra.mxu0 %v661
  %727 = vmatprep.subr.mxu0 %v666
  %728 = vmatpush1.msra.mxu0 %v665
  %729 = vmatprep.subr.mxu0 %v670
  %730 = vmatpush1.msra.mxu0 %v669
  %731 = vmatprep.subr.mxu0 %v674
  %732 = vmatpush1.msra.mxu0 %v673
  %733 = vmatprep.subr.mxu0 %v678
  %734 = vmatpush1.msra.mxu0 %v677
  %735 = vmatprep.subr.mxu0 %v682
  %736 = vmatpush1.msra.mxu0 %v681
  %737 = vmatprep.subr.mxu0 %v686
  %738 = vmatpush1.msra.mxu0 %v685
  %739 = vmatprep.subr.mxu0 %v690
  %740 = vmatpush1.msra.mxu0 %v689
  %741 = vmatprep.subr.mxu0 %v694
  %742 = vmatpush1.msra.mxu0 %v693
  %743 = vmatprep.subr.mxu0 %v698
  %744 = vmatpush1.msra.mxu0 %v697
  %745 = vmatprep.subr.mxu0 %v702
  %746 = vmatpush1.msra.mxu0 %v701
  %747 = vmatprep.subr.mxu0 %v706
  %748 = vmatpush1.msra.mxu0 %v705
  %749 = vmatprep.subr.mxu0 %v710
  %750 = vmatpush1.msra.mxu0 %v709
  %751 = vmatprep.subr.mxu0 %v714
  %752 = vmatpush1.msra.mxu0 %v713
  %753 = vmatprep.subr.mxu0 %v718
  %754 = vmatpush1.msra.mxu0 %v717
  %755 = vmatprep.subr.mxu0 %v722
  %756 = vmatpush1.msra.mxu0 %v721
  %757 = vmatprep.subr.mxu0 0.0
  %758 = vmatpush1.msra.mxu0 0.0
  %759 = vmatprep.subr.mxu0 0.0
  %760 = vmatpush1.msra.mxu0 0.0
  %761 = vmatprep.subr.mxu0 0.0
  %762 = vmatpush1.msra.mxu0 0.0
  %763 = vmatprep.subr.mxu0 0.0
  %764 = vmatpush1.msra.mxu0 0.0
  %765 = vmatprep.subr.mxu0 0.0
  %766 = vmatpush1.msra.mxu0 0.0
  %767 = vmatprep.subr.mxu0 0.0
  %768 = vmatpush1.msra.mxu0 0.0
  %769 = vmatprep.subr.mxu0 0.0
  %770 = vmatpush1.msra.mxu0 0.0
  %771 = vmatprep.subr.mxu0 0.0
  %772 = vmatpush1.msra.mxu0 0.0
  %773 = vmatprep.subr.mxu0 0.0
  %774 = vmatpush1.msra.mxu0 0.0
  %775 = vmatprep.subr.mxu0 0.0
  %776 = vmatpush1.msra.mxu0 0.0
  %777 = vmatprep.subr.mxu0 0.0
  %778 = vmatpush1.msra.mxu0 0.0
  %779 = vmatprep.subr.mxu0 0.0
  %780 = vmatpush1.msra.mxu0 0.0
  %781 = vmatprep.subr.mxu0 0.0
  %782 = vmatpush1.msra.mxu0 0.0
  %783 = vmatprep.subr.mxu0 0.0
  %784 = vmatpush1.msra.mxu0 0.0
  %785 = vmatprep.subr.mxu0 0.0
  %786 = vmatpush1.msra.mxu0 0.0
  %787 = vmatprep.subr.mxu0 0.0
  %788 = vmatpush1.msra.mxu0 0.0
  %789 = vmatprep.mubr.f32.mxu0 0.0
  %790 = vmatmul.mubr.f32.gmra.mrb[0].mxu0 0.0
  %v791 = vpop.f32.mrb[0].mxu0
  %v792 = vadd.f32 0.0, %v791
  %v793 = vpop.f32.mrb[0].mxu0
  %v794 = vadd.f32 0.0, %v793
  %795 = vdwg.mxu0
  %796 = vmatprep.subr.mxu0 %v664
  %797 = vmatpush1.msra.mxu0 %v663
  %798 = vmatprep.subr.mxu0 %v668
  %799 = vmatpush1.msra.mxu0 %v667
  %800 = vmatprep.subr.mxu0 %v672
  %801 = vmatpush1.msra.mxu0 %v671
  %802 = vmatprep.subr.mxu0 %v676
  %803 = vmatpush1.msra.mxu0 %v675
  %804 = vmatprep.subr.mxu0 %v680
  %805 = vmatpush1.msra.mxu0 %v679
  %806 = vmatprep.subr.mxu0 %v684
  %807 = vmatpush1.msra.mxu0 %v683
  %808 = vmatprep.subr.mxu0 %v688
  %809 = vmatpush1.msra.mxu0 %v687
  %810 = vmatprep.subr.mxu0 %v692
  %811 = vmatpush1.msra.mxu0 %v691
  %812 = vmatprep.subr.mxu0 %v696
  %813 = vmatpush1.msra.mxu0 %v695
  %814 = vmatprep.subr.mxu0 %v700
  %815 = vmatpush1.msra.mxu0 %v699
  %816 = vmatprep.subr.mxu0 %v704
  %817 = vmatpush1.msra.mxu0 %v703
  %818 = vmatprep.subr.mxu0 %v708
  %819 = vmatpush1.msra.mxu0 %v707
  %820 = vmatprep.subr.mxu0 %v712
  %821 = vmatpush1.msra.mxu0 %v711
  %822 = vmatprep.subr.mxu0 %v716
  %823 = vmatpush1.msra.mxu0 %v715
  %824 = vmatprep.subr.mxu0 %v720
  %825 = vmatpush1.msra.mxu0 %v719
  %826 = vmatprep.subr.mxu0 %v724
  %827 = vmatpush1.msra.mxu0 %v723
  %828 = vmatprep.subr.mxu0 0.0
  %829 = vmatpush1.msra.mxu0 0.0
  %830 = vmatprep.subr.mxu0 0.0
  %831 = vmatpush1.msra.mxu0 0.0
  %832 = vmatprep.subr.mxu0 0.0
  %833 = vmatpush1.msra.mxu0 0.0
  %834 = vmatprep.subr.mxu0 0.0
  %835 = vmatpush1.msra.mxu0 0.0
  %836 = vmatprep.subr.mxu0 0.0
  %837 = vmatpush1.msra.mxu0 0.0
  %838 = vmatprep.subr.mxu0 0.0
  %839 = vmatpush1.msra.mxu0 0.0
  %840 = vmatprep.subr.mxu0 0.0
  %841 = vmatpush1.msra.mxu0 0.0
  %842 = vmatprep.subr.mxu0 0.0
  %843 = vmatpush1.msra.mxu0 0.0
  %844 = vmatprep.subr.mxu0 0.0
  %845 = vmatpush1.msra.mxu0 0.0
  %846 = vmatprep.subr.mxu0 0.0
  %847 = vmatpush1.msra.mxu0 0.0
  %848 = vmatprep.subr.mxu0 0.0
  %849 = vmatpush1.msra.mxu0 0.0
  %850 = vmatprep.subr.mxu0 0.0
  %851 = vmatpush1.msra.mxu0 0.0
  %852 = vmatprep.subr.mxu0 0.0
  %853 = vmatpush1.msra.mxu0 0.0
  %854 = vmatprep.subr.mxu0 0.0
  %855 = vmatpush1.msra.mxu0 0.0
  %856 = vmatprep.subr.mxu0 0.0
  %857 = vmatpush1.msra.mxu0 0.0
  %858 = vmatprep.subr.mxu0 0.0
  %859 = vmatpush1.msra.mxu0 0.0
  %860 = vmatprep.mubr.f32.mxu0 0.0
  %861 = vmatmul.mubr.f32.gmra.mrb[0].mxu0 0.0
  %v862 = vpop.f32.mrb[0].mxu0
  %v863 = vadd.f32 0.0, %v862
  %v864 = vpop.f32.mrb[0].mxu0
  %v865 = vadd.f32 0.0, %v864
  %866 = vdwg.mxu0
  %v867 = vadd.f32 %v657, %v792
  %v868 = vadd.f32 %v658, %v794
  %v869 = vadd.f32 %v659, %v863
  %v870 = vadd.f32 %v660, %v865
  %v871 = vxor.u32 %v867, 2147483648
  %v872 = vmul.f32 %v871, 1.442695
  %v873 = vpow.pop %v872
  %v874 = vadd.f32 %v873, 1.0
  %v875 = vrcp.pop %v874
  %v876 = vmul.f32 1.0, %v875
  %v877 = vxor.u32 %v868, 2147483648
  %v878 = vmul.f32 %v877, 1.442695
  %v879 = vpow.pop %v878
  %v880 = vadd.f32 %v879, 1.0
  %v881 = vrcp.pop %v880
  %v882 = vmul.f32 1.0, %v881
  %v883 = vtanh.pop %v869
  %v884 = vxor.u32 %v870, 2147483648
  %v885 = vmul.f32 %v884, 1.442695
  %v886 = vpow.pop %v885
  %v887 = vadd.f32 %v886, 1.0
  %v888 = vrcp.pop %v887
  %v889 = vmul.f32 1.0, %v888
  %v890 = vmul.f32 %v882, 0.0
  %v891 = vmul.f32 %v876, %v883
  %v892 = vadd.f32 %v890, %v891
  %v893 = vtanh.pop %v892
  %v894 = vmul.f32 %v889, %v893
  %895 = vst [vmem:[#allocation6] sm:$0x3] %v894
  %v896 = vld [vmem:[#allocation5] sm:$0xc]
  %v897 = vld [vmem:[#allocation5 + $0x8] sm:$0xc]
  %v898 = vld [vmem:[#allocation5 + $0x10] sm:$0xc]
  %v899 = vld [vmem:[#allocation5 + $0x18] sm:$0xc]
  %v900 = vld [vmem:[%s3] sm:$0xff]
  %v901 = vld [vmem:[%s3 + $0x8] sm:$0xff]
  %v902 = vld [vmem:[%s3 + $0x10] sm:$0xff]
  %v903 = vld [vmem:[%s3 + $0x18] sm:$0xff]
  %v904 = vld [vmem:[%s3 + $0x20] sm:$0xff]
  %v905 = vld [vmem:[%s3 + $0x28] sm:$0xff]
  %v906 = vld [vmem:[%s3 + $0x30] sm:$0xff]
  %v907 = vld [vmem:[%s3 + $0x38] sm:$0xff]
  %v908 = vld [vmem:[%s3 + $0x40] sm:$0xff]
  %v909 = vld [vmem:[%s3 + $0x48] sm:$0xff]
  %v910 = vld [vmem:[%s3 + $0x50] sm:$0xff]
  %v911 = vld [vmem:[%s3 + $0x58] sm:$0xff]
  %v912 = vld [vmem:[%s3 + $0x60] sm:$0xff]
  %v913 = vld [vmem:[%s3 + $0x68] sm:$0xff]
  %v914 = vld [vmem:[%s3 + $0x70] sm:$0xff]
  %v915 = vld [vmem:[%s3 + $0x78] sm:$0xff]
  %v916 = vld [vmem:[%s3 + $0x80] sm:$0xff]
  %v917 = vld [vmem:[%s3 + $0x88] sm:$0xff]
  %v918 = vld [vmem:[%s3 + $0x90] sm:$0xff]
  %v919 = vld [vmem:[%s3 + $0x98] sm:$0xff]
  %v920 = vld [vmem:[%s3 + $0xa0] sm:$0xff]
  %v921 = vld [vmem:[%s3 + $0xa8] sm:$0xff]
  %v922 = vld [vmem:[%s3 + $0xb0] sm:$0xff]
  %v923 = vld [vmem:[%s3 + $0xb8] sm:$0xff]
  %v924 = vld [vmem:[%s3 + $0xc0] sm:$0xff]
  %v925 = vld [vmem:[%s3 + $0xc8] sm:$0xff]
  %v926 = vld [vmem:[%s3 + $0xd0] sm:$0xff]
  %v927 = vld [vmem:[%s3 + $0xd8] sm:$0xff]
  %v928 = vld [vmem:[%s3 + $0xe0] sm:$0xff]
  %v929 = vld [vmem:[%s3 + $0xe8] sm:$0xff]
  %v930 = vld [vmem:[%s3 + $0xf0] sm:$0xff]
  %v931 = vld [vmem:[%s3 + $0xf8] sm:$0xff]
  %v932 = vld [vmem:[%s3 + $0x100] sm:$0xff]
  %v933 = vld [vmem:[%s3 + $0x108] sm:$0xff]
  %v934 = vld [vmem:[%s3 + $0x110] sm:$0xff]
  %v935 = vld [vmem:[%s3 + $0x118] sm:$0xff]
  %v936 = vld [vmem:[%s3 + $0x120] sm:$0xff]
  %v937 = vld [vmem:[%s3 + $0x128] sm:$0xff]
  %v938 = vld [vmem:[%s3 + $0x130] sm:$0xff]
  %v939 = vld [vmem:[%s3 + $0x138] sm:$0xff]
  %v940 = vld [vmem:[%s3 + $0x140] sm:$0xff]
  %v941 = vld [vmem:[%s3 + $0x148] sm:$0xff]
  %v942 = vld [vmem:[%s3 + $0x150] sm:$0xff]
  %v943 = vld [vmem:[%s3 + $0x158] sm:$0xff]
  %v944 = vld [vmem:[%s3 + $0x160] sm:$0xff]
  %v945 = vld [vmem:[%s3 + $0x168] sm:$0xff]
  %v946 = vld [vmem:[%s3 + $0x170] sm:$0xff]
  %v947 = vld [vmem:[%s3 + $0x178] sm:$0xff]
  %v948 = vld [vmem:[%s3 + $0x180] sm:$0xff]
  %v949 = vld [vmem:[%s3 + $0x188] sm:$0xff]
  %v950 = vld [vmem:[%s3 + $0x190] sm:$0xff]
  %v951 = vld [vmem:[%s3 + $0x198] sm:$0xff]
  %v952 = vld [vmem:[%s3 + $0x1a0] sm:$0xff]
  %v953 = vld [vmem:[%s3 + $0x1a8] sm:$0xff]
  %v954 = vld [vmem:[%s3 + $0x1b0] sm:$0xff]
  %v955 = vld [vmem:[%s3 + $0x1b8] sm:$0xff]
  %v956 = vld [vmem:[%s3 + $0x1c0] sm:$0xff]
  %v957 = vld [vmem:[%s3 + $0x1c8] sm:$0xff]
  %v958 = vld [vmem:[%s3 + $0x1d0] sm:$0xff]
  %v959 = vld [vmem:[%s3 + $0x1d8] sm:$0xff]
  %v960 = vld [vmem:[%s3 + $0x1e0] sm:$0xff]
  %v961 = vld [vmem:[%s3 + $0x1e8] sm:$0xff]
  %v962 = vld [vmem:[%s3 + $0x1f0] sm:$0xff]
  %v963 = vld [vmem:[%s3 + $0x1f8] sm:$0xff]
  %964 = vmatprep.subr.mxu0 %v901
  %965 = vmatpush1.msra.mxu0 %v900
  %966 = vmatprep.subr.mxu0 %v905
  %967 = vmatpush1.msra.mxu0 %v904
  %968 = vmatprep.subr.mxu0 %v909
  %969 = vmatpush1.msra.mxu0 %v908
  %970 = vmatprep.subr.mxu0 %v913
  %971 = vmatpush1.msra.mxu0 %v912
  %972 = vmatprep.subr.mxu0 %v917
  %973 = vmatpush1.msra.mxu0 %v916
  %974 = vmatprep.subr.mxu0 %v921
  %975 = vmatpush1.msra.mxu0 %v920
  %976 = vmatprep.subr.mxu0 %v925
  %977 = vmatpush1.msra.mxu0 %v924
  %978 = vmatprep.subr.mxu0 %v929
  %979 = vmatpush1.msra.mxu0 %v928
  %980 = vmatprep.subr.mxu0 %v933
  %981 = vmatpush1.msra.mxu0 %v932
  %982 = vmatprep.subr.mxu0 %v937
  %983 = vmatpush1.msra.mxu0 %v936
  %984 = vmatprep.subr.mxu0 %v941
  %985 = vmatpush1.msra.mxu0 %v940
  %986 = vmatprep.subr.mxu0 %v945
  %987 = vmatpush1.msra.mxu0 %v944
  %988 = vmatprep.subr.mxu0 %v949
  %989 = vmatpush1.msra.mxu0 %v948
  %990 = vmatprep.subr.mxu0 %v953
  %991 = vmatpush1.msra.mxu0 %v952
  %992 = vmatprep.subr.mxu0 %v957
  %993 = vmatpush1.msra.mxu0 %v956
  %994 = vmatprep.subr.mxu0 %v961
  %995 = vmatpush1.msra.mxu0 %v960
  %996 = vmatprep.subr.mxu0 0.0
  %997 = vmatpush1.msra.mxu0 0.0
  %998 = vmatprep.subr.mxu0 0.0
  %999 = vmatpush1.msra.mxu0 0.0
  %1000 = vmatprep.subr.mxu0 0.0
  %1001 = vmatpush1.msra.mxu0 0.0
  %1002 = vmatprep.subr.mxu0 0.0
  %1003 = vmatpush1.msra.mxu0 0.0
  %1004 = vmatprep.subr.mxu0 0.0
  %1005 = vmatpush1.msra.mxu0 0.0
  %1006 = vmatprep.subr.mxu0 0.0
  %1007 = vmatpush1.msra.mxu0 0.0
  %1008 = vmatprep.subr.mxu0 0.0
  %1009 = vmatpush1.msra.mxu0 0.0
  %1010 = vmatprep.subr.mxu0 0.0
  %1011 = vmatpush1.msra.mxu0 0.0
  %1012 = vmatprep.subr.mxu0 0.0
  %1013 = vmatpush1.msra.mxu0 0.0
  %1014 = vmatprep.subr.mxu0 0.0
  %1015 = vmatpush1.msra.mxu0 0.0
  %1016 = vmatprep.subr.mxu0 0.0
  %1017 = vmatpush1.msra.mxu0 0.0
  %1018 = vmatprep.subr.mxu0 0.0
  %1019 = vmatpush1.msra.mxu0 0.0
  %1020 = vmatprep.subr.mxu0 0.0
  %1021 = vmatpush1.msra.mxu0 0.0
  %1022 = vmatprep.subr.mxu0 0.0
  %1023 = vmatpush1.msra.mxu0 0.0
  %1024 = vmatprep.subr.mxu0 0.0
  %1025 = vmatpush1.msra.mxu0 0.0
  %1026 = vmatprep.subr.mxu0 0.0
  %1027 = vmatpush1.msra.mxu0 0.0
  %1028 = vmatprep.mubr.f32.mxu0 0.0
  %1029 = vmatmul.mubr.f32.gmra.mrb[0].mxu0 %v894
  %v1030 = vpop.f32.mrb[0].mxu0
  %v1031 = vadd.f32 0.0, %v1030
  %v1032 = vpop.f32.mrb[0].mxu0
  %v1033 = vadd.f32 0.0, %v1032
  %1034 = vdwg.mxu0
  %1035 = vmatprep.subr.mxu0 %v903
  %1036 = vmatpush1.msra.mxu0 %v902
  %1037 = vmatprep.subr.mxu0 %v907
  %1038 = vmatpush1.msra.mxu0 %v906
  %1039 = vmatprep.subr.mxu0 %v911
  %1040 = vmatpush1.msra.mxu0 %v910
  %1041 = vmatprep.subr.mxu0 %v915
  %1042 = vmatpush1.msra.mxu0 %v914
  %1043 = vmatprep.subr.mxu0 %v919
  %1044 = vmatpush1.msra.mxu0 %v918
  %1045 = vmatprep.subr.mxu0 %v923
  %1046 = vmatpush1.msra.mxu0 %v922
  %1047 = vmatprep.subr.mxu0 %v927
  %1048 = vmatpush1.msra.mxu0 %v926
  %1049 = vmatprep.subr.mxu0 %v931
  %1050 = vmatpush1.msra.mxu0 %v930
  %1051 = vmatprep.subr.mxu0 %v935
  %1052 = vmatpush1.msra.mxu0 %v934
  %1053 = vmatprep.subr.mxu0 %v939
  %1054 = vmatpush1.msra.mxu0 %v938
  %1055 = vmatprep.subr.mxu0 %v943
  %1056 = vmatpush1.msra.mxu0 %v942
  %1057 = vmatprep.subr.mxu0 %v947
  %1058 = vmatpush1.msra.mxu0 %v946
  %1059 = vmatprep.subr.mxu0 %v951
  %1060 = vmatpush1.msra.mxu0 %v950
  %1061 = vmatprep.subr.mxu0 %v955
  %1062 = vmatpush1.msra.mxu0 %v954
  %1063 = vmatprep.subr.mxu0 %v959
  %1064 = vmatpush1.msra.mxu0 %v958
  %1065 = vmatprep.subr.mxu0 %v963
  %1066 = vmatpush1.msra.mxu0 %v962
  %1067 = vmatprep.subr.mxu0 0.0
  %1068 = vmatpush1.msra.mxu0 0.0
  %1069 = vmatprep.subr.mxu0 0.0
  %1070 = vmatpush1.msra.mxu0 0.0
  %1071 = vmatprep.subr.mxu0 0.0
  %1072 = vmatpush1.msra.mxu0 0.0
  %1073 = vmatprep.subr.mxu0 0.0
  %1074 = vmatpush1.msra.mxu0 0.0
  %1075 = vmatprep.subr.mxu0 0.0
  %1076 = vmatpush1.msra.mxu0 0.0
  %1077 = vmatprep.subr.mxu0 0.0
  %1078 = vmatpush1.msra.mxu0 0.0
  %1079 = vmatprep.subr.mxu0 0.0
  %1080 = vmatpush1.msra.mxu0 0.0
  %1081 = vmatprep.subr.mxu0 0.0
  %1082 = vmatpush1.msra.mxu0 0.0
  %1083 = vmatprep.subr.mxu0 0.0
  %1084 = vmatpush1.msra.mxu0 0.0
  %1085 = vmatprep.subr.mxu0 0.0
  %1086 = vmatpush1.msra.mxu0 0.0
  %1087 = vmatprep.subr.mxu0 0.0
  %1088 = vmatpush1.msra.mxu0 0.0
  %1089 = vmatprep.subr.mxu0 0.0
  %1090 = vmatpush1.msra.mxu0 0.0
  %1091 = vmatprep.subr.mxu0 0.0
  %1092 = vmatpush1.msra.mxu0 0.0
  %1093 = vmatprep.subr.mxu0 0.0
  %1094 = vmatpush1.msra.mxu0 0.0
  %1095 = vmatprep.subr.mxu0 0.0
  %1096 = vmatpush1.msra.mxu0 0.0
  %1097 = vmatprep.subr.mxu0 0.0
  %1098 = vmatpush1.msra.mxu0 0.0
  %1099 = vmatprep.mubr.f32.mxu0 0.0
  %1100 = vmatmul.mubr.f32.gmra.mrb[0].mxu0 %v894
  %v1101 = vpop.f32.mrb[0].mxu0
  %v1102 = vadd.f32 0.0, %v1101
  %v1103 = vpop.f32.mrb[0].mxu0
  %v1104 = vadd.f32 0.0, %v1103
  %1105 = vdwg.mxu0
  %v1110 = vrot.slane %v1031, 6
  %v1111 = vrot.slane %v1033, 6
  %v1112 = vrot.slane %v1102, 6
  %v1113 = vrot.slane %v1104, 6
  %v1118 = vadd.f32 %v896, %v1110
  %v1119 = vadd.f32 %v897, %v1111
  %v1120 = vadd.f32 %v898, %v1112
  %v1121 = vadd.f32 %v899, %v1113
  %v1122 = vxor.u32 %v1118, 2147483648
  %v1123 = vmul.f32 %v1122, 1.442695
  %v1124 = vpow.pop %v1123
  %v1125 = vadd.f32 %v1124, 1.0
  %v1126 = vrcp.pop %v1125
  %v1127 = vmul.f32 1.0, %v1126
  %v1128 = vxor.u32 %v1119, 2147483648
  %v1129 = vmul.f32 %v1128, 1.442695
  %v1130 = vpow.pop %v1129
  %v1131 = vadd.f32 %v1130, 1.0
  %v1132 = vrcp.pop %v1131
  %v1133 = vmul.f32 1.0, %v1132
  %v1134 = vtanh.pop %v1120
  %v1135 = vxor.u32 %v1121, 2147483648
  %v1136 = vmul.f32 %v1135, 1.442695
  %v1137 = vpow.pop %v1136
  %v1138 = vadd.f32 %v1137, 1.0
  %v1139 = vrcp.pop %v1138
  %v1140 = vmul.f32 1.0, %v1139
  %v1142 = vrot.slane %v892, 6
  %v1144 = vmul.f32 %v1133, %v1142
  %v1145 = vmul.f32 %v1127, %v1134
  %v1146 = vadd.f32 %v1144, %v1145
  %v1147 = vtanh.pop %v1146
  %v1148 = vmul.f32 %v1140, %v1147
  %1149 = vst [vmem:[#allocation6] sm:$0xc] %v1148
  %v1150 = vld [vmem:[#allocation5] sm:$0x30]
  %v1151 = vld [vmem:[#allocation5 + $0x8] sm:$0x30]
  %v1152 = vld [vmem:[#allocation5 + $0x10] sm:$0x30]
  %v1153 = vld [vmem:[#allocation5 + $0x18] sm:$0x30]
  %v1154 = vld [vmem:[%s3] sm:$0xff]
  %v1155 = vld [vmem:[%s3 + $0x8] sm:$0xff]
  %v1156 = vld [vmem:[%s3 + $0x10] sm:$0xff]
  %v1157 = vld [vmem:[%s3 + $0x18] sm:$0xff]
  %v1158 = vld [vmem:[%s3 + $0x20] sm:$0xff]
  %v1159 = vld [vmem:[%s3 + $0x28] sm:$0xff]
  %v1160 = vld [vmem:[%s3 + $0x30] sm:$0xff]
  %v1161 = vld [vmem:[%s3 + $0x38] sm:$0xff]
  %v1162 = vld [vmem:[%s3 + $0x40] sm:$0xff]
  %v1163 = vld [vmem:[%s3 + $0x48] sm:$0xff]
  %v1164 = vld [vmem:[%s3 + $0x50] sm:$0xff]
  %v1165 = vld [vmem:[%s3 + $0x58] sm:$0xff]
  %v1166 = vld [vmem:[%s3 + $0x60] sm:$0xff]
  %v1167 = vld [vmem:[%s3 + $0x68] sm:$0xff]
  %v1168 = vld [vmem:[%s3 + $0x70] sm:$0xff]
  %v1169 = vld [vmem:[%s3 + $0x78] sm:$0xff]
  %v1170 = vld [vmem:[%s3 + $0x80] sm:$0xff]
  %v1171 = vld [vmem:[%s3 + $0x88] sm:$0xff]
  %v1172 = vld [vmem:[%s3 + $0x90] sm:$0xff]
  %v1173 = vld [vmem:[%s3 + $0x98] sm:$0xff]
  %v1174 = vld [vmem:[%s3 + $0xa0] sm:$0xff]
  %v1175 = vld [vmem:[%s3 + $0xa8] sm:$0xff]
  %v1176 = vld [vmem:[%s3 + $0xb0] sm:$0xff]
  %v1177 = vld [vmem:[%s3 + $0xb8] sm:$0xff]
  %v1178 = vld [vmem:[%s3 + $0xc0] sm:$0xff]
  %v1179 = vld [vmem:[%s3 + $0xc8] sm:$0xff]
  %v1180 = vld [vmem:[%s3 + $0xd0] sm:$0xff]
  %v1181 = vld [vmem:[%s3 + $0xd8] sm:$0xff]
  %v1182 = vld [vmem:[%s3 + $0xe0] sm:$0xff]
  %v1183 = vld [vmem:[%s3 + $0xe8] sm:$0xff]
  %v1184 = vld [vmem:[%s3 + $0xf0] sm:$0xff]
  %v1185 = vld [vmem:[%s3 + $0xf8] sm:$0xff]
  %v1186 = vld [vmem:[%s3 + $0x100] sm:$0xff]
  %v1187 = vld [vmem:[%s3 + $0x108] sm:$0xff]
  %v1188 = vld [vmem:[%s3 + $0x110] sm:$0xff]
  %v1189 = vld [vmem:[%s3 + $0x118] sm:$0xff]
  %v1190 = vld [vmem:[%s3 + $0x120] sm:$0xff]
  %v1191 = vld [vmem:[%s3 + $0x128] sm:$0xff]
  %v1192 = vld [vmem:[%s3 + $0x130] sm:$0xff]
  %v1193 = vld [vmem:[%s3 + $0x138] sm:$0xff]
  %v1194 = vld [vmem:[%s3 + $0x140] sm:$0xff]
  %v1195 = vld [vmem:[%s3 + $0x148] sm:$0xff]
  %v1196 = vld [vmem:[%s3 + $0x150] sm:$0xff]
  %v1197 = vld [vmem:[%s3 + $0x158] sm:$0xff]
  %v1198 = vld [vmem:[%s3 + $0x160] sm:$0xff]
  %v1199 = vld [vmem:[%s3 + $0x168] sm:$0xff]
  %v1200 = vld [vmem:[%s3 + $0x170] sm:$0xff]
  %v1201 = vld [vmem:[%s3 + $0x178] sm:$0xff]
  %v1202 = vld [vmem:[%s3 + $0x180] sm:$0xff]
  %v1203 = vld [vmem:[%s3 + $0x188] sm:$0xff]
  %v1204 = vld [vmem:[%s3 + $0x190] sm:$0xff]
  %v1205 = vld [vmem:[%s3 + $0x198] sm:$0xff]
  %v1206 = vld [vmem:[%s3 + $0x1a0] sm:$0xff]
  %v1207 = vld [vmem:[%s3 + $0x1a8] sm:$0xff]
  %v1208 = vld [vmem:[%s3 + $0x1b0] sm:$0xff]
  %v1209 = vld [vmem:[%s3 + $0x1b8] sm:$0xff]
  %v1210 = vld [vmem:[%s3 + $0x1c0] sm:$0xff]
  %v1211 = vld [vmem:[%s3 + $0x1c8] sm:$0xff]
  %v1212 = vld [vmem:[%s3 + $0x1d0] sm:$0xff]
  %v1213 = vld [vmem:[%s3 + $0x1d8] sm:$0xff]
  %v1214 = vld [vmem:[%s3 + $0x1e0] sm:$0xff]
  %v1215 = vld [vmem:[%s3 + $0x1e8] sm:$0xff]
  %v1216 = vld [vmem:[%s3 + $0x1f0] sm:$0xff]
  %v1217 = vld [vmem:[%s3 + $0x1f8] sm:$0xff]
  %v1219 = vrot.slane %v1148, 2
  %1221 = vmatprep.subr.mxu0 %v1155
  %1222 = vmatpush1.msra.mxu0 %v1154
  %1223 = vmatprep.subr.mxu0 %v1159
  %1224 = vmatpush1.msra.mxu0 %v1158
  %1225 = vmatprep.subr.mxu0 %v1163
  %1226 = vmatpush1.msra.mxu0 %v1162
  %1227 = vmatprep.subr.mxu0 %v1167
  %1228 = vmatpush1.msra.mxu0 %v1166
  %1229 = vmatprep.subr.mxu0 %v1171
  %1230 = vmatpush1.msra.mxu0 %v1170
  %1231 = vmatprep.subr.mxu0 %v1175
  %1232 = vmatpush1.msra.mxu0 %v1174
  %1233 = vmatprep.subr.mxu0 %v1179
  %1234 = vmatpush1.msra.mxu0 %v1178
  %1235 = vmatprep.subr.mxu0 %v1183
  %1236 = vmatpush1.msra.mxu0 %v1182
  %1237 = vmatprep.subr.mxu0 %v1187
  %1238 = vmatpush1.msra.mxu0 %v1186
  %1239 = vmatprep.subr.mxu0 %v1191
  %1240 = vmatpush1.msra.mxu0 %v1190
  %1241 = vmatprep.subr.mxu0 %v1195
  %1242 = vmatpush1.msra.mxu0 %v1194
  %1243 = vmatprep.subr.mxu0 %v1199
  %1244 = vmatpush1.msra.mxu0 %v1198
  %1245 = vmatprep.subr.mxu0 %v1203
  %1246 = vmatpush1.msra.mxu0 %v1202
  %1247 = vmatprep.subr.mxu0 %v1207
  %1248 = vmatpush1.msra.mxu0 %v1206
  %1249 = vmatprep.subr.mxu0 %v1211
  %1250 = vmatpush1.msra.mxu0 %v1210
  %1251 = vmatprep.subr.mxu0 %v1215
  %1252 = vmatpush1.msra.mxu0 %v1214
  %1253 = vmatprep.subr.mxu0 0.0
  %1254 = vmatpush1.msra.mxu0 0.0
  %1255 = vmatprep.subr.mxu0 0.0
  %1256 = vmatpush1.msra.mxu0 0.0
  %1257 = vmatprep.subr.mxu0 0.0
  %1258 = vmatpush1.msra.mxu0 0.0
  %1259 = vmatprep.subr.mxu0 0.0
  %1260 = vmatpush1.msra.mxu0 0.0
  %1261 = vmatprep.subr.mxu0 0.0
  %1262 = vmatpush1.msra.mxu0 0.0
  %1263 = vmatprep.subr.mxu0 0.0
  %1264 = vmatpush1.msra.mxu0 0.0
  %1265 = vmatprep.subr.mxu0 0.0
  %1266 = vmatpush1.msra.mxu0 0.0
  %1267 = vmatprep.subr.mxu0 0.0
  %1268 = vmatpush1.msra.mxu0 0.0
  %1269 = vmatprep.subr.mxu0 0.0
  %1270 = vmatpush1.msra.mxu0 0.0
  %1271 = vmatprep.subr.mxu0 0.0
  %1272 = vmatpush1.msra.mxu0 0.0
  %1273 = vmatprep.subr.mxu0 0.0
  %1274 = vmatpush1.msra.mxu0 0.0
  %1275 = vmatprep.subr.mxu0 0.0
  %1276 = vmatpush1.msra.mxu0 0.0
  %1277 = vmatprep.subr.mxu0 0.0
  %1278 = vmatpush1.msra.mxu0 0.0
  %1279 = vmatprep.subr.mxu0 0.0
  %1280 = vmatpush1.msra.mxu0 0.0
  %1281 = vmatprep.subr.mxu0 0.0
  %1282 = vmatpush1.msra.mxu0 0.0
  %1283 = vmatprep.subr.mxu0 0.0
  %1284 = vmatpush1.msra.mxu0 0.0
  %1285 = vmatprep.mubr.f32.mxu0 0.0
  %1286 = vmatmul.mubr.f32.gmra.mrb[0].mxu0 %v1219
  %v1287 = vpop.f32.mrb[0].mxu0
  %v1288 = vadd.f32 0.0, %v1287
  %v1289 = vpop.f32.mrb[0].mxu0
  %v1290 = vadd.f32 0.0, %v1289
  %1291 = vdwg.mxu0
  %1292 = vmatprep.subr.mxu0 %v1157
  %1293 = vmatpush1.msra.mxu0 %v1156
  %1294 = vmatprep.subr.mxu0 %v1161
  %1295 = vmatpush1.msra.mxu0 %v1160
  %1296 = vmatprep.subr.mxu0 %v1165
  %1297 = vmatpush1.msra.mxu0 %v1164
  %1298 = vmatprep.subr.mxu0 %v1169
  %1299 = vmatpush1.msra.mxu0 %v1168
  %1300 = vmatprep.subr.mxu0 %v1173
  %1301 = vmatpush1.msra.mxu0 %v1172
  %1302 = vmatprep.subr.mxu0 %v1177
  %1303 = vmatpush1.msra.mxu0 %v1176
  %1304 = vmatprep.subr.mxu0 %v1181
  %1305 = vmatpush1.msra.mxu0 %v1180
  %1306 = vmatprep.subr.mxu0 %v1185
  %1307 = vmatpush1.msra.mxu0 %v1184
  %1308 = vmatprep.subr.mxu0 %v1189
  %1309 = vmatpush1.msra.mxu0 %v1188
  %1310 = vmatprep.subr.mxu0 %v1193
  %1311 = vmatpush1.msra.mxu0 %v1192
  %1312 = vmatprep.subr.mxu0 %v1197
  %1313 = vmatpush1.msra.mxu0 %v1196
  %1314 = vmatprep.subr.mxu0 %v1201
  %1315 = vmatpush1.msra.mxu0 %v1200
  %1316 = vmatprep.subr.mxu0 %v1205
  %1317 = vmatpush1.msra.mxu0 %v1204
  %1318 = vmatprep.subr.mxu0 %v1209
  %1319 = vmatpush1.msra.mxu0 %v1208
  %1320 = vmatprep.subr.mxu0 %v1213
  %1321 = vmatpush1.msra.mxu0 %v1212
  %1322 = vmatprep.subr.mxu0 %v1217
  %1323 = vmatpush1.msra.mxu0 %v1216
  %1324 = vmatprep.subr.mxu0 0.0
  %1325 = vmatpush1.msra.mxu0 0.0
  %1326 = vmatprep.subr.mxu0 0.0
  %1327 = vmatpush1.msra.mxu0 0.0
  %1328 = vmatprep.subr.mxu0 0.0
  %1329 = vmatpush1.msra.mxu0 0.0
  %1330 = vmatprep.subr.mxu0 0.0
  %1331 = vmatpush1.msra.mxu0 0.0
  %1332 = vmatprep.subr.mxu0 0.0
  %1333 = vmatpush1.msra.mxu0 0.0
  %1334 = vmatprep.subr.mxu0 0.0
  %1335 = vmatpush1.msra.mxu0 0.0
  %1336 = vmatprep.subr.mxu0 0.0
  %1337 = vmatpush1.msra.mxu0 0.0
  %1338 = vmatprep.subr.mxu0 0.0
  %1339 = vmatpush1.msra.mxu0 0.0
  %1340 = vmatprep.subr.mxu0 0.0
  %1341 = vmatpush1.msra.mxu0 0.0
  %1342 = vmatprep.subr.mxu0 0.0
  %1343 = vmatpush1.msra.mxu0 0.0
  %1344 = vmatprep.subr.mxu0 0.0
  %1345 = vmatpush1.msra.mxu0 0.0
  %1346 = vmatprep.subr.mxu0 0.0
  %1347 = vmatpush1.msra.mxu0 0.0
  %1348 = vmatprep.subr.mxu0 0.0
  %1349 = vmatpush1.msra.mxu0 0.0
  %1350 = vmatprep.subr.mxu0 0.0
  %1351 = vmatpush1.msra.mxu0 0.0
  %1352 = vmatprep.subr.mxu0 0.0
  %1353 = vmatpush1.msra.mxu0 0.0
  %1354 = vmatprep.subr.mxu0 0.0
  %1355 = vmatpush1.msra.mxu0 0.0
  %1356 = vmatprep.mubr.f32.mxu0 0.0
  %1357 = vmatmul.mubr.f32.gmra.mrb[0].mxu0 %v1219
  %v1358 = vpop.f32.mrb[0].mxu0
  %v1359 = vadd.f32 0.0, %v1358
  %v1360 = vpop.f32.mrb[0].mxu0
  %v1361 = vadd.f32 0.0, %v1360
  %1362 = vdwg.mxu0
  %v1367 = vrot.slane %v1288, 4
  %v1368 = vrot.slane %v1290, 4
  %v1369 = vrot.slane %v1359, 4
  %v1370 = vrot.slane %v1361, 4
  %v1375 = vadd.f32 %v1150, %v1367
  %v1376 = vadd.f32 %v1151, %v1368
  %v1377 = vadd.f32 %v1152, %v1369
  %v1378 = vadd.f32 %v1153, %v1370
  %v1379 = vxor.u32 %v1375, 2147483648
  %v1380 = vmul.f32 %v1379, 1.442695
  %v1381 = vpow.pop %v1380
  %v1382 = vadd.f32 %v1381, 1.0
  %v1383 = vrcp.pop %v1382
  %v1384 = vmul.f32 1.0, %v1383
  %v1385 = vxor.u32 %v1376, 2147483648
  %v1386 = vmul.f32 %v1385, 1.442695
  %v1387 = vpow.pop %v1386
  %v1388 = vadd.f32 %v1387, 1.0
  %v1389 = vrcp.pop %v1388
  %v1390 = vmul.f32 1.0, %v1389
  %v1391 = vtanh.pop %v1377
  %v1392 = vxor.u32 %v1378, 2147483648
  %v1393 = vmul.f32 %v1392, 1.442695
  %v1394 = vpow.pop %v1393
  %v1395 = vadd.f32 %v1394, 1.0
  %v1396 = vrcp.pop %v1395
  %v1397 = vmul.f32 1.0, %v1396
  %v1399 = vrot.slane %v1146, 6
  %v1401 = vmul.f32 %v1390, %v1399
  %v1402 = vmul.f32 %v1384, %v1391
  %v1403 = vadd.f32 %v1401, %v1402
  %v1404 = vtanh.pop %v1403
  %v1405 = vmul.f32 %v1397, %v1404
  %1406 = vst [vmem:[#allocation6] sm:$0x30] %v1405
  %v1407 = vld [vmem:[#allocation5] sm:$0xc0]
  %v1408 = vld [vmem:[#allocation5 + $0x8] sm:$0xc0]
  %v1409 = vld [vmem:[#allocation5 + $0x10] sm:$0xc0]
  %v1410 = vld [vmem:[#allocation5 + $0x18] sm:$0xc0]
  %v1411 = vld [vmem:[%s3] sm:$0xff]
  %v1412 = vld [vmem:[%s3 + $0x8] sm:$0xff]
  %v1413 = vld [vmem:[%s3 + $0x10] sm:$0xff]
  %v1414 = vld [vmem:[%s3 + $0x18] sm:$0xff]
  %v1415 = vld [vmem:[%s3 + $0x20] sm:$0xff]
  %v1416 = vld [vmem:[%s3 + $0x28] sm:$0xff]
  %v1417 = vld [vmem:[%s3 + $0x30] sm:$0xff]
  %v1418 = vld [vmem:[%s3 + $0x38] sm:$0xff]
  %v1419 = vld [vmem:[%s3 + $0x40] sm:$0xff]
  %v1420 = vld [vmem:[%s3 + $0x48] sm:$0xff]
  %v1421 = vld [vmem:[%s3 + $0x50] sm:$0xff]
  %v1422 = vld [vmem:[%s3 + $0x58] sm:$0xff]
  %v1423 = vld [vmem:[%s3 + $0x60] sm:$0xff]
  %v1424 = vld [vmem:[%s3 + $0x68] sm:$0xff]
  %v1425 = vld [vmem:[%s3 + $0x70] sm:$0xff]
  %v1426 = vld [vmem:[%s3 + $0x78] sm:$0xff]
  %v1427 = vld [vmem:[%s3 + $0x80] sm:$0xff]
  %v1428 = vld [vmem:[%s3 + $0x88] sm:$0xff]
  %v1429 = vld [vmem:[%s3 + $0x90] sm:$0xff]
  %v1430 = vld [vmem:[%s3 + $0x98] sm:$0xff]
  %v1431 = vld [vmem:[%s3 + $0xa0] sm:$0xff]
  %v1432 = vld [vmem:[%s3 + $0xa8] sm:$0xff]
  %v1433 = vld [vmem:[%s3 + $0xb0] sm:$0xff]
  %v1434 = vld [vmem:[%s3 + $0xb8] sm:$0xff]
  %v1435 = vld [vmem:[%s3 + $0xc0] sm:$0xff]
  %v1436 = vld [vmem:[%s3 + $0xc8] sm:$0xff]
  %v1437 = vld [vmem:[%s3 + $0xd0] sm:$0xff]
  %v1438 = vld [vmem:[%s3 + $0xd8] sm:$0xff]
  %v1439 = vld [vmem:[%s3 + $0xe0] sm:$0xff]
  %v1440 = vld [vmem:[%s3 + $0xe8] sm:$0xff]
  %v1441 = vld [vmem:[%s3 + $0xf0] sm:$0xff]
  %v1442 = vld [vmem:[%s3 + $0xf8] sm:$0xff]
  %v1443 = vld [vmem:[%s3 + $0x100] sm:$0xff]
  %v1444 = vld [vmem:[%s3 + $0x108] sm:$0xff]
  %v1445 = vld [vmem:[%s3 + $0x110] sm:$0xff]
  %v1446 = vld [vmem:[%s3 + $0x118] sm:$0xff]
  %v1447 = vld [vmem:[%s3 + $0x120] sm:$0xff]
  %v1448 = vld [vmem:[%s3 + $0x128] sm:$0xff]
  %v1449 = vld [vmem:[%s3 + $0x130] sm:$0xff]
  %v1450 = vld [vmem:[%s3 + $0x138] sm:$0xff]
  %v1451 = vld [vmem:[%s3 + $0x140] sm:$0xff]
  %v1452 = vld [vmem:[%s3 + $0x148] sm:$0xff]
  %v1453 = vld [vmem:[%s3 + $0x150] sm:$0xff]
  %v1454 = vld [vmem:[%s3 + $0x158] sm:$0xff]
  %v1455 = vld [vmem:[%s3 + $0x160] sm:$0xff]
  %v1456 = vld [vmem:[%s3 + $0x168] sm:$0xff]
  %v1457 = vld [vmem:[%s3 + $0x170] sm:$0xff]
  %v1458 = vld [vmem:[%s3 + $0x178] sm:$0xff]
  %v1459 = vld [vmem:[%s3 + $0x180] sm:$0xff]
  %v1460 = vld [vmem:[%s3 + $0x188] sm:$0xff]
  %v1461 = vld [vmem:[%s3 + $0x190] sm:$0xff]
  %v1462 = vld [vmem:[%s3 + $0x198] sm:$0xff]
  %v1463 = vld [vmem:[%s3 + $0x1a0] sm:$0xff]
  %v1464 = vld [vmem:[%s3 + $0x1a8] sm:$0xff]
  %v1465 = vld [vmem:[%s3 + $0x1b0] sm:$0xff]
  %v1466 = vld [vmem:[%s3 + $0x1b8] sm:$0xff]
  %v1467 = vld [vmem:[%s3 + $0x1c0] sm:$0xff]
  %v1468 = vld [vmem:[%s3 + $0x1c8] sm:$0xff]
  %v1469 = vld [vmem:[%s3 + $0x1d0] sm:$0xff]
  %v1470 = vld [vmem:[%s3 + $0x1d8] sm:$0xff]
  %v1471 = vld [vmem:[%s3 + $0x1e0] sm:$0xff]
  %v1472 = vld [vmem:[%s3 + $0x1e8] sm:$0xff]
  %v1473 = vld [vmem:[%s3 + $0x1f0] sm:$0xff]
  %v1474 = vld [vmem:[%s3 + $0x1f8] sm:$0xff]
  %v1476 = vrot.slane %v1405, 4
  %1478 = vmatprep.subr.mxu0 %v1412
  %1479 = vmatpush1.msra.mxu0 %v1411
  %1480 = vmatprep.subr.mxu0 %v1416
  %1481 = vmatpush1.msra.mxu0 %v1415
  %1482 = vmatprep.subr.mxu0 %v1420
  %1483 = vmatpush1.msra.mxu0 %v1419
  %1484 = vmatprep.subr.mxu0 %v1424
  %1485 = vmatpush1.msra.mxu0 %v1423
  %1486 = vmatprep.subr.mxu0 %v1428
  %1487 = vmatpush1.msra.mxu0 %v1427
  %1488 = vmatprep.subr.mxu0 %v1432
  %1489 = vmatpush1.msra.mxu0 %v1431
  %1490 = vmatprep.subr.mxu0 %v1436
  %1491 = vmatpush1.msra.mxu0 %v1435
  %1492 = vmatprep.subr.mxu0 %v1440
  %1493 = vmatpush1.msra.mxu0 %v1439
  %1494 = vmatprep.subr.mxu0 %v1444
  %1495 = vmatpush1.msra.mxu0 %v1443
  %1496 = vmatprep.subr.mxu0 %v1448
  %1497 = vmatpush1.msra.mxu0 %v1447
  %1498 = vmatprep.subr.mxu0 %v1452
  %1499 = vmatpush1.msra.mxu0 %v1451
  %1500 = vmatprep.subr.mxu0 %v1456
  %1501 = vmatpush1.msra.mxu0 %v1455
  %1502 = vmatprep.subr.mxu0 %v1460
  %1503 = vmatpush1.msra.mxu0 %v1459
  %1504 = vmatprep.subr.mxu0 %v1464
  %1505 = vmatpush1.msra.mxu0 %v1463
  %1506 = vmatprep.subr.mxu0 %v1468
  %1507 = vmatpush1.msra.mxu0 %v1467
  %1508 = vmatprep.subr.mxu0 %v1472
  %1509 = vmatpush1.msra.mxu0 %v1471
  %1510 = vmatprep.subr.mxu0 0.0
  %1511 = vmatpush1.msra.mxu0 0.0
  %1512 = vmatprep.subr.mxu0 0.0
  %1513 = vmatpush1.msra.mxu0 0.0
  %1514 = vmatprep.subr.mxu0 0.0
  %1515 = vmatpush1.msra.mxu0 0.0
  %1516 = vmatprep.subr.mxu0 0.0
  %1517 = vmatpush1.msra.mxu0 0.0
  %1518 = vmatprep.subr.mxu0 0.0
  %1519 = vmatpush1.msra.mxu0 0.0
  %1520 = vmatprep.subr.mxu0 0.0
  %1521 = vmatpush1.msra.mxu0 0.0
  %1522 = vmatprep.subr.mxu0 0.0
  %1523 = vmatpush1.msra.mxu0 0.0
  %1524 = vmatprep.subr.mxu0 0.0
  %1525 = vmatpush1.msra.mxu0 0.0
  %1526 = vmatprep.subr.mxu0 0.0
  %1527 = vmatpush1.msra.mxu0 0.0
  %1528 = vmatprep.subr.mxu0 0.0
  %1529 = vmatpush1.msra.mxu0 0.0
  %1530 = vmatprep.subr.mxu0 0.0
  %1531 = vmatpush1.msra.mxu0 0.0
  %1532 = vmatprep.subr.mxu0 0.0
  %1533 = vmatpush1.msra.mxu0 0.0
  %1534 = vmatprep.subr.mxu0 0.0
  %1535 = vmatpush1.msra.mxu0 0.0
  %1536 = vmatprep.subr.mxu0 0.0
  %1537 = vmatpush1.msra.mxu0 0.0
  %1538 = vmatprep.subr.mxu0 0.0
  %1539 = vmatpush1.msra.mxu0 0.0
  %1540 = vmatprep.subr.mxu0 0.0
  %1541 = vmatpush1.msra.mxu0 0.0
  %1542 = vmatprep.mubr.f32.mxu0 0.0
  %1543 = vmatmul.mubr.f32.gmra.mrb[0].mxu0 %v1476
  %v1544 = vpop.f32.mrb[0].mxu0
  %v1545 = vadd.f32 0.0, %v1544
  %v1546 = vpop.f32.mrb[0].mxu0
  %v1547 = vadd.f32 0.0, %v1546
  %1548 = vdwg.mxu0
  %1549 = vmatprep.subr.mxu0 %v1414
  %1550 = vmatpush1.msra.mxu0 %v1413
  %1551 = vmatprep.subr.mxu0 %v1418
  %1552 = vmatpush1.msra.mxu0 %v1417
  %1553 = vmatprep.subr.mxu0 %v1422
  %1554 = vmatpush1.msra.mxu0 %v1421
  %1555 = vmatprep.subr.mxu0 %v1426
  %1556 = vmatpush1.msra.mxu0 %v1425
  %1557 = vmatprep.subr.mxu0 %v1430
  %1558 = vmatpush1.msra.mxu0 %v1429
  %1559 = vmatprep.subr.mxu0 %v1434
  %1560 = vmatpush1.msra.mxu0 %v1433
  %1561 = vmatprep.subr.mxu0 %v1438
  %1562 = vmatpush1.msra.mxu0 %v1437
  %1563 = vmatprep.subr.mxu0 %v1442
  %1564 = vmatpush1.msra.mxu0 %v1441
  %1565 = vmatprep.subr.mxu0 %v1446
  %1566 = vmatpush1.msra.mxu0 %v1445
  %1567 = vmatprep.subr.mxu0 %v1450
  %1568 = vmatpush1.msra.mxu0 %v1449
  %1569 = vmatprep.subr.mxu0 %v1454
  %1570 = vmatpush1.msra.mxu0 %v1453
  %1571 = vmatprep.subr.mxu0 %v1458
  %1572 = vmatpush1.msra.mxu0 %v1457
  %1573 = vmatprep.subr.mxu0 %v1462
  %1574 = vmatpush1.msra.mxu0 %v1461
  %1575 = vmatprep.subr.mxu0 %v1466
  %1576 = vmatpush1.msra.mxu0 %v1465
  %1577 = vmatprep.subr.mxu0 %v1470
  %1578 = vmatpush1.msra.mxu0 %v1469
  %1579 = vmatprep.subr.mxu0 %v1474
  %1580 = vmatpush1.msra.mxu0 %v1473
  %1581 = vmatprep.subr.mxu0 0.0
  %1582 = vmatpush1.msra.mxu0 0.0
  %1583 = vmatprep.subr.mxu0 0.0
  %1584 = vmatpush1.msra.mxu0 0.0
  %1585 = vmatprep.subr.mxu0 0.0
  %1586 = vmatpush1.msra.mxu0 0.0
  %1587 = vmatprep.subr.mxu0 0.0
  %1588 = vmatpush1.msra.mxu0 0.0
  %1589 = vmatprep.subr.mxu0 0.0
  %1590 = vmatpush1.msra.mxu0 0.0
  %1591 = vmatprep.subr.mxu0 0.0
  %1592 = vmatpush1.msra.mxu0 0.0
  %1593 = vmatprep.subr.mxu0 0.0
  %1594 = vmatpush1.msra.mxu0 0.0
  %1595 = vmatprep.subr.mxu0 0.0
  %1596 = vmatpush1.msra.mxu0 0.0
  %1597 = vmatprep.subr.mxu0 0.0
  %1598 = vmatpush1.msra.mxu0 0.0
  %1599 = vmatprep.subr.mxu0 0.0
  %1600 = vmatpush1.msra.mxu0 0.0
  %1601 = vmatprep.subr.mxu0 0.0
  %1602 = vmatpush1.msra.mxu0 0.0
  %1603 = vmatprep.subr.mxu0 0.0
  %1604 = vmatpush1.msra.mxu0 0.0
  %1605 = vmatprep.subr.mxu0 0.0
  %1606 = vmatpush1.msra.mxu0 0.0
  %1607 = vmatprep.subr.mxu0 0.0
  %1608 = vmatpush1.msra.mxu0 0.0
  %1609 = vmatprep.subr.mxu0 0.0
  %1610 = vmatpush1.msra.mxu0 0.0
  %1611 = vmatprep.subr.mxu0 0.0
  %1612 = vmatpush1.msra.mxu0 0.0
  %1613 = vmatprep.mubr.f32.mxu0 0.0
  %1614 = vmatmul.mubr.f32.gmra.mrb[0].mxu0 %v1476
  %v1615 = vpop.f32.mrb[0].mxu0
  %v1616 = vadd.f32 0.0, %v1615
  %v1617 = vpop.f32.mrb[0].mxu0
  %v1618 = vadd.f32 0.0, %v1617
  %1619 = vdwg.mxu0
  %v1624 = vrot.slane %v1545, 2
  %v1625 = vrot.slane %v1547, 2
  %v1626 = vrot.slane %v1616, 2
  %v1627 = vrot.slane %v1618, 2
  %v1632 = vadd.f32 %v1407, %v1624
  %v1633 = vadd.f32 %v1408, %v1625
  %v1634 = vadd.f32 %v1409, %v1626
  %v1635 = vadd.f32 %v1410, %v1627
  %v1636 = vxor.u32 %v1632, 2147483648
  %v1637 = vmul.f32 %v1636, 1.442695
  %v1638 = vpow.pop %v1637
  %v1639 = vadd.f32 %v1638, 1.0
  %v1640 = vrcp.pop %v1639
  %v1641 = vmul.f32 1.0, %v1640
  %v1642 = vxor.u32 %v1633, 2147483648
  %v1643 = vmul.f32 %v1642, 1.442695
  %v1644 = vpow.pop %v1643
  %v1645 = vadd.f32 %v1644, 1.0
  %v1646 = vrcp.pop %v1645
  %v1647 = vmul.f32 1.0, %v1646
  %v1648 = vtanh.pop %v1634
  %v1649 = vxor.u32 %v1635, 2147483648
  %v1650 = vmul.f32 %v1649, 1.442695
  %v1651 = vpow.pop %v1650
  %v1652 = vadd.f32 %v1651, 1.0
  %v1653 = vrcp.pop %v1652
  %v1654 = vmul.f32 1.0, %v1653
  %v1656 = vrot.slane %v1403, 6
  %v1658 = vmul.f32 %v1647, %v1656
  %v1659 = vmul.f32 %v1641, %v1648
  %v1660 = vadd.f32 %v1658, %v1659
  %v1661 = vtanh.pop %v1660
  %v1662 = vmul.f32 %v1654, %v1661
  %1663 = vst [vmem:[#allocation6] sm:$0xc0] %v1662
  %v1664 = vld [vmem:[#allocation5 + $0x20] sm:$0x3]
  %v1665 = vld [vmem:[#allocation5 + $0x28] sm:$0x3]
  %v1666 = vld [vmem:[#allocation5 + $0x30] sm:$0x3]
  %v1667 = vld [vmem:[#allocation5 + $0x38] sm:$0x3]
  %v1668 = vld [vmem:[%s3] sm:$0xff]
  %v1669 = vld [vmem:[%s3 + $0x8] sm:$0xff]
  %v1670 = vld [vmem:[%s3 + $0x10] sm:$0xff]
  %v1671 = vld [vmem:[%s3 + $0x18] sm:$0xff]
  %v1672 = vld [vmem:[%s3 + $0x20] sm:$0xff]
  %v1673 = vld [vmem:[%s3 + $0x28] sm:$0xff]
  %v1674 = vld [vmem:[%s3 + $0x30] sm:$0xff]
  %v1675 = vld [vmem:[%s3 + $0x38] sm:$0xff]
  %v1676 = vld [vmem:[%s3 + $0x40] sm:$0xff]
  %v1677 = vld [vmem:[%s3 + $0x48] sm:$0xff]
  %v1678 = vld [vmem:[%s3 + $0x50] sm:$0xff]
  %v1679 = vld [vmem:[%s3 + $0x58] sm:$0xff]
  %v1680 = vld [vmem:[%s3 + $0x60] sm:$0xff]
  %v1681 = vld [vmem:[%s3 + $0x68] sm:$0xff]
  %v1682 = vld [vmem:[%s3 + $0x70] sm:$0xff]
  %v1683 = vld [vmem:[%s3 + $0x78] sm:$0xff]
  %v1684 = vld [vmem:[%s3 + $0x80] sm:$0xff]
  %v1685 = vld [vmem:[%s3 + $0x88] sm:$0xff]
  %v1686 = vld [vmem:[%s3 + $0x90] sm:$0xff]
  %v1687 = vld [vmem:[%s3 + $0x98] sm:$0xff]
  %v1688 = vld [vmem:[%s3 + $0xa0] sm:$0xff]
  %v1689 = vld [vmem:[%s3 + $0xa8] sm:$0xff]
  %v1690 = vld [vmem:[%s3 + $0xb0] sm:$0xff]
  %v1691 = vld [vmem:[%s3 + $0xb8] sm:$0xff]
  %v1692 = vld [vmem:[%s3 + $0xc0] sm:$0xff]
  %v1693 = vld [vmem:[%s3 + $0xc8] sm:$0xff]
  %v1694 = vld [vmem:[%s3 + $0xd0] sm:$0xff]
  %v1695 = vld [vmem:[%s3 + $0xd8] sm:$0xff]
  %v1696 = vld [vmem:[%s3 + $0xe0] sm:$0xff]
  %v1697 = vld [vmem:[%s3 + $0xe8] sm:$0xff]
  %v1698 = vld [vmem:[%s3 + $0xf0] sm:$0xff]
  %v1699 = vld [vmem:[%s3 + $0xf8] sm:$0xff]
  %v1700 = vld [vmem:[%s3 + $0x100] sm:$0xff]
  %v1701 = vld [vmem:[%s3 + $0x108] sm:$0xff]
  %v1702 = vld [vmem:[%s3 + $0x110] sm:$0xff]
  %v1703 = vld [vmem:[%s3 + $0x118] sm:$0xff]
  %v1704 = vld [vmem:[%s3 + $0x120] sm:$0xff]
  %v1705 = vld [vmem:[%s3 + $0x128] sm:$0xff]
  %v1706 = vld [vmem:[%s3 + $0x130] sm:$0xff]
  %v1707 = vld [vmem:[%s3 + $0x138] sm:$0xff]
  %v1708 = vld [vmem:[%s3 + $0x140] sm:$0xff]
  %v1709 = vld [vmem:[%s3 + $0x148] sm:$0xff]
  %v1710 = vld [vmem:[%s3 + $0x150] sm:$0xff]
  %v1711 = vld [vmem:[%s3 + $0x158] sm:$0xff]
  %v1712 = vld [vmem:[%s3 + $0x160] sm:$0xff]
  %v1713 = vld [vmem:[%s3 + $0x168] sm:$0xff]
  %v1714 = vld [vmem:[%s3 + $0x170] sm:$0xff]
  %v1715 = vld [vmem:[%s3 + $0x178] sm:$0xff]
  %v1716 = vld [vmem:[%s3 + $0x180] sm:$0xff]
  %v1717 = vld [vmem:[%s3 + $0x188] sm:$0xff]
  %v1718 = vld [vmem:[%s3 + $0x190] sm:$0xff]
  %v1719 = vld [vmem:[%s3 + $0x198] sm:$0xff]
  %v1720 = vld [vmem:[%s3 + $0x1a0] sm:$0xff]
  %v1721 = vld [vmem:[%s3 + $0x1a8] sm:$0xff]
  %v1722 = vld [vmem:[%s3 + $0x1b0] sm:$0xff]
  %v1723 = vld [vmem:[%s3 + $0x1b8] sm:$0xff]
  %v1724 = vld [vmem:[%s3 + $0x1c0] sm:$0xff]
  %v1725 = vld [vmem:[%s3 + $0x1c8] sm:$0xff]
  %v1726 = vld [vmem:[%s3 + $0x1d0] sm:$0xff]
  %v1727 = vld [vmem:[%s3 + $0x1d8] sm:$0xff]
  %v1728 = vld [vmem:[%s3 + $0x1e0] sm:$0xff]
  %v1729 = vld [vmem:[%s3 + $0x1e8] sm:$0xff]
  %v1730 = vld [vmem:[%s3 + $0x1f0] sm:$0xff]
  %v1731 = vld [vmem:[%s3 + $0x1f8] sm:$0xff]
  %v1733 = vrot.slane %v1662, 6
  %1735 = vmatprep.subr.mxu0 %v1669
  %1736 = vmatpush1.msra.mxu0 %v1668
  %1737 = vmatprep.subr.mxu0 %v1673
  %1738 = vmatpush1.msra.mxu0 %v1672
  %1739 = vmatprep.subr.mxu0 %v1677
  %1740 = vmatpush1.msra.mxu0 %v1676
  %1741 = vmatprep.subr.mxu0 %v1681
  %1742 = vmatpush1.msra.mxu0 %v1680
  %1743 = vmatprep.subr.mxu0 %v1685
  %1744 = vmatpush1.msra.mxu0 %v1684
  %1745 = vmatprep.subr.mxu0 %v1689
  %1746 = vmatpush1.msra.mxu0 %v1688
  %1747 = vmatprep.subr.mxu0 %v1693
  %1748 = vmatpush1.msra.mxu0 %v1692
  %1749 = vmatprep.subr.mxu0 %v1697
  %1750 = vmatpush1.msra.mxu0 %v1696
  %1751 = vmatprep.subr.mxu0 %v1701
  %1752 = vmatpush1.msra.mxu0 %v1700
  %1753 = vmatprep.subr.mxu0 %v1705
  %1754 = vmatpush1.msra.mxu0 %v1704
  %1755 = vmatprep.subr.mxu0 %v1709
  %1756 = vmatpush1.msra.mxu0 %v1708
  %1757 = vmatprep.subr.mxu0 %v1713
  %1758 = vmatpush1.msra.mxu0 %v1712
  %1759 = vmatprep.subr.mxu0 %v1717
  %1760 = vmatpush1.msra.mxu0 %v1716
  %1761 = vmatprep.subr.mxu0 %v1721
  %1762 = vmatpush1.msra.mxu0 %v1720
  %1763 = vmatprep.subr.mxu0 %v1725
  %1764 = vmatpush1.msra.mxu0 %v1724
  %1765 = vmatprep.subr.mxu0 %v1729
  %1766 = vmatpush1.msra.mxu0 %v1728
  %1767 = vmatprep.subr.mxu0 0.0
  %1768 = vmatpush1.msra.mxu0 0.0
  %1769 = vmatprep.subr.mxu0 0.0
  %1770 = vmatpush1.msra.mxu0 0.0
  %1771 = vmatprep.subr.mxu0 0.0
  %1772 = vmatpush1.msra.mxu0 0.0
  %1773 = vmatprep.subr.mxu0 0.0
  %1774 = vmatpush1.msra.mxu0 0.0
  %1775 = vmatprep.subr.mxu0 0.0
  %1776 = vmatpush1.msra.mxu0 0.0
  %1777 = vmatprep.subr.mxu0 0.0
  %1778 = vmatpush1.msra.mxu0 0.0
  %1779 = vmatprep.subr.mxu0 0.0
  %1780 = vmatpush1.msra.mxu0 0.0
  %1781 = vmatprep.subr.mxu0 0.0
  %1782 = vmatpush1.msra.mxu0 0.0
  %1783 = vmatprep.subr.mxu0 0.0
  %1784 = vmatpush1.msra.mxu0 0.0
  %1785 = vmatprep.subr.mxu0 0.0
  %1786 = vmatpush1.msra.mxu0 0.0
  %1787 = vmatprep.subr.mxu0 0.0
  %1788 = vmatpush1.msra.mxu0 0.0
  %1789 = vmatprep.subr.mxu0 0.0
  %1790 = vmatpush1.msra.mxu0 0.0
  %1791 = vmatprep.subr.mxu0 0.0
  %1792 = vmatpush1.msra.mxu0 0.0
  %1793 = vmatprep.subr.mxu0 0.0
  %1794 = vmatpush1.msra.mxu0 0.0
  %1795 = vmatprep.subr.mxu0 0.0
  %1796 = vmatpush1.msra.mxu0 0.0
  %1797 = vmatprep.subr.mxu0 0.0
  %1798 = vmatpush1.msra.mxu0 0.0
  %1799 = vmatprep.mubr.f32.mxu0 0.0
  %1800 = vmatmul.mubr.f32.gmra.mrb[0].mxu0 %v1733
  %v1801 = vpop.f32.mrb[0].mxu0
  %v1802 = vadd.f32 0.0, %v1801
  %v1803 = vpop.f32.mrb[0].mxu0
  %v1804 = vadd.f32 0.0, %v1803
  %1805 = vdwg.mxu0
  %1806 = vmatprep.subr.mxu0 %v1671
  %1807 = vmatpush1.msra.mxu0 %v1670
  %1808 = vmatprep.subr.mxu0 %v1675
  %1809 = vmatpush1.msra.mxu0 %v1674
  %1810 = vmatprep.subr.mxu0 %v1679
  %1811 = vmatpush1.msra.mxu0 %v1678
  %1812 = vmatprep.subr.mxu0 %v1683
  %1813 = vmatpush1.msra.mxu0 %v1682
  %1814 = vmatprep.subr.mxu0 %v1687
  %1815 = vmatpush1.msra.mxu0 %v1686
  %1816 = vmatprep.subr.mxu0 %v1691
  %1817 = vmatpush1.msra.mxu0 %v1690
  %1818 = vmatprep.subr.mxu0 %v1695
  %1819 = vmatpush1.msra.mxu0 %v1694
  %1820 = vmatprep.subr.mxu0 %v1699
  %1821 = vmatpush1.msra.mxu0 %v1698
  %1822 = vmatprep.subr.mxu0 %v1703
  %1823 = vmatpush1.msra.mxu0 %v1702
  %1824 = vmatprep.subr.mxu0 %v1707
  %1825 = vmatpush1.msra.mxu0 %v1706
  %1826 = vmatprep.subr.mxu0 %v1711
  %1827 = vmatpush1.msra.mxu0 %v1710
  %1828 = vmatprep.subr.mxu0 %v1715
  %1829 = vmatpush1.msra.mxu0 %v1714
  %1830 = vmatprep.subr.mxu0 %v1719
  %1831 = vmatpush1.msra.mxu0 %v1718
  %1832 = vmatprep.subr.mxu0 %v1723
  %1833 = vmatpush1.msra.mxu0 %v1722
  %1834 = vmatprep.subr.mxu0 %v1727
  %1835 = vmatpush1.msra.mxu0 %v1726
  %1836 = vmatprep.subr.mxu0 %v1731
  %1837 = vmatpush1.msra.mxu0 %v1730
  %1838 = vmatprep.subr.mxu0 0.0
  %1839 = vmatpush1.msra.mxu0 0.0
  %1840 = vmatprep.subr.mxu0 0.0
  %1841 = vmatpush1.msra.mxu0 0.0
  %1842 = vmatprep.subr.mxu0 0.0
  %1843 = vmatpush1.msra.mxu0 0.0
  %1844 = vmatprep.subr.mxu0 0.0
  %1845 = vmatpush1.msra.mxu0 0.0
  %1846 = vmatprep.subr.mxu0 0.0
  %1847 = vmatpush1.msra.mxu0 0.0
  %1848 = vmatprep.subr.mxu0 0.0
  %1849 = vmatpush1.msra.mxu0 0.0
  %1850 = vmatprep.subr.mxu0 0.0
  %1851 = vmatpush1.msra.mxu0 0.0
  %1852 = vmatprep.subr.mxu0 0.0
  %1853 = vmatpush1.msra.mxu0 0.0
  %1854 = vmatprep.subr.mxu0 0.0
  %1855 = vmatpush1.msra.mxu0 0.0
  %1856 = vmatprep.subr.mxu0 0.0
  %1857 = vmatpush1.msra.mxu0 0.0
  %1858 = vmatprep.subr.mxu0 0.0
  %1859 = vmatpush1.msra.mxu0 0.0
  %1860 = vmatprep.subr.mxu0 0.0
  %1861 = vmatpush1.msra.mxu0 0.0
  %1862 = vmatprep.subr.mxu0 0.0
  %1863 = vmatpush1.msra.mxu0 0.0
  %1864 = vmatprep.subr.mxu0 0.0
  %1865 = vmatpush1.msra.mxu0 0.0
  %1866 = vmatprep.subr.mxu0 0.0
  %1867 = vmatpush1.msra.mxu0 0.0
  %1868 = vmatprep.subr.mxu0 0.0
  %1869 = vmatpush1.msra.mxu0 0.0
  %1870 = vmatprep.mubr.f32.mxu0 0.0
  %1871 = vmatmul.mubr.f32.gmra.mrb[0].mxu0 %v1733
  %v1872 = vpop.f32.mrb[0].mxu0
  %v1873 = vadd.f32 0.0, %v1872
  %v1874 = vpop.f32.mrb[0].mxu0
  %v1875 = vadd.f32 0.0, %v1874
  %1876 = vdwg.mxu0
  %v1877 = vadd.f32 %v1664, %v1802
  %v1878 = vadd.f32 %v1665, %v1804
  %v1879 = vadd.f32 %v1666, %v1873
  %v1880 = vadd.f32 %v1667, %v1875
  %v1881 = vxor.u32 %v1877, 2147483648
  %v1882 = vmul.f32 %v1881, 1.442695
  %v1883 = vpow.pop %v1882
  %v1884 = vadd.f32 %v1883, 1.0
  %v1885 = vrcp.pop %v1884
  %v1886 = vmul.f32 1.0, %v1885
  %v1887 = vxor.u32 %v1878, 2147483648
  %v1888 = vmul.f32 %v1887, 1.442695
  %v1889 = vpow.pop %v1888
  %v1890 = vadd.f32 %v1889, 1.0
  %v1891 = vrcp.pop %v1890
  %v1892 = vmul.f32 1.0, %v1891
  %v1893 = vtanh.pop %v1879
  %v1894 = vxor.u32 %v1880, 2147483648
  %v1895 = vmul.f32 %v1894, 1.442695
  %v1896 = vpow.pop %v1895
  %v1897 = vadd.f32 %v1896, 1.0
  %v1898 = vrcp.pop %v1897
  %v1899 = vmul.f32 1.0, %v1898
  %v1901 = vrot.slane %v1660, 6
  %v1903 = vmul.f32 %v1892, %v1901
  %v1904 = vmul.f32 %v1886, %v1893
  %v1905 = vadd.f32 %v1903, %v1904
  %v1906 = vtanh.pop %v1905
  %v1907 = vmul.f32 %v1899, %v1906
  %1908 = vst [vmem:[#allocation6 + $0x8] sm:$0x3] %v1907
  %v1909 = vld [vmem:[#allocation5 + $0x20] sm:$0xc]
  %v1910 = vld [vmem:[#allocation5 + $0x28] sm:$0xc]
  %v1911 = vld [vmem:[#allocation5 + $0x30] sm:$0xc]
  %v1912 = vld [vmem:[#allocation5 + $0x38] sm:$0xc]
  %v1913 = vld [vmem:[%s3] sm:$0xff]
  %v1914 = vld [vmem:[%s3 + $0x8] sm:$0xff]
  %v1915 = vld [vmem:[%s3 + $0x10] sm:$0xff]
  %v1916 = vld [vmem:[%s3 + $0x18] sm:$0xff]
  %v1917 = vld [vmem:[%s3 + $0x20] sm:$0xff]
  %v1918 = vld [vmem:[%s3 + $0x28] sm:$0xff]
  %v1919 = vld [vmem:[%s3 + $0x30] sm:$0xff]
  %v1920 = vld [vmem:[%s3 + $0x38] sm:$0xff]
  %v1921 = vld [vmem:[%s3 + $0x40] sm:$0xff]
  %v1922 = vld [vmem:[%s3 + $0x48] sm:$0xff]
  %v1923 = vld [vmem:[%s3 + $0x50] sm:$0xff]
  %v1924 = vld [vmem:[%s3 + $0x58] sm:$0xff]
  %v1925 = vld [vmem:[%s3 + $0x60] sm:$0xff]
  %v1926 = vld [vmem:[%s3 + $0x68] sm:$0xff]
  %v1927 = vld [vmem:[%s3 + $0x70] sm:$0xff]
  %v1928 = vld [vmem:[%s3 + $0x78] sm:$0xff]
  %v1929 = vld [vmem:[%s3 + $0x80] sm:$0xff]
  %v1930 = vld [vmem:[%s3 + $0x88] sm:$0xff]
  %v1931 = vld [vmem:[%s3 + $0x90] sm:$0xff]
  %v1932 = vld [vmem:[%s3 + $0x98] sm:$0xff]
  %v1933 = vld [vmem:[%s3 + $0xa0] sm:$0xff]
  %v1934 = vld [vmem:[%s3 + $0xa8] sm:$0xff]
  %v1935 = vld [vmem:[%s3 + $0xb0] sm:$0xff]
  %v1936 = vld [vmem:[%s3 + $0xb8] sm:$0xff]
  %v1937 = vld [vmem:[%s3 + $0xc0] sm:$0xff]
  %v1938 = vld [vmem:[%s3 + $0xc8] sm:$0xff]
  %v1939 = vld [vmem:[%s3 + $0xd0] sm:$0xff]
  %v1940 = vld [vmem:[%s3 + $0xd8] sm:$0xff]
  %v1941 = vld [vmem:[%s3 + $0xe0] sm:$0xff]
  %v1942 = vld [vmem:[%s3 + $0xe8] sm:$0xff]
  %v1943 = vld [vmem:[%s3 + $0xf0] sm:$0xff]
  %v1944 = vld [vmem:[%s3 + $0xf8] sm:$0xff]
  %v1945 = vld [vmem:[%s3 + $0x100] sm:$0xff]
  %v1946 = vld [vmem:[%s3 + $0x108] sm:$0xff]
  %v1947 = vld [vmem:[%s3 + $0x110] sm:$0xff]
  %v1948 = vld [vmem:[%s3 + $0x118] sm:$0xff]
  %v1949 = vld [vmem:[%s3 + $0x120] sm:$0xff]
  %v1950 = vld [vmem:[%s3 + $0x128] sm:$0xff]
  %v1951 = vld [vmem:[%s3 + $0x130] sm:$0xff]
  %v1952 = vld [vmem:[%s3 + $0x138] sm:$0xff]
  %v1953 = vld [vmem:[%s3 + $0x140] sm:$0xff]
  %v1954 = vld [vmem:[%s3 + $0x148] sm:$0xff]
  %v1955 = vld [vmem:[%s3 + $0x150] sm:$0xff]
  %v1956 = vld [vmem:[%s3 + $0x158] sm:$0xff]
  %v1957 = vld [vmem:[%s3 + $0x160] sm:$0xff]
  %v1958 = vld [vmem:[%s3 + $0x168] sm:$0xff]
  %v1959 = vld [vmem:[%s3 + $0x170] sm:$0xff]
  %v1960 = vld [vmem:[%s3 + $0x178] sm:$0xff]
  %v1961 = vld [vmem:[%s3 + $0x180] sm:$0xff]
  %v1962 = vld [vmem:[%s3 + $0x188] sm:$0xff]
  %v1963 = vld [vmem:[%s3 + $0x190] sm:$0xff]
  %v1964 = vld [vmem:[%s3 + $0x198] sm:$0xff]
  %v1965 = vld [vmem:[%s3 + $0x1a0] sm:$0xff]
  %v1966 = vld [vmem:[%s3 + $0x1a8] sm:$0xff]
  %v1967 = vld [vmem:[%s3 + $0x1b0] sm:$0xff]
  %v1968 = vld [vmem:[%s3 + $0x1b8] sm:$0xff]
  %v1969 = vld [vmem:[%s3 + $0x1c0] sm:$0xff]
  %v1970 = vld [vmem:[%s3 + $0x1c8] sm:$0xff]
  %v1971 = vld [vmem:[%s3 + $0x1d0] sm:$0xff]
  %v1972 = vld [vmem:[%s3 + $0x1d8] sm:$0xff]
  %v1973 = vld [vmem:[%s3 + $0x1e0] sm:$0xff]
  %v1974 = vld [vmem:[%s3 + $0x1e8] sm:$0xff]
  %v1975 = vld [vmem:[%s3 + $0x1f0] sm:$0xff]
  %v1976 = vld [vmem:[%s3 + $0x1f8] sm:$0xff]
  %1977 = vmatprep.subr.mxu0 %v1914
  %1978 = vmatpush1.msra.mxu0 %v1913
  %1979 = vmatprep.subr.mxu0 %v1918
  %1980 = vmatpush1.msra.mxu0 %v1917
  %1981 = vmatprep.subr.mxu0 %v1922
  %1982 = vmatpush1.msra.mxu0 %v1921
  %1983 = vmatprep.subr.mxu0 %v1926
  %1984 = vmatpush1.msra.mxu0 %v1925
  %1985 = vmatprep.subr.mxu0 %v1930
  %1986 = vmatpush1.msra.mxu0 %v1929
  %1987 = vmatprep.subr.mxu0 %v1934
  %1988 = vmatpush1.msra.mxu0 %v1933
  %1989 = vmatprep.subr.mxu0 %v1938
  %1990 = vmatpush1.msra.mxu0 %v1937
  %1991 = vmatprep.subr.mxu0 %v1942
  %1992 = vmatpush1.msra.mxu0 %v1941
  %1993 = vmatprep.subr.mxu0 %v1946
  %1994 = vmatpush1.msra.mxu0 %v1945
  %1995 = vmatprep.subr.mxu0 %v1950
  %1996 = vmatpush1.msra.mxu0 %v1949
  %1997 = vmatprep.subr.mxu0 %v1954
  %1998 = vmatpush1.msra.mxu0 %v1953
  %1999 = vmatprep.subr.mxu0 %v1958
  %2000 = vmatpush1.msra.mxu0 %v1957
  %2001 = vmatprep.subr.mxu0 %v1962
  %2002 = vmatpush1.msra.mxu0 %v1961
  %2003 = vmatprep.subr.mxu0 %v1966
  %2004 = vmatpush1.msra.mxu0 %v1965
  %2005 = vmatprep.subr.mxu0 %v1970
  %2006 = vmatpush1.msra.mxu0 %v1969
  %2007 = vmatprep.subr.mxu0 %v1974
  %2008 = vmatpush1.msra.mxu0 %v1973
  %2009 = vmatprep.subr.mxu0 0.0
  %2010 = vmatpush1.msra.mxu0 0.0
  %2011 = vmatprep.subr.mxu0 0.0
  %2012 = vmatpush1.msra.mxu0 0.0
  %2013 = vmatprep.subr.mxu0 0.0
  %2014 = vmatpush1.msra.mxu0 0.0
  %2015 = vmatprep.subr.mxu0 0.0
  %2016 = vmatpush1.msra.mxu0 0.0
  %2017 = vmatprep.subr.mxu0 0.0
  %2018 = vmatpush1.msra.mxu0 0.0
  %2019 = vmatprep.subr.mxu0 0.0
  %2020 = vmatpush1.msra.mxu0 0.0
  %2021 = vmatprep.subr.mxu0 0.0
  %2022 = vmatpush1.msra.mxu0 0.0
  %2023 = vmatprep.subr.mxu0 0.0
  %2024 = vmatpush1.msra.mxu0 0.0
  %2025 = vmatprep.subr.mxu0 0.0
  %2026 = vmatpush1.msra.mxu0 0.0
  %2027 = vmatprep.subr.mxu0 0.0
  %2028 = vmatpush1.msra.mxu0 0.0
  %2029 = vmatprep.subr.mxu0 0.0
  %2030 = vmatpush1.msra.mxu0 0.0
  %2031 = vmatprep.subr.mxu0 0.0
  %2032 = vmatpush1.msra.mxu0 0.0
  %2033 = vmatprep.subr.mxu0 0.0
  %2034 = vmatpush1.msra.mxu0 0.0
  %2035 = vmatprep.subr.mxu0 0.0
  %2036 = vmatpush1.msra.mxu0 0.0
  %2037 = vmatprep.subr.mxu0 0.0
  %2038 = vmatpush1.msra.mxu0 0.0
  %2039 = vmatprep.subr.mxu0 0.0
  %2040 = vmatpush1.msra.mxu0 0.0
  %2041 = vmatprep.mubr.f32.mxu0 0.0
  %2042 = vmatmul.mubr.f32.gmra.mrb[0].mxu0 %v1907
  %v2043 = vpop.f32.mrb[0].mxu0
  %v2044 = vadd.f32 0.0, %v2043
  %v2045 = vpop.f32.mrb[0].mxu0
  %v2046 = vadd.f32 0.0, %v2045
  %2047 = vdwg.mxu0
  %2048 = vmatprep.subr.mxu0 %v1916
  %2049 = vmatpush1.msra.mxu0 %v1915
  %2050 = vmatprep.subr.mxu0 %v1920
  %2051 = vmatpush1.msra.mxu0 %v1919
  %2052 = vmatprep.subr.mxu0 %v1924
  %2053 = vmatpush1.msra.mxu0 %v1923
  %2054 = vmatprep.subr.mxu0 %v1928
  %2055 = vmatpush1.msra.mxu0 %v1927
  %2056 = vmatprep.subr.mxu0 %v1932
  %2057 = vmatpush1.msra.mxu0 %v1931
  %2058 = vmatprep.subr.mxu0 %v1936
  %2059 = vmatpush1.msra.mxu0 %v1935
  %2060 = vmatprep.subr.mxu0 %v1940
  %2061 = vmatpush1.msra.mxu0 %v1939
  %2062 = vmatprep.subr.mxu0 %v1944
  %2063 = vmatpush1.msra.mxu0 %v1943
  %2064 = vmatprep.subr.mxu0 %v1948
  %2065 = vmatpush1.msra.mxu0 %v1947
  %2066 = vmatprep.subr.mxu0 %v1952
  %2067 = vmatpush1.msra.mxu0 %v1951
  %2068 = vmatprep.subr.mxu0 %v1956
  %2069 = vmatpush1.msra.mxu0 %v1955
  %2070 = vmatprep.subr.mxu0 %v1960
  %2071 = vmatpush1.msra.mxu0 %v1959
  %2072 = vmatprep.subr.mxu0 %v1964
  %2073 = vmatpush1.msra.mxu0 %v1963
  %2074 = vmatprep.subr.mxu0 %v1968
  %2075 = vmatpush1.msra.mxu0 %v1967
  %2076 = vmatprep.subr.mxu0 %v1972
  %2077 = vmatpush1.msra.mxu0 %v1971
  %2078 = vmatprep.subr.mxu0 %v1976
  %2079 = vmatpush1.msra.mxu0 %v1975
  %2080 = vmatprep.subr.mxu0 0.0
  %2081 = vmatpush1.msra.mxu0 0.0
  %2082 = vmatprep.subr.mxu0 0.0
  %2083 = vmatpush1.msra.mxu0 0.0
  %2084 = vmatprep.subr.mxu0 0.0
  %2085 = vmatpush1.msra.mxu0 0.0
  %2086 = vmatprep.subr.mxu0 0.0
  %2087 = vmatpush1.msra.mxu0 0.0
  %2088 = vmatprep.subr.mxu0 0.0
  %2089 = vmatpush1.msra.mxu0 0.0
  %2090 = vmatprep.subr.mxu0 0.0
  %2091 = vmatpush1.msra.mxu0 0.0
  %2092 = vmatprep.subr.mxu0 0.0
  %2093 = vmatpush1.msra.mxu0 0.0
  %2094 = vmatprep.subr.mxu0 0.0
  %2095 = vmatpush1.msra.mxu0 0.0
  %2096 = vmatprep.subr.mxu0 0.0
  %2097 = vmatpush1.msra.mxu0 0.0
  %2098 = vmatprep.subr.mxu0 0.0
  %2099 = vmatpush1.msra.mxu0 0.0
  %2100 = vmatprep.subr.mxu0 0.0
  %2101 = vmatpush1.msra.mxu0 0.0
  %2102 = vmatprep.subr.mxu0 0.0
  %2103 = vmatpush1.msra.mxu0 0.0
  %2104 = vmatprep.subr.mxu0 0.0
  %2105 = vmatpush1.msra.mxu0 0.0
  %2106 = vmatprep.subr.mxu0 0.0
  %2107 = vmatpush1.msra.mxu0 0.0
  %2108 = vmatprep.subr.mxu0 0.0
  %2109 = vmatpush1.msra.mxu0 0.0
  %2110 = vmatprep.subr.mxu0 0.0
  %2111 = vmatpush1.msra.mxu0 0.0
  %2112 = vmatprep.mubr.f32.mxu0 0.0
  %2113 = vmatmul.mubr.f32.gmra.mrb[0].mxu0 %v1907
  %v2114 = vpop.f32.mrb[0].mxu0
  %v2115 = vadd.f32 0.0, %v2114
  %v2116 = vpop.f32.mrb[0].mxu0
  %v2117 = vadd.f32 0.0, %v2116
  %2118 = vdwg.mxu0
  %v2123 = vrot.slane %v2044, 6
  %v2124 = vrot.slane %v2046, 6
  %v2125 = vrot.slane %v2115, 6
  %v2126 = vrot.slane %v2117, 6
  %v2131 = vadd.f32 %v1909, %v2123
  %v2132 = vadd.f32 %v1910, %v2124
  %v2133 = vadd.f32 %v1911, %v2125
  %v2134 = vadd.f32 %v1912, %v2126
  %v2135 = vxor.u32 %v2131, 2147483648
  %v2136 = vmul.f32 %v2135, 1.442695
  %v2137 = vpow.pop %v2136
  %v2138 = vadd.f32 %v2137, 1.0
  %v2139 = vrcp.pop %v2138
  %v2140 = vmul.f32 1.0, %v2139
  %v2141 = vxor.u32 %v2132, 2147483648
  %v2142 = vmul.f32 %v2141, 1.442695
  %v2143 = vpow.pop %v2142
  %v2144 = vadd.f32 %v2143, 1.0
  %v2145 = vrcp.pop %v2144
  %v2146 = vmul.f32 1.0, %v2145
  %v2147 = vtanh.pop %v2133
  %v2148 = vxor.u32 %v2134, 2147483648
  %v2149 = vmul.f32 %v2148, 1.442695
  %v2150 = vpow.pop %v2149
  %v2151 = vadd.f32 %v2150, 1.0
  %v2152 = vrcp.pop %v2151
  %v2153 = vmul.f32 1.0, %v2152
  %v2155 = vrot.slane %v1905, 6
  %v2157 = vmul.f32 %v2146, %v2155
  %v2158 = vmul.f32 %v2140, %v2147
  %v2159 = vadd.f32 %v2157, %v2158
  %v2160 = vtanh.pop %v2159
  %v2161 = vmul.f32 %v2153, %v2160
  %2162 = vst [vmem:[#allocation6 + $0x8] sm:$0xc] %v2161
  %v2163 = vld [vmem:[#allocation5 + $0x20] sm:$0x30]
  %v2164 = vld [vmem:[#allocation5 + $0x28] sm:$0x30]
  %v2165 = vld [vmem:[#allocation5 + $0x30] sm:$0x30]
  %v2166 = vld [vmem:[#allocation5 + $0x38] sm:$0x30]
  %v2167 = vld [vmem:[%s3] sm:$0xff]
  %v2168 = vld [vmem:[%s3 + $0x8] sm:$0xff]
  %v2169 = vld [vmem:[%s3 + $0x10] sm:$0xff]
  %v2170 = vld [vmem:[%s3 + $0x18] sm:$0xff]
  %v2171 = vld [vmem:[%s3 + $0x20] sm:$0xff]
  %v2172 = vld [vmem:[%s3 + $0x28] sm:$0xff]
  %v2173 = vld [vmem:[%s3 + $0x30] sm:$0xff]
  %v2174 = vld [vmem:[%s3 + $0x38] sm:$0xff]
  %v2175 = vld [vmem:[%s3 + $0x40] sm:$0xff]
  %v2176 = vld [vmem:[%s3 + $0x48] sm:$0xff]
  %v2177 = vld [vmem:[%s3 + $0x50] sm:$0xff]
  %v2178 = vld [vmem:[%s3 + $0x58] sm:$0xff]
  %v2179 = vld [vmem:[%s3 + $0x60] sm:$0xff]
  %v2180 = vld [vmem:[%s3 + $0x68] sm:$0xff]
  %v2181 = vld [vmem:[%s3 + $0x70] sm:$0xff]
  %v2182 = vld [vmem:[%s3 + $0x78] sm:$0xff]
  %v2183 = vld [vmem:[%s3 + $0x80] sm:$0xff]
  %v2184 = vld [vmem:[%s3 + $0x88] sm:$0xff]
  %v2185 = vld [vmem:[%s3 + $0x90] sm:$0xff]
  %v2186 = vld [vmem:[%s3 + $0x98] sm:$0xff]
  %v2187 = vld [vmem:[%s3 + $0xa0] sm:$0xff]
  %v2188 = vld [vmem:[%s3 + $0xa8] sm:$0xff]
  %v2189 = vld [vmem:[%s3 + $0xb0] sm:$0xff]
  %v2190 = vld [vmem:[%s3 + $0xb8] sm:$0xff]
  %v2191 = vld [vmem:[%s3 + $0xc0] sm:$0xff]
  %v2192 = vld [vmem:[%s3 + $0xc8] sm:$0xff]
  %v2193 = vld [vmem:[%s3 + $0xd0] sm:$0xff]
  %v2194 = vld [vmem:[%s3 + $0xd8] sm:$0xff]
  %v2195 = vld [vmem:[%s3 + $0xe0] sm:$0xff]
  %v2196 = vld [vmem:[%s3 + $0xe8] sm:$0xff]
  %v2197 = vld [vmem:[%s3 + $0xf0] sm:$0xff]
  %v2198 = vld [vmem:[%s3 + $0xf8] sm:$0xff]
  %v2199 = vld [vmem:[%s3 + $0x100] sm:$0xff]
  %v2200 = vld [vmem:[%s3 + $0x108] sm:$0xff]
  %v2201 = vld [vmem:[%s3 + $0x110] sm:$0xff]
  %v2202 = vld [vmem:[%s3 + $0x118] sm:$0xff]
  %v2203 = vld [vmem:[%s3 + $0x120] sm:$0xff]
  %v2204 = vld [vmem:[%s3 + $0x128] sm:$0xff]
  %v2205 = vld [vmem:[%s3 + $0x130] sm:$0xff]
  %v2206 = vld [vmem:[%s3 + $0x138] sm:$0xff]
  %v2207 = vld [vmem:[%s3 + $0x140] sm:$0xff]
  %v2208 = vld [vmem:[%s3 + $0x148] sm:$0xff]
  %v2209 = vld [vmem:[%s3 + $0x150] sm:$0xff]
  %v2210 = vld [vmem:[%s3 + $0x158] sm:$0xff]
  %v2211 = vld [vmem:[%s3 + $0x160] sm:$0xff]
  %v2212 = vld [vmem:[%s3 + $0x168] sm:$0xff]
  %v2213 = vld [vmem:[%s3 + $0x170] sm:$0xff]
  %v2214 = vld [vmem:[%s3 + $0x178] sm:$0xff]
  %v2215 = vld [vmem:[%s3 + $0x180] sm:$0xff]
  %v2216 = vld [vmem:[%s3 + $0x188] sm:$0xff]
  %v2217 = vld [vmem:[%s3 + $0x190] sm:$0xff]
  %v2218 = vld [vmem:[%s3 + $0x198] sm:$0xff]
  %v2219 = vld [vmem:[%s3 + $0x1a0] sm:$0xff]
  %v2220 = vld [vmem:[%s3 + $0x1a8] sm:$0xff]
  %v2221 = vld [vmem:[%s3 + $0x1b0] sm:$0xff]
  %v2222 = vld [vmem:[%s3 + $0x1b8] sm:$0xff]
  %v2223 = vld [vmem:[%s3 + $0x1c0] sm:$0xff]
  %v2224 = vld [vmem:[%s3 + $0x1c8] sm:$0xff]
  %v2225 = vld [vmem:[%s3 + $0x1d0] sm:$0xff]
  %v2226 = vld [vmem:[%s3 + $0x1d8] sm:$0xff]
  %v2227 = vld [vmem:[%s3 + $0x1e0] sm:$0xff]
  %v2228 = vld [vmem:[%s3 + $0x1e8] sm:$0xff]
  %v2229 = vld [vmem:[%s3 + $0x1f0] sm:$0xff]
  %v2230 = vld [vmem:[%s3 + $0x1f8] sm:$0xff]
  %v2232 = vrot.slane %v2161, 2
  %2234 = vmatprep.subr.mxu0 %v2168
  %2235 = vmatpush1.msra.mxu0 %v2167
  %2236 = vmatprep.subr.mxu0 %v2172
  %2237 = vmatpush1.msra.mxu0 %v2171
  %2238 = vmatprep.subr.mxu0 %v2176
  %2239 = vmatpush1.msra.mxu0 %v2175
  %2240 = vmatprep.subr.mxu0 %v2180
  %2241 = vmatpush1.msra.mxu0 %v2179
  %2242 = vmatprep.subr.mxu0 %v2184
  %2243 = vmatpush1.msra.mxu0 %v2183
  %2244 = vmatprep.subr.mxu0 %v2188
  %2245 = vmatpush1.msra.mxu0 %v2187
  %2246 = vmatprep.subr.mxu0 %v2192
  %2247 = vmatpush1.msra.mxu0 %v2191
  %2248 = vmatprep.subr.mxu0 %v2196
  %2249 = vmatpush1.msra.mxu0 %v2195
  %2250 = vmatprep.subr.mxu0 %v2200
  %2251 = vmatpush1.msra.mxu0 %v2199
  %2252 = vmatprep.subr.mxu0 %v2204
  %2253 = vmatpush1.msra.mxu0 %v2203
  %2254 = vmatprep.subr.mxu0 %v2208
  %2255 = vmatpush1.msra.mxu0 %v2207
  %2256 = vmatprep.subr.mxu0 %v2212
  %2257 = vmatpush1.msra.mxu0 %v2211
  %2258 = vmatprep.subr.mxu0 %v2216
  %2259 = vmatpush1.msra.mxu0 %v2215
  %2260 = vmatprep.subr.mxu0 %v2220
  %2261 = vmatpush1.msra.mxu0 %v2219
  %2262 = vmatprep.subr.mxu0 %v2224
  %2263 = vmatpush1.msra.mxu0 %v2223
  %2264 = vmatprep.subr.mxu0 %v2228
  %2265 = vmatpush1.msra.mxu0 %v2227
  %2266 = vmatprep.subr.mxu0 0.0
  %2267 = vmatpush1.msra.mxu0 0.0
  %2268 = vmatprep.subr.mxu0 0.0
  %2269 = vmatpush1.msra.mxu0 0.0
  %2270 = vmatprep.subr.mxu0 0.0
  %2271 = vmatpush1.msra.mxu0 0.0
  %2272 = vmatprep.subr.mxu0 0.0
  %2273 = vmatpush1.msra.mxu0 0.0
  %2274 = vmatprep.subr.mxu0 0.0
  %2275 = vmatpush1.msra.mxu0 0.0
  %2276 = vmatprep.subr.mxu0 0.0
  %2277 = vmatpush1.msra.mxu0 0.0
  %2278 = vmatprep.subr.mxu0 0.0
  %2279 = vmatpush1.msra.mxu0 0.0
  %2280 = vmatprep.subr.mxu0 0.0
  %2281 = vmatpush1.msra.mxu0 0.0
  %2282 = vmatprep.subr.mxu0 0.0
  %2283 = vmatpush1.msra.mxu0 0.0
  %2284 = vmatprep.subr.mxu0 0.0
  %2285 = vmatpush1.msra.mxu0 0.0
  %2286 = vmatprep.subr.mxu0 0.0
  %2287 = vmatpush1.msra.mxu0 0.0
  %2288 = vmatprep.subr.mxu0 0.0
  %2289 = vmatpush1.msra.mxu0 0.0
  %2290 = vmatprep.subr.mxu0 0.0
  %2291 = vmatpush1.msra.mxu0 0.0
  %2292 = vmatprep.subr.mxu0 0.0
  %2293 = vmatpush1.msra.mxu0 0.0
  %2294 = vmatprep.subr.mxu0 0.0
  %2295 = vmatpush1.msra.mxu0 0.0
  %2296 = vmatprep.subr.mxu0 0.0
  %2297 = vmatpush1.msra.mxu0 0.0
  %2298 = vmatprep.mubr.f32.mxu0 0.0
  %2299 = vmatmul.mubr.f32.gmra.mrb[0].mxu0 %v2232
  %v2300 = vpop.f32.mrb[0].mxu0
  %v2301 = vadd.f32 0.0, %v2300
  %v2302 = vpop.f32.mrb[0].mxu0
  %v2303 = vadd.f32 0.0, %v2302
  %2304 = vdwg.mxu0
  %2305 = vmatprep.subr.mxu0 %v2170
  %2306 = vmatpush1.msra.mxu0 %v2169
  %2307 = vmatprep.subr.mxu0 %v2174
  %2308 = vmatpush1.msra.mxu0 %v2173
  %2309 = vmatprep.subr.mxu0 %v2178
  %2310 = vmatpush1.msra.mxu0 %v2177
  %2311 = vmatprep.subr.mxu0 %v2182
  %2312 = vmatpush1.msra.mxu0 %v2181
  %2313 = vmatprep.subr.mxu0 %v2186
  %2314 = vmatpush1.msra.mxu0 %v2185
  %2315 = vmatprep.subr.mxu0 %v2190
  %2316 = vmatpush1.msra.mxu0 %v2189
  %2317 = vmatprep.subr.mxu0 %v2194
  %2318 = vmatpush1.msra.mxu0 %v2193
  %2319 = vmatprep.subr.mxu0 %v2198
  %2320 = vmatpush1.msra.mxu0 %v2197
  %2321 = vmatprep.subr.mxu0 %v2202
  %2322 = vmatpush1.msra.mxu0 %v2201
  %2323 = vmatprep.subr.mxu0 %v2206
  %2324 = vmatpush1.msra.mxu0 %v2205
  %2325 = vmatprep.subr.mxu0 %v2210
  %2326 = vmatpush1.msra.mxu0 %v2209
  %2327 = vmatprep.subr.mxu0 %v2214
  %2328 = vmatpush1.msra.mxu0 %v2213
  %2329 = vmatprep.subr.mxu0 %v2218
  %2330 = vmatpush1.msra.mxu0 %v2217
  %2331 = vmatprep.subr.mxu0 %v2222
  %2332 = vmatpush1.msra.mxu0 %v2221
  %2333 = vmatprep.subr.mxu0 %v2226
  %2334 = vmatpush1.msra.mxu0 %v2225
  %2335 = vmatprep.subr.mxu0 %v2230
  %2336 = vmatpush1.msra.mxu0 %v2229
  %2337 = vmatprep.subr.mxu0 0.0
  %2338 = vmatpush1.msra.mxu0 0.0
  %2339 = vmatprep.subr.mxu0 0.0
  %2340 = vmatpush1.msra.mxu0 0.0
  %2341 = vmatprep.subr.mxu0 0.0
  %2342 = vmatpush1.msra.mxu0 0.0
  %2343 = vmatprep.subr.mxu0 0.0
  %2344 = vmatpush1.msra.mxu0 0.0
  %2345 = vmatprep.subr.mxu0 0.0
  %2346 = vmatpush1.msra.mxu0 0.0
  %2347 = vmatprep.subr.mxu0 0.0
  %2348 = vmatpush1.msra.mxu0 0.0
  %2349 = vmatprep.subr.mxu0 0.0
  %2350 = vmatpush1.msra.mxu0 0.0
  %2351 = vmatprep.subr.mxu0 0.0
  %2352 = vmatpush1.msra.mxu0 0.0
  %2353 = vmatprep.subr.mxu0 0.0
  %2354 = vmatpush1.msra.mxu0 0.0
  %2355 = vmatprep.subr.mxu0 0.0
  %2356 = vmatpush1.msra.mxu0 0.0
  %2357 = vmatprep.subr.mxu0 0.0
  %2358 = vmatpush1.msra.mxu0 0.0
  %2359 = vmatprep.subr.mxu0 0.0
  %2360 = vmatpush1.msra.mxu0 0.0
  %2361 = vmatprep.subr.mxu0 0.0
  %2362 = vmatpush1.msra.mxu0 0.0
  %2363 = vmatprep.subr.mxu0 0.0
  %2364 = vmatpush1.msra.mxu0 0.0
  %2365 = vmatprep.subr.mxu0 0.0
  %2366 = vmatpush1.msra.mxu0 0.0
  %2367 = vmatprep.subr.mxu0 0.0
  %2368 = vmatpush1.msra.mxu0 0.0
  %2369 = vmatprep.mubr.f32.mxu0 0.0
  %2370 = vmatmul.mubr.f32.gmra.mrb[0].mxu0 %v2232
  %v2371 = vpop.f32.mrb[0].mxu0
  %v2372 = vadd.f32 0.0, %v2371
  %v2373 = vpop.f32.mrb[0].mxu0
  %v2374 = vadd.f32 0.0, %v2373
  %2375 = vdwg.mxu0
  %v2380 = vrot.slane %v2301, 4
  %v2381 = vrot.slane %v2303, 4
  %v2382 = vrot.slane %v2372, 4
  %v2383 = vrot.slane %v2374, 4
  %v2388 = vadd.f32 %v2163, %v2380
  %v2389 = vadd.f32 %v2164, %v2381
  %v2390 = vadd.f32 %v2165, %v2382
  %v2391 = vadd.f32 %v2166, %v2383
  %v2392 = vxor.u32 %v2388, 2147483648
  %v2393 = vmul.f32 %v2392, 1.442695
  %v2394 = vpow.pop %v2393
  %v2395 = vadd.f32 %v2394, 1.0
  %v2396 = vrcp.pop %v2395
  %v2397 = vmul.f32 1.0, %v2396
  %v2398 = vxor.u32 %v2389, 2147483648
  %v2399 = vmul.f32 %v2398, 1.442695
  %v2400 = vpow.pop %v2399
  %v2401 = vadd.f32 %v2400, 1.0
  %v2402 = vrcp.pop %v2401
  %v2403 = vmul.f32 1.0, %v2402
  %v2404 = vtanh.pop %v2390
  %v2405 = vxor.u32 %v2391, 2147483648
  %v2406 = vmul.f32 %v2405, 1.442695
  %v2407 = vpow.pop %v2406
  %v2408 = vadd.f32 %v2407, 1.0
  %v2409 = vrcp.pop %v2408
  %v2410 = vmul.f32 1.0, %v2409
  %v2412 = vrot.slane %v2159, 6
  %v2414 = vmul.f32 %v2403, %v2412
  %v2415 = vmul.f32 %v2397, %v2404
  %v2416 = vadd.f32 %v2414, %v2415
  %v2417 = vtanh.pop %v2416
  %v2418 = vmul.f32 %v2410, %v2417
  %2419 = vst [vmem:[#allocation6 + $0x8] sm:$0x30] %v2418
  %v2420 = vld [vmem:[#allocation5 + $0x20] sm:$0xc0]
  %v2421 = vld [vmem:[#allocation5 + $0x28] sm:$0xc0]
  %v2422 = vld [vmem:[#allocation5 + $0x30] sm:$0xc0]
  %v2423 = vld [vmem:[#allocation5 + $0x38] sm:$0xc0]
  %v2424 = vld [vmem:[%s3] sm:$0xff]
  %v2425 = vld [vmem:[%s3 + $0x8] sm:$0xff]
  %v2426 = vld [vmem:[%s3 + $0x10] sm:$0xff]
  %v2427 = vld [vmem:[%s3 + $0x18] sm:$0xff]
  %v2428 = vld [vmem:[%s3 + $0x20] sm:$0xff]
  %v2429 = vld [vmem:[%s3 + $0x28] sm:$0xff]
  %v2430 = vld [vmem:[%s3 + $0x30] sm:$0xff]
  %v2431 = vld [vmem:[%s3 + $0x38] sm:$0xff]
  %v2432 = vld [vmem:[%s3 + $0x40] sm:$0xff]
  %v2433 = vld [vmem:[%s3 + $0x48] sm:$0xff]
  %v2434 = vld [vmem:[%s3 + $0x50] sm:$0xff]
  %v2435 = vld [vmem:[%s3 + $0x58] sm:$0xff]
  %v2436 = vld [vmem:[%s3 + $0x60] sm:$0xff]
  %v2437 = vld [vmem:[%s3 + $0x68] sm:$0xff]
  %v2438 = vld [vmem:[%s3 + $0x70] sm:$0xff]
  %v2439 = vld [vmem:[%s3 + $0x78] sm:$0xff]
  %v2440 = vld [vmem:[%s3 + $0x80] sm:$0xff]
  %v2441 = vld [vmem:[%s3 + $0x88] sm:$0xff]
  %v2442 = vld [vmem:[%s3 + $0x90] sm:$0xff]
  %v2443 = vld [vmem:[%s3 + $0x98] sm:$0xff]
  %v2444 = vld [vmem:[%s3 + $0xa0] sm:$0xff]
  %v2445 = vld [vmem:[%s3 + $0xa8] sm:$0xff]
  %v2446 = vld [vmem:[%s3 + $0xb0] sm:$0xff]
  %v2447 = vld [vmem:[%s3 + $0xb8] sm:$0xff]
  %v2448 = vld [vmem:[%s3 + $0xc0] sm:$0xff]
  %v2449 = vld [vmem:[%s3 + $0xc8] sm:$0xff]
  %v2450 = vld [vmem:[%s3 + $0xd0] sm:$0xff]
  %v2451 = vld [vmem:[%s3 + $0xd8] sm:$0xff]
  %v2452 = vld [vmem:[%s3 + $0xe0] sm:$0xff]
  %v2453 = vld [vmem:[%s3 + $0xe8] sm:$0xff]
  %v2454 = vld [vmem:[%s3 + $0xf0] sm:$0xff]
  %v2455 = vld [vmem:[%s3 + $0xf8] sm:$0xff]
  %v2456 = vld [vmem:[%s3 + $0x100] sm:$0xff]
  %v2457 = vld [vmem:[%s3 + $0x108] sm:$0xff]
  %v2458 = vld [vmem:[%s3 + $0x110] sm:$0xff]
  %v2459 = vld [vmem:[%s3 + $0x118] sm:$0xff]
  %v2460 = vld [vmem:[%s3 + $0x120] sm:$0xff]
  %v2461 = vld [vmem:[%s3 + $0x128] sm:$0xff]
  %v2462 = vld [vmem:[%s3 + $0x130] sm:$0xff]
  %v2463 = vld [vmem:[%s3 + $0x138] sm:$0xff]
  %v2464 = vld [vmem:[%s3 + $0x140] sm:$0xff]
  %v2465 = vld [vmem:[%s3 + $0x148] sm:$0xff]
  %v2466 = vld [vmem:[%s3 + $0x150] sm:$0xff]
  %v2467 = vld [vmem:[%s3 + $0x158] sm:$0xff]
  %v2468 = vld [vmem:[%s3 + $0x160] sm:$0xff]
  %v2469 = vld [vmem:[%s3 + $0x168] sm:$0xff]
  %v2470 = vld [vmem:[%s3 + $0x170] sm:$0xff]
  %v2471 = vld [vmem:[%s3 + $0x178] sm:$0xff]
  %v2472 = vld [vmem:[%s3 + $0x180] sm:$0xff]
  %v2473 = vld [vmem:[%s3 + $0x188] sm:$0xff]
  %v2474 = vld [vmem:[%s3 + $0x190] sm:$0xff]
  %v2475 = vld [vmem:[%s3 + $0x198] sm:$0xff]
  %v2476 = vld [vmem:[%s3 + $0x1a0] sm:$0xff]
  %v2477 = vld [vmem:[%s3 + $0x1a8] sm:$0xff]
  %v2478 = vld [vmem:[%s3 + $0x1b0] sm:$0xff]
  %v2479 = vld [vmem:[%s3 + $0x1b8] sm:$0xff]
  %v2480 = vld [vmem:[%s3 + $0x1c0] sm:$0xff]
  %v2481 = vld [vmem:[%s3 + $0x1c8] sm:$0xff]
  %v2482 = vld [vmem:[%s3 + $0x1d0] sm:$0xff]
  %v2483 = vld [vmem:[%s3 + $0x1d8] sm:$0xff]
  %v2484 = vld [vmem:[%s3 + $0x1e0] sm:$0xff]
  %v2485 = vld [vmem:[%s3 + $0x1e8] sm:$0xff]
  %v2486 = vld [vmem:[%s3 + $0x1f0] sm:$0xff]
  %v2487 = vld [vmem:[%s3 + $0x1f8] sm:$0xff]
  %v2489 = vrot.slane %v2418, 4
  %2491 = vmatprep.subr.mxu0 %v2425
  %2492 = vmatpush1.msra.mxu0 %v2424
  %2493 = vmatprep.subr.mxu0 %v2429
  %2494 = vmatpush1.msra.mxu0 %v2428
  %2495 = vmatprep.subr.mxu0 %v2433
  %2496 = vmatpush1.msra.mxu0 %v2432
  %2497 = vmatprep.subr.mxu0 %v2437
  %2498 = vmatpush1.msra.mxu0 %v2436
  %2499 = vmatprep.subr.mxu0 %v2441
  %2500 = vmatpush1.msra.mxu0 %v2440
  %2501 = vmatprep.subr.mxu0 %v2445
  %2502 = vmatpush1.msra.mxu0 %v2444
  %2503 = vmatprep.subr.mxu0 %v2449
  %2504 = vmatpush1.msra.mxu0 %v2448
  %2505 = vmatprep.subr.mxu0 %v2453
  %2506 = vmatpush1.msra.mxu0 %v2452
  %2507 = vmatprep.subr.mxu0 %v2457
  %2508 = vmatpush1.msra.mxu0 %v2456
  %2509 = vmatprep.subr.mxu0 %v2461
  %2510 = vmatpush1.msra.mxu0 %v2460
  %2511 = vmatprep.subr.mxu0 %v2465
  %2512 = vmatpush1.msra.mxu0 %v2464
  %2513 = vmatprep.subr.mxu0 %v2469
  %2514 = vmatpush1.msra.mxu0 %v2468
  %2515 = vmatprep.subr.mxu0 %v2473
  %2516 = vmatpush1.msra.mxu0 %v2472
  %2517 = vmatprep.subr.mxu0 %v2477
  %2518 = vmatpush1.msra.mxu0 %v2476
  %2519 = vmatprep.subr.mxu0 %v2481
  %2520 = vmatpush1.msra.mxu0 %v2480
  %2521 = vmatprep.subr.mxu0 %v2485
  %2522 = vmatpush1.msra.mxu0 %v2484
  %2523 = vmatprep.subr.mxu0 0.0
  %2524 = vmatpush1.msra.mxu0 0.0
  %2525 = vmatprep.subr.mxu0 0.0
  %2526 = vmatpush1.msra.mxu0 0.0
  %2527 = vmatprep.subr.mxu0 0.0
  %2528 = vmatpush1.msra.mxu0 0.0
  %2529 = vmatprep.subr.mxu0 0.0
  %2530 = vmatpush1.msra.mxu0 0.0
  %2531 = vmatprep.subr.mxu0 0.0
  %2532 = vmatpush1.msra.mxu0 0.0
  %2533 = vmatprep.subr.mxu0 0.0
  %2534 = vmatpush1.msra.mxu0 0.0
  %2535 = vmatprep.subr.mxu0 0.0
  %2536 = vmatpush1.msra.mxu0 0.0
  %2537 = vmatprep.subr.mxu0 0.0
  %2538 = vmatpush1.msra.mxu0 0.0
  %2539 = vmatprep.subr.mxu0 0.0
  %2540 = vmatpush1.msra.mxu0 0.0
  %2541 = vmatprep.subr.mxu0 0.0
  %2542 = vmatpush1.msra.mxu0 0.0
  %2543 = vmatprep.subr.mxu0 0.0
  %2544 = vmatpush1.msra.mxu0 0.0
  %2545 = vmatprep.subr.mxu0 0.0
  %2546 = vmatpush1.msra.mxu0 0.0
  %2547 = vmatprep.subr.mxu0 0.0
  %2548 = vmatpush1.msra.mxu0 0.0
  %2549 = vmatprep.subr.mxu0 0.0
  %2550 = vmatpush1.msra.mxu0 0.0
  %2551 = vmatprep.subr.mxu0 0.0
  %2552 = vmatpush1.msra.mxu0 0.0
  %2553 = vmatprep.subr.mxu0 0.0
  %2554 = vmatpush1.msra.mxu0 0.0
  %2555 = vmatprep.mubr.f32.mxu0 0.0
  %2556 = vmatmul.mubr.f32.gmra.mrb[0].mxu0 %v2489
  %v2557 = vpop.f32.mrb[0].mxu0
  %v2558 = vadd.f32 0.0, %v2557
  %v2559 = vpop.f32.mrb[0].mxu0
  %v2560 = vadd.f32 0.0, %v2559
  %2561 = vdwg.mxu0
  %2562 = vmatprep.subr.mxu0 %v2427
  %2563 = vmatpush1.msra.mxu0 %v2426
  %2564 = vmatprep.subr.mxu0 %v2431
  %2565 = vmatpush1.msra.mxu0 %v2430
  %2566 = vmatprep.subr.mxu0 %v2435
  %2567 = vmatpush1.msra.mxu0 %v2434
  %2568 = vmatprep.subr.mxu0 %v2439
  %2569 = vmatpush1.msra.mxu0 %v2438
  %2570 = vmatprep.subr.mxu0 %v2443
  %2571 = vmatpush1.msra.mxu0 %v2442
  %2572 = vmatprep.subr.mxu0 %v2447
  %2573 = vmatpush1.msra.mxu0 %v2446
  %2574 = vmatprep.subr.mxu0 %v2451
  %2575 = vmatpush1.msra.mxu0 %v2450
  %2576 = vmatprep.subr.mxu0 %v2455
  %2577 = vmatpush1.msra.mxu0 %v2454
  %2578 = vmatprep.subr.mxu0 %v2459
  %2579 = vmatpush1.msra.mxu0 %v2458
  %2580 = vmatprep.subr.mxu0 %v2463
  %2581 = vmatpush1.msra.mxu0 %v2462
  %2582 = vmatprep.subr.mxu0 %v2467
  %2583 = vmatpush1.msra.mxu0 %v2466
  %2584 = vmatprep.subr.mxu0 %v2471
  %2585 = vmatpush1.msra.mxu0 %v2470
  %2586 = vmatprep.subr.mxu0 %v2475
  %2587 = vmatpush1.msra.mxu0 %v2474
  %2588 = vmatprep.subr.mxu0 %v2479
  %2589 = vmatpush1.msra.mxu0 %v2478
  %2590 = vmatprep.subr.mxu0 %v2483
  %2591 = vmatpush1.msra.mxu0 %v2482
  %2592 = vmatprep.subr.mxu0 %v2487
  %2593 = vmatpush1.msra.mxu0 %v2486
  %2594 = vmatprep.subr.mxu0 0.0
  %2595 = vmatpush1.msra.mxu0 0.0
  %2596 = vmatprep.subr.mxu0 0.0
  %2597 = vmatpush1.msra.mxu0 0.0
  %2598 = vmatprep.subr.mxu0 0.0
  %2599 = vmatpush1.msra.mxu0 0.0
  %2600 = vmatprep.subr.mxu0 0.0
  %2601 = vmatpush1.msra.mxu0 0.0
  %2602 = vmatprep.subr.mxu0 0.0
  %2603 = vmatpush1.msra.mxu0 0.0
  %2604 = vmatprep.subr.mxu0 0.0
  %2605 = vmatpush1.msra.mxu0 0.0
  %2606 = vmatprep.subr.mxu0 0.0
  %2607 = vmatpush1.msra.mxu0 0.0
  %2608 = vmatprep.subr.mxu0 0.0
  %2609 = vmatpush1.msra.mxu0 0.0
  %2610 = vmatprep.subr.mxu0 0.0
  %2611 = vmatpush1.msra.mxu0 0.0
  %2612 = vmatprep.subr.mxu0 0.0
  %2613 = vmatpush1.msra.mxu0 0.0
  %2614 = vmatprep.subr.mxu0 0.0
  %2615 = vmatpush1.msra.mxu0 0.0
  %2616 = vmatprep.subr.mxu0 0.0
  %2617 = vmatpush1.msra.mxu0 0.0
  %2618 = vmatprep.subr.mxu0 0.0
  %2619 = vmatpush1.msra.mxu0 0.0
  %2620 = vmatprep.subr.mxu0 0.0
  %2621 = vmatpush1.msra.mxu0 0.0
  %2622 = vmatprep.subr.mxu0 0.0
  %2623 = vmatpush1.msra.mxu0 0.0
  %2624 = vmatprep.subr.mxu0 0.0
  %2625 = vmatpush1.msra.mxu0 0.0
  %2626 = vmatprep.mubr.f32.mxu0 0.0
  %2627 = vmatmul.mubr.f32.gmra.mrb[0].mxu0 %v2489
  %v2628 = vpop.f32.mrb[0].mxu0
  %v2629 = vadd.f32 0.0, %v2628
  %v2630 = vpop.f32.mrb[0].mxu0
  %v2631 = vadd.f32 0.0, %v2630
  %2632 = vdwg.mxu0
  %v2637 = vrot.slane %v2558, 2
  %v2638 = vrot.slane %v2560, 2
  %v2639 = vrot.slane %v2629, 2
  %v2640 = vrot.slane %v2631, 2
  %v2645 = vadd.f32 %v2420, %v2637
  %v2646 = vadd.f32 %v2421, %v2638
  %v2647 = vadd.f32 %v2422, %v2639
  %v2648 = vadd.f32 %v2423, %v2640
  %v2649 = vxor.u32 %v2645, 2147483648
  %v2650 = vmul.f32 %v2649, 1.442695
  %v2651 = vpow.pop %v2650
  %v2652 = vadd.f32 %v2651, 1.0
  %v2653 = vrcp.pop %v2652
  %v2654 = vmul.f32 1.0, %v2653
  %v2655 = vxor.u32 %v2646, 2147483648
  %v2656 = vmul.f32 %v2655, 1.442695
  %v2657 = vpow.pop %v2656
  %v2658 = vadd.f32 %v2657, 1.0
  %v2659 = vrcp.pop %v2658
  %v2660 = vmul.f32 1.0, %v2659
  %v2661 = vtanh.pop %v2647
  %v2662 = vxor.u32 %v2648, 2147483648
  %v2663 = vmul.f32 %v2662, 1.442695
  %v2664 = vpow.pop %v2663
  %v2665 = vadd.f32 %v2664, 1.0
  %v2666 = vrcp.pop %v2665
  %v2667 = vmul.f32 1.0, %v2666
  %v2669 = vrot.slane %v2416, 6
  %v2671 = vmul.f32 %v2660, %v2669
  %v2672 = vmul.f32 %v2654, %v2661
  %v2673 = vadd.f32 %v2671, %v2672
  %v2674 = vtanh.pop %v2673
  %v2675 = vmul.f32 %v2667, %v2674
  %2676 = vst [vmem:[#allocation6 + $0x8] sm:$0xc0] %v2675
  %s2677 = smul.u32 8, 16
  %s2678 = smul.u32 %s2677, 4
  %s2679 = sshll.u32 %s2678, 4
  %2680 = dma.done [#allocation8], %s2679
  %s2681 = smul.u32 8, 8
  %s2682 = smul.u32 %s2681, 4
  %s2683 = sshll.u32 %s2682, 4
  %2684 = dma.done %s197, %s2683
  %v2685 = vld [vmem:[#allocation6] sm:$0xff]
  %v2686 = vld [vmem:[#allocation6 + $0x8] sm:$0xff]
  %v2687 = vld [vmem:[#allocation2] sm:$0xff]
  %v2688 = vld [vmem:[#allocation2 + $0x8] sm:$0xff]
  %v2689 = vld [vmem:[#allocation2 + $0x10] sm:$0xff]
  %v2690 = vld [vmem:[#allocation2 + $0x18] sm:$0xff]
  %v2691 = vld [vmem:[#allocation2 + $0x20] sm:$0xff]
  %v2692 = vld [vmem:[#allocation2 + $0x28] sm:$0xff]
  %v2693 = vld [vmem:[#allocation2 + $0x30] sm:$0xff]
  %v2694 = vld [vmem:[#allocation2 + $0x38] sm:$0xff]
  %v2695 = vld [vmem:[#allocation2 + $0x40] sm:$0xff]
  %v2696 = vld [vmem:[#allocation2 + $0x48] sm:$0xff]
  %v2697 = vld [vmem:[#allocation2 + $0x50] sm:$0xff]
  %v2698 = vld [vmem:[#allocation2 + $0x58] sm:$0xff]
  %v2699 = vld [vmem:[#allocation2 + $0x60] sm:$0xff]
  %v2700 = vld [vmem:[#allocation2 + $0x68] sm:$0xff]
  %v2701 = vld [vmem:[#allocation2 + $0x70] sm:$0xff]
  %v2702 = vld [vmem:[#allocation2 + $0x78] sm:$0xff]
  %v2703 = vld [vmem:[#allocation2 + $0x80] sm:$0xff]
  %v2704 = vld [vmem:[#allocation2 + $0x88] sm:$0xff]
  %v2705 = vld [vmem:[#allocation2 + $0x90] sm:$0xff]
  %v2706 = vld [vmem:[#allocation2 + $0x98] sm:$0xff]
  %v2707 = vld [vmem:[#allocation2 + $0xa0] sm:$0xff]
  %v2708 = vld [vmem:[#allocation2 + $0xa8] sm:$0xff]
  %v2709 = vld [vmem:[#allocation2 + $0xb0] sm:$0xff]
  %v2710 = vld [vmem:[#allocation2 + $0xb8] sm:$0xff]
  %v2711 = vld [vmem:[#allocation2 + $0xc0] sm:$0xff]
  %v2712 = vld [vmem:[#allocation2 + $0xc8] sm:$0xff]
  %v2713 = vld [vmem:[#allocation2 + $0xd0] sm:$0xff]
  %v2714 = vld [vmem:[#allocation2 + $0xd8] sm:$0xff]
  %v2715 = vld [vmem:[#allocation2 + $0xe0] sm:$0xff]
  %v2716 = vld [vmem:[#allocation2 + $0xe8] sm:$0xff]
  %v2717 = vld [vmem:[#allocation2 + $0xf0] sm:$0xff]
  %v2718 = vld [vmem:[#allocation2 + $0xf8] sm:$0xff]
  %v2719 = vld [vmem:[#allocation2 + $0x100] sm:$0xff]
  %v2720 = vld [vmem:[#allocation2 + $0x108] sm:$0xff]
  %v2721 = vld [vmem:[#allocation2 + $0x110] sm:$0xff]
  %v2722 = vld [vmem:[#allocation2 + $0x118] sm:$0xff]
  %v2723 = vld [vmem:[#allocation2 + $0x120] sm:$0xff]
  %v2724 = vld [vmem:[#allocation2 + $0x128] sm:$0xff]
  %v2725 = vld [vmem:[#allocation2 + $0x130] sm:$0xff]
  %v2726 = vld [vmem:[#allocation2 + $0x138] sm:$0xff]
  %v2727 = vld [vmem:[#allocation2 + $0x140] sm:$0xff]
  %v2728 = vld [vmem:[#allocation2 + $0x148] sm:$0xff]
  %v2729 = vld [vmem:[#allocation2 + $0x150] sm:$0xff]
  %v2730 = vld [vmem:[#allocation2 + $0x158] sm:$0xff]
  %v2731 = vld [vmem:[#allocation2 + $0x160] sm:$0xff]
  %v2732 = vld [vmem:[#allocation2 + $0x168] sm:$0xff]
  %v2733 = vld [vmem:[#allocation2 + $0x170] sm:$0xff]
  %v2734 = vld [vmem:[#allocation2 + $0x178] sm:$0xff]
  %v2735 = vld [vmem:[#allocation2 + $0x180] sm:$0xff]
  %v2736 = vld [vmem:[#allocation2 + $0x188] sm:$0xff]
  %v2737 = vld [vmem:[#allocation2 + $0x190] sm:$0xff]
  %v2738 = vld [vmem:[#allocation2 + $0x198] sm:$0xff]
  %v2739 = vld [vmem:[#allocation2 + $0x1a0] sm:$0xff]
  %v2740 = vld [vmem:[#allocation2 + $0x1a8] sm:$0xff]
  %v2741 = vld [vmem:[#allocation2 + $0x1b0] sm:$0xff]
  %v2742 = vld [vmem:[#allocation2 + $0x1b8] sm:$0xff]
  %v2743 = vld [vmem:[#allocation2 + $0x1c0] sm:$0xff]
  %v2744 = vld [vmem:[#allocation2 + $0x1c8] sm:$0xff]
  %v2745 = vld [vmem:[#allocation2 + $0x1d0] sm:$0xff]
  %v2746 = vld [vmem:[#allocation2 + $0x1d8] sm:$0xff]
  %v2747 = vld [vmem:[#allocation2 + $0x1e0] sm:$0xff]
  %v2748 = vld [vmem:[#allocation2 + $0x1e8] sm:$0xff]
  %v2749 = vld [vmem:[#allocation2 + $0x1f0] sm:$0xff]
  %v2750 = vld [vmem:[#allocation2 + $0x1f8] sm:$0xff]
  %v2751 = vld [vmem:[%s5] sm:$0xf]
  %v2753 = vlaneseq
  %v2754 = vshrl.u32 %v2753, 7
  %v2755 = vsub.s32 0, %v2754
  %v2756 = vrot.slane %v2751, %v2755
  %v2757 = vlaneseq
  %v2758 = vshrl.u32 %v2757, 7
  %v2759 = vsub.s32 1, %v2758
  %v2760 = vrot.slane %v2751, %v2759
  %v2761 = vlaneseq
  %v2762 = vshrl.u32 %v2761, 7
  %v2763 = vsub.s32 2, %v2762
  %v2764 = vrot.slane %v2751, %v2763
  %v2765 = vlaneseq
  %v2766 = vshrl.u32 %v2765, 7
  %v2767 = vsub.s32 3, %v2766
  %v2768 = vrot.slane %v2751, %v2767
  %2773 = vmatprep.subr.mxu0 %v2688
  %2774 = vmatpush1.msra.mxu0 %v2687
  %2775 = vmatprep.subr.mxu0 %v2692
  %2776 = vmatpush1.msra.mxu0 %v2691
  %2777 = vmatprep.subr.mxu0 %v2696
  %2778 = vmatpush1.msra.mxu0 %v2695
  %2779 = vmatprep.subr.mxu0 %v2700
  %2780 = vmatpush1.msra.mxu0 %v2699
  %2781 = vmatprep.subr.mxu0 %v2704
  %2782 = vmatpush1.msra.mxu0 %v2703
  %2783 = vmatprep.subr.mxu0 %v2708
  %2784 = vmatpush1.msra.mxu0 %v2707
  %2785 = vmatprep.subr.mxu0 %v2712
  %2786 = vmatpush1.msra.mxu0 %v2711
  %2787 = vmatprep.subr.mxu0 %v2716
  %2788 = vmatpush1.msra.mxu0 %v2715
  %2789 = vmatprep.subr.mxu0 %v2720
  %2790 = vmatpush1.msra.mxu0 %v2719
  %2791 = vmatprep.subr.mxu0 %v2724
  %2792 = vmatpush1.msra.mxu0 %v2723
  %2793 = vmatprep.subr.mxu0 %v2728
  %2794 = vmatpush1.msra.mxu0 %v2727
  %2795 = vmatprep.subr.mxu0 %v2732
  %2796 = vmatpush1.msra.mxu0 %v2731
  %2797 = vmatprep.subr.mxu0 %v2736
  %2798 = vmatpush1.msra.mxu0 %v2735
  %2799 = vmatprep.subr.mxu0 %v2740
  %2800 = vmatpush1.msra.mxu0 %v2739
  %2801 = vmatprep.subr.mxu0 %v2744
  %2802 = vmatpush1.msra.mxu0 %v2743
  %2803 = vmatprep.subr.mxu0 %v2748
  %2804 = vmatpush1.msra.mxu0 %v2747
  %2805 = vmatprep.subr.mxu0 0.0
  %2806 = vmatpush1.msra.mxu0 0.0
  %2807 = vmatprep.subr.mxu0 0.0
  %2808 = vmatpush1.msra.mxu0 0.0
  %2809 = vmatprep.subr.mxu0 0.0
  %2810 = vmatpush1.msra.mxu0 0.0
  %2811 = vmatprep.subr.mxu0 0.0
  %2812 = vmatpush1.msra.mxu0 0.0
  %2813 = vmatprep.subr.mxu0 0.0
  %2814 = vmatpush1.msra.mxu0 0.0
  %2815 = vmatprep.subr.mxu0 0.0
  %2816 = vmatpush1.msra.mxu0 0.0
  %2817 = vmatprep.subr.mxu0 0.0
  %2818 = vmatpush1.msra.mxu0 0.0
  %2819 = vmatprep.subr.mxu0 0.0
  %2820 = vmatpush1.msra.mxu0 0.0
  %2821 = vmatprep.subr.mxu0 0.0
  %2822 = vmatpush1.msra.mxu0 0.0
  %2823 = vmatprep.subr.mxu0 0.0
  %2824 = vmatpush1.msra.mxu0 0.0
  %2825 = vmatprep.subr.mxu0 0.0
  %2826 = vmatpush1.msra.mxu0 0.0
  %2827 = vmatprep.subr.mxu0 0.0
  %2828 = vmatpush1.msra.mxu0 0.0
  %2829 = vmatprep.subr.mxu0 0.0
  %2830 = vmatpush1.msra.mxu0 0.0
  %2831 = vmatprep.subr.mxu0 0.0
  %2832 = vmatpush1.msra.mxu0 0.0
  %2833 = vmatprep.subr.mxu0 0.0
  %2834 = vmatpush1.msra.mxu0 0.0
  %2835 = vmatprep.subr.mxu0 0.0
  %2836 = vmatpush1.msra.mxu0 0.0
  %2837 = vmatprep.mubr.f32.mxu0 0.0
  %2838 = vmatmul.mubr.f32.gmra.mrb[0].mxu0 %v2685
  %v2839 = vpop.f32.mrb[0].mxu0
  %v2840 = vadd.f32 %v2756, %v2839
  %v2841 = vpop.f32.mrb[0].mxu0
  %v2842 = vadd.f32 %v2760, %v2841
  %2843 = vmatprep.mubr.f32.mxu0 0.0
  %2844 = vmatmul.mubr.f32.gmra.mrb[0].mxu0 %v2686
  %v2845 = vpop.f32.mrb[0].mxu0
  %v2846 = vadd.f32 %v2756, %v2845
  %v2847 = vpop.f32.mrb[0].mxu0
  %v2848 = vadd.f32 %v2760, %v2847
  %2849 = vdwg.mxu0
  %2850 = vmatprep.subr.mxu0 %v2690
  %2851 = vmatpush1.msra.mxu0 %v2689
  %2852 = vmatprep.subr.mxu0 %v2694
  %2853 = vmatpush1.msra.mxu0 %v2693
  %2854 = vmatprep.subr.mxu0 %v2698
  %2855 = vmatpush1.msra.mxu0 %v2697
  %2856 = vmatprep.subr.mxu0 %v2702
  %2857 = vmatpush1.msra.mxu0 %v2701
  %2858 = vmatprep.subr.mxu0 %v2706
  %2859 = vmatpush1.msra.mxu0 %v2705
  %2860 = vmatprep.subr.mxu0 %v2710
  %2861 = vmatpush1.msra.mxu0 %v2709
  %2862 = vmatprep.subr.mxu0 %v2714
  %2863 = vmatpush1.msra.mxu0 %v2713
  %2864 = vmatprep.subr.mxu0 %v2718
  %2865 = vmatpush1.msra.mxu0 %v2717
  %2866 = vmatprep.subr.mxu0 %v2722
  %2867 = vmatpush1.msra.mxu0 %v2721
  %2868 = vmatprep.subr.mxu0 %v2726
  %2869 = vmatpush1.msra.mxu0 %v2725
  %2870 = vmatprep.subr.mxu0 %v2730
  %2871 = vmatpush1.msra.mxu0 %v2729
  %2872 = vmatprep.subr.mxu0 %v2734
  %2873 = vmatpush1.msra.mxu0 %v2733
  %2874 = vmatprep.subr.mxu0 %v2738
  %2875 = vmatpush1.msra.mxu0 %v2737
  %2876 = vmatprep.subr.mxu0 %v2742
  %2877 = vmatpush1.msra.mxu0 %v2741
  %2878 = vmatprep.subr.mxu0 %v2746
  %2879 = vmatpush1.msra.mxu0 %v2745
  %2880 = vmatprep.subr.mxu0 %v2750
  %2881 = vmatpush1.msra.mxu0 %v2749
  %2882 = vmatprep.subr.mxu0 0.0
  %2883 = vmatpush1.msra.mxu0 0.0
  %2884 = vmatprep.subr.mxu0 0.0
  %2885 = vmatpush1.msra.mxu0 0.0
  %2886 = vmatprep.subr.mxu0 0.0
  %2887 = vmatpush1.msra.mxu0 0.0
  %2888 = vmatprep.subr.mxu0 0.0
  %2889 = vmatpush1.msra.mxu0 0.0
  %2890 = vmatprep.subr.mxu0 0.0
  %2891 = vmatpush1.msra.mxu0 0.0
  %2892 = vmatprep.subr.mxu0 0.0
  %2893 = vmatpush1.msra.mxu0 0.0
  %2894 = vmatprep.subr.mxu0 0.0
  %2895 = vmatpush1.msra.mxu0 0.0
  %2896 = vmatprep.subr.mxu0 0.0
  %2897 = vmatpush1.msra.mxu0 0.0
  %2898 = vmatprep.subr.mxu0 0.0
  %2899 = vmatpush1.msra.mxu0 0.0
  %2900 = vmatprep.subr.mxu0 0.0
  %2901 = vmatpush1.msra.mxu0 0.0
  %2902 = vmatprep.subr.mxu0 0.0
  %2903 = vmatpush1.msra.mxu0 0.0
  %2904 = vmatprep.subr.mxu0 0.0
  %2905 = vmatpush1.msra.mxu0 0.0
  %2906 = vmatprep.subr.mxu0 0.0
  %2907 = vmatpush1.msra.mxu0 0.0
  %2908 = vmatprep.subr.mxu0 0.0
  %2909 = vmatpush1.msra.mxu0 0.0
  %2910 = vmatprep.subr.mxu0 0.0
  %2911 = vmatpush1.msra.mxu0 0.0
  %2912 = vmatprep.subr.mxu0 0.0
  %2913 = vmatpush1.msra.mxu0 0.0
  %2914 = vmatprep.mubr.f32.mxu0 0.0
  %2915 = vmatmul.mubr.f32.gmra.mrb[0].mxu0 %v2685
  %v2916 = vpop.f32.mrb[0].mxu0
  %v2917 = vadd.f32 %v2764, %v2916
  %v2918 = vpop.f32.mrb[0].mxu0
  %v2919 = vadd.f32 %v2768, %v2918
  %2920 = vmatprep.mubr.f32.mxu0 0.0
  %2921 = vmatmul.mubr.f32.gmra.mrb[0].mxu0 %v2686
  %v2922 = vpop.f32.mrb[0].mxu0
  %v2923 = vadd.f32 %v2764, %v2922
  %v2924 = vpop.f32.mrb[0].mxu0
  %v2925 = vadd.f32 %v2768, %v2924
  %2926 = vdwg.mxu0
  %2927 = vst [vmem:[#allocation5] sm:$0xff] %v2840
  %2928 = vst [vmem:[#allocation5 + $0x8] sm:$0xff] %v2842
  %2929 = vst [vmem:[#allocation5 + $0x10] sm:$0xff] %v2917
  %2930 = vst [vmem:[#allocation5 + $0x18] sm:$0xff] %v2919
  %2931 = vst [vmem:[#allocation5 + $0x20] sm:$0xff] %v2846
  %2932 = vst [vmem:[#allocation5 + $0x28] sm:$0xff] %v2848
  %2933 = vst [vmem:[#allocation5 + $0x30] sm:$0xff] %v2923
  %2934 = vst [vmem:[#allocation5 + $0x38] sm:$0xff] %v2925
  %v2935 = vld [vmem:[#allocation5] sm:$0x3]
  %v2936 = vld [vmem:[#allocation5 + $0x8] sm:$0x3]
  %v2937 = vld [vmem:[#allocation5 + $0x10] sm:$0x3]
  %v2938 = vld [vmem:[#allocation5 + $0x18] sm:$0x3]
  %v2939 = vld [vmem:[#allocation3] sm:$0xff]
  %v2940 = vld [vmem:[#allocation3 + $0x8] sm:$0xff]
  %v2941 = vld [vmem:[#allocation3 + $0x10] sm:$0xff]
  %v2942 = vld [vmem:[#allocation3 + $0x18] sm:$0xff]
  %v2943 = vld [vmem:[#allocation3 + $0x20] sm:$0xff]
  %v2944 = vld [vmem:[#allocation3 + $0x28] sm:$0xff]
  %v2945 = vld [vmem:[#allocation3 + $0x30] sm:$0xff]
  %v2946 = vld [vmem:[#allocation3 + $0x38] sm:$0xff]
  %v2947 = vld [vmem:[#allocation3 + $0x40] sm:$0xff]
  %v2948 = vld [vmem:[#allocation3 + $0x48] sm:$0xff]
  %v2949 = vld [vmem:[#allocation3 + $0x50] sm:$0xff]
  %v2950 = vld [vmem:[#allocation3 + $0x58] sm:$0xff]
  %v2951 = vld [vmem:[#allocation3 + $0x60] sm:$0xff]
  %v2952 = vld [vmem:[#allocation3 + $0x68] sm:$0xff]
  %v2953 = vld [vmem:[#allocation3 + $0x70] sm:$0xff]
  %v2954 = vld [vmem:[#allocation3 + $0x78] sm:$0xff]
  %v2955 = vld [vmem:[#allocation3 + $0x80] sm:$0xff]
  %v2956 = vld [vmem:[#allocation3 + $0x88] sm:$0xff]
  %v2957 = vld [vmem:[#allocation3 + $0x90] sm:$0xff]
  %v2958 = vld [vmem:[#allocation3 + $0x98] sm:$0xff]
  %v2959 = vld [vmem:[#allocation3 + $0xa0] sm:$0xff]
  %v2960 = vld [vmem:[#allocation3 + $0xa8] sm:$0xff]
  %v2961 = vld [vmem:[#allocation3 + $0xb0] sm:$0xff]
  %v2962 = vld [vmem:[#allocation3 + $0xb8] sm:$0xff]
  %v2963 = vld [vmem:[#allocation3 + $0xc0] sm:$0xff]
  %v2964 = vld [vmem:[#allocation3 + $0xc8] sm:$0xff]
  %v2965 = vld [vmem:[#allocation3 + $0xd0] sm:$0xff]
  %v2966 = vld [vmem:[#allocation3 + $0xd8] sm:$0xff]
  %v2967 = vld [vmem:[#allocation3 + $0xe0] sm:$0xff]
  %v2968 = vld [vmem:[#allocation3 + $0xe8] sm:$0xff]
  %v2969 = vld [vmem:[#allocation3 + $0xf0] sm:$0xff]
  %v2970 = vld [vmem:[#allocation3 + $0xf8] sm:$0xff]
  %vm2971 = vcmask 523264
  %v2973 = vsel %vm2971, 0.0, 0
  %2975 = vmatprep.subr.mxu0 %v2940
  %2976 = vmatpush1.msra.mxu0 %v2939
  %2977 = vmatprep.subr.mxu0 %v2944
  %2978 = vmatpush1.msra.mxu0 %v2943
  %2979 = vmatprep.subr.mxu0 %v2948
  %2980 = vmatpush1.msra.mxu0 %v2947
  %2981 = vmatprep.subr.mxu0 %v2952
  %2982 = vmatpush1.msra.mxu0 %v2951
  %2983 = vmatprep.subr.mxu0 %v2956
  %2984 = vmatpush1.msra.mxu0 %v2955
  %2985 = vmatprep.subr.mxu0 %v2960
  %2986 = vmatpush1.msra.mxu0 %v2959
  %2987 = vmatprep.subr.mxu0 %v2964
  %2988 = vmatpush1.msra.mxu0 %v2963
  %2989 = vmatprep.subr.mxu0 %v2968
  %2990 = vmatpush1.msra.mxu0 %v2967
  %2991 = vmatprep.subr.mxu0 0.0
  %2992 = vmatpush1.msra.mxu0 0.0
  %2993 = vmatprep.subr.mxu0 0.0
  %2994 = vmatpush1.msra.mxu0 0.0
  %2995 = vmatprep.subr.mxu0 0.0
  %2996 = vmatpush1.msra.mxu0 0.0
  %2997 = vmatprep.subr.mxu0 0.0
  %2998 = vmatpush1.msra.mxu0 0.0
  %2999 = vmatprep.subr.mxu0 0.0
  %3000 = vmatpush1.msra.mxu0 0.0
  %3001 = vmatprep.subr.mxu0 0.0
  %3002 = vmatpush1.msra.mxu0 0.0
  %3003 = vmatprep.subr.mxu0 0.0
  %3004 = vmatpush1.msra.mxu0 0.0
  %3005 = vmatprep.subr.mxu0 0.0
  %3006 = vmatpush1.msra.mxu0 0.0
  %3007 = vmatprep.subr.mxu0 0.0
  %3008 = vmatpush1.msra.mxu0 0.0
  %3009 = vmatprep.subr.mxu0 0.0
  %3010 = vmatpush1.msra.mxu0 0.0
  %3011 = vmatprep.subr.mxu0 0.0
  %3012 = vmatpush1.msra.mxu0 0.0
  %3013 = vmatprep.subr.mxu0 0.0
  %3014 = vmatpush1.msra.mxu0 0.0
  %3015 = vmatprep.subr.mxu0 0.0
  %3016 = vmatpush1.msra.mxu0 0.0
  %3017 = vmatprep.subr.mxu0 0.0
  %3018 = vmatpush1.msra.mxu0 0.0
  %3019 = vmatprep.subr.mxu0 0.0
  %3020 = vmatpush1.msra.mxu0 0.0
  %3021 = vmatprep.subr.mxu0 0.0
  %3022 = vmatpush1.msra.mxu0 0.0
  %3023 = vmatprep.subr.mxu0 0.0
  %3024 = vmatpush1.msra.mxu0 0.0
  %3025 = vmatprep.subr.mxu0 0.0
  %3026 = vmatpush1.msra.mxu0 0.0
  %3027 = vmatprep.subr.mxu0 0.0
  %3028 = vmatpush1.msra.mxu0 0.0
  %3029 = vmatprep.subr.mxu0 0.0
  %3030 = vmatpush1.msra.mxu0 0.0
  %3031 = vmatprep.subr.mxu0 0.0
  %3032 = vmatpush1.msra.mxu0 0.0
  %3033 = vmatprep.subr.mxu0 0.0
  %3034 = vmatpush1.msra.mxu0 0.0
  %3035 = vmatprep.subr.mxu0 0.0
  %3036 = vmatpush1.msra.mxu0 0.0
  %3037 = vmatprep.subr.mxu0 0.0
  %3038 = vmatpush1.msra.mxu0 0.0
  %3039 = vmatprep.mubr.f32.mxu0 0.0
  %3040 = vmatmul.mubr.f32.gmra.mrb[0].mxu0 %v2973
  %v3041 = vpop.f32.mrb[0].mxu0
  %v3042 = vadd.f32 0.0, %v3041
  %v3043 = vpop.f32.mrb[0].mxu0
  %v3044 = vadd.f32 0.0, %v3043
  %3045 = vdwg.mxu0
  %3046 = vmatprep.subr.mxu0 %v2942
  %3047 = vmatpush1.msra.mxu0 %v2941
  %3048 = vmatprep.subr.mxu0 %v2946
  %3049 = vmatpush1.msra.mxu0 %v2945
  %3050 = vmatprep.subr.mxu0 %v2950
  %3051 = vmatpush1.msra.mxu0 %v2949
  %3052 = vmatprep.subr.mxu0 %v2954
  %3053 = vmatpush1.msra.mxu0 %v2953
  %3054 = vmatprep.subr.mxu0 %v2958
  %3055 = vmatpush1.msra.mxu0 %v2957
  %3056 = vmatprep.subr.mxu0 %v2962
  %3057 = vmatpush1.msra.mxu0 %v2961
  %3058 = vmatprep.subr.mxu0 %v2966
  %3059 = vmatpush1.msra.mxu0 %v2965
  %3060 = vmatprep.subr.mxu0 %v2970
  %3061 = vmatpush1.msra.mxu0 %v2969
  %3062 = vmatprep.subr.mxu0 0.0
  %3063 = vmatpush1.msra.mxu0 0.0
  %3064 = vmatprep.subr.mxu0 0.0
  %3065 = vmatpush1.msra.mxu0 0.0
  %3066 = vmatprep.subr.mxu0 0.0
  %3067 = vmatpush1.msra.mxu0 0.0
  %3068 = vmatprep.subr.mxu0 0.0
  %3069 = vmatpush1.msra.mxu0 0.0
  %3070 = vmatprep.subr.mxu0 0.0
  %3071 = vmatpush1.msra.mxu0 0.0
  %3072 = vmatprep.subr.mxu0 0.0
  %3073 = vmatpush1.msra.mxu0 0.0
  %3074 = vmatprep.subr.mxu0 0.0
  %3075 = vmatpush1.msra.mxu0 0.0
  %3076 = vmatprep.subr.mxu0 0.0
  %3077 = vmatpush1.msra.mxu0 0.0
  %3078 = vmatprep.subr.mxu0 0.0
  %3079 = vmatpush1.msra.mxu0 0.0
  %3080 = vmatprep.subr.mxu0 0.0
  %3081 = vmatpush1.msra.mxu0 0.0
  %3082 = vmatprep.subr.mxu0 0.0
  %3083 = vmatpush1.msra.mxu0 0.0
  %3084 = vmatprep.subr.mxu0 0.0
  %3085 = vmatpush1.msra.mxu0 0.0
  %3086 = vmatprep.subr.mxu0 0.0
  %3087 = vmatpush1.msra.mxu0 0.0
  %3088 = vmatprep.subr.mxu0 0.0
  %3089 = vmatpush1.msra.mxu0 0.0
  %3090 = vmatprep.subr.mxu0 0.0
  %3091 = vmatpush1.msra.mxu0 0.0
  %3092 = vmatprep.subr.mxu0 0.0
  %3093 = vmatpush1.msra.mxu0 0.0
  %3094 = vmatprep.subr.mxu0 0.0
  %3095 = vmatpush1.msra.mxu0 0.0
  %3096 = vmatprep.subr.mxu0 0.0
  %3097 = vmatpush1.msra.mxu0 0.0
  %3098 = vmatprep.subr.mxu0 0.0
  %3099 = vmatpush1.msra.mxu0 0.0
  %3100 = vmatprep.subr.mxu0 0.0
  %3101 = vmatpush1.msra.mxu0 0.0
  %3102 = vmatprep.subr.mxu0 0.0
  %3103 = vmatpush1.msra.mxu0 0.0
  %3104 = vmatprep.subr.mxu0 0.0
  %3105 = vmatpush1.msra.mxu0 0.0
  %3106 = vmatprep.subr.mxu0 0.0
  %3107 = vmatpush1.msra.mxu0 0.0
  %3108 = vmatprep.subr.mxu0 0.0
  %3109 = vmatpush1.msra.mxu0 0.0
  %3110 = vmatprep.mubr.f32.mxu0 0.0
  %3111 = vmatmul.mubr.f32.gmra.mrb[0].mxu0 %v2973
  %v3112 = vpop.f32.mrb[0].mxu0
  %v3113 = vadd.f32 0.0, %v3112
  %v3114 = vpop.f32.mrb[0].mxu0
  %v3115 = vadd.f32 0.0, %v3114
  %3116 = vdwg.mxu0
  %v3117 = vadd.f32 %v2935, %v3042
  %v3118 = vadd.f32 %v2936, %v3044
  %v3119 = vadd.f32 %v2937, %v3113
  %v3120 = vadd.f32 %v2938, %v3115
  %v3121 = vxor.u32 %v3117, 2147483648
  %v3122 = vmul.f32 %v3121, 1.442695
  %v3123 = vpow.pop %v3122
  %v3124 = vadd.f32 %v3123, 1.0
  %v3125 = vrcp.pop %v3124
  %v3126 = vmul.f32 1.0, %v3125
  %v3127 = vxor.u32 %v3118, 2147483648
  %v3128 = vmul.f32 %v3127, 1.442695
  %v3129 = vpow.pop %v3128
  %v3130 = vadd.f32 %v3129, 1.0
  %v3131 = vrcp.pop %v3130
  %v3132 = vmul.f32 1.0, %v3131
  %v3133 = vtanh.pop %v3119
  %v3134 = vxor.u32 %v3120, 2147483648
  %v3135 = vmul.f32 %v3134, 1.442695
  %v3136 = vpow.pop %v3135
  %v3137 = vadd.f32 %v3136, 1.0
  %v3138 = vrcp.pop %v3137
  %v3139 = vmul.f32 1.0, %v3138
  %v3140 = vmul.f32 %v3132, 0.0
  %v3141 = vmul.f32 %v3126, %v3133
  %v3142 = vadd.f32 %v3140, %v3141
  %v3143 = vtanh.pop %v3142
  %v3144 = vmul.f32 %v3139, %v3143
  %vm3145 = vcmask 517120
  %3146 = vst.msk [vmem:[#allocation7] sm:$0x3] %vm3145, %v3144
  %v3147 = vld [vmem:[#allocation5] sm:$0xc]
  %v3148 = vld [vmem:[#allocation5 + $0x8] sm:$0xc]
  %v3149 = vld [vmem:[#allocation5 + $0x10] sm:$0xc]
  %v3150 = vld [vmem:[#allocation5 + $0x18] sm:$0xc]
  %v3151 = vld [vmem:[#allocation3] sm:$0xff]
  %v3152 = vld [vmem:[#allocation3 + $0x8] sm:$0xff]
  %v3153 = vld [vmem:[#allocation3 + $0x10] sm:$0xff]
  %v3154 = vld [vmem:[#allocation3 + $0x18] sm:$0xff]
  %v3155 = vld [vmem:[#allocation3 + $0x20] sm:$0xff]
  %v3156 = vld [vmem:[#allocation3 + $0x28] sm:$0xff]
  %v3157 = vld [vmem:[#allocation3 + $0x30] sm:$0xff]
  %v3158 = vld [vmem:[#allocation3 + $0x38] sm:$0xff]
  %v3159 = vld [vmem:[#allocation3 + $0x40] sm:$0xff]
  %v3160 = vld [vmem:[#allocation3 + $0x48] sm:$0xff]
  %v3161 = vld [vmem:[#allocation3 + $0x50] sm:$0xff]
  %v3162 = vld [vmem:[#allocation3 + $0x58] sm:$0xff]
  %v3163 = vld [vmem:[#allocation3 + $0x60] sm:$0xff]
  %v3164 = vld [vmem:[#allocation3 + $0x68] sm:$0xff]
  %v3165 = vld [vmem:[#allocation3 + $0x70] sm:$0xff]
  %v3166 = vld [vmem:[#allocation3 + $0x78] sm:$0xff]
  %v3167 = vld [vmem:[#allocation3 + $0x80] sm:$0xff]
  %v3168 = vld [vmem:[#allocation3 + $0x88] sm:$0xff]
  %v3169 = vld [vmem:[#allocation3 + $0x90] sm:$0xff]
  %v3170 = vld [vmem:[#allocation3 + $0x98] sm:$0xff]
  %v3171 = vld [vmem:[#allocation3 + $0xa0] sm:$0xff]
  %v3172 = vld [vmem:[#allocation3 + $0xa8] sm:$0xff]
  %v3173 = vld [vmem:[#allocation3 + $0xb0] sm:$0xff]
  %v3174 = vld [vmem:[#allocation3 + $0xb8] sm:$0xff]
  %v3175 = vld [vmem:[#allocation3 + $0xc0] sm:$0xff]
  %v3176 = vld [vmem:[#allocation3 + $0xc8] sm:$0xff]
  %v3177 = vld [vmem:[#allocation3 + $0xd0] sm:$0xff]
  %v3178 = vld [vmem:[#allocation3 + $0xd8] sm:$0xff]
  %v3179 = vld [vmem:[#allocation3 + $0xe0] sm:$0xff]
  %v3180 = vld [vmem:[#allocation3 + $0xe8] sm:$0xff]
  %v3181 = vld [vmem:[#allocation3 + $0xf0] sm:$0xff]
  %v3182 = vld [vmem:[#allocation3 + $0xf8] sm:$0xff]
  %v3184 = vsel %vm2971, %v3144, 0
  %3186 = vmatprep.subr.mxu0 %v3152
  %3187 = vmatpush1.msra.mxu0 %v3151
  %3188 = vmatprep.subr.mxu0 %v3156
  %3189 = vmatpush1.msra.mxu0 %v3155
  %3190 = vmatprep.subr.mxu0 %v3160
  %3191 = vmatpush1.msra.mxu0 %v3159
  %3192 = vmatprep.subr.mxu0 %v3164
  %3193 = vmatpush1.msra.mxu0 %v3163
  %3194 = vmatprep.subr.mxu0 %v3168
  %3195 = vmatpush1.msra.mxu0 %v3167
  %3196 = vmatprep.subr.mxu0 %v3172
  %3197 = vmatpush1.msra.mxu0 %v3171
  %3198 = vmatprep.subr.mxu0 %v3176
  %3199 = vmatpush1.msra.mxu0 %v3175
  %3200 = vmatprep.subr.mxu0 %v3180
  %3201 = vmatpush1.msra.mxu0 %v3179
  %3202 = vmatprep.subr.mxu0 0.0
  %3203 = vmatpush1.msra.mxu0 0.0
  %3204 = vmatprep.subr.mxu0 0.0
  %3205 = vmatpush1.msra.mxu0 0.0
  %3206 = vmatprep.subr.mxu0 0.0
  %3207 = vmatpush1.msra.mxu0 0.0
  %3208 = vmatprep.subr.mxu0 0.0
  %3209 = vmatpush1.msra.mxu0 0.0
  %3210 = vmatprep.subr.mxu0 0.0
  %3211 = vmatpush1.msra.mxu0 0.0
  %3212 = vmatprep.subr.mxu0 0.0
  %3213 = vmatpush1.msra.mxu0 0.0
  %3214 = vmatprep.subr.mxu0 0.0
  %3215 = vmatpush1.msra.mxu0 0.0
  %3216 = vmatprep.subr.mxu0 0.0
  %3217 = vmatpush1.msra.mxu0 0.0
  %3218 = vmatprep.subr.mxu0 0.0
  %3219 = vmatpush1.msra.mxu0 0.0
  %3220 = vmatprep.subr.mxu0 0.0
  %3221 = vmatpush1.msra.mxu0 0.0
  %3222 = vmatprep.subr.mxu0 0.0
  %3223 = vmatpush1.msra.mxu0 0.0
  %3224 = vmatprep.subr.mxu0 0.0
  %3225 = vmatpush1.msra.mxu0 0.0
  %3226 = vmatprep.subr.mxu0 0.0
  %3227 = vmatpush1.msra.mxu0 0.0
  %3228 = vmatprep.subr.mxu0 0.0
  %3229 = vmatpush1.msra.mxu0 0.0
  %3230 = vmatprep.subr.mxu0 0.0
  %3231 = vmatpush1.msra.mxu0 0.0
  %3232 = vmatprep.subr.mxu0 0.0
  %3233 = vmatpush1.msra.mxu0 0.0
  %3234 = vmatprep.subr.mxu0 0.0
  %3235 = vmatpush1.msra.mxu0 0.0
  %3236 = vmatprep.subr.mxu0 0.0
  %3237 = vmatpush1.msra.mxu0 0.0
  %3238 = vmatprep.subr.mxu0 0.0
  %3239 = vmatpush1.msra.mxu0 0.0
  %3240 = vmatprep.subr.mxu0 0.0
  %3241 = vmatpush1.msra.mxu0 0.0
  %3242 = vmatprep.subr.mxu0 0.0
  %3243 = vmatpush1.msra.mxu0 0.0
  %3244 = vmatprep.subr.mxu0 0.0
  %3245 = vmatpush1.msra.mxu0 0.0
  %3246 = vmatprep.subr.mxu0 0.0
  %3247 = vmatpush1.msra.mxu0 0.0
  %3248 = vmatprep.subr.mxu0 0.0
  %3249 = vmatpush1.msra.mxu0 0.0
  %3250 = vmatprep.mubr.f32.mxu0 0.0
  %3251 = vmatmul.mubr.f32.gmra.mrb[0].mxu0 %v3184
  %v3252 = vpop.f32.mrb[0].mxu0
  %v3253 = vadd.f32 0.0, %v3252
  %v3254 = vpop.f32.mrb[0].mxu0
  %v3255 = vadd.f32 0.0, %v3254
  %3256 = vdwg.mxu0
  %3257 = vmatprep.subr.mxu0 %v3154
  %3258 = vmatpush1.msra.mxu0 %v3153
  %3259 = vmatprep.subr.mxu0 %v3158
  %3260 = vmatpush1.msra.mxu0 %v3157
  %3261 = vmatprep.subr.mxu0 %v3162
  %3262 = vmatpush1.msra.mxu0 %v3161
  %3263 = vmatprep.subr.mxu0 %v3166
  %3264 = vmatpush1.msra.mxu0 %v3165
  %3265 = vmatprep.subr.mxu0 %v3170
  %3266 = vmatpush1.msra.mxu0 %v3169
  %3267 = vmatprep.subr.mxu0 %v3174
  %3268 = vmatpush1.msra.mxu0 %v3173
  %3269 = vmatprep.subr.mxu0 %v3178
  %3270 = vmatpush1.msra.mxu0 %v3177
  %3271 = vmatprep.subr.mxu0 %v3182
  %3272 = vmatpush1.msra.mxu0 %v3181
  %3273 = vmatprep.subr.mxu0 0.0
  %3274 = vmatpush1.msra.mxu0 0.0
  %3275 = vmatprep.subr.mxu0 0.0
  %3276 = vmatpush1.msra.mxu0 0.0
  %3277 = vmatprep.subr.mxu0 0.0
  %3278 = vmatpush1.msra.mxu0 0.0
  %3279 = vmatprep.subr.mxu0 0.0
  %3280 = vmatpush1.msra.mxu0 0.0
  %3281 = vmatprep.subr.mxu0 0.0
  %3282 = vmatpush1.msra.mxu0 0.0
  %3283 = vmatprep.subr.mxu0 0.0
  %3284 = vmatpush1.msra.mxu0 0.0
  %3285 = vmatprep.subr.mxu0 0.0
  %3286 = vmatpush1.msra.mxu0 0.0
  %3287 = vmatprep.subr.mxu0 0.0
  %3288 = vmatpush1.msra.mxu0 0.0
  %3289 = vmatprep.subr.mxu0 0.0
  %3290 = vmatpush1.msra.mxu0 0.0
  %3291 = vmatprep.subr.mxu0 0.0
  %3292 = vmatpush1.msra.mxu0 0.0
  %3293 = vmatprep.subr.mxu0 0.0
  %3294 = vmatpush1.msra.mxu0 0.0
  %3295 = vmatprep.subr.mxu0 0.0
  %3296 = vmatpush1.msra.mxu0 0.0
  %3297 = vmatprep.subr.mxu0 0.0
  %3298 = vmatpush1.msra.mxu0 0.0
  %3299 = vmatprep.subr.mxu0 0.0
  %3300 = vmatpush1.msra.mxu0 0.0
  %3301 = vmatprep.subr.mxu0 0.0
  %3302 = vmatpush1.msra.mxu0 0.0
  %3303 = vmatprep.subr.mxu0 0.0
  %3304 = vmatpush1.msra.mxu0 0.0
  %3305 = vmatprep.subr.mxu0 0.0
  %3306 = vmatpush1.msra.mxu0 0.0
  %3307 = vmatprep.subr.mxu0 0.0
  %3308 = vmatpush1.msra.mxu0 0.0
  %3309 = vmatprep.subr.mxu0 0.0
  %3310 = vmatpush1.msra.mxu0 0.0
  %3311 = vmatprep.subr.mxu0 0.0
  %3312 = vmatpush1.msra.mxu0 0.0
  %3313 = vmatprep.subr.mxu0 0.0
  %3314 = vmatpush1.msra.mxu0 0.0
  %3315 = vmatprep.subr.mxu0 0.0
  %3316 = vmatpush1.msra.mxu0 0.0
  %3317 = vmatprep.subr.mxu0 0.0
  %3318 = vmatpush1.msra.mxu0 0.0
  %3319 = vmatprep.subr.mxu0 0.0
  %3320 = vmatpush1.msra.mxu0 0.0
  %3321 = vmatprep.mubr.f32.mxu0 0.0
  %3322 = vmatmul.mubr.f32.gmra.mrb[0].mxu0 %v3184
  %v3323 = vpop.f32.mrb[0].mxu0
  %v3324 = vadd.f32 0.0, %v3323
  %v3325 = vpop.f32.mrb[0].mxu0
  %v3326 = vadd.f32 0.0, %v3325
  %3327 = vdwg.mxu0
  %v3332 = vrot.slane %v3253, 6
  %v3333 = vrot.slane %v3255, 6
  %v3334 = vrot.slane %v3324, 6
  %v3335 = vrot.slane %v3326, 6
  %v3340 = vadd.f32 %v3147, %v3332
  %v3341 = vadd.f32 %v3148, %v3333
  %v3342 = vadd.f32 %v3149, %v3334
  %v3343 = vadd.f32 %v3150, %v3335
  %v3344 = vxor.u32 %v3340, 2147483648
  %v3345 = vmul.f32 %v3344, 1.442695
  %v3346 = vpow.pop %v3345
  %v3347 = vadd.f32 %v3346, 1.0
  %v3348 = vrcp.pop %v3347
  %v3349 = vmul.f32 1.0, %v3348
  %v3350 = vxor.u32 %v3341, 2147483648
  %v3351 = vmul.f32 %v3350, 1.442695
  %v3352 = vpow.pop %v3351
  %v3353 = vadd.f32 %v3352, 1.0
  %v3354 = vrcp.pop %v3353
  %v3355 = vmul.f32 1.0, %v3354
  %v3356 = vtanh.pop %v3342
  %v3357 = vxor.u32 %v3343, 2147483648
  %v3358 = vmul.f32 %v3357, 1.442695
  %v3359 = vpow.pop %v3358
  %v3360 = vadd.f32 %v3359, 1.0
  %v3361 = vrcp.pop %v3360
  %v3362 = vmul.f32 1.0, %v3361
  %v3364 = vrot.slane %v3142, 6
  %v3366 = vmul.f32 %v3355, %v3364
  %v3367 = vmul.f32 %v3349, %v3356
  %v3368 = vadd.f32 %v3366, %v3367
  %v3369 = vtanh.pop %v3368
  %v3370 = vmul.f32 %v3362, %v3369
  %vm3371 = vcmask 519170
  %3372 = vst.msk [vmem:[#allocation7] sm:$0xc] %vm3371, %v3370
  %v3373 = vld [vmem:[#allocation5] sm:$0x30]
  %v3374 = vld [vmem:[#allocation5 + $0x8] sm:$0x30]
  %v3375 = vld [vmem:[#allocation5 + $0x10] sm:$0x30]
  %v3376 = vld [vmem:[#allocation5 + $0x18] sm:$0x30]
  %v3377 = vld [vmem:[#allocation3] sm:$0xff]
  %v3378 = vld [vmem:[#allocation3 + $0x8] sm:$0xff]
  %v3379 = vld [vmem:[#allocation3 + $0x10] sm:$0xff]
  %v3380 = vld [vmem:[#allocation3 + $0x18] sm:$0xff]
  %v3381 = vld [vmem:[#allocation3 + $0x20] sm:$0xff]
  %v3382 = vld [vmem:[#allocation3 + $0x28] sm:$0xff]
  %v3383 = vld [vmem:[#allocation3 + $0x30] sm:$0xff]
  %v3384 = vld [vmem:[#allocation3 + $0x38] sm:$0xff]
  %v3385 = vld [vmem:[#allocation3 + $0x40] sm:$0xff]
  %v3386 = vld [vmem:[#allocation3 + $0x48] sm:$0xff]
  %v3387 = vld [vmem:[#allocation3 + $0x50] sm:$0xff]
  %v3388 = vld [vmem:[#allocation3 + $0x58] sm:$0xff]
  %v3389 = vld [vmem:[#allocation3 + $0x60] sm:$0xff]
  %v3390 = vld [vmem:[#allocation3 + $0x68] sm:$0xff]
  %v3391 = vld [vmem:[#allocation3 + $0x70] sm:$0xff]
  %v3392 = vld [vmem:[#allocation3 + $0x78] sm:$0xff]
  %v3393 = vld [vmem:[#allocation3 + $0x80] sm:$0xff]
  %v3394 = vld [vmem:[#allocation3 + $0x88] sm:$0xff]
  %v3395 = vld [vmem:[#allocation3 + $0x90] sm:$0xff]
  %v3396 = vld [vmem:[#allocation3 + $0x98] sm:$0xff]
  %v3397 = vld [vmem:[#allocation3 + $0xa0] sm:$0xff]
  %v3398 = vld [vmem:[#allocation3 + $0xa8] sm:$0xff]
  %v3399 = vld [vmem:[#allocation3 + $0xb0] sm:$0xff]
  %v3400 = vld [vmem:[#allocation3 + $0xb8] sm:$0xff]
  %v3401 = vld [vmem:[#allocation3 + $0xc0] sm:$0xff]
  %v3402 = vld [vmem:[#allocation3 + $0xc8] sm:$0xff]
  %v3403 = vld [vmem:[#allocation3 + $0xd0] sm:$0xff]
  %v3404 = vld [vmem:[#allocation3 + $0xd8] sm:$0xff]
  %v3405 = vld [vmem:[#allocation3 + $0xe0] sm:$0xff]
  %v3406 = vld [vmem:[#allocation3 + $0xe8] sm:$0xff]
  %v3407 = vld [vmem:[#allocation3 + $0xf0] sm:$0xff]
  %v3408 = vld [vmem:[#allocation3 + $0xf8] sm:$0xff]
  %v3410 = vrot.slane %v3370, 2
  %v3411 = vsel %vm2971, %v3410, 0
  %3413 = vmatprep.subr.mxu0 %v3378
  %3414 = vmatpush1.msra.mxu0 %v3377
  %3415 = vmatprep.subr.mxu0 %v3382
  %3416 = vmatpush1.msra.mxu0 %v3381
  %3417 = vmatprep.subr.mxu0 %v3386
  %3418 = vmatpush1.msra.mxu0 %v3385
  %3419 = vmatprep.subr.mxu0 %v3390
  %3420 = vmatpush1.msra.mxu0 %v3389
  %3421 = vmatprep.subr.mxu0 %v3394
  %3422 = vmatpush1.msra.mxu0 %v3393
  %3423 = vmatprep.subr.mxu0 %v3398
  %3424 = vmatpush1.msra.mxu0 %v3397
  %3425 = vmatprep.subr.mxu0 %v3402
  %3426 = vmatpush1.msra.mxu0 %v3401
  %3427 = vmatprep.subr.mxu0 %v3406
  %3428 = vmatpush1.msra.mxu0 %v3405
  %3429 = vmatprep.subr.mxu0 0.0
  %3430 = vmatpush1.msra.mxu0 0.0
  %3431 = vmatprep.subr.mxu0 0.0
  %3432 = vmatpush1.msra.mxu0 0.0
  %3433 = vmatprep.subr.mxu0 0.0
  %3434 = vmatpush1.msra.mxu0 0.0
  %3435 = vmatprep.subr.mxu0 0.0
  %3436 = vmatpush1.msra.mxu0 0.0
  %3437 = vmatprep.subr.mxu0 0.0
  %3438 = vmatpush1.msra.mxu0 0.0
  %3439 = vmatprep.subr.mxu0 0.0
  %3440 = vmatpush1.msra.mxu0 0.0
  %3441 = vmatprep.subr.mxu0 0.0
  %3442 = vmatpush1.msra.mxu0 0.0
  %3443 = vmatprep.subr.mxu0 0.0
  %3444 = vmatpush1.msra.mxu0 0.0
  %3445 = vmatprep.subr.mxu0 0.0
  %3446 = vmatpush1.msra.mxu0 0.0
  %3447 = vmatprep.subr.mxu0 0.0
  %3448 = vmatpush1.msra.mxu0 0.0
  %3449 = vmatprep.subr.mxu0 0.0
  %3450 = vmatpush1.msra.mxu0 0.0
  %3451 = vmatprep.subr.mxu0 0.0
  %3452 = vmatpush1.msra.mxu0 0.0
  %3453 = vmatprep.subr.mxu0 0.0
  %3454 = vmatpush1.msra.mxu0 0.0
  %3455 = vmatprep.subr.mxu0 0.0
  %3456 = vmatpush1.msra.mxu0 0.0
  %3457 = vmatprep.subr.mxu0 0.0
  %3458 = vmatpush1.msra.mxu0 0.0
  %3459 = vmatprep.subr.mxu0 0.0
  %3460 = vmatpush1.msra.mxu0 0.0
  %3461 = vmatprep.subr.mxu0 0.0
  %3462 = vmatpush1.msra.mxu0 0.0
  %3463 = vmatprep.subr.mxu0 0.0
  %3464 = vmatpush1.msra.mxu0 0.0
  %3465 = vmatprep.subr.mxu0 0.0
  %3466 = vmatpush1.msra.mxu0 0.0
  %3467 = vmatprep.subr.mxu0 0.0
  %3468 = vmatpush1.msra.mxu0 0.0
  %3469 = vmatprep.subr.mxu0 0.0
  %3470 = vmatpush1.msra.mxu0 0.0
  %3471 = vmatprep.subr.mxu0 0.0
  %3472 = vmatpush1.msra.mxu0 0.0
  %3473 = vmatprep.subr.mxu0 0.0
  %3474 = vmatpush1.msra.mxu0 0.0
  %3475 = vmatprep.subr.mxu0 0.0
  %3476 = vmatpush1.msra.mxu0 0.0
  %3477 = vmatprep.mubr.f32.mxu0 0.0
  %3478 = vmatmul.mubr.f32.gmra.mrb[0].mxu0 %v3411
  %v3479 = vpop.f32.mrb[0].mxu0
  %v3480 = vadd.f32 0.0, %v3479
  %v3481 = vpop.f32.mrb[0].mxu0
  %v3482 = vadd.f32 0.0, %v3481
  %3483 = vdwg.mxu0
  %3484 = vmatprep.subr.mxu0 %v3380
  %3485 = vmatpush1.msra.mxu0 %v3379
  %3486 = vmatprep.subr.mxu0 %v3384
  %3487 = vmatpush1.msra.mxu0 %v3383
  %3488 = vmatprep.subr.mxu0 %v3388
  %3489 = vmatpush1.msra.mxu0 %v3387
  %3490 = vmatprep.subr.mxu0 %v3392
  %3491 = vmatpush1.msra.mxu0 %v3391
  %3492 = vmatprep.subr.mxu0 %v3396
  %3493 = vmatpush1.msra.mxu0 %v3395
  %3494 = vmatprep.subr.mxu0 %v3400
  %3495 = vmatpush1.msra.mxu0 %v3399
  %3496 = vmatprep.subr.mxu0 %v3404
  %3497 = vmatpush1.msra.mxu0 %v3403
  %3498 = vmatprep.subr.mxu0 %v3408
  %3499 = vmatpush1.msra.mxu0 %v3407
  %3500 = vmatprep.subr.mxu0 0.0
  %3501 = vmatpush1.msra.mxu0 0.0
  %3502 = vmatprep.subr.mxu0 0.0
  %3503 = vmatpush1.msra.mxu0 0.0
  %3504 = vmatprep.subr.mxu0 0.0
  %3505 = vmatpush1.msra.mxu0 0.0
  %3506 = vmatprep.subr.mxu0 0.0
  %3507 = vmatpush1.msra.mxu0 0.0
  %3508 = vmatprep.subr.mxu0 0.0
  %3509 = vmatpush1.msra.mxu0 0.0
  %3510 = vmatprep.subr.mxu0 0.0
  %3511 = vmatpush1.msra.mxu0 0.0
  %3512 = vmatprep.subr.mxu0 0.0
  %3513 = vmatpush1.msra.mxu0 0.0
  %3514 = vmatprep.subr.mxu0 0.0
  %3515 = vmatpush1.msra.mxu0 0.0
  %3516 = vmatprep.subr.mxu0 0.0
  %3517 = vmatpush1.msra.mxu0 0.0
  %3518 = vmatprep.subr.mxu0 0.0
  %3519 = vmatpush1.msra.mxu0 0.0
  %3520 = vmatprep.subr.mxu0 0.0
  %3521 = vmatpush1.msra.mxu0 0.0
  %3522 = vmatprep.subr.mxu0 0.0
  %3523 = vmatpush1.msra.mxu0 0.0
  %3524 = vmatprep.subr.mxu0 0.0
  %3525 = vmatpush1.msra.mxu0 0.0
  %3526 = vmatprep.subr.mxu0 0.0
  %3527 = vmatpush1.msra.mxu0 0.0
  %3528 = vmatprep.subr.mxu0 0.0
  %3529 = vmatpush1.msra.mxu0 0.0
  %3530 = vmatprep.subr.mxu0 0.0
  %3531 = vmatpush1.msra.mxu0 0.0
  %3532 = vmatprep.subr.mxu0 0.0
  %3533 = vmatpush1.msra.mxu0 0.0
  %3534 = vmatprep.subr.mxu0 0.0
  %3535 = vmatpush1.msra.mxu0 0.0
  %3536 = vmatprep.subr.mxu0 0.0
  %3537 = vmatpush1.msra.mxu0 0.0
  %3538 = vmatprep.subr.mxu0 0.0
  %3539 = vmatpush1.msra.mxu0 0.0
  %3540 = vmatprep.subr.mxu0 0.0
  %3541 = vmatpush1.msra.mxu0 0.0
  %3542 = vmatprep.subr.mxu0 0.0
  %3543 = vmatpush1.msra.mxu0 0.0
  %3544 = vmatprep.subr.mxu0 0.0
  %3545 = vmatpush1.msra.mxu0 0.0
  %3546 = vmatprep.subr.mxu0 0.0
  %3547 = vmatpush1.msra.mxu0 0.0
  %3548 = vmatprep.mubr.f32.mxu0 0.0
  %3549 = vmatmul.mubr.f32.gmra.mrb[0].mxu0 %v3411
  %v3550 = vpop.f32.mrb[0].mxu0
  %v3551 = vadd.f32 0.0, %v3550
  %v3552 = vpop.f32.mrb[0].mxu0
  %v3553 = vadd.f32 0.0, %v3552
  %3554 = vdwg.mxu0
  %v3559 = vrot.slane %v3480, 4
  %v3560 = vrot.slane %v3482, 4
  %v3561 = vrot.slane %v3551, 4
  %v3562 = vrot.slane %v3553, 4
  %v3567 = vadd.f32 %v3373, %v3559
  %v3568 = vadd.f32 %v3374, %v3560
  %v3569 = vadd.f32 %v3375, %v3561
  %v3570 = vadd.f32 %v3376, %v3562
  %v3571 = vxor.u32 %v3567, 2147483648
  %v3572 = vmul.f32 %v3571, 1.442695
  %v3573 = vpow.pop %v3572
  %v3574 = vadd.f32 %v3573, 1.0
  %v3575 = vrcp.pop %v3574
  %v3576 = vmul.f32 1.0, %v3575
  %v3577 = vxor.u32 %v3568, 2147483648
  %v3578 = vmul.f32 %v3577, 1.442695
  %v3579 = vpow.pop %v3578
  %v3580 = vadd.f32 %v3579, 1.0
  %v3581 = vrcp.pop %v3580
  %v3582 = vmul.f32 1.0, %v3581
  %v3583 = vtanh.pop %v3569
  %v3584 = vxor.u32 %v3570, 2147483648
  %v3585 = vmul.f32 %v3584, 1.442695
  %v3586 = vpow.pop %v3585
  %v3587 = vadd.f32 %v3586, 1.0
  %v3588 = vrcp.pop %v3587
  %v3589 = vmul.f32 1.0, %v3588
  %v3591 = vrot.slane %v3368, 6
  %v3593 = vmul.f32 %v3582, %v3591
  %v3594 = vmul.f32 %v3576, %v3583
  %v3595 = vadd.f32 %v3593, %v3594
  %v3596 = vtanh.pop %v3595
  %v3597 = vmul.f32 %v3589, %v3596
  %vm3598 = vcmask 521220
  %3599 = vst.msk [vmem:[#allocation7] sm:$0x30] %vm3598, %v3597
  %v3600 = vld [vmem:[#allocation5] sm:$0xc0]
  %v3601 = vld [vmem:[#allocation5 + $0x8] sm:$0xc0]
  %v3602 = vld [vmem:[#allocation5 + $0x10] sm:$0xc0]
  %v3603 = vld [vmem:[#allocation5 + $0x18] sm:$0xc0]
  %v3604 = vld [vmem:[#allocation3] sm:$0xff]
  %v3605 = vld [vmem:[#allocation3 + $0x8] sm:$0xff]
  %v3606 = vld [vmem:[#allocation3 + $0x10] sm:$0xff]
  %v3607 = vld [vmem:[#allocation3 + $0x18] sm:$0xff]
  %v3608 = vld [vmem:[#allocation3 + $0x20] sm:$0xff]
  %v3609 = vld [vmem:[#allocation3 + $0x28] sm:$0xff]
  %v3610 = vld [vmem:[#allocation3 + $0x30] sm:$0xff]
  %v3611 = vld [vmem:[#allocation3 + $0x38] sm:$0xff]
  %v3612 = vld [vmem:[#allocation3 + $0x40] sm:$0xff]
  %v3613 = vld [vmem:[#allocation3 + $0x48] sm:$0xff]
  %v3614 = vld [vmem:[#allocation3 + $0x50] sm:$0xff]
  %v3615 = vld [vmem:[#allocation3 + $0x58] sm:$0xff]
  %v3616 = vld [vmem:[#allocation3 + $0x60] sm:$0xff]
  %v3617 = vld [vmem:[#allocation3 + $0x68] sm:$0xff]
  %v3618 = vld [vmem:[#allocation3 + $0x70] sm:$0xff]
  %v3619 = vld [vmem:[#allocation3 + $0x78] sm:$0xff]
  %v3620 = vld [vmem:[#allocation3 + $0x80] sm:$0xff]
  %v3621 = vld [vmem:[#allocation3 + $0x88] sm:$0xff]
  %v3622 = vld [vmem:[#allocation3 + $0x90] sm:$0xff]
  %v3623 = vld [vmem:[#allocation3 + $0x98] sm:$0xff]
  %v3624 = vld [vmem:[#allocation3 + $0xa0] sm:$0xff]
  %v3625 = vld [vmem:[#allocation3 + $0xa8] sm:$0xff]
  %v3626 = vld [vmem:[#allocation3 + $0xb0] sm:$0xff]
  %v3627 = vld [vmem:[#allocation3 + $0xb8] sm:$0xff]
  %v3628 = vld [vmem:[#allocation3 + $0xc0] sm:$0xff]
  %v3629 = vld [vmem:[#allocation3 + $0xc8] sm:$0xff]
  %v3630 = vld [vmem:[#allocation3 + $0xd0] sm:$0xff]
  %v3631 = vld [vmem:[#allocation3 + $0xd8] sm:$0xff]
  %v3632 = vld [vmem:[#allocation3 + $0xe0] sm:$0xff]
  %v3633 = vld [vmem:[#allocation3 + $0xe8] sm:$0xff]
  %v3634 = vld [vmem:[#allocation3 + $0xf0] sm:$0xff]
  %v3635 = vld [vmem:[#allocation3 + $0xf8] sm:$0xff]
  %v3637 = vrot.slane %v3597, 4
  %v3638 = vsel %vm2971, %v3637, 0
  %3640 = vmatprep.subr.mxu0 %v3605
  %3641 = vmatpush1.msra.mxu0 %v3604
  %3642 = vmatprep.subr.mxu0 %v3609
  %3643 = vmatpush1.msra.mxu0 %v3608
  %3644 = vmatprep.subr.mxu0 %v3613
  %3645 = vmatpush1.msra.mxu0 %v3612
  %3646 = vmatprep.subr.mxu0 %v3617
  %3647 = vmatpush1.msra.mxu0 %v3616
  %3648 = vmatprep.subr.mxu0 %v3621
  %3649 = vmatpush1.msra.mxu0 %v3620
  %3650 = vmatprep.subr.mxu0 %v3625
  %3651 = vmatpush1.msra.mxu0 %v3624
  %3652 = vmatprep.subr.mxu0 %v3629
  %3653 = vmatpush1.msra.mxu0 %v3628
  %3654 = vmatprep.subr.mxu0 %v3633
  %3655 = vmatpush1.msra.mxu0 %v3632
  %3656 = vmatprep.subr.mxu0 0.0
  %3657 = vmatpush1.msra.mxu0 0.0
  %3658 = vmatprep.subr.mxu0 0.0
  %3659 = vmatpush1.msra.mxu0 0.0
  %3660 = vmatprep.subr.mxu0 0.0
  %3661 = vmatpush1.msra.mxu0 0.0
  %3662 = vmatprep.subr.mxu0 0.0
  %3663 = vmatpush1.msra.mxu0 0.0
  %3664 = vmatprep.subr.mxu0 0.0
  %3665 = vmatpush1.msra.mxu0 0.0
  %3666 = vmatprep.subr.mxu0 0.0
  %3667 = vmatpush1.msra.mxu0 0.0
  %3668 = vmatprep.subr.mxu0 0.0
  %3669 = vmatpush1.msra.mxu0 0.0
  %3670 = vmatprep.subr.mxu0 0.0
  %3671 = vmatpush1.msra.mxu0 0.0
  %3672 = vmatprep.subr.mxu0 0.0
  %3673 = vmatpush1.msra.mxu0 0.0
  %3674 = vmatprep.subr.mxu0 0.0
  %3675 = vmatpush1.msra.mxu0 0.0
  %3676 = vmatprep.subr.mxu0 0.0
  %3677 = vmatpush1.msra.mxu0 0.0
  %3678 = vmatprep.subr.mxu0 0.0
  %3679 = vmatpush1.msra.mxu0 0.0
  %3680 = vmatprep.subr.mxu0 0.0
  %3681 = vmatpush1.msra.mxu0 0.0
  %3682 = vmatprep.subr.mxu0 0.0
  %3683 = vmatpush1.msra.mxu0 0.0
  %3684 = vmatprep.subr.mxu0 0.0
  %3685 = vmatpush1.msra.mxu0 0.0
  %3686 = vmatprep.subr.mxu0 0.0
  %3687 = vmatpush1.msra.mxu0 0.0
  %3688 = vmatprep.subr.mxu0 0.0
  %3689 = vmatpush1.msra.mxu0 0.0
  %3690 = vmatprep.subr.mxu0 0.0
  %3691 = vmatpush1.msra.mxu0 0.0
  %3692 = vmatprep.subr.mxu0 0.0
  %3693 = vmatpush1.msra.mxu0 0.0
  %3694 = vmatprep.subr.mxu0 0.0
  %3695 = vmatpush1.msra.mxu0 0.0
  %3696 = vmatprep.subr.mxu0 0.0
  %3697 = vmatpush1.msra.mxu0 0.0
  %3698 = vmatprep.subr.mxu0 0.0
  %3699 = vmatpush1.msra.mxu0 0.0
  %3700 = vmatprep.subr.mxu0 0.0
  %3701 = vmatpush1.msra.mxu0 0.0
  %3702 = vmatprep.subr.mxu0 0.0
  %3703 = vmatpush1.msra.mxu0 0.0
  %3704 = vmatprep.mubr.f32.mxu0 0.0
  %3705 = vmatmul.mubr.f32.gmra.mrb[0].mxu0 %v3638
  %v3706 = vpop.f32.mrb[0].mxu0
  %v3707 = vadd.f32 0.0, %v3706
  %v3708 = vpop.f32.mrb[0].mxu0
  %v3709 = vadd.f32 0.0, %v3708
  %3710 = vdwg.mxu0
  %3711 = vmatprep.subr.mxu0 %v3607
  %3712 = vmatpush1.msra.mxu0 %v3606
  %3713 = vmatprep.subr.mxu0 %v3611
  %3714 = vmatpush1.msra.mxu0 %v3610
  %3715 = vmatprep.subr.mxu0 %v3615
  %3716 = vmatpush1.msra.mxu0 %v3614
  %3717 = vmatprep.subr.mxu0 %v3619
  %3718 = vmatpush1.msra.mxu0 %v3618
  %3719 = vmatprep.subr.mxu0 %v3623
  %3720 = vmatpush1.msra.mxu0 %v3622
  %3721 = vmatprep.subr.mxu0 %v3627
  %3722 = vmatpush1.msra.mxu0 %v3626
  %3723 = vmatprep.subr.mxu0 %v3631
  %3724 = vmatpush1.msra.mxu0 %v3630
  %3725 = vmatprep.subr.mxu0 %v3635
  %3726 = vmatpush1.msra.mxu0 %v3634
  %3727 = vmatprep.subr.mxu0 0.0
  %3728 = vmatpush1.msra.mxu0 0.0
  %3729 = vmatprep.subr.mxu0 0.0
  %3730 = vmatpush1.msra.mxu0 0.0
  %3731 = vmatprep.subr.mxu0 0.0
  %3732 = vmatpush1.msra.mxu0 0.0
  %3733 = vmatprep.subr.mxu0 0.0
  %3734 = vmatpush1.msra.mxu0 0.0
  %3735 = vmatprep.subr.mxu0 0.0
  %3736 = vmatpush1.msra.mxu0 0.0
  %3737 = vmatprep.subr.mxu0 0.0
  %3738 = vmatpush1.msra.mxu0 0.0
  %3739 = vmatprep.subr.mxu0 0.0
  %3740 = vmatpush1.msra.mxu0 0.0
  %3741 = vmatprep.subr.mxu0 0.0
  %3742 = vmatpush1.msra.mxu0 0.0
  %3743 = vmatprep.subr.mxu0 0.0
  %3744 = vmatpush1.msra.mxu0 0.0
  %3745 = vmatprep.subr.mxu0 0.0
  %3746 = vmatpush1.msra.mxu0 0.0
  %3747 = vmatprep.subr.mxu0 0.0
  %3748 = vmatpush1.msra.mxu0 0.0
  %3749 = vmatprep.subr.mxu0 0.0
  %3750 = vmatpush1.msra.mxu0 0.0
  %3751 = vmatprep.subr.mxu0 0.0
  %3752 = vmatpush1.msra.mxu0 0.0
  %3753 = vmatprep.subr.mxu0 0.0
  %3754 = vmatpush1.msra.mxu0 0.0
  %3755 = vmatprep.subr.mxu0 0.0
  %3756 = vmatpush1.msra.mxu0 0.0
  %3757 = vmatprep.subr.mxu0 0.0
  %3758 = vmatpush1.msra.mxu0 0.0
  %3759 = vmatprep.subr.mxu0 0.0
  %3760 = vmatpush1.msra.mxu0 0.0
  %3761 = vmatprep.subr.mxu0 0.0
  %3762 = vmatpush1.msra.mxu0 0.0
  %3763 = vmatprep.subr.mxu0 0.0
  %3764 = vmatpush1.msra.mxu0 0.0
  %3765 = vmatprep.subr.mxu0 0.0
  %3766 = vmatpush1.msra.mxu0 0.0
  %3767 = vmatprep.subr.mxu0 0.0
  %3768 = vmatpush1.msra.mxu0 0.0
  %3769 = vmatprep.subr.mxu0 0.0
  %3770 = vmatpush1.msra.mxu0 0.0
  %3771 = vmatprep.subr.mxu0 0.0
  %3772 = vmatpush1.msra.mxu0 0.0
  %3773 = vmatprep.subr.mxu0 0.0
  %3774 = vmatpush1.msra.mxu0 0.0
  %3775 = vmatprep.mubr.f32.mxu0 0.0
  %3776 = vmatmul.mubr.f32.gmra.mrb[0].mxu0 %v3638
  %v3777 = vpop.f32.mrb[0].mxu0
  %v3778 = vadd.f32 0.0, %v3777
  %v3779 = vpop.f32.mrb[0].mxu0
  %v3780 = vadd.f32 0.0, %v3779
  %3781 = vdwg.mxu0
  %v3786 = vrot.slane %v3707, 2
  %v3787 = vrot.slane %v3709, 2
  %v3788 = vrot.slane %v3778, 2
  %v3789 = vrot.slane %v3780, 2
  %v3794 = vadd.f32 %v3600, %v3786
  %v3795 = vadd.f32 %v3601, %v3787
  %v3796 = vadd.f32 %v3602, %v3788
  %v3797 = vadd.f32 %v3603, %v3789
  %v3798 = vxor.u32 %v3794, 2147483648
  %v3799 = vmul.f32 %v3798, 1.442695
  %v3800 = vpow.pop %v3799
  %v3801 = vadd.f32 %v3800, 1.0
  %v3802 = vrcp.pop %v3801
  %v3803 = vmul.f32 1.0, %v3802
  %v3804 = vxor.u32 %v3795, 2147483648
  %v3805 = vmul.f32 %v3804, 1.442695
  %v3806 = vpow.pop %v3805
  %v3807 = vadd.f32 %v3806, 1.0
  %v3808 = vrcp.pop %v3807
  %v3809 = vmul.f32 1.0, %v3808
  %v3810 = vtanh.pop %v3796
  %v3811 = vxor.u32 %v3797, 2147483648
  %v3812 = vmul.f32 %v3811, 1.442695
  %v3813 = vpow.pop %v3812
  %v3814 = vadd.f32 %v3813, 1.0
  %v3815 = vrcp.pop %v3814
  %v3816 = vmul.f32 1.0, %v3815
  %v3818 = vrot.slane %v3595, 6
  %v3820 = vmul.f32 %v3809, %v3818
  %v3821 = vmul.f32 %v3803, %v3810
  %v3822 = vadd.f32 %v3820, %v3821
  %v3823 = vtanh.pop %v3822
  %v3824 = vmul.f32 %v3816, %v3823
  %vm3825 = vcmask 523270
  %3826 = vst.msk [vmem:[#allocation7] sm:$0xc0] %vm3825, %v3824
  %v3827 = vld [vmem:[#allocation5 + $0x20] sm:$0x3]
  %v3828 = vld [vmem:[#allocation5 + $0x28] sm:$0x3]
  %v3829 = vld [vmem:[#allocation5 + $0x30] sm:$0x3]
  %v3830 = vld [vmem:[#allocation5 + $0x38] sm:$0x3]
  %v3831 = vld [vmem:[#allocation3] sm:$0xff]
  %v3832 = vld [vmem:[#allocation3 + $0x8] sm:$0xff]
  %v3833 = vld [vmem:[#allocation3 + $0x10] sm:$0xff]
  %v3834 = vld [vmem:[#allocation3 + $0x18] sm:$0xff]
  %v3835 = vld [vmem:[#allocation3 + $0x20] sm:$0xff]
  %v3836 = vld [vmem:[#allocation3 + $0x28] sm:$0xff]
  %v3837 = vld [vmem:[#allocation3 + $0x30] sm:$0xff]
  %v3838 = vld [vmem:[#allocation3 + $0x38] sm:$0xff]
  %v3839 = vld [vmem:[#allocation3 + $0x40] sm:$0xff]
  %v3840 = vld [vmem:[#allocation3 + $0x48] sm:$0xff]
  %v3841 = vld [vmem:[#allocation3 + $0x50] sm:$0xff]
  %v3842 = vld [vmem:[#allocation3 + $0x58] sm:$0xff]
  %v3843 = vld [vmem:[#allocation3 + $0x60] sm:$0xff]
  %v3844 = vld [vmem:[#allocation3 + $0x68] sm:$0xff]
  %v3845 = vld [vmem:[#allocation3 + $0x70] sm:$0xff]
  %v3846 = vld [vmem:[#allocation3 + $0x78] sm:$0xff]
  %v3847 = vld [vmem:[#allocation3 + $0x80] sm:$0xff]
  %v3848 = vld [vmem:[#allocation3 + $0x88] sm:$0xff]
  %v3849 = vld [vmem:[#allocation3 + $0x90] sm:$0xff]
  %v3850 = vld [vmem:[#allocation3 + $0x98] sm:$0xff]
  %v3851 = vld [vmem:[#allocation3 + $0xa0] sm:$0xff]
  %v3852 = vld [vmem:[#allocation3 + $0xa8] sm:$0xff]
  %v3853 = vld [vmem:[#allocation3 + $0xb0] sm:$0xff]
  %v3854 = vld [vmem:[#allocation3 + $0xb8] sm:$0xff]
  %v3855 = vld [vmem:[#allocation3 + $0xc0] sm:$0xff]
  %v3856 = vld [vmem:[#allocation3 + $0xc8] sm:$0xff]
  %v3857 = vld [vmem:[#allocation3 + $0xd0] sm:$0xff]
  %v3858 = vld [vmem:[#allocation3 + $0xd8] sm:$0xff]
  %v3859 = vld [vmem:[#allocation3 + $0xe0] sm:$0xff]
  %v3860 = vld [vmem:[#allocation3 + $0xe8] sm:$0xff]
  %v3861 = vld [vmem:[#allocation3 + $0xf0] sm:$0xff]
  %v3862 = vld [vmem:[#allocation3 + $0xf8] sm:$0xff]
  %v3864 = vrot.slane %v3824, 6
  %v3865 = vsel %vm2971, %v3864, 0
  %3867 = vmatprep.subr.mxu0 %v3832
  %3868 = vmatpush1.msra.mxu0 %v3831
  %3869 = vmatprep.subr.mxu0 %v3836
  %3870 = vmatpush1.msra.mxu0 %v3835
  %3871 = vmatprep.subr.mxu0 %v3840
  %3872 = vmatpush1.msra.mxu0 %v3839
  %3873 = vmatprep.subr.mxu0 %v3844
  %3874 = vmatpush1.msra.mxu0 %v3843
  %3875 = vmatprep.subr.mxu0 %v3848
  %3876 = vmatpush1.msra.mxu0 %v3847
  %3877 = vmatprep.subr.mxu0 %v3852
  %3878 = vmatpush1.msra.mxu0 %v3851
  %3879 = vmatprep.subr.mxu0 %v3856
  %3880 = vmatpush1.msra.mxu0 %v3855
  %3881 = vmatprep.subr.mxu0 %v3860
  %3882 = vmatpush1.msra.mxu0 %v3859
  %3883 = vmatprep.subr.mxu0 0.0
  %3884 = vmatpush1.msra.mxu0 0.0
  %3885 = vmatprep.subr.mxu0 0.0
  %3886 = vmatpush1.msra.mxu0 0.0
  %3887 = vmatprep.subr.mxu0 0.0
  %3888 = vmatpush1.msra.mxu0 0.0
  %3889 = vmatprep.subr.mxu0 0.0
  %3890 = vmatpush1.msra.mxu0 0.0
  %3891 = vmatprep.subr.mxu0 0.0
  %3892 = vmatpush1.msra.mxu0 0.0
  %3893 = vmatprep.subr.mxu0 0.0
  %3894 = vmatpush1.msra.mxu0 0.0
  %3895 = vmatprep.subr.mxu0 0.0
  %3896 = vmatpush1.msra.mxu0 0.0
  %3897 = vmatprep.subr.mxu0 0.0
  %3898 = vmatpush1.msra.mxu0 0.0
  %3899 = vmatprep.subr.mxu0 0.0
  %3900 = vmatpush1.msra.mxu0 0.0
  %3901 = vmatprep.subr.mxu0 0.0
  %3902 = vmatpush1.msra.mxu0 0.0
  %3903 = vmatprep.subr.mxu0 0.0
  %3904 = vmatpush1.msra.mxu0 0.0
  %3905 = vmatprep.subr.mxu0 0.0
  %3906 = vmatpush1.msra.mxu0 0.0
  %3907 = vmatprep.subr.mxu0 0.0
  %3908 = vmatpush1.msra.mxu0 0.0
  %3909 = vmatprep.subr.mxu0 0.0
  %3910 = vmatpush1.msra.mxu0 0.0
  %3911 = vmatprep.subr.mxu0 0.0
  %3912 = vmatpush1.msra.mxu0 0.0
  %3913 = vmatprep.subr.mxu0 0.0
  %3914 = vmatpush1.msra.mxu0 0.0
  %3915 = vmatprep.subr.mxu0 0.0
  %3916 = vmatpush1.msra.mxu0 0.0
  %3917 = vmatprep.subr.mxu0 0.0
  %3918 = vmatpush1.msra.mxu0 0.0
  %3919 = vmatprep.subr.mxu0 0.0
  %3920 = vmatpush1.msra.mxu0 0.0
  %3921 = vmatprep.subr.mxu0 0.0
  %3922 = vmatpush1.msra.mxu0 0.0
  %3923 = vmatprep.subr.mxu0 0.0
  %3924 = vmatpush1.msra.mxu0 0.0
  %3925 = vmatprep.subr.mxu0 0.0
  %3926 = vmatpush1.msra.mxu0 0.0
  %3927 = vmatprep.subr.mxu0 0.0
  %3928 = vmatpush1.msra.mxu0 0.0
  %3929 = vmatprep.subr.mxu0 0.0
  %3930 = vmatpush1.msra.mxu0 0.0
  %3931 = vmatprep.mubr.f32.mxu0 0.0
  %3932 = vmatmul.mubr.f32.gmra.mrb[0].mxu0 %v3865
  %v3933 = vpop.f32.mrb[0].mxu0
  %v3934 = vadd.f32 0.0, %v3933
  %v3935 = vpop.f32.mrb[0].mxu0
  %v3936 = vadd.f32 0.0, %v3935
  %3937 = vdwg.mxu0
  %3938 = vmatprep.subr.mxu0 %v3834
  %3939 = vmatpush1.msra.mxu0 %v3833
  %3940 = vmatprep.subr.mxu0 %v3838
  %3941 = vmatpush1.msra.mxu0 %v3837
  %3942 = vmatprep.subr.mxu0 %v3842
  %3943 = vmatpush1.msra.mxu0 %v3841
  %3944 = vmatprep.subr.mxu0 %v3846
  %3945 = vmatpush1.msra.mxu0 %v3845
  %3946 = vmatprep.subr.mxu0 %v3850
  %3947 = vmatpush1.msra.mxu0 %v3849
  %3948 = vmatprep.subr.mxu0 %v3854
  %3949 = vmatpush1.msra.mxu0 %v3853
  %3950 = vmatprep.subr.mxu0 %v3858
  %3951 = vmatpush1.msra.mxu0 %v3857
  %3952 = vmatprep.subr.mxu0 %v3862
  %3953 = vmatpush1.msra.mxu0 %v3861
  %3954 = vmatprep.subr.mxu0 0.0
  %3955 = vmatpush1.msra.mxu0 0.0
  %3956 = vmatprep.subr.mxu0 0.0
  %3957 = vmatpush1.msra.mxu0 0.0
  %3958 = vmatprep.subr.mxu0 0.0
  %3959 = vmatpush1.msra.mxu0 0.0
  %3960 = vmatprep.subr.mxu0 0.0
  %3961 = vmatpush1.msra.mxu0 0.0
  %3962 = vmatprep.subr.mxu0 0.0
  %3963 = vmatpush1.msra.mxu0 0.0
  %3964 = vmatprep.subr.mxu0 0.0
  %3965 = vmatpush1.msra.mxu0 0.0
  %3966 = vmatprep.subr.mxu0 0.0
  %3967 = vmatpush1.msra.mxu0 0.0
  %3968 = vmatprep.subr.mxu0 0.0
  %3969 = vmatpush1.msra.mxu0 0.0
  %3970 = vmatprep.subr.mxu0 0.0
  %3971 = vmatpush1.msra.mxu0 0.0
  %3972 = vmatprep.subr.mxu0 0.0
  %3973 = vmatpush1.msra.mxu0 0.0
  %3974 = vmatprep.subr.mxu0 0.0
  %3975 = vmatpush1.msra.mxu0 0.0
  %3976 = vmatprep.subr.mxu0 0.0
  %3977 = vmatpush1.msra.mxu0 0.0
  %3978 = vmatprep.subr.mxu0 0.0
  %3979 = vmatpush1.msra.mxu0 0.0
  %3980 = vmatprep.subr.mxu0 0.0
  %3981 = vmatpush1.msra.mxu0 0.0
  %3982 = vmatprep.subr.mxu0 0.0
  %3983 = vmatpush1.msra.mxu0 0.0
  %3984 = vmatprep.subr.mxu0 0.0
  %3985 = vmatpush1.msra.mxu0 0.0
  %3986 = vmatprep.subr.mxu0 0.0
  %3987 = vmatpush1.msra.mxu0 0.0
  %3988 = vmatprep.subr.mxu0 0.0
  %3989 = vmatpush1.msra.mxu0 0.0
  %3990 = vmatprep.subr.mxu0 0.0
  %3991 = vmatpush1.msra.mxu0 0.0
  %3992 = vmatprep.subr.mxu0 0.0
  %3993 = vmatpush1.msra.mxu0 0.0
  %3994 = vmatprep.subr.mxu0 0.0
  %3995 = vmatpush1.msra.mxu0 0.0
  %3996 = vmatprep.subr.mxu0 0.0
  %3997 = vmatpush1.msra.mxu0 0.0
  %3998 = vmatprep.subr.mxu0 0.0
  %3999 = vmatpush1.msra.mxu0 0.0
  %4000 = vmatprep.subr.mxu0 0.0
  %4001 = vmatpush1.msra.mxu0 0.0
  %4002 = vmatprep.mubr.f32.mxu0 0.0
  %4003 = vmatmul.mubr.f32.gmra.mrb[0].mxu0 %v3865
  %v4004 = vpop.f32.mrb[0].mxu0
  %v4005 = vadd.f32 0.0, %v4004
  %v4006 = vpop.f32.mrb[0].mxu0
  %v4007 = vadd.f32 0.0, %v4006
  %4008 = vdwg.mxu0
  %v4009 = vadd.f32 %v3827, %v3934
  %v4010 = vadd.f32 %v3828, %v3936
  %v4011 = vadd.f32 %v3829, %v4005
  %v4012 = vadd.f32 %v3830, %v4007
  %v4013 = vxor.u32 %v4009, 2147483648
  %v4014 = vmul.f32 %v4013, 1.442695
  %v4015 = vpow.pop %v4014
  %v4016 = vadd.f32 %v4015, 1.0
  %v4017 = vrcp.pop %v4016
  %v4018 = vmul.f32 1.0, %v4017
  %v4019 = vxor.u32 %v4010, 2147483648
  %v4020 = vmul.f32 %v4019, 1.442695
  %v4021 = vpow.pop %v4020
  %v4022 = vadd.f32 %v4021, 1.0
  %v4023 = vrcp.pop %v4022
  %v4024 = vmul.f32 1.0, %v4023
  %v4025 = vtanh.pop %v4011
  %v4026 = vxor.u32 %v4012, 2147483648
  %v4027 = vmul.f32 %v4026, 1.442695
  %v4028 = vpow.pop %v4027
  %v4029 = vadd.f32 %v4028, 1.0
  %v4030 = vrcp.pop %v4029
  %v4031 = vmul.f32 1.0, %v4030
  %v4033 = vrot.slane %v3822, 6
  %v4035 = vmul.f32 %v4024, %v4033
  %v4036 = vmul.f32 %v4018, %v4025
  %v4037 = vadd.f32 %v4035, %v4036
  %v4038 = vtanh.pop %v4037
  %v4039 = vmul.f32 %v4031, %v4038
  %4040 = vst.msk [vmem:[#allocation7 + $0x8] sm:$0x3] %vm3145, %v4039
  %v4041 = vld [vmem:[#allocation5 + $0x20] sm:$0xc]
  %v4042 = vld [vmem:[#allocation5 + $0x28] sm:$0xc]
  %v4043 = vld [vmem:[#allocation5 + $0x30] sm:$0xc]
  %v4044 = vld [vmem:[#allocation5 + $0x38] sm:$0xc]
  %v4045 = vld [vmem:[#allocation3] sm:$0xff]
  %v4046 = vld [vmem:[#allocation3 + $0x8] sm:$0xff]
  %v4047 = vld [vmem:[#allocation3 + $0x10] sm:$0xff]
  %v4048 = vld [vmem:[#allocation3 + $0x18] sm:$0xff]
  %v4049 = vld [vmem:[#allocation3 + $0x20] sm:$0xff]
  %v4050 = vld [vmem:[#allocation3 + $0x28] sm:$0xff]
  %v4051 = vld [vmem:[#allocation3 + $0x30] sm:$0xff]
  %v4052 = vld [vmem:[#allocation3 + $0x38] sm:$0xff]
  %v4053 = vld [vmem:[#allocation3 + $0x40] sm:$0xff]
  %v4054 = vld [vmem:[#allocation3 + $0x48] sm:$0xff]
  %v4055 = vld [vmem:[#allocation3 + $0x50] sm:$0xff]
  %v4056 = vld [vmem:[#allocation3 + $0x58] sm:$0xff]
  %v4057 = vld [vmem:[#allocation3 + $0x60] sm:$0xff]
  %v4058 = vld [vmem:[#allocation3 + $0x68] sm:$0xff]
  %v4059 = vld [vmem:[#allocation3 + $0x70] sm:$0xff]
  %v4060 = vld [vmem:[#allocation3 + $0x78] sm:$0xff]
  %v4061 = vld [vmem:[#allocation3 + $0x80] sm:$0xff]
  %v4062 = vld [vmem:[#allocation3 + $0x88] sm:$0xff]
  %v4063 = vld [vmem:[#allocation3 + $0x90] sm:$0xff]
  %v4064 = vld [vmem:[#allocation3 + $0x98] sm:$0xff]
  %v4065 = vld [vmem:[#allocation3 + $0xa0] sm:$0xff]
  %v4066 = vld [vmem:[#allocation3 + $0xa8] sm:$0xff]
  %v4067 = vld [vmem:[#allocation3 + $0xb0] sm:$0xff]
  %v4068 = vld [vmem:[#allocation3 + $0xb8] sm:$0xff]
  %v4069 = vld [vmem:[#allocation3 + $0xc0] sm:$0xff]
  %v4070 = vld [vmem:[#allocation3 + $0xc8] sm:$0xff]
  %v4071 = vld [vmem:[#allocation3 + $0xd0] sm:$0xff]
  %v4072 = vld [vmem:[#allocation3 + $0xd8] sm:$0xff]
  %v4073 = vld [vmem:[#allocation3 + $0xe0] sm:$0xff]
  %v4074 = vld [vmem:[#allocation3 + $0xe8] sm:$0xff]
  %v4075 = vld [vmem:[#allocation3 + $0xf0] sm:$0xff]
  %v4076 = vld [vmem:[#allocation3 + $0xf8] sm:$0xff]
  %v4078 = vsel %vm2971, %v4039, 0
  %4080 = vmatprep.subr.mxu0 %v4046
  %4081 = vmatpush1.msra.mxu0 %v4045
  %4082 = vmatprep.subr.mxu0 %v4050
  %4083 = vmatpush1.msra.mxu0 %v4049
  %4084 = vmatprep.subr.mxu0 %v4054
  %4085 = vmatpush1.msra.mxu0 %v4053
  %4086 = vmatprep.subr.mxu0 %v4058
  %4087 = vmatpush1.msra.mxu0 %v4057
  %4088 = vmatprep.subr.mxu0 %v4062
  %4089 = vmatpush1.msra.mxu0 %v4061
  %4090 = vmatprep.subr.mxu0 %v4066
  %4091 = vmatpush1.msra.mxu0 %v4065
  %4092 = vmatprep.subr.mxu0 %v4070
  %4093 = vmatpush1.msra.mxu0 %v4069
  %4094 = vmatprep.subr.mxu0 %v4074
  %4095 = vmatpush1.msra.mxu0 %v4073
  %4096 = vmatprep.subr.mxu0 0.0
  %4097 = vmatpush1.msra.mxu0 0.0
  %4098 = vmatprep.subr.mxu0 0.0
  %4099 = vmatpush1.msra.mxu0 0.0
  %4100 = vmatprep.subr.mxu0 0.0
  %4101 = vmatpush1.msra.mxu0 0.0
  %4102 = vmatprep.subr.mxu0 0.0
  %4103 = vmatpush1.msra.mxu0 0.0
  %4104 = vmatprep.subr.mxu0 0.0
  %4105 = vmatpush1.msra.mxu0 0.0
  %4106 = vmatprep.subr.mxu0 0.0
  %4107 = vmatpush1.msra.mxu0 0.0
  %4108 = vmatprep.subr.mxu0 0.0
  %4109 = vmatpush1.msra.mxu0 0.0
  %4110 = vmatprep.subr.mxu0 0.0
  %4111 = vmatpush1.msra.mxu0 0.0
  %4112 = vmatprep.subr.mxu0 0.0
  %4113 = vmatpush1.msra.mxu0 0.0
  %4114 = vmatprep.subr.mxu0 0.0
  %4115 = vmatpush1.msra.mxu0 0.0
  %4116 = vmatprep.subr.mxu0 0.0
  %4117 = vmatpush1.msra.mxu0 0.0
  %4118 = vmatprep.subr.mxu0 0.0
  %4119 = vmatpush1.msra.mxu0 0.0
  %4120 = vmatprep.subr.mxu0 0.0
  %4121 = vmatpush1.msra.mxu0 0.0
  %4122 = vmatprep.subr.mxu0 0.0
  %4123 = vmatpush1.msra.mxu0 0.0
  %4124 = vmatprep.subr.mxu0 0.0
  %4125 = vmatpush1.msra.mxu0 0.0
  %4126 = vmatprep.subr.mxu0 0.0
  %4127 = vmatpush1.msra.mxu0 0.0
  %4128 = vmatprep.subr.mxu0 0.0
  %4129 = vmatpush1.msra.mxu0 0.0
  %4130 = vmatprep.subr.mxu0 0.0
  %4131 = vmatpush1.msra.mxu0 0.0
  %4132 = vmatprep.subr.mxu0 0.0
  %4133 = vmatpush1.msra.mxu0 0.0
  %4134 = vmatprep.subr.mxu0 0.0
  %4135 = vmatpush1.msra.mxu0 0.0
  %4136 = vmatprep.subr.mxu0 0.0
  %4137 = vmatpush1.msra.mxu0 0.0
  %4138 = vmatprep.subr.mxu0 0.0
  %4139 = vmatpush1.msra.mxu0 0.0
  %4140 = vmatprep.subr.mxu0 0.0
  %4141 = vmatpush1.msra.mxu0 0.0
  %4142 = vmatprep.subr.mxu0 0.0
  %4143 = vmatpush1.msra.mxu0 0.0
  %4144 = vmatprep.mubr.f32.mxu0 0.0
  %4145 = vmatmul.mubr.f32.gmra.mrb[0].mxu0 %v4078
  %v4146 = vpop.f32.mrb[0].mxu0
  %v4147 = vadd.f32 0.0, %v4146
  %v4148 = vpop.f32.mrb[0].mxu0
  %v4149 = vadd.f32 0.0, %v4148
  %4150 = vdwg.mxu0
  %4151 = vmatprep.subr.mxu0 %v4048
  %4152 = vmatpush1.msra.mxu0 %v4047
  %4153 = vmatprep.subr.mxu0 %v4052
  %4154 = vmatpush1.msra.mxu0 %v4051
  %4155 = vmatprep.subr.mxu0 %v4056
  %4156 = vmatpush1.msra.mxu0 %v4055
  %4157 = vmatprep.subr.mxu0 %v4060
  %4158 = vmatpush1.msra.mxu0 %v4059
  %4159 = vmatprep.subr.mxu0 %v4064
  %4160 = vmatpush1.msra.mxu0 %v4063
  %4161 = vmatprep.subr.mxu0 %v4068
  %4162 = vmatpush1.msra.mxu0 %v4067
  %4163 = vmatprep.subr.mxu0 %v4072
  %4164 = vmatpush1.msra.mxu0 %v4071
  %4165 = vmatprep.subr.mxu0 %v4076
  %4166 = vmatpush1.msra.mxu0 %v4075
  %4167 = vmatprep.subr.mxu0 0.0
  %4168 = vmatpush1.msra.mxu0 0.0
  %4169 = vmatprep.subr.mxu0 0.0
  %4170 = vmatpush1.msra.mxu0 0.0
  %4171 = vmatprep.subr.mxu0 0.0
  %4172 = vmatpush1.msra.mxu0 0.0
  %4173 = vmatprep.subr.mxu0 0.0
  %4174 = vmatpush1.msra.mxu0 0.0
  %4175 = vmatprep.subr.mxu0 0.0
  %4176 = vmatpush1.msra.mxu0 0.0
  %4177 = vmatprep.subr.mxu0 0.0
  %4178 = vmatpush1.msra.mxu0 0.0
  %4179 = vmatprep.subr.mxu0 0.0
  %4180 = vmatpush1.msra.mxu0 0.0
  %4181 = vmatprep.subr.mxu0 0.0
  %4182 = vmatpush1.msra.mxu0 0.0
  %4183 = vmatprep.subr.mxu0 0.0
  %4184 = vmatpush1.msra.mxu0 0.0
  %4185 = vmatprep.subr.mxu0 0.0
  %4186 = vmatpush1.msra.mxu0 0.0
  %4187 = vmatprep.subr.mxu0 0.0
  %4188 = vmatpush1.msra.mxu0 0.0
  %4189 = vmatprep.subr.mxu0 0.0
  %4190 = vmatpush1.msra.mxu0 0.0
  %4191 = vmatprep.subr.mxu0 0.0
  %4192 = vmatpush1.msra.mxu0 0.0
  %4193 = vmatprep.subr.mxu0 0.0
  %4194 = vmatpush1.msra.mxu0 0.0
  %4195 = vmatprep.subr.mxu0 0.0
  %4196 = vmatpush1.msra.mxu0 0.0
  %4197 = vmatprep.subr.mxu0 0.0
  %4198 = vmatpush1.msra.mxu0 0.0
  %4199 = vmatprep.subr.mxu0 0.0
  %4200 = vmatpush1.msra.mxu0 0.0
  %4201 = vmatprep.subr.mxu0 0.0
  %4202 = vmatpush1.msra.mxu0 0.0
  %4203 = vmatprep.subr.mxu0 0.0
  %4204 = vmatpush1.msra.mxu0 0.0
  %4205 = vmatprep.subr.mxu0 0.0
  %4206 = vmatpush1.msra.mxu0 0.0
  %4207 = vmatprep.subr.mxu0 0.0
  %4208 = vmatpush1.msra.mxu0 0.0
  %4209 = vmatprep.subr.mxu0 0.0
  %4210 = vmatpush1.msra.mxu0 0.0
  %4211 = vmatprep.subr.mxu0 0.0
  %4212 = vmatpush1.msra.mxu0 0.0
  %4213 = vmatprep.subr.mxu0 0.0
  %4214 = vmatpush1.msra.mxu0 0.0
  %4215 = vmatprep.mubr.f32.mxu0 0.0
  %4216 = vmatmul.mubr.f32.gmra.mrb[0].mxu0 %v4078
  %v4217 = vpop.f32.mrb[0].mxu0
  %v4218 = vadd.f32 0.0, %v4217
  %v4219 = vpop.f32.mrb[0].mxu0
  %v4220 = vadd.f32 0.0, %v4219
  %4221 = vdwg.mxu0
  %v4226 = vrot.slane %v4147, 6
  %v4227 = vrot.slane %v4149, 6
  %v4228 = vrot.slane %v4218, 6
  %v4229 = vrot.slane %v4220, 6
  %v4234 = vadd.f32 %v4041, %v4226
  %v4235 = vadd.f32 %v4042, %v4227
  %v4236 = vadd.f32 %v4043, %v4228
  %v4237 = vadd.f32 %v4044, %v4229
  %v4238 = vxor.u32 %v4234, 2147483648
  %v4239 = vmul.f32 %v4238, 1.442695
  %v4240 = vpow.pop %v4239
  %v4241 = vadd.f32 %v4240, 1.0
  %v4242 = vrcp.pop %v4241
  %v4243 = vmul.f32 1.0, %v4242
  %v4244 = vxor.u32 %v4235, 2147483648
  %v4245 = vmul.f32 %v4244, 1.442695
  %v4246 = vpow.pop %v4245
  %v4247 = vadd.f32 %v4246, 1.0
  %v4248 = vrcp.pop %v4247
  %v4249 = vmul.f32 1.0, %v4248
  %v4250 = vtanh.pop %v4236
  %v4251 = vxor.u32 %v4237, 2147483648
  %v4252 = vmul.f32 %v4251, 1.442695
  %v4253 = vpow.pop %v4252
  %v4254 = vadd.f32 %v4253, 1.0
  %v4255 = vrcp.pop %v4254
  %v4256 = vmul.f32 1.0, %v4255
  %v4258 = vrot.slane %v4037, 6
  %v4260 = vmul.f32 %v4249, %v4258
  %v4261 = vmul.f32 %v4243, %v4250
  %v4262 = vadd.f32 %v4260, %v4261
  %v4263 = vtanh.pop %v4262
  %v4264 = vmul.f32 %v4256, %v4263
  %4265 = vst.msk [vmem:[#allocation7 + $0x8] sm:$0xc] %vm3371, %v4264
  %v4266 = vld [vmem:[#allocation5 + $0x20] sm:$0x30]
  %v4267 = vld [vmem:[#allocation5 + $0x28] sm:$0x30]
  %v4268 = vld [vmem:[#allocation5 + $0x30] sm:$0x30]
  %v4269 = vld [vmem:[#allocation5 + $0x38] sm:$0x30]
  %v4270 = vld [vmem:[#allocation3] sm:$0xff]
  %v4271 = vld [vmem:[#allocation3 + $0x8] sm:$0xff]
  %v4272 = vld [vmem:[#allocation3 + $0x10] sm:$0xff]
  %v4273 = vld [vmem:[#allocation3 + $0x18] sm:$0xff]
  %v4274 = vld [vmem:[#allocation3 + $0x20] sm:$0xff]
  %v4275 = vld [vmem:[#allocation3 + $0x28] sm:$0xff]
  %v4276 = vld [vmem:[#allocation3 + $0x30] sm:$0xff]
  %v4277 = vld [vmem:[#allocation3 + $0x38] sm:$0xff]
  %v4278 = vld [vmem:[#allocation3 + $0x40] sm:$0xff]
  %v4279 = vld [vmem:[#allocation3 + $0x48] sm:$0xff]
  %v4280 = vld [vmem:[#allocation3 + $0x50] sm:$0xff]
  %v4281 = vld [vmem:[#allocation3 + $0x58] sm:$0xff]
  %v4282 = vld [vmem:[#allocation3 + $0x60] sm:$0xff]
  %v4283 = vld [vmem:[#allocation3 + $0x68] sm:$0xff]
  %v4284 = vld [vmem:[#allocation3 + $0x70] sm:$0xff]
  %v4285 = vld [vmem:[#allocation3 + $0x78] sm:$0xff]
  %v4286 = vld [vmem:[#allocation3 + $0x80] sm:$0xff]
  %v4287 = vld [vmem:[#allocation3 + $0x88] sm:$0xff]
  %v4288 = vld [vmem:[#allocation3 + $0x90] sm:$0xff]
  %v4289 = vld [vmem:[#allocation3 + $0x98] sm:$0xff]
  %v4290 = vld [vmem:[#allocation3 + $0xa0] sm:$0xff]
  %v4291 = vld [vmem:[#allocation3 + $0xa8] sm:$0xff]
  %v4292 = vld [vmem:[#allocation3 + $0xb0] sm:$0xff]
  %v4293 = vld [vmem:[#allocation3 + $0xb8] sm:$0xff]
  %v4294 = vld [vmem:[#allocation3 + $0xc0] sm:$0xff]
  %v4295 = vld [vmem:[#allocation3 + $0xc8] sm:$0xff]
  %v4296 = vld [vmem:[#allocation3 + $0xd0] sm:$0xff]
  %v4297 = vld [vmem:[#allocation3 + $0xd8] sm:$0xff]
  %v4298 = vld [vmem:[#allocation3 + $0xe0] sm:$0xff]
  %v4299 = vld [vmem:[#allocation3 + $0xe8] sm:$0xff]
  %v4300 = vld [vmem:[#allocation3 + $0xf0] sm:$0xff]
  %v4301 = vld [vmem:[#allocation3 + $0xf8] sm:$0xff]
  %v4303 = vrot.slane %v4264, 2
  %v4304 = vsel %vm2971, %v4303, 0
  %4306 = vmatprep.subr.mxu0 %v4271
  %4307 = vmatpush1.msra.mxu0 %v4270
  %4308 = vmatprep.subr.mxu0 %v4275
  %4309 = vmatpush1.msra.mxu0 %v4274
  %4310 = vmatprep.subr.mxu0 %v4279
  %4311 = vmatpush1.msra.mxu0 %v4278
  %4312 = vmatprep.subr.mxu0 %v4283
  %4313 = vmatpush1.msra.mxu0 %v4282
  %4314 = vmatprep.subr.mxu0 %v4287
  %4315 = vmatpush1.msra.mxu0 %v4286
  %4316 = vmatprep.subr.mxu0 %v4291
  %4317 = vmatpush1.msra.mxu0 %v4290
  %4318 = vmatprep.subr.mxu0 %v4295
  %4319 = vmatpush1.msra.mxu0 %v4294
  %4320 = vmatprep.subr.mxu0 %v4299
  %4321 = vmatpush1.msra.mxu0 %v4298
  %4322 = vmatprep.subr.mxu0 0.0
  %4323 = vmatpush1.msra.mxu0 0.0
  %4324 = vmatprep.subr.mxu0 0.0
  %4325 = vmatpush1.msra.mxu0 0.0
  %4326 = vmatprep.subr.mxu0 0.0
  %4327 = vmatpush1.msra.mxu0 0.0
  %4328 = vmatprep.subr.mxu0 0.0
  %4329 = vmatpush1.msra.mxu0 0.0
  %4330 = vmatprep.subr.mxu0 0.0
  %4331 = vmatpush1.msra.mxu0 0.0
  %4332 = vmatprep.subr.mxu0 0.0
  %4333 = vmatpush1.msra.mxu0 0.0
  %4334 = vmatprep.subr.mxu0 0.0
  %4335 = vmatpush1.msra.mxu0 0.0
  %4336 = vmatprep.subr.mxu0 0.0
  %4337 = vmatpush1.msra.mxu0 0.0
  %4338 = vmatprep.subr.mxu0 0.0
  %4339 = vmatpush1.msra.mxu0 0.0
  %4340 = vmatprep.subr.mxu0 0.0
  %4341 = vmatpush1.msra.mxu0 0.0
  %4342 = vmatprep.subr.mxu0 0.0
  %4343 = vmatpush1.msra.mxu0 0.0
  %4344 = vmatprep.subr.mxu0 0.0
  %4345 = vmatpush1.msra.mxu0 0.0
  %4346 = vmatprep.subr.mxu0 0.0
  %4347 = vmatpush1.msra.mxu0 0.0
  %4348 = vmatprep.subr.mxu0 0.0
  %4349 = vmatpush1.msra.mxu0 0.0
  %4350 = vmatprep.subr.mxu0 0.0
  %4351 = vmatpush1.msra.mxu0 0.0
  %4352 = vmatprep.subr.mxu0 0.0
  %4353 = vmatpush1.msra.mxu0 0.0
  %4354 = vmatprep.subr.mxu0 0.0
  %4355 = vmatpush1.msra.mxu0 0.0
  %4356 = vmatprep.subr.mxu0 0.0
  %4357 = vmatpush1.msra.mxu0 0.0
  %4358 = vmatprep.subr.mxu0 0.0
  %4359 = vmatpush1.msra.mxu0 0.0
  %4360 = vmatprep.subr.mxu0 0.0
  %4361 = vmatpush1.msra.mxu0 0.0
  %4362 = vmatprep.subr.mxu0 0.0
  %4363 = vmatpush1.msra.mxu0 0.0
  %4364 = vmatprep.subr.mxu0 0.0
  %4365 = vmatpush1.msra.mxu0 0.0
  %4366 = vmatprep.subr.mxu0 0.0
  %4367 = vmatpush1.msra.mxu0 0.0
  %4368 = vmatprep.subr.mxu0 0.0
  %4369 = vmatpush1.msra.mxu0 0.0
  %4370 = vmatprep.mubr.f32.mxu0 0.0
  %4371 = vmatmul.mubr.f32.gmra.mrb[0].mxu0 %v4304
  %v4372 = vpop.f32.mrb[0].mxu0
  %v4373 = vadd.f32 0.0, %v4372
  %v4374 = vpop.f32.mrb[0].mxu0
  %v4375 = vadd.f32 0.0, %v4374
  %4376 = vdwg.mxu0
  %4377 = vmatprep.subr.mxu0 %v4273
  %4378 = vmatpush1.msra.mxu0 %v4272
  %4379 = vmatprep.subr.mxu0 %v4277
  %4380 = vmatpush1.msra.mxu0 %v4276
  %4381 = vmatprep.subr.mxu0 %v4281
  %4382 = vmatpush1.msra.mxu0 %v4280
  %4383 = vmatprep.subr.mxu0 %v4285
  %4384 = vmatpush1.msra.mxu0 %v4284
  %4385 = vmatprep.subr.mxu0 %v4289
  %4386 = vmatpush1.msra.mxu0 %v4288
  %4387 = vmatprep.subr.mxu0 %v4293
  %4388 = vmatpush1.msra.mxu0 %v4292
  %4389 = vmatprep.subr.mxu0 %v4297
  %4390 = vmatpush1.msra.mxu0 %v4296
  %4391 = vmatprep.subr.mxu0 %v4301
  %4392 = vmatpush1.msra.mxu0 %v4300
  %4393 = vmatprep.subr.mxu0 0.0
  %4394 = vmatpush1.msra.mxu0 0.0
  %4395 = vmatprep.subr.mxu0 0.0
  %4396 = vmatpush1.msra.mxu0 0.0
  %4397 = vmatprep.subr.mxu0 0.0
  %4398 = vmatpush1.msra.mxu0 0.0
  %4399 = vmatprep.subr.mxu0 0.0
  %4400 = vmatpush1.msra.mxu0 0.0
  %4401 = vmatprep.subr.mxu0 0.0
  %4402 = vmatpush1.msra.mxu0 0.0
  %4403 = vmatprep.subr.mxu0 0.0
  %4404 = vmatpush1.msra.mxu0 0.0
  %4405 = vmatprep.subr.mxu0 0.0
  %4406 = vmatpush1.msra.mxu0 0.0
  %4407 = vmatprep.subr.mxu0 0.0
  %4408 = vmatpush1.msra.mxu0 0.0
  %4409 = vmatprep.subr.mxu0 0.0
  %4410 = vmatpush1.msra.mxu0 0.0
  %4411 = vmatprep.subr.mxu0 0.0
  %4412 = vmatpush1.msra.mxu0 0.0
  %4413 = vmatprep.subr.mxu0 0.0
  %4414 = vmatpush1.msra.mxu0 0.0
  %4415 = vmatprep.subr.mxu0 0.0
  %4416 = vmatpush1.msra.mxu0 0.0
  %4417 = vmatprep.subr.mxu0 0.0
  %4418 = vmatpush1.msra.mxu0 0.0
  %4419 = vmatprep.subr.mxu0 0.0
  %4420 = vmatpush1.msra.mxu0 0.0
  %4421 = vmatprep.subr.mxu0 0.0
  %4422 = vmatpush1.msra.mxu0 0.0
  %4423 = vmatprep.subr.mxu0 0.0
  %4424 = vmatpush1.msra.mxu0 0.0
  %4425 = vmatprep.subr.mxu0 0.0
  %4426 = vmatpush1.msra.mxu0 0.0
  %4427 = vmatprep.subr.mxu0 0.0
  %4428 = vmatpush1.msra.mxu0 0.0
  %4429 = vmatprep.subr.mxu0 0.0
  %4430 = vmatpush1.msra.mxu0 0.0
  %4431 = vmatprep.subr.mxu0 0.0
  %4432 = vmatpush1.msra.mxu0 0.0
  %4433 = vmatprep.subr.mxu0 0.0
  %4434 = vmatpush1.msra.mxu0 0.0
  %4435 = vmatprep.subr.mxu0 0.0
  %4436 = vmatpush1.msra.mxu0 0.0
  %4437 = vmatprep.subr.mxu0 0.0
  %4438 = vmatpush1.msra.mxu0 0.0
  %4439 = vmatprep.subr.mxu0 0.0
  %4440 = vmatpush1.msra.mxu0 0.0
  %4441 = vmatprep.mubr.f32.mxu0 0.0
  %4442 = vmatmul.mubr.f32.gmra.mrb[0].mxu0 %v4304
  %v4443 = vpop.f32.mrb[0].mxu0
  %v4444 = vadd.f32 0.0, %v4443
  %v4445 = vpop.f32.mrb[0].mxu0
  %v4446 = vadd.f32 0.0, %v4445
  %4447 = vdwg.mxu0
  %v4452 = vrot.slane %v4373, 4
  %v4453 = vrot.slane %v4375, 4
  %v4454 = vrot.slane %v4444, 4
  %v4455 = vrot.slane %v4446, 4
  %v4460 = vadd.f32 %v4266, %v4452
  %v4461 = vadd.f32 %v4267, %v4453
  %v4462 = vadd.f32 %v4268, %v4454
  %v4463 = vadd.f32 %v4269, %v4455
  %v4464 = vxor.u32 %v4460, 2147483648
  %v4465 = vmul.f32 %v4464, 1.442695
  %v4466 = vpow.pop %v4465
  %v4467 = vadd.f32 %v4466, 1.0
  %v4468 = vrcp.pop %v4467
  %v4469 = vmul.f32 1.0, %v4468
  %v4470 = vxor.u32 %v4461, 2147483648
  %v4471 = vmul.f32 %v4470, 1.442695
  %v4472 = vpow.pop %v4471
  %v4473 = vadd.f32 %v4472, 1.0
  %v4474 = vrcp.pop %v4473
  %v4475 = vmul.f32 1.0, %v4474
  %v4476 = vtanh.pop %v4462
  %v4477 = vxor.u32 %v4463, 2147483648
  %v4478 = vmul.f32 %v4477, 1.442695
  %v4479 = vpow.pop %v4478
  %v4480 = vadd.f32 %v4479, 1.0
  %v4481 = vrcp.pop %v4480
  %v4482 = vmul.f32 1.0, %v4481
  %v4484 = vrot.slane %v4262, 6
  %v4486 = vmul.f32 %v4475, %v4484
  %v4487 = vmul.f32 %v4469, %v4476
  %v4488 = vadd.f32 %v4486, %v4487
  %v4489 = vtanh.pop %v4488
  %v4490 = vmul.f32 %v4482, %v4489
  %4491 = vst.msk [vmem:[#allocation7 + $0x8] sm:$0x30] %vm3598, %v4490
  %v4492 = vld [vmem:[#allocation5 + $0x20] sm:$0xc0]
  %v4493 = vld [vmem:[#allocation5 + $0x28] sm:$0xc0]
  %v4494 = vld [vmem:[#allocation5 + $0x30] sm:$0xc0]
  %v4495 = vld [vmem:[#allocation5 + $0x38] sm:$0xc0]
  %v4496 = vld [vmem:[#allocation3] sm:$0xff]
  %v4497 = vld [vmem:[#allocation3 + $0x8] sm:$0xff]
  %v4498 = vld [vmem:[#allocation3 + $0x10] sm:$0xff]
  %v4499 = vld [vmem:[#allocation3 + $0x18] sm:$0xff]
  %v4500 = vld [vmem:[#allocation3 + $0x20] sm:$0xff]
  %v4501 = vld [vmem:[#allocation3 + $0x28] sm:$0xff]
  %v4502 = vld [vmem:[#allocation3 + $0x30] sm:$0xff]
  %v4503 = vld [vmem:[#allocation3 + $0x38] sm:$0xff]
  %v4504 = vld [vmem:[#allocation3 + $0x40] sm:$0xff]
  %v4505 = vld [vmem:[#allocation3 + $0x48] sm:$0xff]
  %v4506 = vld [vmem:[#allocation3 + $0x50] sm:$0xff]
  %v4507 = vld [vmem:[#allocation3 + $0x58] sm:$0xff]
  %v4508 = vld [vmem:[#allocation3 + $0x60] sm:$0xff]
  %v4509 = vld [vmem:[#allocation3 + $0x68] sm:$0xff]
  %v4510 = vld [vmem:[#allocation3 + $0x70] sm:$0xff]
  %v4511 = vld [vmem:[#allocation3 + $0x78] sm:$0xff]
  %v4512 = vld [vmem:[#allocation3 + $0x80] sm:$0xff]
  %v4513 = vld [vmem:[#allocation3 + $0x88] sm:$0xff]
  %v4514 = vld [vmem:[#allocation3 + $0x90] sm:$0xff]
  %v4515 = vld [vmem:[#allocation3 + $0x98] sm:$0xff]
  %v4516 = vld [vmem:[#allocation3 + $0xa0] sm:$0xff]
  %v4517 = vld [vmem:[#allocation3 + $0xa8] sm:$0xff]
  %v4518 = vld [vmem:[#allocation3 + $0xb0] sm:$0xff]
  %v4519 = vld [vmem:[#allocation3 + $0xb8] sm:$0xff]
  %v4520 = vld [vmem:[#allocation3 + $0xc0] sm:$0xff]
  %v4521 = vld [vmem:[#allocation3 + $0xc8] sm:$0xff]
  %v4522 = vld [vmem:[#allocation3 + $0xd0] sm:$0xff]
  %v4523 = vld [vmem:[#allocation3 + $0xd8] sm:$0xff]
  %v4524 = vld [vmem:[#allocation3 + $0xe0] sm:$0xff]
  %v4525 = vld [vmem:[#allocation3 + $0xe8] sm:$0xff]
  %v4526 = vld [vmem:[#allocation3 + $0xf0] sm:$0xff]
  %v4527 = vld [vmem:[#allocation3 + $0xf8] sm:$0xff]
  %v4529 = vrot.slane %v4490, 4
  %v4530 = vsel %vm2971, %v4529, 0
  %4532 = vmatprep.subr.mxu0 %v4497
  %4533 = vmatpush1.msra.mxu0 %v4496
  %4534 = vmatprep.subr.mxu0 %v4501
  %4535 = vmatpush1.msra.mxu0 %v4500
  %4536 = vmatprep.subr.mxu0 %v4505
  %4537 = vmatpush1.msra.mxu0 %v4504
  %4538 = vmatprep.subr.mxu0 %v4509
  %4539 = vmatpush1.msra.mxu0 %v4508
  %4540 = vmatprep.subr.mxu0 %v4513
  %4541 = vmatpush1.msra.mxu0 %v4512
  %4542 = vmatprep.subr.mxu0 %v4517
  %4543 = vmatpush1.msra.mxu0 %v4516
  %4544 = vmatprep.subr.mxu0 %v4521
  %4545 = vmatpush1.msra.mxu0 %v4520
  %4546 = vmatprep.subr.mxu0 %v4525
  %4547 = vmatpush1.msra.mxu0 %v4524
  %4548 = vmatprep.subr.mxu0 0.0
  %4549 = vmatpush1.msra.mxu0 0.0
  %4550 = vmatprep.subr.mxu0 0.0
  %4551 = vmatpush1.msra.mxu0 0.0
  %4552 = vmatprep.subr.mxu0 0.0
  %4553 = vmatpush1.msra.mxu0 0.0
  %4554 = vmatprep.subr.mxu0 0.0
  %4555 = vmatpush1.msra.mxu0 0.0
  %4556 = vmatprep.subr.mxu0 0.0
  %4557 = vmatpush1.msra.mxu0 0.0
  %4558 = vmatprep.subr.mxu0 0.0
  %4559 = vmatpush1.msra.mxu0 0.0
  %4560 = vmatprep.subr.mxu0 0.0
  %4561 = vmatpush1.msra.mxu0 0.0
  %4562 = vmatprep.subr.mxu0 0.0
  %4563 = vmatpush1.msra.mxu0 0.0
  %4564 = vmatprep.subr.mxu0 0.0
  %4565 = vmatpush1.msra.mxu0 0.0
  %4566 = vmatprep.subr.mxu0 0.0
  %4567 = vmatpush1.msra.mxu0 0.0
  %4568 = vmatprep.subr.mxu0 0.0
  %4569 = vmatpush1.msra.mxu0 0.0
  %4570 = vmatprep.subr.mxu0 0.0
  %4571 = vmatpush1.msra.mxu0 0.0
  %4572 = vmatprep.subr.mxu0 0.0
  %4573 = vmatpush1.msra.mxu0 0.0
  %4574 = vmatprep.subr.mxu0 0.0
  %4575 = vmatpush1.msra.mxu0 0.0
  %4576 = vmatprep.subr.mxu0 0.0
  %4577 = vmatpush1.msra.mxu0 0.0
  %4578 = vmatprep.subr.mxu0 0.0
  %4579 = vmatpush1.msra.mxu0 0.0
  %4580 = vmatprep.subr.mxu0 0.0
  %4581 = vmatpush1.msra.mxu0 0.0
  %4582 = vmatprep.subr.mxu0 0.0
  %4583 = vmatpush1.msra.mxu0 0.0
  %4584 = vmatprep.subr.mxu0 0.0
  %4585 = vmatpush1.msra.mxu0 0.0
  %4586 = vmatprep.subr.mxu0 0.0
  %4587 = vmatpush1.msra.mxu0 0.0
  %4588 = vmatprep.subr.mxu0 0.0
  %4589 = vmatpush1.msra.mxu0 0.0
  %4590 = vmatprep.subr.mxu0 0.0
  %4591 = vmatpush1.msra.mxu0 0.0
  %4592 = vmatprep.subr.mxu0 0.0
  %4593 = vmatpush1.msra.mxu0 0.0
  %4594 = vmatprep.subr.mxu0 0.0
  %4595 = vmatpush1.msra.mxu0 0.0
  %4596 = vmatprep.mubr.f32.mxu0 0.0
  %4597 = vmatmul.mubr.f32.gmra.mrb[0].mxu0 %v4530
  %v4598 = vpop.f32.mrb[0].mxu0
  %v4599 = vadd.f32 0.0, %v4598
  %v4600 = vpop.f32.mrb[0].mxu0
  %v4601 = vadd.f32 0.0, %v4600
  %4602 = vdwg.mxu0
  %4603 = vmatprep.subr.mxu0 %v4499
  %4604 = vmatpush1.msra.mxu0 %v4498
  %4605 = vmatprep.subr.mxu0 %v4503
  %4606 = vmatpush1.msra.mxu0 %v4502
  %4607 = vmatprep.subr.mxu0 %v4507
  %4608 = vmatpush1.msra.mxu0 %v4506
  %4609 = vmatprep.subr.mxu0 %v4511
  %4610 = vmatpush1.msra.mxu0 %v4510
  %4611 = vmatprep.subr.mxu0 %v4515
  %4612 = vmatpush1.msra.mxu0 %v4514
  %4613 = vmatprep.subr.mxu0 %v4519
  %4614 = vmatpush1.msra.mxu0 %v4518
  %4615 = vmatprep.subr.mxu0 %v4523
  %4616 = vmatpush1.msra.mxu0 %v4522
  %4617 = vmatprep.subr.mxu0 %v4527
  %4618 = vmatpush1.msra.mxu0 %v4526
  %4619 = vmatprep.subr.mxu0 0.0
  %4620 = vmatpush1.msra.mxu0 0.0
  %4621 = vmatprep.subr.mxu0 0.0
  %4622 = vmatpush1.msra.mxu0 0.0
  %4623 = vmatprep.subr.mxu0 0.0
  %4624 = vmatpush1.msra.mxu0 0.0
  %4625 = vmatprep.subr.mxu0 0.0
  %4626 = vmatpush1.msra.mxu0 0.0
  %4627 = vmatprep.subr.mxu0 0.0
  %4628 = vmatpush1.msra.mxu0 0.0
  %4629 = vmatprep.subr.mxu0 0.0
  %4630 = vmatpush1.msra.mxu0 0.0
  %4631 = vmatprep.subr.mxu0 0.0
  %4632 = vmatpush1.msra.mxu0 0.0
  %4633 = vmatprep.subr.mxu0 0.0
  %4634 = vmatpush1.msra.mxu0 0.0
  %4635 = vmatprep.subr.mxu0 0.0
  %4636 = vmatpush1.msra.mxu0 0.0
  %4637 = vmatprep.subr.mxu0 0.0
  %4638 = vmatpush1.msra.mxu0 0.0
  %4639 = vmatprep.subr.mxu0 0.0
  %4640 = vmatpush1.msra.mxu0 0.0
  %4641 = vmatprep.subr.mxu0 0.0
  %4642 = vmatpush1.msra.mxu0 0.0
  %4643 = vmatprep.subr.mxu0 0.0
  %4644 = vmatpush1.msra.mxu0 0.0
  %4645 = vmatprep.subr.mxu0 0.0
  %4646 = vmatpush1.msra.mxu0 0.0
  %4647 = vmatprep.subr.mxu0 0.0
  %4648 = vmatpush1.msra.mxu0 0.0
  %4649 = vmatprep.subr.mxu0 0.0
  %4650 = vmatpush1.msra.mxu0 0.0
  %4651 = vmatprep.subr.mxu0 0.0
  %4652 = vmatpush1.msra.mxu0 0.0
  %4653 = vmatprep.subr.mxu0 0.0
  %4654 = vmatpush1.msra.mxu0 0.0
  %4655 = vmatprep.subr.mxu0 0.0
  %4656 = vmatpush1.msra.mxu0 0.0
  %4657 = vmatprep.subr.mxu0 0.0
  %4658 = vmatpush1.msra.mxu0 0.0
  %4659 = vmatprep.subr.mxu0 0.0
  %4660 = vmatpush1.msra.mxu0 0.0
  %4661 = vmatprep.subr.mxu0 0.0
  %4662 = vmatpush1.msra.mxu0 0.0
  %4663 = vmatprep.subr.mxu0 0.0
  %4664 = vmatpush1.msra.mxu0 0.0
  %4665 = vmatprep.subr.mxu0 0.0
  %4666 = vmatpush1.msra.mxu0 0.0
  %4667 = vmatprep.mubr.f32.mxu0 0.0
  %4668 = vmatmul.mubr.f32.gmra.mrb[0].mxu0 %v4530
  %v4669 = vpop.f32.mrb[0].mxu0
  %v4670 = vadd.f32 0.0, %v4669
  %v4671 = vpop.f32.mrb[0].mxu0
  %v4672 = vadd.f32 0.0, %v4671
  %4673 = vdwg.mxu0
  %v4678 = vrot.slane %v4599, 2
  %v4679 = vrot.slane %v4601, 2
  %v4680 = vrot.slane %v4670, 2
  %v4681 = vrot.slane %v4672, 2
  %v4686 = vadd.f32 %v4492, %v4678
  %v4687 = vadd.f32 %v4493, %v4679
  %v4688 = vadd.f32 %v4494, %v4680
  %v4689 = vadd.f32 %v4495, %v4681
  %v4690 = vxor.u32 %v4686, 2147483648
  %v4691 = vmul.f32 %v4690, 1.442695
  %v4692 = vpow.pop %v4691
  %v4693 = vadd.f32 %v4692, 1.0
  %v4694 = vrcp.pop %v4693
  %v4695 = vmul.f32 1.0, %v4694
  %v4696 = vxor.u32 %v4687, 2147483648
  %v4697 = vmul.f32 %v4696, 1.442695
  %v4698 = vpow.pop %v4697
  %v4699 = vadd.f32 %v4698, 1.0
  %v4700 = vrcp.pop %v4699
  %v4701 = vmul.f32 1.0, %v4700
  %v4702 = vtanh.pop %v4688
  %v4703 = vxor.u32 %v4689, 2147483648
  %v4704 = vmul.f32 %v4703, 1.442695
  %v4705 = vpow.pop %v4704
  %v4706 = vadd.f32 %v4705, 1.0
  %v4707 = vrcp.pop %v4706
  %v4708 = vmul.f32 1.0, %v4707
  %v4710 = vrot.slane %v4488, 6
  %v4712 = vmul.f32 %v4701, %v4710
  %v4713 = vmul.f32 %v4695, %v4702
  %v4714 = vadd.f32 %v4712, %v4713
  %v4715 = vtanh.pop %v4714
  %v4716 = vmul.f32 %v4708, %v4715
  %4717 = vst.msk [vmem:[#allocation7 + $0x8] sm:$0xc0] %vm3825, %v4716
  %s4718 = sshll.u32 %s2682, 4
  %4719 = dma.done %s302, %s4718
  %v4720 = vld [vmem:[#allocation7] sm:$0xff]
  %v4721 = vld [vmem:[#allocation7 + $0x8] sm:$0xff]
  %v4722 = vld [vmem:[#allocation4] sm:$0xff]
  %v4723 = vld [vmem:[#allocation4 + $0x8] sm:$0xff]
  %v4724 = vld [vmem:[#allocation4 + $0x10] sm:$0xff]
  %v4725 = vld [vmem:[#allocation4 + $0x18] sm:$0xff]
  %v4726 = vld [vmem:[#allocation4 + $0x20] sm:$0xff]
  %v4727 = vld [vmem:[#allocation4 + $0x28] sm:$0xff]
  %v4728 = vld [vmem:[#allocation4 + $0x30] sm:$0xff]
  %v4729 = vld [vmem:[#allocation4 + $0x38] sm:$0xff]
  %v4730 = vld [vmem:[#allocation4 + $0x40] sm:$0xff]
  %v4731 = vld [vmem:[#allocation4 + $0x48] sm:$0xff]
  %v4732 = vld [vmem:[#allocation4 + $0x50] sm:$0xff]
  %v4733 = vld [vmem:[#allocation4 + $0x58] sm:$0xff]
  %v4734 = vld [vmem:[#allocation4 + $0x60] sm:$0xff]
  %v4735 = vld [vmem:[#allocation4 + $0x68] sm:$0xff]
  %v4736 = vld [vmem:[#allocation4 + $0x70] sm:$0xff]
  %v4737 = vld [vmem:[#allocation4 + $0x78] sm:$0xff]
  %v4738 = vld [vmem:[#allocation4 + $0x80] sm:$0xff]
  %v4739 = vld [vmem:[#allocation4 + $0x88] sm:$0xff]
  %v4740 = vld [vmem:[#allocation4 + $0x90] sm:$0xff]
  %v4741 = vld [vmem:[#allocation4 + $0x98] sm:$0xff]
  %v4742 = vld [vmem:[#allocation4 + $0xa0] sm:$0xff]
  %v4743 = vld [vmem:[#allocation4 + $0xa8] sm:$0xff]
  %v4744 = vld [vmem:[#allocation4 + $0xb0] sm:$0xff]
  %v4745 = vld [vmem:[#allocation4 + $0xb8] sm:$0xff]
  %v4746 = vld [vmem:[#allocation4 + $0xc0] sm:$0xff]
  %v4747 = vld [vmem:[#allocation4 + $0xc8] sm:$0xff]
  %v4748 = vld [vmem:[#allocation4 + $0xd0] sm:$0xff]
  %v4749 = vld [vmem:[#allocation4 + $0xd8] sm:$0xff]
  %v4750 = vld [vmem:[#allocation4 + $0xe0] sm:$0xff]
  %v4751 = vld [vmem:[#allocation4 + $0xe8] sm:$0xff]
  %v4752 = vld [vmem:[#allocation4 + $0xf0] sm:$0xff]
  %v4753 = vld [vmem:[#allocation4 + $0xf8] sm:$0xff]
  %v4754 = vld [vmem:[%s8] sm:$0xf]
  %v4756 = vlaneseq
  %v4757 = vshrl.u32 %v4756, 7
  %v4758 = vsub.s32 0, %v4757
  %v4759 = vrot.slane %v4754, %v4758
  %v4760 = vlaneseq
  %v4761 = vshrl.u32 %v4760, 7
  %v4762 = vsub.s32 1, %v4761
  %v4763 = vrot.slane %v4754, %v4762
  %v4764 = vlaneseq
  %v4765 = vshrl.u32 %v4764, 7
  %v4766 = vsub.s32 2, %v4765
  %v4767 = vrot.slane %v4754, %v4766
  %v4768 = vlaneseq
  %v4769 = vshrl.u32 %v4768, 7
  %v4770 = vsub.s32 3, %v4769
  %v4771 = vrot.slane %v4754, %v4770
  %v4777 = vsel %vm2971, %v4720, 0
  %v4780 = vsel %vm2971, %v4721, 0
  %4782 = vmatprep.subr.mxu0 %v4723
  %4783 = vmatpush1.msra.mxu0 %v4722
  %4784 = vmatprep.subr.mxu0 %v4727
  %4785 = vmatpush1.msra.mxu0 %v4726
  %4786 = vmatprep.subr.mxu0 %v4731
  %4787 = vmatpush1.msra.mxu0 %v4730
  %4788 = vmatprep.subr.mxu0 %v4735
  %4789 = vmatpush1.msra.mxu0 %v4734
  %4790 = vmatprep.subr.mxu0 %v4739
  %4791 = vmatpush1.msra.mxu0 %v4738
  %4792 = vmatprep.subr.mxu0 %v4743
  %4793 = vmatpush1.msra.mxu0 %v4742
  %4794 = vmatprep.subr.mxu0 %v4747
  %4795 = vmatpush1.msra.mxu0 %v4746
  %4796 = vmatprep.subr.mxu0 %v4751
  %4797 = vmatpush1.msra.mxu0 %v4750
  %4798 = vmatprep.subr.mxu0 0.0
  %4799 = vmatpush1.msra.mxu0 0.0
  %4800 = vmatprep.subr.mxu0 0.0
  %4801 = vmatpush1.msra.mxu0 0.0
  %4802 = vmatprep.subr.mxu0 0.0
  %4803 = vmatpush1.msra.mxu0 0.0
  %4804 = vmatprep.subr.mxu0 0.0
  %4805 = vmatpush1.msra.mxu0 0.0
  %4806 = vmatprep.subr.mxu0 0.0
  %4807 = vmatpush1.msra.mxu0 0.0
  %4808 = vmatprep.subr.mxu0 0.0
  %4809 = vmatpush1.msra.mxu0 0.0
  %4810 = vmatprep.subr.mxu0 0.0
  %4811 = vmatpush1.msra.mxu0 0.0
  %4812 = vmatprep.subr.mxu0 0.0
  %4813 = vmatpush1.msra.mxu0 0.0
  %4814 = vmatprep.subr.mxu0 0.0
  %4815 = vmatpush1.msra.mxu0 0.0
  %4816 = vmatprep.subr.mxu0 0.0
  %4817 = vmatpush1.msra.mxu0 0.0
  %4818 = vmatprep.subr.mxu0 0.0
  %4819 = vmatpush1.msra.mxu0 0.0
  %4820 = vmatprep.subr.mxu0 0.0
  %4821 = vmatpush1.msra.mxu0 0.0
  %4822 = vmatprep.subr.mxu0 0.0
  %4823 = vmatpush1.msra.mxu0 0.0
  %4824 = vmatprep.subr.mxu0 0.0
  %4825 = vmatpush1.msra.mxu0 0.0
  %4826 = vmatprep.subr.mxu0 0.0
  %4827 = vmatpush1.msra.mxu0 0.0
  %4828 = vmatprep.subr.mxu0 0.0
  %4829 = vmatpush1.msra.mxu0 0.0
  %4830 = vmatprep.subr.mxu0 0.0
  %4831 = vmatpush1.msra.mxu0 0.0
  %4832 = vmatprep.subr.mxu0 0.0
  %4833 = vmatpush1.msra.mxu0 0.0
  %4834 = vmatprep.subr.mxu0 0.0
  %4835 = vmatpush1.msra.mxu0 0.0
  %4836 = vmatprep.subr.mxu0 0.0
  %4837 = vmatpush1.msra.mxu0 0.0
  %4838 = vmatprep.subr.mxu0 0.0
  %4839 = vmatpush1.msra.mxu0 0.0
  %4840 = vmatprep.subr.mxu0 0.0
  %4841 = vmatpush1.msra.mxu0 0.0
  %4842 = vmatprep.subr.mxu0 0.0
  %4843 = vmatpush1.msra.mxu0 0.0
  %4844 = vmatprep.subr.mxu0 0.0
  %4845 = vmatpush1.msra.mxu0 0.0
  %4846 = vmatprep.mubr.f32.mxu0 0.0
  %4847 = vmatmul.mubr.f32.gmra.mrb[0].mxu0 %v4777
  %v4848 = vpop.f32.mrb[0].mxu0
  %v4849 = vadd.f32 %v4759, %v4848
  %v4850 = vpop.f32.mrb[0].mxu0
  %v4851 = vadd.f32 %v4763, %v4850
  %4852 = vmatprep.mubr.f32.mxu0 0.0
  %4853 = vmatmul.mubr.f32.gmra.mrb[0].mxu0 %v4780
  %v4854 = vpop.f32.mrb[0].mxu0
  %v4855 = vadd.f32 %v4759, %v4854
  %v4856 = vpop.f32.mrb[0].mxu0
  %v4857 = vadd.f32 %v4763, %v4856
  %4858 = vdwg.mxu0
  %4859 = vmatprep.subr.mxu0 %v4725
  %4860 = vmatpush1.msra.mxu0 %v4724
  %4861 = vmatprep.subr.mxu0 %v4729
  %4862 = vmatpush1.msra.mxu0 %v4728
  %4863 = vmatprep.subr.mxu0 %v4733
  %4864 = vmatpush1.msra.mxu0 %v4732
  %4865 = vmatprep.subr.mxu0 %v4737
  %4866 = vmatpush1.msra.mxu0 %v4736
  %4867 = vmatprep.subr.mxu0 %v4741
  %4868 = vmatpush1.msra.mxu0 %v4740
  %4869 = vmatprep.subr.mxu0 %v4745
  %4870 = vmatpush1.msra.mxu0 %v4744
  %4871 = vmatprep.subr.mxu0 %v4749
  %4872 = vmatpush1.msra.mxu0 %v4748
  %4873 = vmatprep.subr.mxu0 %v4753
  %4874 = vmatpush1.msra.mxu0 %v4752
  %4875 = vmatprep.subr.mxu0 0.0
  %4876 = vmatpush1.msra.mxu0 0.0
  %4877 = vmatprep.subr.mxu0 0.0
  %4878 = vmatpush1.msra.mxu0 0.0
  %4879 = vmatprep.subr.mxu0 0.0
  %4880 = vmatpush1.msra.mxu0 0.0
  %4881 = vmatprep.subr.mxu0 0.0
  %4882 = vmatpush1.msra.mxu0 0.0
  %4883 = vmatprep.subr.mxu0 0.0
  %4884 = vmatpush1.msra.mxu0 0.0
  %4885 = vmatprep.subr.mxu0 0.0
  %4886 = vmatpush1.msra.mxu0 0.0
  %4887 = vmatprep.subr.mxu0 0.0
  %4888 = vmatpush1.msra.mxu0 0.0
  %4889 = vmatprep.subr.mxu0 0.0
  %4890 = vmatpush1.msra.mxu0 0.0
  %4891 = vmatprep.subr.mxu0 0.0
  %4892 = vmatpush1.msra.mxu0 0.0
  %4893 = vmatprep.subr.mxu0 0.0
  %4894 = vmatpush1.msra.mxu0 0.0
  %4895 = vmatprep.subr.mxu0 0.0
  %4896 = vmatpush1.msra.mxu0 0.0
  %4897 = vmatprep.subr.mxu0 0.0
  %4898 = vmatpush1.msra.mxu0 0.0
  %4899 = vmatprep.subr.mxu0 0.0
  %4900 = vmatpush1.msra.mxu0 0.0
  %4901 = vmatprep.subr.mxu0 0.0
  %4902 = vmatpush1.msra.mxu0 0.0
  %4903 = vmatprep.subr.mxu0 0.0
  %4904 = vmatpush1.msra.mxu0 0.0
  %4905 = vmatprep.subr.mxu0 0.0
  %4906 = vmatpush1.msra.mxu0 0.0
  %4907 = vmatprep.subr.mxu0 0.0
  %4908 = vmatpush1.msra.mxu0 0.0
  %4909 = vmatprep.subr.mxu0 0.0
  %4910 = vmatpush1.msra.mxu0 0.0
  %4911 = vmatprep.subr.mxu0 0.0
  %4912 = vmatpush1.msra.mxu0 0.0
  %4913 = vmatprep.subr.mxu0 0.0
  %4914 = vmatpush1.msra.mxu0 0.0
  %4915 = vmatprep.subr.mxu0 0.0
  %4916 = vmatpush1.msra.mxu0 0.0
  %4917 = vmatprep.subr.mxu0 0.0
  %4918 = vmatpush1.msra.mxu0 0.0
  %4919 = vmatprep.subr.mxu0 0.0
  %4920 = vmatpush1.msra.mxu0 0.0
  %4921 = vmatprep.subr.mxu0 0.0
  %4922 = vmatpush1.msra.mxu0 0.0
  %4923 = vmatprep.mubr.f32.mxu0 0.0
  %4924 = vmatmul.mubr.f32.gmra.mrb[0].mxu0 %v4777
  %v4925 = vpop.f32.mrb[0].mxu0
  %v4926 = vadd.f32 %v4767, %v4925
  %v4927 = vpop.f32.mrb[0].mxu0
  %v4928 = vadd.f32 %v4771, %v4927
  %4929 = vmatprep.mubr.f32.mxu0 0.0
  %4930 = vmatmul.mubr.f32.gmra.mrb[0].mxu0 %v4780
  %v4931 = vpop.f32.mrb[0].mxu0
  %v4932 = vadd.f32 %v4767, %v4931
  %v4933 = vpop.f32.mrb[0].mxu0
  %v4934 = vadd.f32 %v4771, %v4933
  %4935 = vdwg.mxu0
  %4936 = vst [vmem:[#allocation5] sm:$0xff] %v4849
  %4937 = vst [vmem:[#allocation5 + $0x8] sm:$0xff] %v4851
  %4938 = vst [vmem:[#allocation5 + $0x10] sm:$0xff] %v4926
  %4939 = vst [vmem:[#allocation5 + $0x18] sm:$0xff] %v4928
  %4940 = vst [vmem:[#allocation5 + $0x20] sm:$0xff] %v4855
  %4941 = vst [vmem:[#allocation5 + $0x28] sm:$0xff] %v4857
  %4942 = vst [vmem:[#allocation5 + $0x30] sm:$0xff] %v4932
  %4943 = vst [vmem:[#allocation5 + $0x38] sm:$0xff] %v4934
  %v4944 = vld [vmem:[#allocation5] sm:$0x3]
  %v4945 = vld [vmem:[#allocation5 + $0x8] sm:$0x3]
  %v4946 = vld [vmem:[#allocation5 + $0x10] sm:$0x3]
  %v4947 = vld [vmem:[#allocation5 + $0x18] sm:$0x3]
  %v4948 = vld [vmem:[%s9] sm:$0xf]
  %v4950 = vlaneseq
  %v4951 = vshrl.u32 %v4950, 7
  %v4952 = vsub.s32 0, %v4951
  %v4953 = vrot.slane %v4948, %v4952
  %v4954 = vlaneseq
  %v4955 = vshrl.u32 %v4954, 7
  %v4956 = vsub.s32 1, %v4955
  %v4957 = vrot.slane %v4948, %v4956
  %v4958 = vlaneseq
  %v4959 = vshrl.u32 %v4958, 7
  %v4960 = vsub.s32 2, %v4959
  %v4961 = vrot.slane %v4948, %v4960
  %v4962 = vlaneseq
  %v4963 = vshrl.u32 %v4962, 7
  %v4964 = vsub.s32 3, %v4963
  %v4965 = vrot.slane %v4948, %v4964
  %v4970 = vmul.f32 %v4953, 0.0
  %v4971 = vmul.f32 %v4957, 0.0
  %v4972 = vmul.f32 %v4961, 0.0
  %v4973 = vmul.f32 %v4965, 0.0
  %v4974 = vadd.f32 %v4944, %v4970
  %v4975 = vadd.f32 %v4945, %v4971
  %v4976 = vadd.f32 %v4946, %v4972
  %v4977 = vadd.f32 %v4947, %v4973
  %v4978 = vxor.u32 %v4974, 2147483648
  %v4979 = vmul.f32 %v4978, 1.442695
  %v4980 = vpow.pop %v4979
  %v4981 = vadd.f32 %v4980, 1.0
  %v4982 = vrcp.pop %v4981
  %v4983 = vmul.f32 1.0, %v4982
  %v4984 = vxor.u32 %v4975, 2147483648
  %v4985 = vmul.f32 %v4984, 1.442695
  %v4986 = vpow.pop %v4985
  %v4987 = vadd.f32 %v4986, 1.0
  %v4988 = vrcp.pop %v4987
  %v4989 = vmul.f32 1.0, %v4988
  %v4990 = vtanh.pop %v4976
  %v4991 = vxor.u32 %v4977, 2147483648
  %v4992 = vmul.f32 %v4991, 1.442695
  %v4993 = vpow.pop %v4992
  %v4994 = vadd.f32 %v4993, 1.0
  %v4995 = vrcp.pop %v4994
  %v4996 = vmul.f32 1.0, %v4995
  %v4997 = vmul.f32 %v4989, 0.0
  %v4998 = vmul.f32 %v4983, %v4990
  %v4999 = vadd.f32 %v4997, %v4998
  %v5000 = vtanh.pop %v4999
  %v5001 = vmul.f32 %v4996, %v5000
  %5002 = vst [vmem:[%s10] sm:$0x3] %v5001
  %v5003 = vld [vmem:[#allocation5] sm:$0xc]
  %v5004 = vld [vmem:[#allocation5 + $0x8] sm:$0xc]
  %v5005 = vld [vmem:[#allocation5 + $0x10] sm:$0xc]
  %v5006 = vld [vmem:[#allocation5 + $0x18] sm:$0xc]
  %v5007 = vld [vmem:[%s9] sm:$0xf]
  %5009 = vset.pattern.permute.xlu0 0
  %5010 = vperm.xlu0 %5009, %v5001
  %v5011 = vpop.permute.xlu0 %5010
  %v5014 = vlaneseq
  %v5015 = vshrl.u32 %v5014, 7
  %v5016 = vsub.s32 0, %v5015
  %v5017 = vrot.slane %v5007, %v5016
  %v5018 = vlaneseq
  %v5019 = vshrl.u32 %v5018, 7
  %v5020 = vsub.s32 1, %v5019
  %v5021 = vrot.slane %v5007, %v5020
  %v5022 = vlaneseq
  %v5023 = vshrl.u32 %v5022, 7
  %v5024 = vsub.s32 2, %v5023
  %v5025 = vrot.slane %v5007, %v5024
  %v5026 = vlaneseq
  %v5027 = vshrl.u32 %v5026, 7
  %v5028 = vsub.s32 3, %v5027
  %v5029 = vrot.slane %v5007, %v5028
  %v5034 = vmul.f32 %v5011, %v5017
  %v5035 = vmul.f32 %v5011, %v5021
  %v5036 = vmul.f32 %v5011, %v5025
  %v5037 = vmul.f32 %v5011, %v5029
  %v5042 = vrot.slane %v5034, 6
  %v5043 = vrot.slane %v5035, 6
  %v5044 = vrot.slane %v5036, 6
  %v5045 = vrot.slane %v5037, 6
  %v5050 = vadd.f32 %v5003, %v5042
  %v5051 = vadd.f32 %v5004, %v5043
  %v5052 = vadd.f32 %v5005, %v5044
  %v5053 = vadd.f32 %v5006, %v5045
  %v5054 = vxor.u32 %v5050, 2147483648
  %v5055 = vmul.f32 %v5054, 1.442695
  %v5056 = vpow.pop %v5055
  %v5057 = vadd.f32 %v5056, 1.0
  %v5058 = vrcp.pop %v5057
  %v5059 = vmul.f32 1.0, %v5058
  %v5060 = vxor.u32 %v5051, 2147483648
  %v5061 = vmul.f32 %v5060, 1.442695
  %v5062 = vpow.pop %v5061
  %v5063 = vadd.f32 %v5062, 1.0
  %v5064 = vrcp.pop %v5063
  %v5065 = vmul.f32 1.0, %v5064
  %v5066 = vtanh.pop %v5052
  %v5067 = vxor.u32 %v5053, 2147483648
  %v5068 = vmul.f32 %v5067, 1.442695
  %v5069 = vpow.pop %v5068
  %v5070 = vadd.f32 %v5069, 1.0
  %v5071 = vrcp.pop %v5070
  %v5072 = vmul.f32 1.0, %v5071
  %v5074 = vrot.slane %v4999, 6
  %v5076 = vmul.f32 %v5065, %v5074
  %v5077 = vmul.f32 %v5059, %v5066
  %v5078 = vadd.f32 %v5076, %v5077
  %v5079 = vtanh.pop %v5078
  %v5080 = vmul.f32 %v5072, %v5079
  %5081 = vst [vmem:[%s10] sm:$0xc] %v5080
  %v5082 = vld [vmem:[#allocation5] sm:$0x30]
  %v5083 = vld [vmem:[#allocation5 + $0x8] sm:$0x30]
  %v5084 = vld [vmem:[#allocation5 + $0x10] sm:$0x30]
  %v5085 = vld [vmem:[#allocation5 + $0x18] sm:$0x30]
  %v5086 = vld [vmem:[%s9] sm:$0xf]
  %5088 = vset.pattern.permute.xlu0 0
  %5089 = vperm.xlu0 %5088, %v5080
  %v5090 = vpop.permute.xlu0 %5089
  %v5093 = vlaneseq
  %v5094 = vshrl.u32 %v5093, 7
  %v5095 = vsub.s32 0, %v5094
  %v5096 = vrot.slane %v5086, %v5095
  %v5097 = vlaneseq
  %v5098 = vshrl.u32 %v5097, 7
  %v5099 = vsub.s32 1, %v5098
  %v5100 = vrot.slane %v5086, %v5099
  %v5101 = vlaneseq
  %v5102 = vshrl.u32 %v5101, 7
  %v5103 = vsub.s32 2, %v5102
  %v5104 = vrot.slane %v5086, %v5103
  %v5105 = vlaneseq
  %v5106 = vshrl.u32 %v5105, 7
  %v5107 = vsub.s32 3, %v5106
  %v5108 = vrot.slane %v5086, %v5107
  %v5113 = vmul.f32 %v5090, %v5096
  %v5114 = vmul.f32 %v5090, %v5100
  %v5115 = vmul.f32 %v5090, %v5104
  %v5116 = vmul.f32 %v5090, %v5108
  %v5121 = vrot.slane %v5113, 6
  %v5122 = vrot.slane %v5114, 6
  %v5123 = vrot.slane %v5115, 6
  %v5124 = vrot.slane %v5116, 6
  %v5129 = vadd.f32 %v5082, %v5121
  %v5130 = vadd.f32 %v5083, %v5122
  %v5131 = vadd.f32 %v5084, %v5123
  %v5132 = vadd.f32 %v5085, %v5124
  %v5133 = vxor.u32 %v5129, 2147483648
  %v5134 = vmul.f32 %v5133, 1.442695
  %v5135 = vpow.pop %v5134
  %v5136 = vadd.f32 %v5135, 1.0
  %v5137 = vrcp.pop %v5136
  %v5138 = vmul.f32 1.0, %v5137
  %v5139 = vxor.u32 %v5130, 2147483648
  %v5140 = vmul.f32 %v5139, 1.442695
  %v5141 = vpow.pop %v5140
  %v5142 = vadd.f32 %v5141, 1.0
  %v5143 = vrcp.pop %v5142
  %v5144 = vmul.f32 1.0, %v5143
  %v5145 = vtanh.pop %v5131
  %v5146 = vxor.u32 %v5132, 2147483648
  %v5147 = vmul.f32 %v5146, 1.442695
  %v5148 = vpow.pop %v5147
  %v5149 = vadd.f32 %v5148, 1.0
  %v5150 = vrcp.pop %v5149
  %v5151 = vmul.f32 1.0, %v5150
  %v5153 = vrot.slane %v5078, 6
  %v5155 = vmul.f32 %v5144, %v5153
  %v5156 = vmul.f32 %v5138, %v5145
  %v5157 = vadd.f32 %v5155, %v5156
  %v5158 = vtanh.pop %v5157
  %v5159 = vmul.f32 %v5151, %v5158
  %5160 = vst [vmem:[%s10] sm:$0x30] %v5159
  %v5161 = vld [vmem:[#allocation5] sm:$0xc0]
  %v5162 = vld [vmem:[#allocation5 + $0x8] sm:$0xc0]
  %v5163 = vld [vmem:[#allocation5 + $0x10] sm:$0xc0]
  %v5164 = vld [vmem:[#allocation5 + $0x18] sm:$0xc0]
  %v5165 = vld [vmem:[%s9] sm:$0xf]
  %5167 = vset.pattern.permute.xlu0 0
  %5168 = vperm.xlu0 %5167, %v5159
  %v5169 = vpop.permute.xlu0 %5168
  %v5172 = vlaneseq
  %v5173 = vshrl.u32 %v5172, 7
  %v5174 = vsub.s32 0, %v5173
  %v5175 = vrot.slane %v5165, %v5174
  %v5176 = vlaneseq
  %v5177 = vshrl.u32 %v5176, 7
  %v5178 = vsub.s32 1, %v5177
  %v5179 = vrot.slane %v5165, %v5178
  %v5180 = vlaneseq
  %v5181 = vshrl.u32 %v5180, 7
  %v5182 = vsub.s32 2, %v5181
  %v5183 = vrot.slane %v5165, %v5182
  %v5184 = vlaneseq
  %v5185 = vshrl.u32 %v5184, 7
  %v5186 = vsub.s32 3, %v5185
  %v5187 = vrot.slane %v5165, %v5186
  %v5192 = vmul.f32 %v5169, %v5175
  %v5193 = vmul.f32 %v5169, %v5179
  %v5194 = vmul.f32 %v5169, %v5183
  %v5195 = vmul.f32 %v5169, %v5187
  %v5200 = vrot.slane %v5192, 6
  %v5201 = vrot.slane %v5193, 6
  %v5202 = vrot.slane %v5194, 6
  %v5203 = vrot.slane %v5195, 6
  %v5208 = vadd.f32 %v5161, %v5200
  %v5209 = vadd.f32 %v5162, %v5201
  %v5210 = vadd.f32 %v5163, %v5202
  %v5211 = vadd.f32 %v5164, %v5203
  %v5212 = vxor.u32 %v5208, 2147483648
  %v5213 = vmul.f32 %v5212, 1.442695
  %v5214 = vpow.pop %v5213
  %v5215 = vadd.f32 %v5214, 1.0
  %v5216 = vrcp.pop %v5215
  %v5217 = vmul.f32 1.0, %v5216
  %v5218 = vxor.u32 %v5209, 2147483648
  %v5219 = vmul.f32 %v5218, 1.442695
  %v5220 = vpow.pop %v5219
  %v5221 = vadd.f32 %v5220, 1.0
  %v5222 = vrcp.pop %v5221
  %v5223 = vmul.f32 1.0, %v5222
  %v5224 = vtanh.pop %v5210
  %v5225 = vxor.u32 %v5211, 2147483648
  %v5226 = vmul.f32 %v5225, 1.442695
  %v5227 = vpow.pop %v5226
  %v5228 = vadd.f32 %v5227, 1.0
  %v5229 = vrcp.pop %v5228
  %v5230 = vmul.f32 1.0, %v5229
  %v5232 = vrot.slane %v5157, 6
  %v5234 = vmul.f32 %v5223, %v5232
  %v5235 = vmul.f32 %v5217, %v5224
  %v5236 = vadd.f32 %v5234, %v5235
  %v5237 = vtanh.pop %v5236
  %v5238 = vmul.f32 %v5230, %v5237
  %5239 = vst [vmem:[%s10] sm:$0xc0] %v5238
  %v5240 = vld [vmem:[#allocation5 + $0x20] sm:$0x3]
  %v5241 = vld [vmem:[#allocation5 + $0x28] sm:$0x3]
  %v5242 = vld [vmem:[#allocation5 + $0x30] sm:$0x3]
  %v5243 = vld [vmem:[#allocation5 + $0x38] sm:$0x3]
  %v5244 = vld [vmem:[%s9] sm:$0xf]
  %5246 = vset.pattern.permute.xlu0 0
  %5247 = vperm.xlu0 %5246, %v5238
  %v5248 = vpop.permute.xlu0 %5247
  %v5251 = vlaneseq
  %v5252 = vshrl.u32 %v5251, 7
  %v5253 = vsub.s32 0, %v5252
  %v5254 = vrot.slane %v5244, %v5253
  %v5255 = vlaneseq
  %v5256 = vshrl.u32 %v5255, 7
  %v5257 = vsub.s32 1, %v5256
  %v5258 = vrot.slane %v5244, %v5257
  %v5259 = vlaneseq
  %v5260 = vshrl.u32 %v5259, 7
  %v5261 = vsub.s32 2, %v5260
  %v5262 = vrot.slane %v5244, %v5261
  %v5263 = vlaneseq
  %v5264 = vshrl.u32 %v5263, 7
  %v5265 = vsub.s32 3, %v5264
  %v5266 = vrot.slane %v5244, %v5265
  %v5271 = vmul.f32 %v5248, %v5254
  %v5272 = vmul.f32 %v5248, %v5258
  %v5273 = vmul.f32 %v5248, %v5262
  %v5274 = vmul.f32 %v5248, %v5266
  %v5279 = vrot.slane %v5271, 6
  %v5280 = vrot.slane %v5272, 6
  %v5281 = vrot.slane %v5273, 6
  %v5282 = vrot.slane %v5274, 6
  %v5287 = vadd.f32 %v5240, %v5279
  %v5288 = vadd.f32 %v5241, %v5280
  %v5289 = vadd.f32 %v5242, %v5281
  %v5290 = vadd.f32 %v5243, %v5282
  %v5291 = vxor.u32 %v5287, 2147483648
  %v5292 = vmul.f32 %v5291, 1.442695
  %v5293 = vpow.pop %v5292
  %v5294 = vadd.f32 %v5293, 1.0
  %v5295 = vrcp.pop %v5294
  %v5296 = vmul.f32 1.0, %v5295
  %v5297 = vxor.u32 %v5288, 2147483648
  %v5298 = vmul.f32 %v5297, 1.442695
  %v5299 = vpow.pop %v5298
  %v5300 = vadd.f32 %v5299, 1.0
  %v5301 = vrcp.pop %v5300
  %v5302 = vmul.f32 1.0, %v5301
  %v5303 = vtanh.pop %v5289
  %v5304 = vxor.u32 %v5290, 2147483648
  %v5305 = vmul.f32 %v5304, 1.442695
  %v5306 = vpow.pop %v5305
  %v5307 = vadd.f32 %v5306, 1.0
  %v5308 = vrcp.pop %v5307
  %v5309 = vmul.f32 1.0, %v5308
  %v5311 = vrot.slane %v5236, 6
  %v5313 = vmul.f32 %v5302, %v5311
  %v5314 = vmul.f32 %v5296, %v5303
  %v5315 = vadd.f32 %v5313, %v5314
  %v5316 = vtanh.pop %v5315
  %v5317 = vmul.f32 %v5309, %v5316
  %5318 = vst [vmem:[%s10 + $0x8] sm:$0x3] %v5317
  %v5319 = vld [vmem:[#allocation5 + $0x20] sm:$0xc]
  %v5320 = vld [vmem:[#allocation5 + $0x28] sm:$0xc]
  %v5321 = vld [vmem:[#allocation5 + $0x30] sm:$0xc]
  %v5322 = vld [vmem:[#allocation5 + $0x38] sm:$0xc]
  %v5323 = vld [vmem:[%s9] sm:$0xf]
  %5325 = vset.pattern.permute.xlu0 0
  %5326 = vperm.xlu0 %5325, %v5317
  %v5327 = vpop.permute.xlu0 %5326
  %v5330 = vlaneseq
  %v5331 = vshrl.u32 %v5330, 7
  %v5332 = vsub.s32 0, %v5331
  %v5333 = vrot.slane %v5323, %v5332
  %v5334 = vlaneseq
  %v5335 = vshrl.u32 %v5334, 7
  %v5336 = vsub.s32 1, %v5335
  %v5337 = vrot.slane %v5323, %v5336
  %v5338 = vlaneseq
  %v5339 = vshrl.u32 %v5338, 7
  %v5340 = vsub.s32 2, %v5339
  %v5341 = vrot.slane %v5323, %v5340
  %v5342 = vlaneseq
  %v5343 = vshrl.u32 %v5342, 7
  %v5344 = vsub.s32 3, %v5343
  %v5345 = vrot.slane %v5323, %v5344
  %v5350 = vmul.f32 %v5327, %v5333
  %v5351 = vmul.f32 %v5327, %v5337
  %v5352 = vmul.f32 %v5327, %v5341
  %v5353 = vmul.f32 %v5327, %v5345
  %v5358 = vrot.slane %v5350, 6
  %v5359 = vrot.slane %v5351, 6
  %v5360 = vrot.slane %v5352, 6
  %v5361 = vrot.slane %v5353, 6
  %v5366 = vadd.f32 %v5319, %v5358
  %v5367 = vadd.f32 %v5320, %v5359
  %v5368 = vadd.f32 %v5321, %v5360
  %v5369 = vadd.f32 %v5322, %v5361
  %v5370 = vxor.u32 %v5366, 2147483648
  %v5371 = vmul.f32 %v5370, 1.442695
  %v5372 = vpow.pop %v5371
  %v5373 = vadd.f32 %v5372, 1.0
  %v5374 = vrcp.pop %v5373
  %v5375 = vmul.f32 1.0, %v5374
  %v5376 = vxor.u32 %v5367, 2147483648
  %v5377 = vmul.f32 %v5376, 1.442695
  %v5378 = vpow.pop %v5377
  %v5379 = vadd.f32 %v5378, 1.0
  %v5380 = vrcp.pop %v5379
  %v5381 = vmul.f32 1.0, %v5380
  %v5382 = vtanh.pop %v5368
  %v5383 = vxor.u32 %v5369, 2147483648
  %v5384 = vmul.f32 %v5383, 1.442695
  %v5385 = vpow.pop %v5384
  %v5386 = vadd.f32 %v5385, 1.0
  %v5387 = vrcp.pop %v5386
  %v5388 = vmul.f32 1.0, %v5387
  %v5390 = vrot.slane %v5315, 6
  %v5392 = vmul.f32 %v5381, %v5390
  %v5393 = vmul.f32 %v5375, %v5382
  %v5394 = vadd.f32 %v5392, %v5393
  %v5395 = vtanh.pop %v5394
  %v5396 = vmul.f32 %v5388, %v5395
  %5397 = vst [vmem:[%s10 + $0x8] sm:$0xc] %v5396
  %v5398 = vld [vmem:[#allocation5 + $0x20] sm:$0x30]
  %v5399 = vld [vmem:[#allocation5 + $0x28] sm:$0x30]
  %v5400 = vld [vmem:[#allocation5 + $0x30] sm:$0x30]
  %v5401 = vld [vmem:[#allocation5 + $0x38] sm:$0x30]
  %v5402 = vld [vmem:[%s9] sm:$0xf]
  %5404 = vset.pattern.permute.xlu0 0
  %5405 = vperm.xlu0 %5404, %v5396
  %v5406 = vpop.permute.xlu0 %5405
  %v5409 = vlaneseq
  %v5410 = vshrl.u32 %v5409, 7
  %v5411 = vsub.s32 0, %v5410
  %v5412 = vrot.slane %v5402, %v5411
  %v5413 = vlaneseq
  %v5414 = vshrl.u32 %v5413, 7
  %v5415 = vsub.s32 1, %v5414
  %v5416 = vrot.slane %v5402, %v5415
  %v5417 = vlaneseq
  %v5418 = vshrl.u32 %v5417, 7
  %v5419 = vsub.s32 2, %v5418
  %v5420 = vrot.slane %v5402, %v5419
  %v5421 = vlaneseq
  %v5422 = vshrl.u32 %v5421, 7
  %v5423 = vsub.s32 3, %v5422
  %v5424 = vrot.slane %v5402, %v5423
  %v5429 = vmul.f32 %v5406, %v5412
  %v5430 = vmul.f32 %v5406, %v5416
  %v5431 = vmul.f32 %v5406, %v5420
  %v5432 = vmul.f32 %v5406, %v5424
  %v5437 = vrot.slane %v5429, 6
  %v5438 = vrot.slane %v5430, 6
  %v5439 = vrot.slane %v5431, 6
  %v5440 = vrot.slane %v5432, 6
  %v5445 = vadd.f32 %v5398, %v5437
  %v5446 = vadd.f32 %v5399, %v5438
  %v5447 = vadd.f32 %v5400, %v5439
  %v5448 = vadd.f32 %v5401, %v5440
  %v5449 = vxor.u32 %v5445, 2147483648
  %v5450 = vmul.f32 %v5449, 1.442695
  %v5451 = vpow.pop %v5450
  %v5452 = vadd.f32 %v5451, 1.0
  %v5453 = vrcp.pop %v5452
  %v5454 = vmul.f32 1.0, %v5453
  %v5455 = vxor.u32 %v5446, 2147483648
  %v5456 = vmul.f32 %v5455, 1.442695
  %v5457 = vpow.pop %v5456
  %v5458 = vadd.f32 %v5457, 1.0
  %v5459 = vrcp.pop %v5458
  %v5460 = vmul.f32 1.0, %v5459
  %v5461 = vtanh.pop %v5447
  %v5462 = vxor.u32 %v5448, 2147483648
  %v5463 = vmul.f32 %v5462, 1.442695
  %v5464 = vpow.pop %v5463
  %v5465 = vadd.f32 %v5464, 1.0
  %v5466 = vrcp.pop %v5465
  %v5467 = vmul.f32 1.0, %v5466
  %v5469 = vrot.slane %v5394, 6
  %v5471 = vmul.f32 %v5460, %v5469
  %v5472 = vmul.f32 %v5454, %v5461
  %v5473 = vadd.f32 %v5471, %v5472
  %v5474 = vtanh.pop %v5473
  %v5475 = vmul.f32 %v5467, %v5474
  %5476 = vst [vmem:[%s10 + $0x8] sm:$0x30] %v5475
  %v5477 = vld [vmem:[#allocation5 + $0x20] sm:$0xc0]
  %v5478 = vld [vmem:[#allocation5 + $0x28] sm:$0xc0]
  %v5479 = vld [vmem:[#allocation5 + $0x30] sm:$0xc0]
  %v5480 = vld [vmem:[#allocation5 + $0x38] sm:$0xc0]
  %v5481 = vld [vmem:[%s9] sm:$0xf]
  %5483 = vset.pattern.permute.xlu0 0
  %5484 = vperm.xlu0 %5483, %v5475
  %v5485 = vpop.permute.xlu0 %5484
  %v5488 = vlaneseq
  %v5489 = vshrl.u32 %v5488, 7
  %v5490 = vsub.s32 0, %v5489
  %v5491 = vrot.slane %v5481, %v5490
  %v5492 = vlaneseq
  %v5493 = vshrl.u32 %v5492, 7
  %v5494 = vsub.s32 1, %v5493
  %v5495 = vrot.slane %v5481, %v5494
  %v5496 = vlaneseq
  %v5497 = vshrl.u32 %v5496, 7
  %v5498 = vsub.s32 2, %v5497
  %v5499 = vrot.slane %v5481, %v5498
  %v5500 = vlaneseq
  %v5501 = vshrl.u32 %v5500, 7
  %v5502 = vsub.s32 3, %v5501
  %v5503 = vrot.slane %v5481, %v5502
  %v5508 = vmul.f32 %v5485, %v5491
  %v5509 = vmul.f32 %v5485, %v5495
  %v5510 = vmul.f32 %v5485, %v5499
  %v5511 = vmul.f32 %v5485, %v5503
  %v5516 = vrot.slane %v5508, 6
  %v5517 = vrot.slane %v5509, 6
  %v5518 = vrot.slane %v5510, 6
  %v5519 = vrot.slane %v5511, 6
  %v5524 = vadd.f32 %v5477, %v5516
  %v5525 = vadd.f32 %v5478, %v5517
  %v5526 = vadd.f32 %v5479, %v5518
  %v5527 = vadd.f32 %v5480, %v5519
  %v5528 = vxor.u32 %v5524, 2147483648
  %v5529 = vmul.f32 %v5528, 1.442695
  %v5530 = vpow.pop %v5529
  %v5531 = vadd.f32 %v5530, 1.0
  %v5532 = vrcp.pop %v5531
  %v5533 = vmul.f32 1.0, %v5532
  %v5534 = vxor.u32 %v5525, 2147483648
  %v5535 = vmul.f32 %v5534, 1.442695
  %v5536 = vpow.pop %v5535
  %v5537 = vadd.f32 %v5536, 1.0
  %v5538 = vrcp.pop %v5537
  %v5539 = vmul.f32 1.0, %v5538
  %v5540 = vtanh.pop %v5526
  %v5541 = vxor.u32 %v5527, 2147483648
  %v5542 = vmul.f32 %v5541, 1.442695
  %v5543 = vpow.pop %v5542
  %v5544 = vadd.f32 %v5543, 1.0
  %v5545 = vrcp.pop %v5544
  %v5546 = vmul.f32 1.0, %v5545
  %v5548 = vrot.slane %v5473, 6
  %v5550 = vmul.f32 %v5539, %v5548
  %v5551 = vmul.f32 %v5533, %v5540
  %v5552 = vadd.f32 %v5550, %v5551
  %v5553 = vtanh.pop %v5552
  %v5554 = vmul.f32 %v5546, %v5553
  %5555 = vst [vmem:[%s10 + $0x8] sm:$0xc0] %v5554
  // Predicated region
  $region132: #{encoder_forward.1} parent=0 // pred_check
    _
  $region133: #{encoder_forward.1} parent=0 // pred_check_branch
    %5557 = sbr.rel (0) target = $region135
  $region134: #{encoder_forward.1} parent=0 // pred_region
    _
  $region135: #{encoder_forward.1} parent=0 // pred_fallthru
    _
  // Predicated region
  $region136: #{encoder_forward.1} parent=0 // pred_check
    _
  $region137: #{encoder_forward.1} parent=0 // pred_check_branch
    %5559 = sbr.rel (0) target = $region139
  $region138: #{encoder_forward.1} parent=0 // pred_region
    _
  $region139: #{encoder_forward.1} parent=0 // pred_fallthru
    _
  %5560 = vsyncmov [#allocation8]
  %s5561 = vpop.sfrf %5560
  %p5562 = scmp.eq.s32.totalorder %s5561, 0
  %p5563 = pneg %p5562
  %5565 = shalt.err (%p5563)
  %s5566 = scalar_lea.sflag [#allocation8], 1
  %5567 = vsyncmov %s5566
  %s5568 = vpop.sfrf %5567
  %p5569 = scmp.eq.s32.totalorder %s5568, 0
  %p5570 = pneg %p5569
  %5572 = shalt.err (%p5570)
  %s5573 = scalar_lea.sflag [#allocation8], 2
  %5574 = vsyncmov %s5573
  %s5575 = vpop.sfrf %5574
  %p5576 = scmp.eq.s32.totalorder %s5575, 0
  %p5577 = pneg %p5576
  %5579 = shalt.err (%p5577)

</llo_original>
